<compile_context>
chip_gen: v6e
topology: v6e:2x2x1
jax: 0.10.0
libtpu: 0.0.40
codegen_flags: <defaults>
</compile_context>

<pallas_src>
import functools

import jax
import jax.numpy as jnp
from jax.experimental import pallas as pl
from jax.experimental.pallas import tpu as pltpu


def _layernorm_f32(x, gamma, beta, eps):
    mu = jnp.mean(x, axis=-1, keepdims=True)
    xc = x - mu
    var = jnp.mean(xc * xc, axis=-1, keepdims=True)
    return xc * jax.lax.rsqrt(var + eps) * gamma + beta


def _block_kernel(x_ref, g1_ref, b1_ref, wq_ref, wk_ref, wv_ref,
                  wproj_ref, bproj_ref, g2_ref, b2_ref,
                  wfc1_ref, bfc1_ref, wfc2_ref, bfc2_ref,
                  *rest, num_heads, eps, has_mask, block_q):
    # x_ref   : (1, N, C)  full sequence of one batch element (resident over qi)
    # wq/wk/wv: (H, C, hd) bf16 per-head projection weights (scale folded in Q)
    # wproj   : (C, C) bf16 (W_proj^T); wfc1: (C, Hm); wfc2: (Hm, C) bf16
    # biases / LN params: f32 (1, dim);  optional bias_ref: (1, N, N) f32 additive mask
    # scratch : q_sc/k_sc/v_sc (H, N, hd) bf16, filled once per batch element
    if has_mask:
        bias_ref, o_ref, q_sc, k_sc, v_sc = rest
    else:
        o_ref, q_sc, k_sc, v_sc = rest

    H = num_heads
    C = x_ref.shape[2]
    hd = C // H
    Tq = block_q
    cdt = wq_ref.dtype                                  # bf16 compute dtype
    qi = pl.program_id(1)
    q0 = pl.multiple_of(qi * Tq, Tq)

    # ---- once per batch element: LayerNorm 1 + Q/K/V projections -----------
    # Head split lives on the weights: H independent (N,C)x(C,hd) matmuls
    # (full K = C contraction depth) writing directly into the (H, N, hd)
    # per-head scratch layout.
    @pl.when(qi == 0)
    def _():
        xf = x_ref[0].astype(jnp.float32)                        # (N, C)
        xn1 = _layernorm_f32(xf, g1_ref[...], b1_ref[...], eps)
        xn1c = xn1.astype(cdt)
        for h in range(H):                                       # static unroll
            q_sc[h] = jnp.dot(xn1c, wq_ref[h],
                              preferred_element_type=jnp.float32).astype(cdt)
            k_sc[h] = jnp.dot(xn1c, wk_ref[h],
                              preferred_element_type=jnp.float32).astype(cdt)
            v_sc[h] = jnp.dot(xn1c, wv_ref[h],
                              preferred_element_type=jnp.float32).astype(cdt)

    # ---- attention for this query tile --------------------------------------
    qh = q_sc[:, pl.ds(q0, Tq), :]                               # (H, Tq, hd)
    kh = k_sc[...]                                               # (H, N,  hd)
    vh = v_sc[...]                                               # (H, N,  hd)

    s = jnp.einsum('hqd,hkd->hqk', qh, kh,
                   preferred_element_type=jnp.float32)           # (H, Tq, N)
    if has_mask:
        # Resident additive bias (0 where attended, -1e9 where masked).
        # Note: fully-masked rows degrade to a softmax over the raw scores
        # (same as rows of all -1e9 up to the row-max shift).
        s = s + bias_ref[0, pl.ds(q0, Tq), :]
    s = s - jnp.max(s, axis=-1, keepdims=True)
    p = jnp.exp(s)
    p = p * pl.reciprocal(jnp.sum(p, axis=-1, keepdims=True), approx=True)
    # attn_drop p=0.0 -> identity

    ctx = jnp.einsum('hqk,hkd->hqd', p.astype(cdt), vh,
                     preferred_element_type=jnp.float32)         # (H, Tq, hd)

    # ---- output projection: lane-concat heads, one full-depth matmul --------
    ctx16 = ctx.astype(cdt)
    ctx_cat = jnp.concatenate([ctx16[h] for h in range(H)], axis=-1)  # (Tq, C)
    attn_out = jnp.dot(ctx_cat, wproj_ref[...],
                       preferred_element_type=jnp.float32) + bproj_ref[...]
    # proj_drop / drop_path p=0.0 -> identity

    xf_t = x_ref[0, pl.ds(q0, Tq), :].astype(jnp.float32)        # residual rows
    x1 = xf_t + attn_out                                         # (Tq, C)

    # ---- LayerNorm 2 + MLP (row-wise, so safe per query tile) ---------------
    xn2 = _layernorm_f32(x1, g2_ref[...], b2_ref[...], eps)
    h1 = jnp.dot(xn2.astype(cdt), wfc1_ref[...],
                 preferred_element_type=jnp.float32) + bfc1_ref[...]
    # TODO(synk): PyTorch nn.GELU default is the exact erf form; tanh approx used here.
    h1 = jax.nn.gelu(h1, approximate=True)
    h2 = jnp.dot(h1.astype(cdt), wfc2_ref[...],
                 preferred_element_type=jnp.float32) + bfc2_ref[...]

    o_ref[0] = (x1 + h2).astype(o_ref.dtype)


def block_forward(x, params, mask=None, num_heads=8, qk_scale=None,
                  eps=1e-5, compute_dtype=jnp.bfloat16, block_q=None,
                  vmem_limit_bytes=48 * 1024 * 1024):
    """x: (B, N, C) (f32 or bf16). params use PyTorch Linear layout (out, in)."""
    B, N, C = x.shape
    assert C % num_heads == 0
    hd = C // num_heads
    scale = qk_scale if qk_scale is not None else hd ** (-0.5)
    Hm = params['w_fc1'].shape[0]
    f32 = jnp.float32

    # Query tile: full N when it comfortably fits (v5e/v6e 128 MiB VMEM),
    # otherwise 128-row tiles (bounds the (H, Tq, N) scores for v7x).
    if block_q is None:
        block_q = N if (N <= 128 or N % 128 != 0) else 128
    assert N % block_q == 0 and (block_q == N or block_q % 8 == 0)
    nq = N // block_q

    # ---- host-side weight prep (layouts match the kernel; done once) --------
    w_qkv = jnp.asarray(params['w_qkv']).astype(f32)                  # (3C, C)
    w3 = w_qkv.reshape(3, num_heads, hd, C).transpose(0, 1, 3, 2)     # (3,H,C,hd)
    wq = (w3[0] * scale).astype(compute_dtype)        # attention scale folded into Q
    wk = w3[1].astype(compute_dtype)
    wv = w3[2].astype(compute_dtype)
    wproj_t = jnp.asarray(params['w_proj']).astype(f32).T.astype(compute_dtype)  # (C, C)
    wfc1_t = jnp.asarray(params['w_fc1']).astype(f32).T.astype(compute_dtype)    # (C, Hm)
    wfc2_t = jnp.asarray(params['w_fc2']).astype(f32).T.astype(compute_dtype)    # (Hm, C)

    g1 = jnp.asarray(params['ln1_g']).astype(f32).reshape(1, C)
    b1 = jnp.asarray(params['ln1_b']).astype(f32).reshape(1, C)
    g2 = jnp.asarray(params['ln2_g']).astype(f32).reshape(1, C)
    b2 = jnp.asarray(params['ln2_b']).astype(f32).reshape(1, C)
    bproj = jnp.asarray(params['b_proj']).astype(f32).reshape(1, C)
    bfc1 = jnp.asarray(params['b_fc1']).astype(f32).reshape(1, Hm)
    bfc2 = jnp.asarray(params['b_fc2']).astype(f32).reshape(1, C)

    has_mask = mask is not None
    args = [x, g1, b1, wq, wk, wv, wproj_t, bproj, g2, b2, wfc1_t, bfc1, wfc2_t, bfc2]
    mask_b = 1
    if has_mask:
        mask_arr = jnp.asarray(mask).reshape(-1, N, N)
        mask_b = mask_arr.shape[0]
        assert mask_b in (1, B)
        # Precompute additive bias once (no per-batch broadcast, no in-kernel select).
        args.append(jnp.where(mask_arr == 0, jnp.float32(-1e9), jnp.float32(0.0)))

    kernel = functools.partial(_block_kernel, num_heads=num_heads, eps=eps,
                               has_mask=has_mask, block_q=block_q)

    def build_specs(single_buffer_weights):
        def wspec(shape, imap):
            # Constant-index weights/biases: single-buffer them (double
            # buffering buys nothing and doubles their VMEM footprint).
            if single_buffer_weights:
                return pl.BlockSpec(shape, imap, pipeline_mode=pl.Buffered(1))
            return pl.BlockSpec(shape, imap)

        in_specs = [
            pl.BlockSpec((1, N, C), lambda b, q: (b, 0, 0)),        # x (full seq / batch)
            wspec((1, C), lambda b, q: (0, 0)),                     # ln1 gamma
            wspec((1, C), lambda b, q: (0, 0)),                     # ln1 beta
            wspec((num_heads, C, hd), lambda b, q: (0, 0, 0)),      # Wq (scaled)
            wspec((num_heads, C, hd), lambda b, q: (0, 0, 0)),      # Wk
            wspec((num_heads, C, hd), lambda b, q: (0, 0, 0)),      # Wv
            wspec((C, C), lambda b, q: (0, 0)),                     # Wproj^T
            wspec((1, C), lambda b, q: (0, 0)),                     # proj bias
            wspec((1, C), lambda b, q: (0, 0)),                     # ln2 gamma
            wspec((1, C), lambda b, q: (0, 0)),                     # ln2 beta
            wspec((C, Hm), lambda b, q: (0, 0)),                    # Wfc1^T
            wspec((1, Hm), lambda b, q: (0, 0)),                    # fc1 bias
            wspec((Hm, C), lambda b, q: (0, 0)),                    # Wfc2^T
            wspec((1, C), lambda b, q: (0, 0)),                     # fc2 bias
        ]
        if has_mask:
            if mask_b == 1:
                in_specs.append(wspec((1, N, N), lambda b, q: (0, 0, 0)))      # resident
            else:
                in_specs.append(pl.BlockSpec((1, N, N), lambda b, q: (b, 0, 0)))
        return in_specs

    def run(single_buffer_weights):
        return pl.pallas_call(
            kernel,
            out_shape=jax.ShapeDtypeStruct((B, N, C), x.dtype),
            grid_spec=pltpu.PrefetchScalarGridSpec(
                num_scalar_prefetch=0,
                grid=(B, nq),
                in_specs=build_specs(single_buffer_weights),
                out_specs=pl.BlockSpec((1, block_q, C), lambda b, q: (b, q, 0)),
                scratch_shapes=[
                    pltpu.VMEM((num_heads, N, hd), compute_dtype),   # Q (all rows)
                    pltpu.VMEM((num_heads, N, hd), compute_dtype),   # K
                    pltpu.VMEM((num_heads, N, hd), compute_dtype),   # V
                ],
            ),
            compiler_params=pltpu.CompilerParams(
                dimension_semantics=("parallel", "arbitrary"),
                vmem_limit_bytes=vmem_limit_bytes),
        )(*args)

    try:
        return run(single_buffer_weights=True)
    except Exception:
        # Fallback if this jax build rejects pipeline_mode=pl.Buffered(1).
        return run(single_buffer_weights=False)


def _reference_block(x, p, mask, num_heads, scale, eps=1e-5):
    def ln(z, g, b):
        mu = z.mean(-1, keepdims=True)
        var = ((z - mu) ** 2).mean(-1, keepdims=True)
        return (z - mu) * jax.lax.rsqrt(var + eps) * g + b

    B, N, C = x.shape
    hd = C // num_heads
    xn = ln(x, p['ln1_g'], p['ln1_b'])
    qkv = xn @ p['w_qkv'].T                                        # (B, N, 3C)
    qkv = qkv.reshape(B, N, 3, num_heads, hd).transpose(2, 0, 3, 1, 4)
    q, k, v = qkv[0], qkv[1], qkv[2]                               # (B, H, N, hd)
    attn = jnp.einsum('bhnd,bhmd->bhnm', q, k) * scale
    if mask is not None:
        m = jnp.asarray(mask).reshape(-1, 1, N, N)
        attn = jnp.where(m == 0, -1e9, attn)
    attn = jax.nn.softmax(attn, axis=-1)
    ctx = jnp.einsum('bhnm,bhmd->bhnd', attn, v)
    ctx = ctx.transpose(0, 2, 1, 3).reshape(B, N, C)
    x = x + ctx @ p['w_proj'].T + p['b_proj']
    xn2 = ln(x, p['ln2_g'], p['ln2_b'])
    h = jax.nn.gelu(xn2 @ p['w_fc1'].T + p['b_fc1'], approximate=True)
    return x + h @ p['w_fc2'].T + p['b_fc2']


if __name__ == "__main__":
    B, N, C, H = 2, 16, 32, 8
    Hm = 4 * C
    key = jax.random.PRNGKey(0)
    ks = jax.random.split(key, 13)

    x = jax.random.normal(ks[0], (B, N, C), dtype=jnp.float32)
    params = dict(
        ln1_g=1.0 + 0.1 * jax.random.normal(ks[1], (C,), dtype=jnp.float32),
        ln1_b=0.05 * jax.random.normal(ks[2], (C,), dtype=jnp.float32),
        w_qkv=0.02 * jax.random.normal(ks[3], (3 * C, C), dtype=jnp.float32),
        w_proj=0.02 * jax.random.normal(ks[4], (C, C), dtype=jnp.float32),
        b_proj=0.01 * jax.random.normal(ks[5], (C,), dtype=jnp.float32),
        ln2_g=1.0 + 0.1 * jax.random.normal(ks[6], (C,), dtype=jnp.float32),
        ln2_b=0.05 * jax.random.normal(ks[7], (C,), dtype=jnp.float32),
        w_fc1=0.02 * jax.random.normal(ks[8], (Hm, C), dtype=jnp.float32),
        b_fc1=0.01 * jax.random.normal(ks[9], (Hm,), dtype=jnp.float32),
        w_fc2=0.02 * jax.random.normal(ks[10], (C, Hm), dtype=jnp.float32),
        b_fc2=0.01 * jax.random.normal(ks[11], (C,), dtype=jnp.float32),
    )
    scale = (C // H) ** -0.5

    # 1) no mask, single query tile (block_q == N)
    out1 = jax.block_until_ready(block_forward(x, params, mask=None, num_heads=H))
    ref1 = _reference_block(x, params, None, H, scale)
    assert out1.shape == (B, N, C)
    assert jnp.allclose(out1, ref1, atol=3e-2, rtol=3e-2), "mismatch vs reference (no mask)"

    # 2) shared mask (resident additive bias) + query tiling (two q tiles)
    mask = (jax.random.uniform(ks[12], (1, N, N)) > 0.3).astype(jnp.float32)
    mask = jnp.maximum(mask, jnp.eye(N, dtype=jnp.float32)[None])  # no fully-masked rows
    out2 = jax.block_until_ready(
        block_forward(x, params, mask=mask, num_heads=H, block_q=8))
    ref2 = _reference_block(x, params, mask, H, scale)
    assert jnp.allclose(out2, ref2, atol=3e-2, rtol=3e-2), "mismatch vs reference (mask)"

    print("KERNEL_OK")
</pallas_src>

<mosaic_0001>
module attributes {stable_mosaic.version = 11 : i64} {
  func.func @_block_kernel(%arg0: i32, %arg1: i32, %arg2: memref<1x16x32xf32, #tpu.memory_space<vmem>>, %arg3: memref<1x32xf32, #tpu.memory_space<vmem>>, %arg4: memref<1x32xf32, #tpu.memory_space<vmem>>, %arg5: memref<8x32x4xbf16, #tpu.memory_space<vmem>>, %arg6: memref<8x32x4xbf16, #tpu.memory_space<vmem>>, %arg7: memref<8x32x4xbf16, #tpu.memory_space<vmem>>, %arg8: memref<32x32xbf16, #tpu.memory_space<vmem>>, %arg9: memref<1x32xf32, #tpu.memory_space<vmem>>, %arg10: memref<1x32xf32, #tpu.memory_space<vmem>>, %arg11: memref<1x32xf32, #tpu.memory_space<vmem>>, %arg12: memref<32x128xbf16, #tpu.memory_space<vmem>>, %arg13: memref<1x128xf32, #tpu.memory_space<vmem>>, %arg14: memref<128x32xbf16, #tpu.memory_space<vmem>>, %arg15: memref<1x32xf32, #tpu.memory_space<vmem>>, %arg16: memref<1x16x32xf32, #tpu.memory_space<vmem>>, %arg17: memref<8x16x4xbf16, #tpu.memory_space<vmem>>, %arg18: memref<8x16x4xbf16, #tpu.memory_space<vmem>>, %arg19: memref<8x16x4xbf16, #tpu.memory_space<vmem>>) attributes {dimension_semantics = [#tpu.dimension_semantics<parallel>, #tpu.dimension_semantics<arbitrary>], iteration_bounds = array<i64: 2, 1>, scalar_prefetch = 0 : i64, scratch_operands = 3 : i64, tpu.core_type = #tpu.core_type<tc>, window_params = [{transform_indices = @transform_0, window_bounds = array<i64: 1, 16, 32>}, {pipeline_mode = #tpu.pipeline_mode<synchronous>, transform_indices = @transform_1, window_bounds = array<i64: 1, 32>}, {pipeline_mode = #tpu.pipeline_mode<synchronous>, transform_indices = @transform_2, window_bounds = array<i64: 1, 32>}, {pipeline_mode = #tpu.pipeline_mode<synchronous>, transform_indices = @transform_3, window_bounds = array<i64: 8, 32, 4>}, {pipeline_mode = #tpu.pipeline_mode<synchronous>, transform_indices = @transform_4, window_bounds = array<i64: 8, 32, 4>}, {pipeline_mode = #tpu.pipeline_mode<synchronous>, transform_indices = @transform_5, window_bounds = array<i64: 8, 32, 4>}, {pipeline_mode = #tpu.pipeline_mode<synchronous>, transform_indices = @transform_6, window_bounds = array<i64: 32, 32>}, {pipeline_mode = #tpu.pipeline_mode<synchronous>, transform_indices = @transform_7, window_bounds = array<i64: 1, 32>}, {pipeline_mode = #tpu.pipeline_mode<synchronous>, transform_indices = @transform_8, window_bounds = array<i64: 1, 32>}, {pipeline_mode = #tpu.pipeline_mode<synchronous>, transform_indices = @transform_9, window_bounds = array<i64: 1, 32>}, {pipeline_mode = #tpu.pipeline_mode<synchronous>, transform_indices = @transform_10, window_bounds = array<i64: 32, 128>}, {pipeline_mode = #tpu.pipeline_mode<synchronous>, transform_indices = @transform_11, window_bounds = array<i64: 1, 128>}, {pipeline_mode = #tpu.pipeline_mode<synchronous>, transform_indices = @transform_12, window_bounds = array<i64: 128, 32>}, {pipeline_mode = #tpu.pipeline_mode<synchronous>, transform_indices = @transform_13, window_bounds = array<i64: 1, 32>}, {transform_indices = @transform_14, window_bounds = array<i64: 1, 16, 32>}]} {
    %c16_i32 = arith.constant 16 : i32
    %0 = arith.muli %arg1, %c16_i32 : i32
    %1 = tpu.assume_multiple %0, 16 : i32
    %c0_i32 = arith.constant 0 : i32
    %2 = arith.cmpi eq, %arg1, %c0_i32 : i32
    %3 = arith.extui %2 : i1 to i32
    %c0_i32_0 = arith.constant 0 : i32
    %4 = arith.cmpi ne, %3, %c0_i32_0 : i32
    scf.if %4 {
      %c0_44 = arith.constant 0 : index
      %c0_45 = arith.constant 0 : index
      %c0_46 = arith.constant 0 : index
      %100 = vector.load %arg2[%c0_44, %c0_45, %c0_46] : memref<1x16x32xf32, #tpu.memory_space<vmem>>, vector<1x16x32xf32>
      %101 = vector.shape_cast %100 : vector<1x16x32xf32> to vector<16x32xf32>
      %c0_47 = arith.constant 0 : index
      %c0_48 = arith.constant 0 : index
      %102 = vector.load %arg3[%c0_47, %c0_48] : memref<1x32xf32, #tpu.memory_space<vmem>>, vector<1x32xf32>
      %c0_49 = arith.constant 0 : index
      %c0_50 = arith.constant 0 : index
      %103 = vector.load %arg4[%c0_49, %c0_50] : memref<1x32xf32, #tpu.memory_space<vmem>>, vector<1x32xf32>
      %cst_51 = arith.constant dense<0.000000e+00> : vector<16xf32>
      %104 = vector.multi_reduction <add>, %101, %cst_51 [1] : vector<16x32xf32> to vector<16xf32>
      %105 = vector.shape_cast %104 : vector<16xf32> to vector<16x1xf32>
      %cst_52 = arith.constant 3.200000e+01 : f32
      %106 = vector.broadcast %cst_52 : f32 to vector<16x1xf32>
      %107 = arith.divf %105, %106 : vector<16x1xf32>
      %108 = vector.broadcast %107 : vector<16x1xf32> to vector<16x32xf32>
      %109 = arith.subf %101, %108 : vector<16x32xf32>
      %110 = arith.mulf %109, %109 : vector<16x32xf32>
      %cst_53 = arith.constant dense<0.000000e+00> : vector<16xf32>
      %111 = vector.multi_reduction <add>, %110, %cst_53 [1] : vector<16x32xf32> to vector<16xf32>
      %112 = vector.shape_cast %111 : vector<16xf32> to vector<16x1xf32>
      %cst_54 = arith.constant 3.200000e+01 : f32
      %113 = vector.broadcast %cst_54 : f32 to vector<16x1xf32>
      %114 = arith.divf %112, %113 : vector<16x1xf32>
      %cst_55 = arith.constant 9.99999974E-6 : f32
      %115 = vector.broadcast %cst_55 : f32 to vector<16x1xf32>
      %116 = arith.addf %114, %115 : vector<16x1xf32>
      %117 = math.rsqrt %116 : vector<16x1xf32>
      %118 = vector.broadcast %117 : vector<16x1xf32> to vector<16x32xf32>
      %119 = arith.mulf %109, %118 : vector<16x32xf32>
      %120 = vector.broadcast %102 : vector<1x32xf32> to vector<16x32xf32>
      %121 = arith.mulf %119, %120 : vector<16x32xf32>
      %122 = vector.broadcast %103 : vector<1x32xf32> to vector<16x32xf32>
      %123 = arith.addf %121, %122 : vector<16x32xf32>
      %124 = arith.truncf %123 : vector<16x32xf32> to vector<16x32xbf16>
      %c0_56 = arith.constant 0 : index
      %c0_57 = arith.constant 0 : index
      %c0_58 = arith.constant 0 : index
      %125 = vector.load %arg5[%c0_56, %c0_57, %c0_58] : memref<8x32x4xbf16, #tpu.memory_space<vmem>>, vector<1x32x4xbf16>
      %126 = vector.shape_cast %125 : vector<1x32x4xbf16> to vector<32x4xbf16>
      %cst_59 = arith.constant dense<0.000000e+00> : vector<16x4xf32>
      %127 = tpu.matmul %124, %126, %cst_59 {dimension_numbers = #tpu.dot_dimension_numbers<[1], [0], [0], [1], [0, 0, 1, 1], [], []>} : vector<16x32xbf16>, vector<32x4xbf16>, vector<16x4xf32> -> vector<16x4xf32>
      %128 = arith.truncf %127 : vector<16x4xf32> to vector<16x4xbf16>
      %c0_60 = arith.constant 0 : index
      %c0_61 = arith.constant 0 : index
      %c0_62 = arith.constant 0 : index
      %129 = vector.load %arg17[%c0_60, %c0_61, %c0_62] : memref<8x16x4xbf16, #tpu.memory_space<vmem>>, vector<1x16x4xbf16>
      %130 = vector.shape_cast %129 : vector<1x16x4xbf16> to vector<16x4xbf16>
      %131 = vector.shape_cast %128 : vector<16x4xbf16> to vector<1x16x4xbf16>
      tpu.vector_store %arg17[%c0_60, %c0_61, %c0_62], %131 {strides = array<i32>} : memref<8x16x4xbf16, #tpu.memory_space<vmem>>, vector<1x16x4xbf16>,
      %c0_63 = arith.constant 0 : index
      %c0_64 = arith.constant 0 : index
      %c0_65 = arith.constant 0 : index
      %132 = vector.load %arg6[%c0_63, %c0_64, %c0_65] : memref<8x32x4xbf16, #tpu.memory_space<vmem>>, vector<1x32x4xbf16>
      %133 = vector.shape_cast %132 : vector<1x32x4xbf16> to vector<32x4xbf16>
      %cst_66 = arith.constant dense<0.000000e+00> : vector<16x4xf32>
      %134 = tpu.matmul %124, %133, %cst_66 {dimension_numbers = #tpu.dot_dimension_numbers<[1], [0], [0], [1], [0, 0, 1, 1], [], []>} : vector<16x32xbf16>, vector<32x4xbf16>, vector<16x4xf32> -> vector<16x4xf32>
      %135 = arith.truncf %134 : vector<16x4xf32> to vector<16x4xbf16>
      %c0_67 = arith.constant 0 : index
      %c0_68 = arith.constant 0 : index
      %c0_69 = arith.constant 0 : index
      %136 = vector.load %arg18[%c0_67, %c0_68, %c0_69] : memref<8x16x4xbf16, #tpu.memory_space<vmem>>, vector<1x16x4xbf16>
      %137 = vector.shape_cast %136 : vector<1x16x4xbf16> to vector<16x4xbf16>
      %138 = vector.shape_cast %135 : vector<16x4xbf16> to vector<1x16x4xbf16>
      tpu.vector_store %arg18[%c0_67, %c0_68, %c0_69], %138 {strides = array<i32>} : memref<8x16x4xbf16, #tpu.memory_space<vmem>>, vector<1x16x4xbf16>,
      %c0_70 = arith.constant 0 : index
      %c0_71 = arith.constant 0 : index
      %c0_72 = arith.constant 0 : index
      %139 = vector.load %arg7[%c0_70, %c0_71, %c0_72] : memref<8x32x4xbf16, #tpu.memory_space<vmem>>, vector<1x32x4xbf16>
      %140 = vector.shape_cast %139 : vector<1x32x4xbf16> to vector<32x4xbf16>
      %cst_73 = arith.constant dense<0.000000e+00> : vector<16x4xf32>
      %141 = tpu.matmul %124, %140, %cst_73 {dimension_numbers = #tpu.dot_dimension_numbers<[1], [0], [0], [1], [0, 0, 1, 1], [], []>} : vector<16x32xbf16>, vector<32x4xbf16>, vector<16x4xf32> -> vector<16x4xf32>
      %142 = arith.truncf %141 : vector<16x4xf32> to vector<16x4xbf16>
      %c0_74 = arith.constant 0 : index
      %c0_75 = arith.constant 0 : index
      %c0_76 = arith.constant 0 : index
      %143 = vector.load %arg19[%c0_74, %c0_75, %c0_76] : memref<8x16x4xbf16, #tpu.memory_space<vmem>>, vector<1x16x4xbf16>
      %144 = vector.shape_cast %143 : vector<1x16x4xbf16> to vector<16x4xbf16>
      %145 = vector.shape_cast %142 : vector<16x4xbf16> to vector<1x16x4xbf16>
      tpu.vector_store %arg19[%c0_74, %c0_75, %c0_76], %145 {strides = array<i32>} : memref<8x16x4xbf16, #tpu.memory_space<vmem>>, vector<1x16x4xbf16>,
      %c1 = arith.constant 1 : index
      %c0_77 = arith.constant 0 : index
      %c0_78 = arith.constant 0 : index
      %146 = vector.load %arg5[%c1, %c0_77, %c0_78] : memref<8x32x4xbf16, #tpu.memory_space<vmem>>, vector<1x32x4xbf16>
      %147 = vector.shape_cast %146 : vector<1x32x4xbf16> to vector<32x4xbf16>
      %cst_79 = arith.constant dense<0.000000e+00> : vector<16x4xf32>
      %148 = tpu.matmul %124, %147, %cst_79 {dimension_numbers = #tpu.dot_dimension_numbers<[1], [0], [0], [1], [0, 0, 1, 1], [], []>} : vector<16x32xbf16>, vector<32x4xbf16>, vector<16x4xf32> -> vector<16x4xf32>
      %149 = arith.truncf %148 : vector<16x4xf32> to vector<16x4xbf16>
      %c1_80 = arith.constant 1 : index
      %c0_81 = arith.constant 0 : index
      %c0_82 = arith.constant 0 : index
      %150 = vector.load %arg17[%c1_80, %c0_81, %c0_82] : memref<8x16x4xbf16, #tpu.memory_space<vmem>>, vector<1x16x4xbf16>
      %151 = vector.shape_cast %150 : vector<1x16x4xbf16> to vector<16x4xbf16>
      %152 = vector.shape_cast %149 : vector<16x4xbf16> to vector<1x16x4xbf16>
      tpu.vector_store %arg17[%c1_80, %c0_81, %c0_82], %152 {strides = array<i32>} : memref<8x16x4xbf16, #tpu.memory_space<vmem>>, vector<1x16x4xbf16>,
      %c1_83 = arith.constant 1 : index
      %c0_84 = arith.constant 0 : index
      %c0_85 = arith.constant 0 : index
      %153 = vector.load %arg6[%c1_83, %c0_84, %c0_85] : memref<8x32x4xbf16, #tpu.memory_space<vmem>>, vector<1x32x4xbf16>
      %154 = vector.shape_cast %153 : vector<1x32x4xbf16> to vector<32x4xbf16>
      %cst_86 = arith.constant dense<0.000000e+00> : vector<16x4xf32>
      %155 = tpu.matmul %124, %154, %cst_86 {dimension_numbers = #tpu.dot_dimension_numbers<[1], [0], [0], [1], [0, 0, 1, 1], [], []>} : vector<16x32xbf16>, vector<32x4xbf16>, vector<16x4xf32> -> vector<16x4xf32>
      %156 = arith.truncf %155 : vector<16x4xf32> to vector<16x4xbf16>
      %c1_87 = arith.constant 1 : index
      %c0_88 = arith.constant 0 : index
      %c0_89 = arith.constant 0 : index
      %157 = vector.load %arg18[%c1_87, %c0_88, %c0_89] : memref<8x16x4xbf16, #tpu.memory_space<vmem>>, vector<1x16x4xbf16>
      %158 = vector.shape_cast %157 : vector<1x16x4xbf16> to vector<16x4xbf16>
      %159 = vector.shape_cast %156 : vector<16x4xbf16> to vector<1x16x4xbf16>
      tpu.vector_store %arg18[%c1_87, %c0_88, %c0_89], %159 {strides = array<i32>} : memref<8x16x4xbf16, #tpu.memory_space<vmem>>, vector<1x16x4xbf16>,
      %c1_90 = arith.constant 1 : index
      %c0_91 = arith.constant 0 : index
      %c0_92 = arith.constant 0 : index
      %160 = vector.load %arg7[%c1_90, %c0_91, %c0_92] : memref<8x32x4xbf16, #tpu.memory_space<vmem>>, vector<1x32x4xbf16>
      %161 = vector.shape_cast %160 : vector<1x32x4xbf16> to vector<32x4xbf16>
      %cst_93 = arith.constant dense<0.000000e+00> : vector<16x4xf32>
      %162 = tpu.matmul %124, %161, %cst_93 {dimension_numbers = #tpu.dot_dimension_numbers<[1], [0], [0], [1], [0, 0, 1, 1], [], []>} : vector<16x32xbf16>, vector<32x4xbf16>, vector<16x4xf32> -> vector<16x4xf32>
      %163 = arith.truncf %162 : vector<16x4xf32> to vector<16x4xbf16>
      %c1_94 = arith.constant 1 : index
      %c0_95 = arith.constant 0 : index
      %c0_96 = arith.constant 0 : index
      %164 = vector.load %arg19[%c1_94, %c0_95, %c0_96] : memref<8x16x4xbf16, #tpu.memory_space<vmem>>, vector<1x16x4xbf16>
      %165 = vector.shape_cast %164 : vector<1x16x4xbf16> to vector<16x4xbf16>
      %166 = vector.shape_cast %163 : vector<16x4xbf16> to vector<1x16x4xbf16>
      tpu.vector_store %arg19[%c1_94, %c0_95, %c0_96], %166 {strides = array<i32>} : memref<8x16x4xbf16, #tpu.memory_space<vmem>>, vector<1x16x4xbf16>,
      %c2 = arith.constant 2 : index
      %c0_97 = arith.constant 0 : index
      %c0_98 = arith.constant 0 : index
      %167 = vector.load %arg5[%c2, %c0_97, %c0_98] : memref<8x32x4xbf16, #tpu.memory_space<vmem>>, vector<1x32x4xbf16>
      %168 = vector.shape_cast %167 : vector<1x32x4xbf16> to vector<32x4xbf16>
      %cst_99 = arith.constant dense<0.000000e+00> : vector<16x4xf32>
      %169 = tpu.matmul %124, %168, %cst_99 {dimension_numbers = #tpu.dot_dimension_numbers<[1], [0], [0], [1], [0, 0, 1, 1], [], []>} : vector<16x32xbf16>, vector<32x4xbf16>, vector<16x4xf32> -> vector<16x4xf32>
      %170 = arith.truncf %169 : vector<16x4xf32> to vector<16x4xbf16>
      %c2_100 = arith.constant 2 : index
      %c0_101 = arith.constant 0 : index
      %c0_102 = arith.constant 0 : index
      %171 = vector.load %arg17[%c2_100, %c0_101, %c0_102] : memref<8x16x4xbf16, #tpu.memory_space<vmem>>, vector<1x16x4xbf16>
      %172 = vector.shape_cast %171 : vector<1x16x4xbf16> to vector<16x4xbf16>
      %173 = vector.shape_cast %170 : vector<16x4xbf16> to vector<1x16x4xbf16>
      tpu.vector_store %arg17[%c2_100, %c0_101, %c0_102], %173 {strides = array<i32>} : memref<8x16x4xbf16, #tpu.memory_space<vmem>>, vector<1x16x4xbf16>,
      %c2_103 = arith.constant 2 : index
      %c0_104 = arith.constant 0 : index
      %c0_105 = arith.constant 0 : index
      %174 = vector.load %arg6[%c2_103, %c0_104, %c0_105] : memref<8x32x4xbf16, #tpu.memory_space<vmem>>, vector<1x32x4xbf16>
      %175 = vector.shape_cast %174 : vector<1x32x4xbf16> to vector<32x4xbf16>
      %cst_106 = arith.constant dense<0.000000e+00> : vector<16x4xf32>
      %176 = tpu.matmul %124, %175, %cst_106 {dimension_numbers = #tpu.dot_dimension_numbers<[1], [0], [0], [1], [0, 0, 1, 1], [], []>} : vector<16x32xbf16>, vector<32x4xbf16>, vector<16x4xf32> -> vector<16x4xf32>
      %177 = arith.truncf %176 : vector<16x4xf32> to vector<16x4xbf16>
      %c2_107 = arith.constant 2 : index
      %c0_108 = arith.constant 0 : index
      %c0_109 = arith.constant 0 : index
      %178 = vector.load %arg18[%c2_107, %c0_108, %c0_109] : memref<8x16x4xbf16, #tpu.memory_space<vmem>>, vector<1x16x4xbf16>
      %179 = vector.shape_cast %178 : vector<1x16x4xbf16> to vector<16x4xbf16>
      %180 = vector.shape_cast %177 : vector<16x4xbf16> to vector<1x16x4xbf16>
      tpu.vector_store %arg18[%c2_107, %c0_108, %c0_109], %180 {strides = array<i32>} : memref<8x16x4xbf16, #tpu.memory_space<vmem>>, vector<1x16x4xbf16>,
      %c2_110 = arith.constant 2 : index
      %c0_111 = arith.constant 0 : index
      %c0_112 = arith.constant 0 : index
      %181 = vector.load %arg7[%c2_110, %c0_111, %c0_112] : memref<8x32x4xbf16, #tpu.memory_space<vmem>>, vector<1x32x4xbf16>
      %182 = vector.shape_cast %181 : vector<1x32x4xbf16> to vector<32x4xbf16>
      %cst_113 = arith.constant dense<0.000000e+00> : vector<16x4xf32>
      %183 = tpu.matmul %124, %182, %cst_113 {dimension_numbers = #tpu.dot_dimension_numbers<[1], [0], [0], [1], [0, 0, 1, 1], [], []>} : vector<16x32xbf16>, vector<32x4xbf16>, vector<16x4xf32> -> vector<16x4xf32>
      %184 = arith.truncf %183 : vector<16x4xf32> to vector<16x4xbf16>
      %c2_114 = arith.constant 2 : index
      %c0_115 = arith.constant 0 : index
      %c0_116 = arith.constant 0 : index
      %185 = vector.load %arg19[%c2_114, %c0_115, %c0_116] : memref<8x16x4xbf16, #tpu.memory_space<vmem>>, vector<1x16x4xbf16>
      %186 = vector.shape_cast %185 : vector<1x16x4xbf16> to vector<16x4xbf16>
      %187 = vector.shape_cast %184 : vector<16x4xbf16> to vector<1x16x4xbf16>
      tpu.vector_store %arg19[%c2_114, %c0_115, %c0_116], %187 {strides = array<i32>} : memref<8x16x4xbf16, #tpu.memory_space<vmem>>, vector<1x16x4xbf16>,
      %c3 = arith.constant 3 : index
      %c0_117 = arith.constant 0 : index
      %c0_118 = arith.constant 0 : index
      %188 = vector.load %arg5[%c3, %c0_117, %c0_118] : memref<8x32x4xbf16, #tpu.memory_space<vmem>>, vector<1x32x4xbf16>
      %189 = vector.shape_cast %188 : vector<1x32x4xbf16> to vector<32x4xbf16>
      %cst_119 = arith.constant dense<0.000000e+00> : vector<16x4xf32>
      %190 = tpu.matmul %124, %189, %cst_119 {dimension_numbers = #tpu.dot_dimension_numbers<[1], [0], [0], [1], [0, 0, 1, 1], [], []>} : vector<16x32xbf16>, vector<32x4xbf16>, vector<16x4xf32> -> vector<16x4xf32>
      %191 = arith.truncf %190 : vector<16x4xf32> to vector<16x4xbf16>
      %c3_120 = arith.constant 3 : index
      %c0_121 = arith.constant 0 : index
      %c0_122 = arith.constant 0 : index
      %192 = vector.load %arg17[%c3_120, %c0_121, %c0_122] : memref<8x16x4xbf16, #tpu.memory_space<vmem>>, vector<1x16x4xbf16>
      %193 = vector.shape_cast %192 : vector<1x16x4xbf16> to vector<16x4xbf16>
      %194 = vector.shape_cast %191 : vector<16x4xbf16> to vector<1x16x4xbf16>
      tpu.vector_store %arg17[%c3_120, %c0_121, %c0_122], %194 {strides = array<i32>} : memref<8x16x4xbf16, #tpu.memory_space<vmem>>, vector<1x16x4xbf16>,
      %c3_123 = arith.constant 3 : index
      %c0_124 = arith.constant 0 : index
      %c0_125 = arith.constant 0 : index
      %195 = vector.load %arg6[%c3_123, %c0_124, %c0_125] : memref<8x32x4xbf16, #tpu.memory_space<vmem>>, vector<1x32x4xbf16>
      %196 = vector.shape_cast %195 : vector<1x32x4xbf16> to vector<32x4xbf16>
      %cst_126 = arith.constant dense<0.000000e+00> : vector<16x4xf32>
      %197 = tpu.matmul %124, %196, %cst_126 {dimension_numbers = #tpu.dot_dimension_numbers<[1], [0], [0], [1], [0, 0, 1, 1], [], []>} : vector<16x32xbf16>, vector<32x4xbf16>, vector<16x4xf32> -> vector<16x4xf32>
      %198 = arith.truncf %197 : vector<16x4xf32> to vector<16x4xbf16>
      %c3_127 = arith.constant 3 : index
      %c0_128 = arith.constant 0 : index
      %c0_129 = arith.constant 0 : index
      %199 = vector.load %arg18[%c3_127, %c0_128, %c0_129] : memref<8x16x4xbf16, #tpu.memory_space<vmem>>, vector<1x16x4xbf16>
      %200 = vector.shape_cast %199 : vector<1x16x4xbf16> to vector<16x4xbf16>
      %201 = vector.shape_cast %198 : vector<16x4xbf16> to vector<1x16x4xbf16>
      tpu.vector_store %arg18[%c3_127, %c0_128, %c0_129], %201 {strides = array<i32>} : memref<8x16x4xbf16, #tpu.memory_space<vmem>>, vector<1x16x4xbf16>,
      %c3_130 = arith.constant 3 : index
      %c0_131 = arith.constant 0 : index
      %c0_132 = arith.constant 0 : index
      %202 = vector.load %arg7[%c3_130, %c0_131, %c0_132] : memref<8x32x4xbf16, #tpu.memory_space<vmem>>, vector<1x32x4xbf16>
      %203 = vector.shape_cast %202 : vector<1x32x4xbf16> to vector<32x4xbf16>
      %cst_133 = arith.constant dense<0.000000e+00> : vector<16x4xf32>
      %204 = tpu.matmul %124, %203, %cst_133 {dimension_numbers = #tpu.dot_dimension_numbers<[1], [0], [0], [1], [0, 0, 1, 1], [], []>} : vector<16x32xbf16>, vector<32x4xbf16>, vector<16x4xf32> -> vector<16x4xf32>
      %205 = arith.truncf %204 : vector<16x4xf32> to vector<16x4xbf16>
      %c3_134 = arith.constant 3 : index
      %c0_135 = arith.constant 0 : index
      %c0_136 = arith.constant 0 : index
      %206 = vector.load %arg19[%c3_134, %c0_135, %c0_136] : memref<8x16x4xbf16, #tpu.memory_space<vmem>>, vector<1x16x4xbf16>
      %207 = vector.shape_cast %206 : vector<1x16x4xbf16> to vector<16x4xbf16>
      %208 = vector.shape_cast %205 : vector<16x4xbf16> to vector<1x16x4xbf16>
      tpu.vector_store %arg19[%c3_134, %c0_135, %c0_136], %208 {strides = array<i32>} : memref<8x16x4xbf16, #tpu.memory_space<vmem>>, vector<1x16x4xbf16>,
      %c4 = arith.constant 4 : index
      %c0_137 = arith.constant 0 : index
      %c0_138 = arith.constant 0 : index
      %209 = vector.load %arg5[%c4, %c0_137, %c0_138] : memref<8x32x4xbf16, #tpu.memory_space<vmem>>, vector<1x32x4xbf16>
      %210 = vector.shape_cast %209 : vector<1x32x4xbf16> to vector<32x4xbf16>
      %cst_139 = arith.constant dense<0.000000e+00> : vector<16x4xf32>
      %211 = tpu.matmul %124, %210, %cst_139 {dimension_numbers = #tpu.dot_dimension_numbers<[1], [0], [0], [1], [0, 0, 1, 1], [], []>} : vector<16x32xbf16>, vector<32x4xbf16>, vector<16x4xf32> -> vector<16x4xf32>
      %212 = arith.truncf %211 : vector<16x4xf32> to vector<16x4xbf16>
      %c4_140 = arith.constant 4 : index
      %c0_141 = arith.constant 0 : index
      %c0_142 = arith.constant 0 : index
      %213 = vector.load %arg17[%c4_140, %c0_141, %c0_142] : memref<8x16x4xbf16, #tpu.memory_space<vmem>>, vector<1x16x4xbf16>
      %214 = vector.shape_cast %213 : vector<1x16x4xbf16> to vector<16x4xbf16>
      %215 = vector.shape_cast %212 : vector<16x4xbf16> to vector<1x16x4xbf16>
      tpu.vector_store %arg17[%c4_140, %c0_141, %c0_142], %215 {strides = array<i32>} : memref<8x16x4xbf16, #tpu.memory_space<vmem>>, vector<1x16x4xbf16>,
      %c4_143 = arith.constant 4 : index
      %c0_144 = arith.constant 0 : index
      %c0_145 = arith.constant 0 : index
      %216 = vector.load %arg6[%c4_143, %c0_144, %c0_145] : memref<8x32x4xbf16, #tpu.memory_space<vmem>>, vector<1x32x4xbf16>
      %217 = vector.shape_cast %216 : vector<1x32x4xbf16> to vector<32x4xbf16>
      %cst_146 = arith.constant dense<0.000000e+00> : vector<16x4xf32>
      %218 = tpu.matmul %124, %217, %cst_146 {dimension_numbers = #tpu.dot_dimension_numbers<[1], [0], [0], [1], [0, 0, 1, 1], [], []>} : vector<16x32xbf16>, vector<32x4xbf16>, vector<16x4xf32> -> vector<16x4xf32>
      %219 = arith.truncf %218 : vector<16x4xf32> to vector<16x4xbf16>
      %c4_147 = arith.constant 4 : index
      %c0_148 = arith.constant 0 : index
      %c0_149 = arith.constant 0 : index
      %220 = vector.load %arg18[%c4_147, %c0_148, %c0_149] : memref<8x16x4xbf16, #tpu.memory_space<vmem>>, vector<1x16x4xbf16>
      %221 = vector.shape_cast %220 : vector<1x16x4xbf16> to vector<16x4xbf16>
      %222 = vector.shape_cast %219 : vector<16x4xbf16> to vector<1x16x4xbf16>
      tpu.vector_store %arg18[%c4_147, %c0_148, %c0_149], %222 {strides = array<i32>} : memref<8x16x4xbf16, #tpu.memory_space<vmem>>, vector<1x16x4xbf16>,
      %c4_150 = arith.constant 4 : index
      %c0_151 = arith.constant 0 : index
      %c0_152 = arith.constant 0 : index
      %223 = vector.load %arg7[%c4_150, %c0_151, %c0_152] : memref<8x32x4xbf16, #tpu.memory_space<vmem>>, vector<1x32x4xbf16>
      %224 = vector.shape_cast %223 : vector<1x32x4xbf16> to vector<32x4xbf16>
      %cst_153 = arith.constant dense<0.000000e+00> : vector<16x4xf32>
      %225 = tpu.matmul %124, %224, %cst_153 {dimension_numbers = #tpu.dot_dimension_numbers<[1], [0], [0], [1], [0, 0, 1, 1], [], []>} : vector<16x32xbf16>, vector<32x4xbf16>, vector<16x4xf32> -> vector<16x4xf32>
      %226 = arith.truncf %225 : vector<16x4xf32> to vector<16x4xbf16>
      %c4_154 = arith.constant 4 : index
      %c0_155 = arith.constant 0 : index
      %c0_156 = arith.constant 0 : index
      %227 = vector.load %arg19[%c4_154, %c0_155, %c0_156] : memref<8x16x4xbf16, #tpu.memory_space<vmem>>, vector<1x16x4xbf16>
      %228 = vector.shape_cast %227 : vector<1x16x4xbf16> to vector<16x4xbf16>
      %229 = vector.shape_cast %226 : vector<16x4xbf16> to vector<1x16x4xbf16>
      tpu.vector_store %arg19[%c4_154, %c0_155, %c0_156], %229 {strides = array<i32>} : memref<8x16x4xbf16, #tpu.memory_space<vmem>>, vector<1x16x4xbf16>,
      %c5 = arith.constant 5 : index
      %c0_157 = arith.constant 0 : index
      %c0_158 = arith.constant 0 : index
      %230 = vector.load %arg5[%c5, %c0_157, %c0_158] : memref<8x32x4xbf16, #tpu.memory_space<vmem>>, vector<1x32x4xbf16>
      %231 = vector.shape_cast %230 : vector<1x32x4xbf16> to vector<32x4xbf16>
      %cst_159 = arith.constant dense<0.000000e+00> : vector<16x4xf32>
      %232 = tpu.matmul %124, %231, %cst_159 {dimension_numbers = #tpu.dot_dimension_numbers<[1], [0], [0], [1], [0, 0, 1, 1], [], []>} : vector<16x32xbf16>, vector<32x4xbf16>, vector<16x4xf32> -> vector<16x4xf32>
      %233 = arith.truncf %232 : vector<16x4xf32> to vector<16x4xbf16>
      %c5_160 = arith.constant 5 : index
      %c0_161 = arith.constant 0 : index
      %c0_162 = arith.constant 0 : index
      %234 = vector.load %arg17[%c5_160, %c0_161, %c0_162] : memref<8x16x4xbf16, #tpu.memory_space<vmem>>, vector<1x16x4xbf16>
      %235 = vector.shape_cast %234 : vector<1x16x4xbf16> to vector<16x4xbf16>
      %236 = vector.shape_cast %233 : vector<16x4xbf16> to vector<1x16x4xbf16>
      tpu.vector_store %arg17[%c5_160, %c0_161, %c0_162], %236 {strides = array<i32>} : memref<8x16x4xbf16, #tpu.memory_space<vmem>>, vector<1x16x4xbf16>,
      %c5_163 = arith.constant 5 : index
      %c0_164 = arith.constant 0 : index
      %c0_165 = arith.constant 0 : index
      %237 = vector.load %arg6[%c5_163, %c0_164, %c0_165] : memref<8x32x4xbf16, #tpu.memory_space<vmem>>, vector<1x32x4xbf16>
      %238 = vector.shape_cast %237 : vector<1x32x4xbf16> to vector<32x4xbf16>
      %cst_166 = arith.constant dense<0.000000e+00> : vector<16x4xf32>
      %239 = tpu.matmul %124, %238, %cst_166 {dimension_numbers = #tpu.dot_dimension_numbers<[1], [0], [0], [1], [0, 0, 1, 1], [], []>} : vector<16x32xbf16>, vector<32x4xbf16>, vector<16x4xf32> -> vector<16x4xf32>
      %240 = arith.truncf %239 : vector<16x4xf32> to vector<16x4xbf16>
      %c5_167 = arith.constant 5 : index
      %c0_168 = arith.constant 0 : index
      %c0_169 = arith.constant 0 : index
      %241 = vector.load %arg18[%c5_167, %c0_168, %c0_169] : memref<8x16x4xbf16, #tpu.memory_space<vmem>>, vector<1x16x4xbf16>
      %242 = vector.shape_cast %241 : vector<1x16x4xbf16> to vector<16x4xbf16>
      %243 = vector.shape_cast %240 : vector<16x4xbf16> to vector<1x16x4xbf16>
      tpu.vector_store %arg18[%c5_167, %c0_168, %c0_169], %243 {strides = array<i32>} : memref<8x16x4xbf16, #tpu.memory_space<vmem>>, vector<1x16x4xbf16>,
      %c5_170 = arith.constant 5 : index
      %c0_171 = arith.constant 0 : index
      %c0_172 = arith.constant 0 : index
      %244 = vector.load %arg7[%c5_170, %c0_171, %c0_172] : memref<8x32x4xbf16, #tpu.memory_space<vmem>>, vector<1x32x4xbf16>
      %245 = vector.shape_cast %244 : vector<1x32x4xbf16> to vector<32x4xbf16>
      %cst_173 = arith.constant dense<0.000000e+00> : vector<16x4xf32>
      %246 = tpu.matmul %124, %245, %cst_173 {dimension_numbers = #tpu.dot_dimension_numbers<[1], [0], [0], [1], [0, 0, 1, 1], [], []>} : vector<16x32xbf16>, vector<32x4xbf16>, vector<16x4xf32> -> vector<16x4xf32>
      %247 = arith.truncf %246 : vector<16x4xf32> to vector<16x4xbf16>
      %c5_174 = arith.constant 5 : index
      %c0_175 = arith.constant 0 : index
      %c0_176 = arith.constant 0 : index
      %248 = vector.load %arg19[%c5_174, %c0_175, %c0_176] : memref<8x16x4xbf16, #tpu.memory_space<vmem>>, vector<1x16x4xbf16>
      %249 = vector.shape_cast %248 : vector<1x16x4xbf16> to vector<16x4xbf16>
      %250 = vector.shape_cast %247 : vector<16x4xbf16> to vector<1x16x4xbf16>
      tpu.vector_store %arg19[%c5_174, %c0_175, %c0_176], %250 {strides = array<i32>} : memref<8x16x4xbf16, #tpu.memory_space<vmem>>, vector<1x16x4xbf16>,
      %c6 = arith.constant 6 : index
      %c0_177 = arith.constant 0 : index
      %c0_178 = arith.constant 0 : index
      %251 = vector.load %arg5[%c6, %c0_177, %c0_178] : memref<8x32x4xbf16, #tpu.memory_space<vmem>>, vector<1x32x4xbf16>
      %252 = vector.shape_cast %251 : vector<1x32x4xbf16> to vector<32x4xbf16>
      %cst_179 = arith.constant dense<0.000000e+00> : vector<16x4xf32>
      %253 = tpu.matmul %124, %252, %cst_179 {dimension_numbers = #tpu.dot_dimension_numbers<[1], [0], [0], [1], [0, 0, 1, 1], [], []>} : vector<16x32xbf16>, vector<32x4xbf16>, vector<16x4xf32> -> vector<16x4xf32>
      %254 = arith.truncf %253 : vector<16x4xf32> to vector<16x4xbf16>
      %c6_180 = arith.constant 6 : index
      %c0_181 = arith.constant 0 : index
      %c0_182 = arith.constant 0 : index
      %255 = vector.load %arg17[%c6_180, %c0_181, %c0_182] : memref<8x16x4xbf16, #tpu.memory_space<vmem>>, vector<1x16x4xbf16>
      %256 = vector.shape_cast %255 : vector<1x16x4xbf16> to vector<16x4xbf16>
      %257 = vector.shape_cast %254 : vector<16x4xbf16> to vector<1x16x4xbf16>
      tpu.vector_store %arg17[%c6_180, %c0_181, %c0_182], %257 {strides = array<i32>} : memref<8x16x4xbf16, #tpu.memory_space<vmem>>, vector<1x16x4xbf16>,
      %c6_183 = arith.constant 6 : index
      %c0_184 = arith.constant 0 : index
      %c0_185 = arith.constant 0 : index
      %258 = vector.load %arg6[%c6_183, %c0_184, %c0_185] : memref<8x32x4xbf16, #tpu.memory_space<vmem>>, vector<1x32x4xbf16>
      %259 = vector.shape_cast %258 : vector<1x32x4xbf16> to vector<32x4xbf16>
      %cst_186 = arith.constant dense<0.000000e+00> : vector<16x4xf32>
      %260 = tpu.matmul %124, %259, %cst_186 {dimension_numbers = #tpu.dot_dimension_numbers<[1], [0], [0], [1], [0, 0, 1, 1], [], []>} : vector<16x32xbf16>, vector<32x4xbf16>, vector<16x4xf32> -> vector<16x4xf32>
      %261 = arith.truncf %260 : vector<16x4xf32> to vector<16x4xbf16>
      %c6_187 = arith.constant 6 : index
      %c0_188 = arith.constant 0 : index
      %c0_189 = arith.constant 0 : index
      %262 = vector.load %arg18[%c6_187, %c0_188, %c0_189] : memref<8x16x4xbf16, #tpu.memory_space<vmem>>, vector<1x16x4xbf16>
      %263 = vector.shape_cast %262 : vector<1x16x4xbf16> to vector<16x4xbf16>
      %264 = vector.shape_cast %261 : vector<16x4xbf16> to vector<1x16x4xbf16>
      tpu.vector_store %arg18[%c6_187, %c0_188, %c0_189], %264 {strides = array<i32>} : memref<8x16x4xbf16, #tpu.memory_space<vmem>>, vector<1x16x4xbf16>,
      %c6_190 = arith.constant 6 : index
      %c0_191 = arith.constant 0 : index
      %c0_192 = arith.constant 0 : index
      %265 = vector.load %arg7[%c6_190, %c0_191, %c0_192] : memref<8x32x4xbf16, #tpu.memory_space<vmem>>, vector<1x32x4xbf16>
      %266 = vector.shape_cast %265 : vector<1x32x4xbf16> to vector<32x4xbf16>
      %cst_193 = arith.constant dense<0.000000e+00> : vector<16x4xf32>
      %267 = tpu.matmul %124, %266, %cst_193 {dimension_numbers = #tpu.dot_dimension_numbers<[1], [0], [0], [1], [0, 0, 1, 1], [], []>} : vector<16x32xbf16>, vector<32x4xbf16>, vector<16x4xf32> -> vector<16x4xf32>
      %268 = arith.truncf %267 : vector<16x4xf32> to vector<16x4xbf16>
      %c6_194 = arith.constant 6 : index
      %c0_195 = arith.constant 0 : index
      %c0_196 = arith.constant 0 : index
      %269 = vector.load %arg19[%c6_194, %c0_195, %c0_196] : memref<8x16x4xbf16, #tpu.memory_space<vmem>>, vector<1x16x4xbf16>
      %270 = vector.shape_cast %269 : vector<1x16x4xbf16> to vector<16x4xbf16>
      %271 = vector.shape_cast %268 : vector<16x4xbf16> to vector<1x16x4xbf16>
      tpu.vector_store %arg19[%c6_194, %c0_195, %c0_196], %271 {strides = array<i32>} : memref<8x16x4xbf16, #tpu.memory_space<vmem>>, vector<1x16x4xbf16>,
      %c7 = arith.constant 7 : index
      %c0_197 = arith.constant 0 : index
      %c0_198 = arith.constant 0 : index
      %272 = vector.load %arg5[%c7, %c0_197, %c0_198] : memref<8x32x4xbf16, #tpu.memory_space<vmem>>, vector<1x32x4xbf16>
      %273 = vector.shape_cast %272 : vector<1x32x4xbf16> to vector<32x4xbf16>
      %cst_199 = arith.constant dense<0.000000e+00> : vector<16x4xf32>
      %274 = tpu.matmul %124, %273, %cst_199 {dimension_numbers = #tpu.dot_dimension_numbers<[1], [0], [0], [1], [0, 0, 1, 1], [], []>} : vector<16x32xbf16>, vector<32x4xbf16>, vector<16x4xf32> -> vector<16x4xf32>
      %275 = arith.truncf %274 : vector<16x4xf32> to vector<16x4xbf16>
      %c7_200 = arith.constant 7 : index
      %c0_201 = arith.constant 0 : index
      %c0_202 = arith.constant 0 : index
      %276 = vector.load %arg17[%c7_200, %c0_201, %c0_202] : memref<8x16x4xbf16, #tpu.memory_space<vmem>>, vector<1x16x4xbf16>
      %277 = vector.shape_cast %276 : vector<1x16x4xbf16> to vector<16x4xbf16>
      %278 = vector.shape_cast %275 : vector<16x4xbf16> to vector<1x16x4xbf16>
      tpu.vector_store %arg17[%c7_200, %c0_201, %c0_202], %278 {strides = array<i32>} : memref<8x16x4xbf16, #tpu.memory_space<vmem>>, vector<1x16x4xbf16>,
      %c7_203 = arith.constant 7 : index
      %c0_204 = arith.constant 0 : index
      %c0_205 = arith.constant 0 : index
      %279 = vector.load %arg6[%c7_203, %c0_204, %c0_205] : memref<8x32x4xbf16, #tpu.memory_space<vmem>>, vector<1x32x4xbf16>
      %280 = vector.shape_cast %279 : vector<1x32x4xbf16> to vector<32x4xbf16>
      %cst_206 = arith.constant dense<0.000000e+00> : vector<16x4xf32>
      %281 = tpu.matmul %124, %280, %cst_206 {dimension_numbers = #tpu.dot_dimension_numbers<[1], [0], [0], [1], [0, 0, 1, 1], [], []>} : vector<16x32xbf16>, vector<32x4xbf16>, vector<16x4xf32> -> vector<16x4xf32>
      %282 = arith.truncf %281 : vector<16x4xf32> to vector<16x4xbf16>
      %c7_207 = arith.constant 7 : index
      %c0_208 = arith.constant 0 : index
      %c0_209 = arith.constant 0 : index
      %283 = vector.load %arg18[%c7_207, %c0_208, %c0_209] : memref<8x16x4xbf16, #tpu.memory_space<vmem>>, vector<1x16x4xbf16>
      %284 = vector.shape_cast %283 : vector<1x16x4xbf16> to vector<16x4xbf16>
      %285 = vector.shape_cast %282 : vector<16x4xbf16> to vector<1x16x4xbf16>
      tpu.vector_store %arg18[%c7_207, %c0_208, %c0_209], %285 {strides = array<i32>} : memref<8x16x4xbf16, #tpu.memory_space<vmem>>, vector<1x16x4xbf16>,
      %c7_210 = arith.constant 7 : index
      %c0_211 = arith.constant 0 : index
      %c0_212 = arith.constant 0 : index
      %286 = vector.load %arg7[%c7_210, %c0_211, %c0_212] : memref<8x32x4xbf16, #tpu.memory_space<vmem>>, vector<1x32x4xbf16>
      %287 = vector.shape_cast %286 : vector<1x32x4xbf16> to vector<32x4xbf16>
      %cst_213 = arith.constant dense<0.000000e+00> : vector<16x4xf32>
      %288 = tpu.matmul %124, %287, %cst_213 {dimension_numbers = #tpu.dot_dimension_numbers<[1], [0], [0], [1], [0, 0, 1, 1], [], []>} : vector<16x32xbf16>, vector<32x4xbf16>, vector<16x4xf32> -> vector<16x4xf32>
      %289 = arith.truncf %288 : vector<16x4xf32> to vector<16x4xbf16>
      %c7_214 = arith.constant 7 : index
      %c0_215 = arith.constant 0 : index
      %c0_216 = arith.constant 0 : index
      %290 = vector.load %arg19[%c7_214, %c0_215, %c0_216] : memref<8x16x4xbf16, #tpu.memory_space<vmem>>, vector<1x16x4xbf16>
      %291 = vector.shape_cast %290 : vector<1x16x4xbf16> to vector<16x4xbf16>
      %292 = vector.shape_cast %289 : vector<16x4xbf16> to vector<1x16x4xbf16>
      tpu.vector_store %arg19[%c7_214, %c0_215, %c0_216], %292 {strides = array<i32>} : memref<8x16x4xbf16, #tpu.memory_space<vmem>>, vector<1x16x4xbf16>,
    } else {
    }
    %c0 = arith.constant 0 : index
    %5 = arith.index_cast %1 : i32 to index
    %c0_1 = arith.constant 0 : index
    %6 = vector.load %arg17[%c0, %5, %c0_1] : memref<8x16x4xbf16, #tpu.memory_space<vmem>>, vector<8x16x4xbf16>
    %c0_2 = arith.constant 0 : index
    %c0_3 = arith.constant 0 : index
    %c0_4 = arith.constant 0 : index
    %7 = vector.load %arg18[%c0_2, %c0_3, %c0_4] : memref<8x16x4xbf16, #tpu.memory_space<vmem>>, vector<8x16x4xbf16>
    %c0_5 = arith.constant 0 : index
    %c0_6 = arith.constant 0 : index
    %c0_7 = arith.constant 0 : index
    %8 = vector.load %arg19[%c0_5, %c0_6, %c0_7] : memref<8x16x4xbf16, #tpu.memory_space<vmem>>, vector<8x16x4xbf16>
    "tpu.trace_start"() <{level = 10 : i32, message = "hqd,hkd->hqk"}> : () -> ()
    %cst = arith.constant dense<0.000000e+00> : vector<8x16x16xf32>
    %9 = tpu.matmul %6, %7, %cst {dimension_numbers = #tpu.dot_dimension_numbers<[2], [2], [1], [1], [0, 0, 0, 1, 1, 1], [0], [0]>} : vector<8x16x4xbf16>, vector<8x16x4xbf16>, vector<8x16x16xf32> -> vector<8x16x16xf32>
    "tpu.trace_stop"() : () -> ()
    %cst_8 = arith.constant dense<0xFF800000> : vector<8x16xf32>
    %10 = vector.multi_reduction <maximumf>, %9, %cst_8 [2] : vector<8x16x16xf32> to vector<8x16xf32>
    %11 = vector.shape_cast %10 : vector<8x16xf32> to vector<8x16x1xf32>
    %12 = vector.broadcast %11 : vector<8x16x1xf32> to vector<8x16x16xf32>
    %13 = arith.subf %9, %12 : vector<8x16x16xf32>
    %14 = math.exp %13 : vector<8x16x16xf32>
    %cst_9 = arith.constant dense<0.000000e+00> : vector<8x16xf32>
    %15 = vector.multi_reduction <add>, %14, %cst_9 [2] : vector<8x16x16xf32> to vector<8x16xf32>
    %16 = vector.shape_cast %15 : vector<8x16xf32> to vector<8x16x1xf32>
    %17 = tpu.reciprocal %16 {approx = true} : vector<8x16x1xf32> -> vector<8x16x1xf32>
    %18 = vector.broadcast %17 : vector<8x16x1xf32> to vector<8x16x16xf32>
    %19 = arith.mulf %14, %18 : vector<8x16x16xf32>
    %20 = arith.truncf %19 : vector<8x16x16xf32> to vector<8x16x16xbf16>
    "tpu.trace_start"() <{level = 10 : i32, message = "hqk,hkd->hqd"}> : () -> ()
    %cst_10 = arith.constant dense<0.000000e+00> : vector<8x16x4xf32>
    %21 = tpu.matmul %20, %8, %cst_10 {dimension_numbers = #tpu.dot_dimension_numbers<[2], [1], [1], [2], [0, 0, 0, 1, 1, 2], [0], [0]>} : vector<8x16x16xbf16>, vector<8x16x4xbf16>, vector<8x16x4xf32> -> vector<8x16x4xf32>
    "tpu.trace_stop"() : () -> ()
    %22 = arith.truncf %21 : vector<8x16x4xf32> to vector<8x16x4xbf16>
    %23 = vector.extract_strided_slice %22 {offsets = [0, 0, 0], sizes = [1, 16, 4], strides = [1, 1, 1]} : vector<8x16x4xbf16> to vector<1x16x4xbf16>
    %24 = vector.shape_cast %23 : vector<1x16x4xbf16> to vector<16x4xbf16>
    %25 = vector.extract_strided_slice %22 {offsets = [1, 0, 0], sizes = [1, 16, 4], strides = [1, 1, 1]} : vector<8x16x4xbf16> to vector<1x16x4xbf16>
    %26 = vector.shape_cast %25 : vector<1x16x4xbf16> to vector<16x4xbf16>
    %27 = vector.extract_strided_slice %22 {offsets = [2, 0, 0], sizes = [1, 16, 4], strides = [1, 1, 1]} : vector<8x16x4xbf16> to vector<1x16x4xbf16>
    %28 = vector.shape_cast %27 : vector<1x16x4xbf16> to vector<16x4xbf16>
    %29 = vector.extract_strided_slice %22 {offsets = [3, 0, 0], sizes = [1, 16, 4], strides = [1, 1, 1]} : vector<8x16x4xbf16> to vector<1x16x4xbf16>
    %30 = vector.shape_cast %29 : vector<1x16x4xbf16> to vector<16x4xbf16>
    %31 = vector.extract_strided_slice %22 {offsets = [4, 0, 0], sizes = [1, 16, 4], strides = [1, 1, 1]} : vector<8x16x4xbf16> to vector<1x16x4xbf16>
    %32 = vector.shape_cast %31 : vector<1x16x4xbf16> to vector<16x4xbf16>
    %33 = vector.extract_strided_slice %22 {offsets = [5, 0, 0], sizes = [1, 16, 4], strides = [1, 1, 1]} : vector<8x16x4xbf16> to vector<1x16x4xbf16>
    %34 = vector.shape_cast %33 : vector<1x16x4xbf16> to vector<16x4xbf16>
    %35 = vector.extract_strided_slice %22 {offsets = [6, 0, 0], sizes = [1, 16, 4], strides = [1, 1, 1]} : vector<8x16x4xbf16> to vector<1x16x4xbf16>
    %36 = vector.shape_cast %35 : vector<1x16x4xbf16> to vector<16x4xbf16>
    %37 = vector.extract_strided_slice %22 {offsets = [7, 0, 0], sizes = [1, 16, 4], strides = [1, 1, 1]} : vector<8x16x4xbf16> to vector<1x16x4xbf16>
    %38 = vector.shape_cast %37 : vector<1x16x4xbf16> to vector<16x4xbf16>
    %39 = tpu.concatenate %24, %26, %28, %30, %32, %34, %36, %38 in 1 : vector<16x4xbf16>, vector<16x4xbf16>, vector<16x4xbf16>, vector<16x4xbf16>, vector<16x4xbf16>, vector<16x4xbf16>, vector<16x4xbf16>, vector<16x4xbf16> -> vector<16x32xbf16>
    %c0_11 = arith.constant 0 : index
    %c0_12 = arith.constant 0 : index
    %40 = vector.load %arg8[%c0_11, %c0_12] : memref<32x32xbf16, #tpu.memory_space<vmem>>, vector<32x32xbf16>
    %cst_13 = arith.constant dense<0.000000e+00> : vector<16x32xf32>
    %41 = tpu.matmul %39, %40, %cst_13 {dimension_numbers = #tpu.dot_dimension_numbers<[1], [0], [0], [1], [0, 0, 1, 1], [], []>} : vector<16x32xbf16>, vector<32x32xbf16>, vector<16x32xf32> -> vector<16x32xf32>
    %c0_14 = arith.constant 0 : index
    %c0_15 = arith.constant 0 : index
    %42 = vector.load %arg9[%c0_14, %c0_15] : memref<1x32xf32, #tpu.memory_space<vmem>>, vector<1x32xf32>
    %43 = vector.broadcast %42 : vector<1x32xf32> to vector<16x32xf32>
    %44 = arith.addf %41, %43 : vector<16x32xf32>
    %c0_16 = arith.constant 0 : index
    %45 = arith.index_cast %1 : i32 to index
    %c0_17 = arith.constant 0 : index
    %46 = vector.load %arg2[%c0_16, %45, %c0_17] : memref<1x16x32xf32, #tpu.memory_space<vmem>>, vector<1x16x32xf32>
    %47 = vector.shape_cast %46 : vector<1x16x32xf32> to vector<16x32xf32>
    %48 = arith.addf %47, %44 : vector<16x32xf32>
    %c0_18 = arith.constant 0 : index
    %c0_19 = arith.constant 0 : index
    %49 = vector.load %arg10[%c0_18, %c0_19] : memref<1x32xf32, #tpu.memory_space<vmem>>, vector<1x32xf32>
    %c0_20 = arith.constant 0 : index
    %c0_21 = arith.constant 0 : index
    %50 = vector.load %arg11[%c0_20, %c0_21] : memref<1x32xf32, #tpu.memory_space<vmem>>, vector<1x32xf32>
    %cst_22 = arith.constant dense<0.000000e+00> : vector<16xf32>
    %51 = vector.multi_reduction <add>, %48, %cst_22 [1] : vector<16x32xf32> to vector<16xf32>
    %52 = vector.shape_cast %51 : vector<16xf32> to vector<16x1xf32>
    %cst_23 = arith.constant 3.200000e+01 : f32
    %53 = vector.broadcast %cst_23 : f32 to vector<16x1xf32>
    %54 = arith.divf %52, %53 : vector<16x1xf32>
    %55 = vector.broadcast %54 : vector<16x1xf32> to vector<16x32xf32>
    %56 = arith.subf %48, %55 : vector<16x32xf32>
    %57 = arith.mulf %56, %56 : vector<16x32xf32>
    %cst_24 = arith.constant dense<0.000000e+00> : vector<16xf32>
    %58 = vector.multi_reduction <add>, %57, %cst_24 [1] : vector<16x32xf32> to vector<16xf32>
    %59 = vector.shape_cast %58 : vector<16xf32> to vector<16x1xf32>
    %cst_25 = arith.constant 3.200000e+01 : f32
    %60 = vector.broadcast %cst_25 : f32 to vector<16x1xf32>
    %61 = arith.divf %59, %60 : vector<16x1xf32>
    %cst_26 = arith.constant 9.99999974E-6 : f32
    %62 = vector.broadcast %cst_26 : f32 to vector<16x1xf32>
    %63 = arith.addf %61, %62 : vector<16x1xf32>
    %64 = math.rsqrt %63 : vector<16x1xf32>
    %65 = vector.broadcast %64 : vector<16x1xf32> to vector<16x32xf32>
    %66 = arith.mulf %56, %65 : vector<16x32xf32>
    %67 = vector.broadcast %49 : vector<1x32xf32> to vector<16x32xf32>
    %68 = arith.mulf %66, %67 : vector<16x32xf32>
    %69 = vector.broadcast %50 : vector<1x32xf32> to vector<16x32xf32>
    %70 = arith.addf %68, %69 : vector<16x32xf32>
    %71 = arith.truncf %70 : vector<16x32xf32> to vector<16x32xbf16>
    %c0_27 = arith.constant 0 : index
    %c0_28 = arith.constant 0 : index
    %72 = vector.load %arg12[%c0_27, %c0_28] : memref<32x128xbf16, #tpu.memory_space<vmem>>, vector<32x128xbf16>
    %cst_29 = arith.constant dense<0.000000e+00> : vector<16x128xf32>
    %73 = tpu.matmul %71, %72, %cst_29 {dimension_numbers = #tpu.dot_dimension_numbers<[1], [0], [0], [1], [0, 0, 1, 1], [], []>} : vector<16x32xbf16>, vector<32x128xbf16>, vector<16x128xf32> -> vector<16x128xf32>
    %c0_30 = arith.constant 0 : index
    %c0_31 = arith.constant 0 : index
    %74 = vector.load %arg13[%c0_30, %c0_31] : memref<1x128xf32, #tpu.memory_space<vmem>>, vector<1x128xf32>
    %75 = vector.broadcast %74 : vector<1x128xf32> to vector<16x128xf32>
    %76 = arith.addf %73, %75 : vector<16x128xf32>
    %77 = arith.mulf %76, %76 : vector<16x128xf32>
    %78 = arith.mulf %76, %77 : vector<16x128xf32>
    %cst_32 = arith.constant 4.471500e-02 : f32
    %79 = vector.broadcast %cst_32 : f32 to vector<16x128xf32>
    %80 = arith.mulf %79, %78 : vector<16x128xf32>
    %81 = arith.addf %76, %80 : vector<16x128xf32>
    %cst_33 = arith.constant 0.797884583 : f32
    %82 = vector.broadcast %cst_33 : f32 to vector<16x128xf32>
    %83 = arith.mulf %82, %81 : vector<16x128xf32>
    %84 = math.tanh %83 : vector<16x128xf32>
    %cst_34 = arith.constant 1.000000e+00 : f32
    %85 = vector.broadcast %cst_34 : f32 to vector<16x128xf32>
    %86 = arith.addf %85, %84 : vector<16x128xf32>
    %cst_35 = arith.constant 5.000000e-01 : f32
    %87 = vector.broadcast %cst_35 : f32 to vector<16x128xf32>
    %88 = arith.mulf %87, %86 : vector<16x128xf32>
    %89 = arith.mulf %76, %88 : vector<16x128xf32>
    %90 = arith.truncf %89 : vector<16x128xf32> to vector<16x128xbf16>
    %c0_36 = arith.constant 0 : index
    %c0_37 = arith.constant 0 : index
    %91 = vector.load %arg14[%c0_36, %c0_37] : memref<128x32xbf16, #tpu.memory_space<vmem>>, vector<128x32xbf16>
    %cst_38 = arith.constant dense<0.000000e+00> : vector<16x32xf32>
    %92 = tpu.matmul %90, %91, %cst_38 {dimension_numbers = #tpu.dot_dimension_numbers<[1], [0], [0], [1], [0, 0, 1, 1], [], []>} : vector<16x128xbf16>, vector<128x32xbf16>, vector<16x32xf32> -> vector<16x32xf32>
    %c0_39 = arith.constant 0 : index
    %c0_40 = arith.constant 0 : index
    %93 = vector.load %arg15[%c0_39, %c0_40] : memref<1x32xf32, #tpu.memory_space<vmem>>, vector<1x32xf32>
    %94 = vector.broadcast %93 : vector<1x32xf32> to vector<16x32xf32>
    %95 = arith.addf %92, %94 : vector<16x32xf32>
    %96 = arith.addf %48, %95 : vector<16x32xf32>
    %c0_41 = arith.constant 0 : index
    %c0_42 = arith.constant 0 : index
    %c0_43 = arith.constant 0 : index
    %97 = vector.load %arg16[%c0_41, %c0_42, %c0_43] : memref<1x16x32xf32, #tpu.memory_space<vmem>>, vector<1x16x32xf32>
    %98 = vector.shape_cast %97 : vector<1x16x32xf32> to vector<16x32xf32>
    %99 = vector.shape_cast %96 : vector<16x32xf32> to vector<1x16x32xf32>
    tpu.vector_store %arg16[%c0_41, %c0_42, %c0_43], %99 {strides = array<i32>} : memref<1x16x32xf32, #tpu.memory_space<vmem>>, vector<1x16x32xf32>,
    return
  }
  func.func @transform_0(%arg0: i32, %arg1: i32) -> (i32, i32, i32) {
    %c0_i32 = arith.constant 0 : i32
    %c0_i32_0 = arith.constant 0 : i32
    %c0_i32_1 = arith.constant 0 : i32
    return %arg0, %c0_i32, %c0_i32_0 : i32, i32, i32
  }
  func.func @transform_1(%arg0: i32, %arg1: i32) -> (i32, i32) {
    %c0_i32 = arith.constant 0 : i32
    %c0_i32_0 = arith.constant 0 : i32
    %c0_i32_1 = arith.constant 0 : i32
    return %c0_i32, %c0_i32_0 : i32, i32
  }
  func.func @transform_2(%arg0: i32, %arg1: i32) -> (i32, i32) {
    %c0_i32 = arith.constant 0 : i32
    %c0_i32_0 = arith.constant 0 : i32
    %c0_i32_1 = arith.constant 0 : i32
    return %c0_i32, %c0_i32_0 : i32, i32
  }
  func.func @transform_3(%arg0: i32, %arg1: i32) -> (i32, i32, i32) {
    %c0_i32 = arith.constant 0 : i32
    %c0_i32_0 = arith.constant 0 : i32
    %c0_i32_1 = arith.constant 0 : i32
    %c0_i32_2 = arith.constant 0 : i32
    return %c0_i32, %c0_i32_0, %c0_i32_1 : i32, i32, i32
  }
  func.func @transform_4(%arg0: i32, %arg1: i32) -> (i32, i32, i32) {
    %c0_i32 = arith.constant 0 : i32
    %c0_i32_0 = arith.constant 0 : i32
    %c0_i32_1 = arith.constant 0 : i32
    %c0_i32_2 = arith.constant 0 : i32
    return %c0_i32, %c0_i32_0, %c0_i32_1 : i32, i32, i32
  }
  func.func @transform_5(%arg0: i32, %arg1: i32) -> (i32, i32, i32) {
    %c0_i32 = arith.constant 0 : i32
    %c0_i32_0 = arith.constant 0 : i32
    %c0_i32_1 = arith.constant 0 : i32
    %c0_i32_2 = arith.constant 0 : i32
    return %c0_i32, %c0_i32_0, %c0_i32_1 : i32, i32, i32
  }
  func.func @transform_6(%arg0: i32, %arg1: i32) -> (i32, i32) {
    %c0_i32 = arith.constant 0 : i32
    %c0_i32_0 = arith.constant 0 : i32
    %c0_i32_1 = arith.constant 0 : i32
    return %c0_i32, %c0_i32_0 : i32, i32
  }
  func.func @transform_7(%arg0: i32, %arg1: i32) -> (i32, i32) {
    %c0_i32 = arith.constant 0 : i32
    %c0_i32_0 = arith.constant 0 : i32
    %c0_i32_1 = arith.constant 0 : i32
    return %c0_i32, %c0_i32_0 : i32, i32
  }
  func.func @transform_8(%arg0: i32, %arg1: i32) -> (i32, i32) {
    %c0_i32 = arith.constant 0 : i32
    %c0_i32_0 = arith.constant 0 : i32
    %c0_i32_1 = arith.constant 0 : i32
    return %c0_i32, %c0_i32_0 : i32, i32
  }
  func.func @transform_9(%arg0: i32, %arg1: i32) -> (i32, i32) {
    %c0_i32 = arith.constant 0 : i32
    %c0_i32_0 = arith.constant 0 : i32
    %c0_i32_1 = arith.constant 0 : i32
    return %c0_i32, %c0_i32_0 : i32, i32
  }
  func.func @transform_10(%arg0: i32, %arg1: i32) -> (i32, i32) {
    %c0_i32 = arith.constant 0 : i32
    %c0_i32_0 = arith.constant 0 : i32
    %c0_i32_1 = arith.constant 0 : i32
    return %c0_i32, %c0_i32_0 : i32, i32
  }
  func.func @transform_11(%arg0: i32, %arg1: i32) -> (i32, i32) {
    %c0_i32 = arith.constant 0 : i32
    %c0_i32_0 = arith.constant 0 : i32
    %c0_i32_1 = arith.constant 0 : i32
    return %c0_i32, %c0_i32_0 : i32, i32
  }
  func.func @transform_12(%arg0: i32, %arg1: i32) -> (i32, i32) {
    %c0_i32 = arith.constant 0 : i32
    %c0_i32_0 = arith.constant 0 : i32
    %c0_i32_1 = arith.constant 0 : i32
    return %c0_i32, %c0_i32_0 : i32, i32
  }
  func.func @transform_13(%arg0: i32, %arg1: i32) -> (i32, i32) {
    %c0_i32 = arith.constant 0 : i32
    %c0_i32_0 = arith.constant 0 : i32
    %c0_i32_1 = arith.constant 0 : i32
    return %c0_i32, %c0_i32_0 : i32, i32
  }
  func.func @transform_14(%arg0: i32, %arg1: i32) -> (i32, i32, i32) {
    %c0_i32 = arith.constant 0 : i32
    %c0_i32_0 = arith.constant 0 : i32
    return %arg0, %arg1, %c0_i32 : i32, i32, i32
  }
}

module attributes {stable_mosaic.version = 11 : i64} {
  func.func @_block_kernel(%arg0: i32, %arg1: i32, %arg2: memref<1x16x32xf32, #tpu.memory_space<vmem>>, %arg3: memref<1x32xf32, #tpu.memory_space<vmem>>, %arg4: memref<1x32xf32, #tpu.memory_space<vmem>>, %arg5: memref<8x32x4xbf16, #tpu.memory_space<vmem>>, %arg6: memref<8x32x4xbf16, #tpu.memory_space<vmem>>, %arg7: memref<8x32x4xbf16, #tpu.memory_space<vmem>>, %arg8: memref<32x32xbf16, #tpu.memory_space<vmem>>, %arg9: memref<1x32xf32, #tpu.memory_space<vmem>>, %arg10: memref<1x32xf32, #tpu.memory_space<vmem>>, %arg11: memref<1x32xf32, #tpu.memory_space<vmem>>, %arg12: memref<32x128xbf16, #tpu.memory_space<vmem>>, %arg13: memref<1x128xf32, #tpu.memory_space<vmem>>, %arg14: memref<128x32xbf16, #tpu.memory_space<vmem>>, %arg15: memref<1x32xf32, #tpu.memory_space<vmem>>, %arg16: memref<1x16x32xf32, #tpu.memory_space<vmem>>, %arg17: memref<8x16x4xbf16, #tpu.memory_space<vmem>>, %arg18: memref<8x16x4xbf16, #tpu.memory_space<vmem>>, %arg19: memref<8x16x4xbf16, #tpu.memory_space<vmem>>) attributes {dimension_semantics = [#tpu.dimension_semantics<parallel>, #tpu.dimension_semantics<arbitrary>], iteration_bounds = array<i64: 2, 1>, scalar_prefetch = 0 : i64, scratch_operands = 3 : i64, tpu.core_type = #tpu.core_type<tc>, window_params = [{transform_indices = @transform_0, window_bounds = array<i64: 1, 16, 32>}, {pipeline_mode = #tpu.pipeline_mode<synchronous>, transform_indices = @transform_1, window_bounds = array<i64: 1, 32>}, {pipeline_mode = #tpu.pipeline_mode<synchronous>, transform_indices = @transform_2, window_bounds = array<i64: 1, 32>}, {pipeline_mode = #tpu.pipeline_mode<synchronous>, transform_indices = @transform_3, window_bounds = array<i64: 8, 32, 4>}, {pipeline_mode = #tpu.pipeline_mode<synchronous>, transform_indices = @transform_4, window_bounds = array<i64: 8, 32, 4>}, {pipeline_mode = #tpu.pipeline_mode<synchronous>, transform_indices = @transform_5, window_bounds = array<i64: 8, 32, 4>}, {pipeline_mode = #tpu.pipeline_mode<synchronous>, transform_indices = @transform_6, window_bounds = array<i64: 32, 32>}, {pipeline_mode = #tpu.pipeline_mode<synchronous>, transform_indices = @transform_7, window_bounds = array<i64: 1, 32>}, {pipeline_mode = #tpu.pipeline_mode<synchronous>, transform_indices = @transform_8, window_bounds = array<i64: 1, 32>}, {pipeline_mode = #tpu.pipeline_mode<synchronous>, transform_indices = @transform_9, window_bounds = array<i64: 1, 32>}, {pipeline_mode = #tpu.pipeline_mode<synchronous>, transform_indices = @transform_10, window_bounds = array<i64: 32, 128>}, {pipeline_mode = #tpu.pipeline_mode<synchronous>, transform_indices = @transform_11, window_bounds = array<i64: 1, 128>}, {pipeline_mode = #tpu.pipeline_mode<synchronous>, transform_indices = @transform_12, window_bounds = array<i64: 128, 32>}, {pipeline_mode = #tpu.pipeline_mode<synchronous>, transform_indices = @transform_13, window_bounds = array<i64: 1, 32>}, {transform_indices = @transform_14, window_bounds = array<i64: 1, 16, 32>}]} {
    %c16_i32 = arith.constant 16 : i32
    %0 = arith.muli %arg1, %c16_i32 : i32
    %1 = tpu.assume_multiple %0, 16 : i32
    %c0_i32 = arith.constant 0 : i32
    %2 = arith.cmpi eq, %arg1, %c0_i32 : i32
    %3 = arith.extui %2 : i1 to i32
    %c0_i32_0 = arith.constant 0 : i32
    %4 = arith.cmpi ne, %3, %c0_i32_0 : i32
    scf.if %4 {
      %c0_44 = arith.constant 0 : index
      %c0_45 = arith.constant 0 : index
      %c0_46 = arith.constant 0 : index
      %100 = vector.load %arg2[%c0_44, %c0_45, %c0_46] : memref<1x16x32xf32, #tpu.memory_space<vmem>>, vector<1x16x32xf32>
      %101 = vector.shape_cast %100 : vector<1x16x32xf32> to vector<16x32xf32>
      %c0_47 = arith.constant 0 : index
      %c0_48 = arith.constant 0 : index
      %102 = vector.load %arg3[%c0_47, %c0_48] : memref<1x32xf32, #tpu.memory_space<vmem>>, vector<1x32xf32>
      %c0_49 = arith.constant 0 : index
      %c0_50 = arith.constant 0 : index
      %103 = vector.load %arg4[%c0_49, %c0_50] : memref<1x32xf32, #tpu.memory_space<vmem>>, vector<1x32xf32>
      %cst_51 = arith.constant dense<0.000000e+00> : vector<16xf32>
      %104 = vector.multi_reduction <add>, %101, %cst_51 [1] : vector<16x32xf32> to vector<16xf32>
      %105 = vector.shape_cast %104 : vector<16xf32> to vector<16x1xf32>
      %cst_52 = arith.constant 3.200000e+01 : f32
      %106 = vector.broadcast %cst_52 : f32 to vector<16x1xf32>
      %107 = arith.divf %105, %106 : vector<16x1xf32>
      %108 = vector.broadcast %107 : vector<16x1xf32> to vector<16x32xf32>
      %109 = arith.subf %101, %108 : vector<16x32xf32>
      %110 = arith.mulf %109, %109 : vector<16x32xf32>
      %cst_53 = arith.constant dense<0.000000e+00> : vector<16xf32>
      %111 = vector.multi_reduction <add>, %110, %cst_53 [1] : vector<16x32xf32> to vector<16xf32>
      %112 = vector.shape_cast %111 : vector<16xf32> to vector<16x1xf32>
      %cst_54 = arith.constant 3.200000e+01 : f32
      %113 = vector.broadcast %cst_54 : f32 to vector<16x1xf32>
      %114 = arith.divf %112, %113 : vector<16x1xf32>
      %cst_55 = arith.constant 9.99999974E-6 : f32
      %115 = vector.broadcast %cst_55 : f32 to vector<16x1xf32>
      %116 = arith.addf %114, %115 : vector<16x1xf32>
      %117 = math.rsqrt %116 : vector<16x1xf32>
      %118 = vector.broadcast %117 : vector<16x1xf32> to vector<16x32xf32>
      %119 = arith.mulf %109, %118 : vector<16x32xf32>
      %120 = vector.broadcast %102 : vector<1x32xf32> to vector<16x32xf32>
      %121 = arith.mulf %119, %120 : vector<16x32xf32>
      %122 = vector.broadcast %103 : vector<1x32xf32> to vector<16x32xf32>
      %123 = arith.addf %121, %122 : vector<16x32xf32>
      %124 = arith.truncf %123 : vector<16x32xf32> to vector<16x32xbf16>
      %c0_56 = arith.constant 0 : index
      %c0_57 = arith.constant 0 : index
      %c0_58 = arith.constant 0 : index
      %125 = vector.load %arg5[%c0_56, %c0_57, %c0_58] : memref<8x32x4xbf16, #tpu.memory_space<vmem>>, vector<1x32x4xbf16>
      %126 = vector.shape_cast %125 : vector<1x32x4xbf16> to vector<32x4xbf16>
      %cst_59 = arith.constant dense<0.000000e+00> : vector<16x4xf32>
      %127 = tpu.matmul %124, %126, %cst_59 {dimension_numbers = #tpu.dot_dimension_numbers<[1], [0], [0], [1], [0, 0, 1, 1], [], []>} : vector<16x32xbf16>, vector<32x4xbf16>, vector<16x4xf32> -> vector<16x4xf32>
      %128 = arith.truncf %127 : vector<16x4xf32> to vector<16x4xbf16>
      %c0_60 = arith.constant 0 : index
      %c0_61 = arith.constant 0 : index
      %c0_62 = arith.constant 0 : index
      %129 = vector.load %arg17[%c0_60, %c0_61, %c0_62] : memref<8x16x4xbf16, #tpu.memory_space<vmem>>, vector<1x16x4xbf16>
      %130 = vector.shape_cast %129 : vector<1x16x4xbf16> to vector<16x4xbf16>
      %131 = vector.shape_cast %128 : vector<16x4xbf16> to vector<1x16x4xbf16>
      tpu.vector_store %arg17[%c0_60, %c0_61, %c0_62], %131 {strides = array<i32>} : memref<8x16x4xbf16, #tpu.memory_space<vmem>>, vector<1x16x4xbf16>,
      %c0_63 = arith.constant 0 : index
      %c0_64 = arith.constant 0 : index
      %c0_65 = arith.constant 0 : index
      %132 = vector.load %arg6[%c0_63, %c0_64, %c0_65] : memref<8x32x4xbf16, #tpu.memory_space<vmem>>, vector<1x32x4xbf16>
      %133 = vector.shape_cast %132 : vector<1x32x4xbf16> to vector<32x4xbf16>
      %cst_66 = arith.constant dense<0.000000e+00> : vector<16x4xf32>
      %134 = tpu.matmul %124, %133, %cst_66 {dimension_numbers = #tpu.dot_dimension_numbers<[1], [0], [0], [1], [0, 0, 1, 1], [], []>} : vector<16x32xbf16>, vector<32x4xbf16>, vector<16x4xf32> -> vector<16x4xf32>
      %135 = arith.truncf %134 : vector<16x4xf32> to vector<16x4xbf16>
      %c0_67 = arith.constant 0 : index
      %c0_68 = arith.constant 0 : index
      %c0_69 = arith.constant 0 : index
      %136 = vector.load %arg18[%c0_67, %c0_68, %c0_69] : memref<8x16x4xbf16, #tpu.memory_space<vmem>>, vector<1x16x4xbf16>
      %137 = vector.shape_cast %136 : vector<1x16x4xbf16> to vector<16x4xbf16>
      %138 = vector.shape_cast %135 : vector<16x4xbf16> to vector<1x16x4xbf16>
      tpu.vector_store %arg18[%c0_67, %c0_68, %c0_69], %138 {strides = array<i32>} : memref<8x16x4xbf16, #tpu.memory_space<vmem>>, vector<1x16x4xbf16>,
      %c0_70 = arith.constant 0 : index
      %c0_71 = arith.constant 0 : index
      %c0_72 = arith.constant 0 : index
      %139 = vector.load %arg7[%c0_70, %c0_71, %c0_72] : memref<8x32x4xbf16, #tpu.memory_space<vmem>>, vector<1x32x4xbf16>
      %140 = vector.shape_cast %139 : vector<1x32x4xbf16> to vector<32x4xbf16>
      %cst_73 = arith.constant dense<0.000000e+00> : vector<16x4xf32>
      %141 = tpu.matmul %124, %140, %cst_73 {dimension_numbers = #tpu.dot_dimension_numbers<[1], [0], [0], [1], [0, 0, 1, 1], [], []>} : vector<16x32xbf16>, vector<32x4xbf16>, vector<16x4xf32> -> vector<16x4xf32>
      %142 = arith.truncf %141 : vector<16x4xf32> to vector<16x4xbf16>
      %c0_74 = arith.constant 0 : index
      %c0_75 = arith.constant 0 : index
      %c0_76 = arith.constant 0 : index
      %143 = vector.load %arg19[%c0_74, %c0_75, %c0_76] : memref<8x16x4xbf16, #tpu.memory_space<vmem>>, vector<1x16x4xbf16>
      %144 = vector.shape_cast %143 : vector<1x16x4xbf16> to vector<16x4xbf16>
      %145 = vector.shape_cast %142 : vector<16x4xbf16> to vector<1x16x4xbf16>
      tpu.vector_store %arg19[%c0_74, %c0_75, %c0_76], %145 {strides = array<i32>} : memref<8x16x4xbf16, #tpu.memory_space<vmem>>, vector<1x16x4xbf16>,
      %c1 = arith.constant 1 : index
      %c0_77 = arith.constant 0 : index
      %c0_78 = arith.constant 0 : index
      %146 = vector.load %arg5[%c1, %c0_77, %c0_78] : memref<8x32x4xbf16, #tpu.memory_space<vmem>>, vector<1x32x4xbf16>
      %147 = vector.shape_cast %146 : vector<1x32x4xbf16> to vector<32x4xbf16>
      %cst_79 = arith.constant dense<0.000000e+00> : vector<16x4xf32>
      %148 = tpu.matmul %124, %147, %cst_79 {dimension_numbers = #tpu.dot_dimension_numbers<[1], [0], [0], [1], [0, 0, 1, 1], [], []>} : vector<16x32xbf16>, vector<32x4xbf16>, vector<16x4xf32> -> vector<16x4xf32>
      %149 = arith.truncf %148 : vector<16x4xf32> to vector<16x4xbf16>
      %c1_80 = arith.constant 1 : index
      %c0_81 = arith.constant 0 : index
      %c0_82 = arith.constant 0 : index
      %150 = vector.load %arg17[%c1_80, %c0_81, %c0_82] : memref<8x16x4xbf16, #tpu.memory_space<vmem>>, vector<1x16x4xbf16>
      %151 = vector.shape_cast %150 : vector<1x16x4xbf16> to vector<16x4xbf16>
      %152 = vector.shape_cast %149 : vector<16x4xbf16> to vector<1x16x4xbf16>
      tpu.vector_store %arg17[%c1_80, %c0_81, %c0_82], %152 {strides = array<i32>} : memref<8x16x4xbf16, #tpu.memory_space<vmem>>, vector<1x16x4xbf16>,
      %c1_83 = arith.constant 1 : index
      %c0_84 = arith.constant 0 : index
      %c0_85 = arith.constant 0 : index
      %153 = vector.load %arg6[%c1_83, %c0_84, %c0_85] : memref<8x32x4xbf16, #tpu.memory_space<vmem>>, vector<1x32x4xbf16>
      %154 = vector.shape_cast %153 : vector<1x32x4xbf16> to vector<32x4xbf16>
      %cst_86 = arith.constant dense<0.000000e+00> : vector<16x4xf32>
      %155 = tpu.matmul %124, %154, %cst_86 {dimension_numbers = #tpu.dot_dimension_numbers<[1], [0], [0], [1], [0, 0, 1, 1], [], []>} : vector<16x32xbf16>, vector<32x4xbf16>, vector<16x4xf32> -> vector<16x4xf32>
      %156 = arith.truncf %155 : vector<16x4xf32> to vector<16x4xbf16>
      %c1_87 = arith.constant 1 : index
      %c0_88 = arith.constant 0 : index
      %c0_89 = arith.constant 0 : index
      %157 = vector.load %arg18[%c1_87, %c0_88, %c0_89] : memref<8x16x4xbf16, #tpu.memory_space<vmem>>, vector<1x16x4xbf16>
      %158 = vector.shape_cast %157 : vector<1x16x4xbf16> to vector<16x4xbf16>
      %159 = vector.shape_cast %156 : vector<16x4xbf16> to vector<1x16x4xbf16>
      tpu.vector_store %arg18[%c1_87, %c0_88, %c0_89], %159 {strides = array<i32>} : memref<8x16x4xbf16, #tpu.memory_space<vmem>>, vector<1x16x4xbf16>,
      %c1_90 = arith.constant 1 : index
      %c0_91 = arith.constant 0 : index
      %c0_92 = arith.constant 0 : index
      %160 = vector.load %arg7[%c1_90, %c0_91, %c0_92] : memref<8x32x4xbf16, #tpu.memory_space<vmem>>, vector<1x32x4xbf16>
      %161 = vector.shape_cast %160 : vector<1x32x4xbf16> to vector<32x4xbf16>
      %cst_93 = arith.constant dense<0.000000e+00> : vector<16x4xf32>
      %162 = tpu.matmul %124, %161, %cst_93 {dimension_numbers = #tpu.dot_dimension_numbers<[1], [0], [0], [1], [0, 0, 1, 1], [], []>} : vector<16x32xbf16>, vector<32x4xbf16>, vector<16x4xf32> -> vector<16x4xf32>
      %163 = arith.truncf %162 : vector<16x4xf32> to vector<16x4xbf16>
      %c1_94 = arith.constant 1 : index
      %c0_95 = arith.constant 0 : index
      %c0_96 = arith.constant 0 : index
      %164 = vector.load %arg19[%c1_94, %c0_95, %c0_96] : memref<8x16x4xbf16, #tpu.memory_space<vmem>>, vector<1x16x4xbf16>
      %165 = vector.shape_cast %164 : vector<1x16x4xbf16> to vector<16x4xbf16>
      %166 = vector.shape_cast %163 : vector<16x4xbf16> to vector<1x16x4xbf16>
      tpu.vector_store %arg19[%c1_94, %c0_95, %c0_96], %166 {strides = array<i32>} : memref<8x16x4xbf16, #tpu.memory_space<vmem>>, vector<1x16x4xbf16>,
      %c2 = arith.constant 2 : index
      %c0_97 = arith.constant 0 : index
      %c0_98 = arith.constant 0 : index
      %167 = vector.load %arg5[%c2, %c0_97, %c0_98] : memref<8x32x4xbf16, #tpu.memory_space<vmem>>, vector<1x32x4xbf16>
      %168 = vector.shape_cast %167 : vector<1x32x4xbf16> to vector<32x4xbf16>
      %cst_99 = arith.constant dense<0.000000e+00> : vector<16x4xf32>
      %169 = tpu.matmul %124, %168, %cst_99 {dimension_numbers = #tpu.dot_dimension_numbers<[1], [0], [0], [1], [0, 0, 1, 1], [], []>} : vector<16x32xbf16>, vector<32x4xbf16>, vector<16x4xf32> -> vector<16x4xf32>
      %170 = arith.truncf %169 : vector<16x4xf32> to vector<16x4xbf16>
      %c2_100 = arith.constant 2 : index
      %c0_101 = arith.constant 0 : index
      %c0_102 = arith.constant 0 : index
      %171 = vector.load %arg17[%c2_100, %c0_101, %c0_102] : memref<8x16x4xbf16, #tpu.memory_space<vmem>>, vector<1x16x4xbf16>
      %172 = vector.shape_cast %171 : vector<1x16x4xbf16> to vector<16x4xbf16>
      %173 = vector.shape_cast %170 : vector<16x4xbf16> to vector<1x16x4xbf16>
      tpu.vector_store %arg17[%c2_100, %c0_101, %c0_102], %173 {strides = array<i32>} : memref<8x16x4xbf16, #tpu.memory_space<vmem>>, vector<1x16x4xbf16>,
      %c2_103 = arith.constant 2 : index
      %c0_104 = arith.constant 0 : index
      %c0_105 = arith.constant 0 : index
      %174 = vector.load %arg6[%c2_103, %c0_104, %c0_105] : memref<8x32x4xbf16, #tpu.memory_space<vmem>>, vector<1x32x4xbf16>
      %175 = vector.shape_cast %174 : vector<1x32x4xbf16> to vector<32x4xbf16>
      %cst_106 = arith.constant dense<0.000000e+00> : vector<16x4xf32>
      %176 = tpu.matmul %124, %175, %cst_106 {dimension_numbers = #tpu.dot_dimension_numbers<[1], [0], [0], [1], [0, 0, 1, 1], [], []>} : vector<16x32xbf16>, vector<32x4xbf16>, vector<16x4xf32> -> vector<16x4xf32>
      %177 = arith.truncf %176 : vector<16x4xf32> to vector<16x4xbf16>
      %c2_107 = arith.constant 2 : index
      %c0_108 = arith.constant 0 : index
      %c0_109 = arith.constant 0 : index
      %178 = vector.load %arg18[%c2_107, %c0_108, %c0_109] : memref<8x16x4xbf16, #tpu.memory_space<vmem>>, vector<1x16x4xbf16>
      %179 = vector.shape_cast %178 : vector<1x16x4xbf16> to vector<16x4xbf16>
      %180 = vector.shape_cast %177 : vector<16x4xbf16> to vector<1x16x4xbf16>
      tpu.vector_store %arg18[%c2_107, %c0_108, %c0_109], %180 {strides = array<i32>} : memref<8x16x4xbf16, #tpu.memory_space<vmem>>, vector<1x16x4xbf16>,
      %c2_110 = arith.constant 2 : index
      %c0_111 = arith.constant 0 : index
      %c0_112 = arith.constant 0 : index
      %181 = vector.load %arg7[%c2_110, %c0_111, %c0_112] : memref<8x32x4xbf16, #tpu.memory_space<vmem>>, vector<1x32x4xbf16>
      %182 = vector.shape_cast %181 : vector<1x32x4xbf16> to vector<32x4xbf16>
      %cst_113 = arith.constant dense<0.000000e+00> : vector<16x4xf32>
      %183 = tpu.matmul %124, %182, %cst_113 {dimension_numbers = #tpu.dot_dimension_numbers<[1], [0], [0], [1], [0, 0, 1, 1], [], []>} : vector<16x32xbf16>, vector<32x4xbf16>, vector<16x4xf32> -> vector<16x4xf32>
      %184 = arith.truncf %183 : vector<16x4xf32> to vector<16x4xbf16>
      %c2_114 = arith.constant 2 : index
      %c0_115 = arith.constant 0 : index
      %c0_116 = arith.constant 0 : index
      %185 = vector.load %arg19[%c2_114, %c0_115, %c0_116] : memref<8x16x4xbf16, #tpu.memory_space<vmem>>, vector<1x16x4xbf16>
      %186 = vector.shape_cast %185 : vector<1x16x4xbf16> to vector<16x4xbf16>
      %187 = vector.shape_cast %184 : vector<16x4xbf16> to vector<1x16x4xbf16>
      tpu.vector_store %arg19[%c2_114, %c0_115, %c0_116], %187 {strides = array<i32>} : memref<8x16x4xbf16, #tpu.memory_space<vmem>>, vector<1x16x4xbf16>,
      %c3 = arith.constant 3 : index
      %c0_117 = arith.constant 0 : index
      %c0_118 = arith.constant 0 : index
      %188 = vector.load %arg5[%c3, %c0_117, %c0_118] : memref<8x32x4xbf16, #tpu.memory_space<vmem>>, vector<1x32x4xbf16>
      %189 = vector.shape_cast %188 : vector<1x32x4xbf16> to vector<32x4xbf16>
      %cst_119 = arith.constant dense<0.000000e+00> : vector<16x4xf32>
      %190 = tpu.matmul %124, %189, %cst_119 {dimension_numbers = #tpu.dot_dimension_numbers<[1], [0], [0], [1], [0, 0, 1, 1], [], []>} : vector<16x32xbf16>, vector<32x4xbf16>, vector<16x4xf32> -> vector<16x4xf32>
      %191 = arith.truncf %190 : vector<16x4xf32> to vector<16x4xbf16>
      %c3_120 = arith.constant 3 : index
      %c0_121 = arith.constant 0 : index
      %c0_122 = arith.constant 0 : index
      %192 = vector.load %arg17[%c3_120, %c0_121, %c0_122] : memref<8x16x4xbf16, #tpu.memory_space<vmem>>, vector<1x16x4xbf16>
      %193 = vector.shape_cast %192 : vector<1x16x4xbf16> to vector<16x4xbf16>
      %194 = vector.shape_cast %191 : vector<16x4xbf16> to vector<1x16x4xbf16>
      tpu.vector_store %arg17[%c3_120, %c0_121, %c0_122], %194 {strides = array<i32>} : memref<8x16x4xbf16, #tpu.memory_space<vmem>>, vector<1x16x4xbf16>,
      %c3_123 = arith.constant 3 : index
      %c0_124 = arith.constant 0 : index
      %c0_125 = arith.constant 0 : index
      %195 = vector.load %arg6[%c3_123, %c0_124, %c0_125] : memref<8x32x4xbf16, #tpu.memory_space<vmem>>, vector<1x32x4xbf16>
      %196 = vector.shape_cast %195 : vector<1x32x4xbf16> to vector<32x4xbf16>
      %cst_126 = arith.constant dense<0.000000e+00> : vector<16x4xf32>
      %197 = tpu.matmul %124, %196, %cst_126 {dimension_numbers = #tpu.dot_dimension_numbers<[1], [0], [0], [1], [0, 0, 1, 1], [], []>} : vector<16x32xbf16>, vector<32x4xbf16>, vector<16x4xf32> -> vector<16x4xf32>
      %198 = arith.truncf %197 : vector<16x4xf32> to vector<16x4xbf16>
      %c3_127 = arith.constant 3 : index
      %c0_128 = arith.constant 0 : index
      %c0_129 = arith.constant 0 : index
      %199 = vector.load %arg18[%c3_127, %c0_128, %c0_129] : memref<8x16x4xbf16, #tpu.memory_space<vmem>>, vector<1x16x4xbf16>
      %200 = vector.shape_cast %199 : vector<1x16x4xbf16> to vector<16x4xbf16>
      %201 = vector.shape_cast %198 : vector<16x4xbf16> to vector<1x16x4xbf16>
      tpu.vector_store %arg18[%c3_127, %c0_128, %c0_129], %201 {strides = array<i32>} : memref<8x16x4xbf16, #tpu.memory_space<vmem>>, vector<1x16x4xbf16>,
      %c3_130 = arith.constant 3 : index
      %c0_131 = arith.constant 0 : index
      %c0_132 = arith.constant 0 : index
      %202 = vector.load %arg7[%c3_130, %c0_131, %c0_132] : memref<8x32x4xbf16, #tpu.memory_space<vmem>>, vector<1x32x4xbf16>
      %203 = vector.shape_cast %202 : vector<1x32x4xbf16> to vector<32x4xbf16>
      %cst_133 = arith.constant dense<0.000000e+00> : vector<16x4xf32>
      %204 = tpu.matmul %124, %203, %cst_133 {dimension_numbers = #tpu.dot_dimension_numbers<[1], [0], [0], [1], [0, 0, 1, 1], [], []>} : vector<16x32xbf16>, vector<32x4xbf16>, vector<16x4xf32> -> vector<16x4xf32>
      %205 = arith.truncf %204 : vector<16x4xf32> to vector<16x4xbf16>
      %c3_134 = arith.constant 3 : index
      %c0_135 = arith.constant 0 : index
      %c0_136 = arith.constant 0 : index
      %206 = vector.load %arg19[%c3_134, %c0_135, %c0_136] : memref<8x16x4xbf16, #tpu.memory_space<vmem>>, vector<1x16x4xbf16>
      %207 = vector.shape_cast %206 : vector<1x16x4xbf16> to vector<16x4xbf16>
      %208 = vector.shape_cast %205 : vector<16x4xbf16> to vector<1x16x4xbf16>
      tpu.vector_store %arg19[%c3_134, %c0_135, %c0_136], %208 {strides = array<i32>} : memref<8x16x4xbf16, #tpu.memory_space<vmem>>, vector<1x16x4xbf16>,
      %c4 = arith.constant 4 : index
      %c0_137 = arith.constant 0 : index
      %c0_138 = arith.constant 0 : index
      %209 = vector.load %arg5[%c4, %c0_137, %c0_138] : memref<8x32x4xbf16, #tpu.memory_space<vmem>>, vector<1x32x4xbf16>
      %210 = vector.shape_cast %209 : vector<1x32x4xbf16> to vector<32x4xbf16>
      %cst_139 = arith.constant dense<0.000000e+00> : vector<16x4xf32>
      %211 = tpu.matmul %124, %210, %cst_139 {dimension_numbers = #tpu.dot_dimension_numbers<[1], [0], [0], [1], [0, 0, 1, 1], [], []>} : vector<16x32xbf16>, vector<32x4xbf16>, vector<16x4xf32> -> vector<16x4xf32>
      %212 = arith.truncf %211 : vector<16x4xf32> to vector<16x4xbf16>
      %c4_140 = arith.constant 4 : index
      %c0_141 = arith.constant 0 : index
      %c0_142 = arith.constant 0 : index
      %213 = vector.load %arg17[%c4_140, %c0_141, %c0_142] : memref<8x16x4xbf16, #tpu.memory_space<vmem>>, vector<1x16x4xbf16>
      %214 = vector.shape_cast %213 : vector<1x16x4xbf16> to vector<16x4xbf16>
      %215 = vector.shape_cast %212 : vector<16x4xbf16> to vector<1x16x4xbf16>
      tpu.vector_store %arg17[%c4_140, %c0_141, %c0_142], %215 {strides = array<i32>} : memref<8x16x4xbf16, #tpu.memory_space<vmem>>, vector<1x16x4xbf16>,
      %c4_143 = arith.constant 4 : index
      %c0_144 = arith.constant 0 : index
      %c0_145 = arith.constant 0 : index
      %216 = vector.load %arg6[%c4_143, %c0_144, %c0_145] : memref<8x32x4xbf16, #tpu.memory_space<vmem>>, vector<1x32x4xbf16>
      %217 = vector.shape_cast %216 : vector<1x32x4xbf16> to vector<32x4xbf16>
      %cst_146 = arith.constant dense<0.000000e+00> : vector<16x4xf32>
      %218 = tpu.matmul %124, %217, %cst_146 {dimension_numbers = #tpu.dot_dimension_numbers<[1], [0], [0], [1], [0, 0, 1, 1], [], []>} : vector<16x32xbf16>, vector<32x4xbf16>, vector<16x4xf32> -> vector<16x4xf32>
      %219 = arith.truncf %218 : vector<16x4xf32> to vector<16x4xbf16>
      %c4_147 = arith.constant 4 : index
      %c0_148 = arith.constant 0 : index
      %c0_149 = arith.constant 0 : index
      %220 = vector.load %arg18[%c4_147, %c0_148, %c0_149] : memref<8x16x4xbf16, #tpu.memory_space<vmem>>, vector<1x16x4xbf16>
      %221 = vector.shape_cast %220 : vector<1x16x4xbf16> to vector<16x4xbf16>
      %222 = vector.shape_cast %219 : vector<16x4xbf16> to vector<1x16x4xbf16>
      tpu.vector_store %arg18[%c4_147, %c0_148, %c0_149], %222 {strides = array<i32>} : memref<8x16x4xbf16, #tpu.memory_space<vmem>>, vector<1x16x4xbf16>,
      %c4_150 = arith.constant 4 : index
      %c0_151 = arith.constant 0 : index
      %c0_152 = arith.constant 0 : index
      %223 = vector.load %arg7[%c4_150, %c0_151, %c0_152] : memref<8x32x4xbf16, #tpu.memory_space<vmem>>, vector<1x32x4xbf16>
      %224 = vector.shape_cast %223 : vector<1x32x4xbf16> to vector<32x4xbf16>
      %cst_153 = arith.constant dense<0.000000e+00> : vector<16x4xf32>
      %225 = tpu.matmul %124, %224, %cst_153 {dimension_numbers = #tpu.dot_dimension_numbers<[1], [0], [0], [1], [0, 0, 1, 1], [], []>} : vector<16x32xbf16>, vector<32x4xbf16>, vector<16x4xf32> -> vector<16x4xf32>
      %226 = arith.truncf %225 : vector<16x4xf32> to vector<16x4xbf16>
      %c4_154 = arith.constant 4 : index
      %c0_155 = arith.constant 0 : index
      %c0_156 = arith.constant 0 : index
      %227 = vector.load %arg19[%c4_154, %c0_155, %c0_156] : memref<8x16x4xbf16, #tpu.memory_space<vmem>>, vector<1x16x4xbf16>
      %228 = vector.shape_cast %227 : vector<1x16x4xbf16> to vector<16x4xbf16>
      %229 = vector.shape_cast %226 : vector<16x4xbf16> to vector<1x16x4xbf16>
      tpu.vector_store %arg19[%c4_154, %c0_155, %c0_156], %229 {strides = array<i32>} : memref<8x16x4xbf16, #tpu.memory_space<vmem>>, vector<1x16x4xbf16>,
      %c5 = arith.constant 5 : index
      %c0_157 = arith.constant 0 : index
      %c0_158 = arith.constant 0 : index
      %230 = vector.load %arg5[%c5, %c0_157, %c0_158] : memref<8x32x4xbf16, #tpu.memory_space<vmem>>, vector<1x32x4xbf16>
      %231 = vector.shape_cast %230 : vector<1x32x4xbf16> to vector<32x4xbf16>
      %cst_159 = arith.constant dense<0.000000e+00> : vector<16x4xf32>
      %232 = tpu.matmul %124, %231, %cst_159 {dimension_numbers = #tpu.dot_dimension_numbers<[1], [0], [0], [1], [0, 0, 1, 1], [], []>} : vector<16x32xbf16>, vector<32x4xbf16>, vector<16x4xf32> -> vector<16x4xf32>
      %233 = arith.truncf %232 : vector<16x4xf32> to vector<16x4xbf16>
      %c5_160 = arith.constant 5 : index
      %c0_161 = arith.constant 0 : index
      %c0_162 = arith.constant 0 : index
      %234 = vector.load %arg17[%c5_160, %c0_161, %c0_162] : memref<8x16x4xbf16, #tpu.memory_space<vmem>>, vector<1x16x4xbf16>
      %235 = vector.shape_cast %234 : vector<1x16x4xbf16> to vector<16x4xbf16>
      %236 = vector.shape_cast %233 : vector<16x4xbf16> to vector<1x16x4xbf16>
      tpu.vector_store %arg17[%c5_160, %c0_161, %c0_162], %236 {strides = array<i32>} : memref<8x16x4xbf16, #tpu.memory_space<vmem>>, vector<1x16x4xbf16>,
      %c5_163 = arith.constant 5 : index
      %c0_164 = arith.constant 0 : index
      %c0_165 = arith.constant 0 : index
      %237 = vector.load %arg6[%c5_163, %c0_164, %c0_165] : memref<8x32x4xbf16, #tpu.memory_space<vmem>>, vector<1x32x4xbf16>
      %238 = vector.shape_cast %237 : vector<1x32x4xbf16> to vector<32x4xbf16>
      %cst_166 = arith.constant dense<0.000000e+00> : vector<16x4xf32>
      %239 = tpu.matmul %124, %238, %cst_166 {dimension_numbers = #tpu.dot_dimension_numbers<[1], [0], [0], [1], [0, 0, 1, 1], [], []>} : vector<16x32xbf16>, vector<32x4xbf16>, vector<16x4xf32> -> vector<16x4xf32>
      %240 = arith.truncf %239 : vector<16x4xf32> to vector<16x4xbf16>
      %c5_167 = arith.constant 5 : index
      %c0_168 = arith.constant 0 : index
      %c0_169 = arith.constant 0 : index
      %241 = vector.load %arg18[%c5_167, %c0_168, %c0_169] : memref<8x16x4xbf16, #tpu.memory_space<vmem>>, vector<1x16x4xbf16>
      %242 = vector.shape_cast %241 : vector<1x16x4xbf16> to vector<16x4xbf16>
      %243 = vector.shape_cast %240 : vector<16x4xbf16> to vector<1x16x4xbf16>
      tpu.vector_store %arg18[%c5_167, %c0_168, %c0_169], %243 {strides = array<i32>} : memref<8x16x4xbf16, #tpu.memory_space<vmem>>, vector<1x16x4xbf16>,
      %c5_170 = arith.constant 5 : index
      %c0_171 = arith.constant 0 : index
      %c0_172 = arith.constant 0 : index
      %244 = vector.load %arg7[%c5_170, %c0_171, %c0_172] : memref<8x32x4xbf16, #tpu.memory_space<vmem>>, vector<1x32x4xbf16>
      %245 = vector.shape_cast %244 : vector<1x32x4xbf16> to vector<32x4xbf16>
      %cst_173 = arith.constant dense<0.000000e+00> : vector<16x4xf32>
      %246 = tpu.matmul %124, %245, %cst_173 {dimension_numbers = #tpu.dot_dimension_numbers<[1], [0], [0], [1], [0, 0, 1, 1], [], []>} : vector<16x32xbf16>, vector<32x4xbf16>, vector<16x4xf32> -> vector<16x4xf32>
      %247 = arith.truncf %246 : vector<16x4xf32> to vector<16x4xbf16>
      %c5_174 = arith.constant 5 : index
      %c0_175 = arith.constant 0 : index
      %c0_176 = arith.constant 0 : index
      %248 = vector.load %arg19[%c5_174, %c0_175, %c0_176] : memref<8x16x4xbf16, #tpu.memory_space<vmem>>, vector<1x16x4xbf16>
      %249 = vector.shape_cast %248 : vector<1x16x4xbf16> to vector<16x4xbf16>
      %250 = vector.shape_cast %247 : vector<16x4xbf16> to vector<1x16x4xbf16>
      tpu.vector_store %arg19[%c5_174, %c0_175, %c0_176], %250 {strides = array<i32>} : memref<8x16x4xbf16, #tpu.memory_space<vmem>>, vector<1x16x4xbf16>,
      %c6 = arith.constant 6 : index
      %c0_177 = arith.constant 0 : index
      %c0_178 = arith.constant 0 : index
      %251 = vector.load %arg5[%c6, %c0_177, %c0_178] : memref<8x32x4xbf16, #tpu.memory_space<vmem>>, vector<1x32x4xbf16>
      %252 = vector.shape_cast %251 : vector<1x32x4xbf16> to vector<32x4xbf16>
      %cst_179 = arith.constant dense<0.000000e+00> : vector<16x4xf32>
      %253 = tpu.matmul %124, %252, %cst_179 {dimension_numbers = #tpu.dot_dimension_numbers<[1], [0], [0], [1], [0, 0, 1, 1], [], []>} : vector<16x32xbf16>, vector<32x4xbf16>, vector<16x4xf32> -> vector<16x4xf32>
      %254 = arith.truncf %253 : vector<16x4xf32> to vector<16x4xbf16>
      %c6_180 = arith.constant 6 : index
      %c0_181 = arith.constant 0 : index
      %c0_182 = arith.constant 0 : index
      %255 = vector.load %arg17[%c6_180, %c0_181, %c0_182] : memref<8x16x4xbf16, #tpu.memory_space<vmem>>, vector<1x16x4xbf16>
      %256 = vector.shape_cast %255 : vector<1x16x4xbf16> to vector<16x4xbf16>
      %257 = vector.shape_cast %254 : vector<16x4xbf16> to vector<1x16x4xbf16>
      tpu.vector_store %arg17[%c6_180, %c0_181, %c0_182], %257 {strides = array<i32>} : memref<8x16x4xbf16, #tpu.memory_space<vmem>>, vector<1x16x4xbf16>,
      %c6_183 = arith.constant 6 : index
      %c0_184 = arith.constant 0 : index
      %c0_185 = arith.constant 0 : index
      %258 = vector.load %arg6[%c6_183, %c0_184, %c0_185] : memref<8x32x4xbf16, #tpu.memory_space<vmem>>, vector<1x32x4xbf16>
      %259 = vector.shape_cast %258 : vector<1x32x4xbf16> to vector<32x4xbf16>
      %cst_186 = arith.constant dense<0.000000e+00> : vector<16x4xf32>
      %260 = tpu.matmul %124, %259, %cst_186 {dimension_numbers = #tpu.dot_dimension_numbers<[1], [0], [0], [1], [0, 0, 1, 1], [], []>} : vector<16x32xbf16>, vector<32x4xbf16>, vector<16x4xf32> -> vector<16x4xf32>
      %261 = arith.truncf %260 : vector<16x4xf32> to vector<16x4xbf16>
      %c6_187 = arith.constant 6 : index
      %c0_188 = arith.constant 0 : index
      %c0_189 = arith.constant 0 : index
      %262 = vector.load %arg18[%c6_187, %c0_188, %c0_189] : memref<8x16x4xbf16, #tpu.memory_space<vmem>>, vector<1x16x4xbf16>
      %263 = vector.shape_cast %262 : vector<1x16x4xbf16> to vector<16x4xbf16>
      %264 = vector.shape_cast %261 : vector<16x4xbf16> to vector<1x16x4xbf16>
      tpu.vector_store %arg18[%c6_187, %c0_188, %c0_189], %264 {strides = array<i32>} : memref<8x16x4xbf16, #tpu.memory_space<vmem>>, vector<1x16x4xbf16>,
      %c6_190 = arith.constant 6 : index
      %c0_191 = arith.constant 0 : index
      %c0_192 = arith.constant 0 : index
      %265 = vector.load %arg7[%c6_190, %c0_191, %c0_192] : memref<8x32x4xbf16, #tpu.memory_space<vmem>>, vector<1x32x4xbf16>
      %266 = vector.shape_cast %265 : vector<1x32x4xbf16> to vector<32x4xbf16>
      %cst_193 = arith.constant dense<0.000000e+00> : vector<16x4xf32>
      %267 = tpu.matmul %124, %266, %cst_193 {dimension_numbers = #tpu.dot_dimension_numbers<[1], [0], [0], [1], [0, 0, 1, 1], [], []>} : vector<16x32xbf16>, vector<32x4xbf16>, vector<16x4xf32> -> vector<16x4xf32>
      %268 = arith.truncf %267 : vector<16x4xf32> to vector<16x4xbf16>
      %c6_194 = arith.constant 6 : index
      %c0_195 = arith.constant 0 : index
      %c0_196 = arith.constant 0 : index
      %269 = vector.load %arg19[%c6_194, %c0_195, %c0_196] : memref<8x16x4xbf16, #tpu.memory_space<vmem>>, vector<1x16x4xbf16>
      %270 = vector.shape_cast %269 : vector<1x16x4xbf16> to vector<16x4xbf16>
      %271 = vector.shape_cast %268 : vector<16x4xbf16> to vector<1x16x4xbf16>
      tpu.vector_store %arg19[%c6_194, %c0_195, %c0_196], %271 {strides = array<i32>} : memref<8x16x4xbf16, #tpu.memory_space<vmem>>, vector<1x16x4xbf16>,
      %c7 = arith.constant 7 : index
      %c0_197 = arith.constant 0 : index
      %c0_198 = arith.constant 0 : index
      %272 = vector.load %arg5[%c7, %c0_197, %c0_198] : memref<8x32x4xbf16, #tpu.memory_space<vmem>>, vector<1x32x4xbf16>
      %273 = vector.shape_cast %272 : vector<1x32x4xbf16> to vector<32x4xbf16>
      %cst_199 = arith.constant dense<0.000000e+00> : vector<16x4xf32>
      %274 = tpu.matmul %124, %273, %cst_199 {dimension_numbers = #tpu.dot_dimension_numbers<[1], [0], [0], [1], [0, 0, 1, 1], [], []>} : vector<16x32xbf16>, vector<32x4xbf16>, vector<16x4xf32> -> vector<16x4xf32>
      %275 = arith.truncf %274 : vector<16x4xf32> to vector<16x4xbf16>
      %c7_200 = arith.constant 7 : index
      %c0_201 = arith.constant 0 : index
      %c0_202 = arith.constant 0 : index
      %276 = vector.load %arg17[%c7_200, %c0_201, %c0_202] : memref<8x16x4xbf16, #tpu.memory_space<vmem>>, vector<1x16x4xbf16>
      %277 = vector.shape_cast %276 : vector<1x16x4xbf16> to vector<16x4xbf16>
      %278 = vector.shape_cast %275 : vector<16x4xbf16> to vector<1x16x4xbf16>
      tpu.vector_store %arg17[%c7_200, %c0_201, %c0_202], %278 {strides = array<i32>} : memref<8x16x4xbf16, #tpu.memory_space<vmem>>, vector<1x16x4xbf16>,
      %c7_203 = arith.constant 7 : index
      %c0_204 = arith.constant 0 : index
      %c0_205 = arith.constant 0 : index
      %279 = vector.load %arg6[%c7_203, %c0_204, %c0_205] : memref<8x32x4xbf16, #tpu.memory_space<vmem>>, vector<1x32x4xbf16>
      %280 = vector.shape_cast %279 : vector<1x32x4xbf16> to vector<32x4xbf16>
      %cst_206 = arith.constant dense<0.000000e+00> : vector<16x4xf32>
      %281 = tpu.matmul %124, %280, %cst_206 {dimension_numbers = #tpu.dot_dimension_numbers<[1], [0], [0], [1], [0, 0, 1, 1], [], []>} : vector<16x32xbf16>, vector<32x4xbf16>, vector<16x4xf32> -> vector<16x4xf32>
      %282 = arith.truncf %281 : vector<16x4xf32> to vector<16x4xbf16>
      %c7_207 = arith.constant 7 : index
      %c0_208 = arith.constant 0 : index
      %c0_209 = arith.constant 0 : index
      %283 = vector.load %arg18[%c7_207, %c0_208, %c0_209] : memref<8x16x4xbf16, #tpu.memory_space<vmem>>, vector<1x16x4xbf16>
      %284 = vector.shape_cast %283 : vector<1x16x4xbf16> to vector<16x4xbf16>
      %285 = vector.shape_cast %282 : vector<16x4xbf16> to vector<1x16x4xbf16>
      tpu.vector_store %arg18[%c7_207, %c0_208, %c0_209], %285 {strides = array<i32>} : memref<8x16x4xbf16, #tpu.memory_space<vmem>>, vector<1x16x4xbf16>,
      %c7_210 = arith.constant 7 : index
      %c0_211 = arith.constant 0 : index
      %c0_212 = arith.constant 0 : index
      %286 = vector.load %arg7[%c7_210, %c0_211, %c0_212] : memref<8x32x4xbf16, #tpu.memory_space<vmem>>, vector<1x32x4xbf16>
      %287 = vector.shape_cast %286 : vector<1x32x4xbf16> to vector<32x4xbf16>
      %cst_213 = arith.constant dense<0.000000e+00> : vector<16x4xf32>
      %288 = tpu.matmul %124, %287, %cst_213 {dimension_numbers = #tpu.dot_dimension_numbers<[1], [0], [0], [1], [0, 0, 1, 1], [], []>} : vector<16x32xbf16>, vector<32x4xbf16>, vector<16x4xf32> -> vector<16x4xf32>
      %289 = arith.truncf %288 : vector<16x4xf32> to vector<16x4xbf16>
      %c7_214 = arith.constant 7 : index
      %c0_215 = arith.constant 0 : index
      %c0_216 = arith.constant 0 : index
      %290 = vector.load %arg19[%c7_214, %c0_215, %c0_216] : memref<8x16x4xbf16, #tpu.memory_space<vmem>>, vector<1x16x4xbf16>
      %291 = vector.shape_cast %290 : vector<1x16x4xbf16> to vector<16x4xbf16>
      %292 = vector.shape_cast %289 : vector<16x4xbf16> to vector<1x16x4xbf16>
      tpu.vector_store %arg19[%c7_214, %c0_215, %c0_216], %292 {strides = array<i32>} : memref<8x16x4xbf16, #tpu.memory_space<vmem>>, vector<1x16x4xbf16>,
    } else {
    }
    %c0 = arith.constant 0 : index
    %5 = arith.index_cast %1 : i32 to index
    %c0_1 = arith.constant 0 : index
    %6 = vector.load %arg17[%c0, %5, %c0_1] : memref<8x16x4xbf16, #tpu.memory_space<vmem>>, vector<8x16x4xbf16>
    %c0_2 = arith.constant 0 : index
    %c0_3 = arith.constant 0 : index
    %c0_4 = arith.constant 0 : index
    %7 = vector.load %arg18[%c0_2, %c0_3, %c0_4] : memref<8x16x4xbf16, #tpu.memory_space<vmem>>, vector<8x16x4xbf16>
    %c0_5 = arith.constant 0 : index
    %c0_6 = arith.constant 0 : index
    %c0_7 = arith.constant 0 : index
    %8 = vector.load %arg19[%c0_5, %c0_6, %c0_7] : memref<8x16x4xbf16, #tpu.memory_space<vmem>>, vector<8x16x4xbf16>
    "tpu.trace_start"() <{level = 10 : i32, message = "hqd,hkd->hqk"}> : () -> ()
    %cst = arith.constant dense<0.000000e+00> : vector<8x16x16xf32>
    %9 = tpu.matmul %6, %7, %cst {dimension_numbers = #tpu.dot_dimension_numbers<[2], [2], [1], [1], [0, 0, 0, 1, 1, 1], [0], [0]>} : vector<8x16x4xbf16>, vector<8x16x4xbf16>, vector<8x16x16xf32> -> vector<8x16x16xf32>
    "tpu.trace_stop"() : () -> ()
    %cst_8 = arith.constant dense<0xFF800000> : vector<8x16xf32>
    %10 = vector.multi_reduction <maximumf>, %9, %cst_8 [2] : vector<8x16x16xf32> to vector<8x16xf32>
    %11 = vector.shape_cast %10 : vector<8x16xf32> to vector<8x16x1xf32>
    %12 = vector.broadcast %11 : vector<8x16x1xf32> to vector<8x16x16xf32>
    %13 = arith.subf %9, %12 : vector<8x16x16xf32>
    %14 = math.exp %13 : vector<8x16x16xf32>
    %cst_9 = arith.constant dense<0.000000e+00> : vector<8x16xf32>
    %15 = vector.multi_reduction <add>, %14, %cst_9 [2] : vector<8x16x16xf32> to vector<8x16xf32>
    %16 = vector.shape_cast %15 : vector<8x16xf32> to vector<8x16x1xf32>
    %17 = tpu.reciprocal %16 {approx = true} : vector<8x16x1xf32> -> vector<8x16x1xf32>
    %18 = vector.broadcast %17 : vector<8x16x1xf32> to vector<8x16x16xf32>
    %19 = arith.mulf %14, %18 : vector<8x16x16xf32>
    %20 = arith.truncf %19 : vector<8x16x16xf32> to vector<8x16x16xbf16>
    "tpu.trace_start"() <{level = 10 : i32, message = "hqk,hkd->hqd"}> : () -> ()
    %cst_10 = arith.constant dense<0.000000e+00> : vector<8x16x4xf32>
    %21 = tpu.matmul %20, %8, %cst_10 {dimension_numbers = #tpu.dot_dimension_numbers<[2], [1], [1], [2], [0, 0, 0, 1, 1, 2], [0], [0]>} : vector<8x16x16xbf16>, vector<8x16x4xbf16>, vector<8x16x4xf32> -> vector<8x16x4xf32>
    "tpu.trace_stop"() : () -> ()
    %22 = arith.truncf %21 : vector<8x16x4xf32> to vector<8x16x4xbf16>
    %23 = vector.extract_strided_slice %22 {offsets = [0, 0, 0], sizes = [1, 16, 4], strides = [1, 1, 1]} : vector<8x16x4xbf16> to vector<1x16x4xbf16>
    %24 = vector.shape_cast %23 : vector<1x16x4xbf16> to vector<16x4xbf16>
    %25 = vector.extract_strided_slice %22 {offsets = [1, 0, 0], sizes = [1, 16, 4], strides = [1, 1, 1]} : vector<8x16x4xbf16> to vector<1x16x4xbf16>
    %26 = vector.shape_cast %25 : vector<1x16x4xbf16> to vector<16x4xbf16>
    %27 = vector.extract_strided_slice %22 {offsets = [2, 0, 0], sizes = [1, 16, 4], strides = [1, 1, 1]} : vector<8x16x4xbf16> to vector<1x16x4xbf16>
    %28 = vector.shape_cast %27 : vector<1x16x4xbf16> to vector<16x4xbf16>
    %29 = vector.extract_strided_slice %22 {offsets = [3, 0, 0], sizes = [1, 16, 4], strides = [1, 1, 1]} : vector<8x16x4xbf16> to vector<1x16x4xbf16>
    %30 = vector.shape_cast %29 : vector<1x16x4xbf16> to vector<16x4xbf16>
    %31 = vector.extract_strided_slice %22 {offsets = [4, 0, 0], sizes = [1, 16, 4], strides = [1, 1, 1]} : vector<8x16x4xbf16> to vector<1x16x4xbf16>
    %32 = vector.shape_cast %31 : vector<1x16x4xbf16> to vector<16x4xbf16>
    %33 = vector.extract_strided_slice %22 {offsets = [5, 0, 0], sizes = [1, 16, 4], strides = [1, 1, 1]} : vector<8x16x4xbf16> to vector<1x16x4xbf16>
    %34 = vector.shape_cast %33 : vector<1x16x4xbf16> to vector<16x4xbf16>
    %35 = vector.extract_strided_slice %22 {offsets = [6, 0, 0], sizes = [1, 16, 4], strides = [1, 1, 1]} : vector<8x16x4xbf16> to vector<1x16x4xbf16>
    %36 = vector.shape_cast %35 : vector<1x16x4xbf16> to vector<16x4xbf16>
    %37 = vector.extract_strided_slice %22 {offsets = [7, 0, 0], sizes = [1, 16, 4], strides = [1, 1, 1]} : vector<8x16x4xbf16> to vector<1x16x4xbf16>
    %38 = vector.shape_cast %37 : vector<1x16x4xbf16> to vector<16x4xbf16>
    %39 = tpu.concatenate %24, %26, %28, %30, %32, %34, %36, %38 in 1 : vector<16x4xbf16>, vector<16x4xbf16>, vector<16x4xbf16>, vector<16x4xbf16>, vector<16x4xbf16>, vector<16x4xbf16>, vector<16x4xbf16>, vector<16x4xbf16> -> vector<16x32xbf16>
    %c0_11 = arith.constant 0 : index
    %c0_12 = arith.constant 0 : index
    %40 = vector.load %arg8[%c0_11, %c0_12] : memref<32x32xbf16, #tpu.memory_space<vmem>>, vector<32x32xbf16>
    %cst_13 = arith.constant dense<0.000000e+00> : vector<16x32xf32>
    %41 = tpu.matmul %39, %40, %cst_13 {dimension_numbers = #tpu.dot_dimension_numbers<[1], [0], [0], [1], [0, 0, 1, 1], [], []>} : vector<16x32xbf16>, vector<32x32xbf16>, vector<16x32xf32> -> vector<16x32xf32>
    %c0_14 = arith.constant 0 : index
    %c0_15 = arith.constant 0 : index
    %42 = vector.load %arg9[%c0_14, %c0_15] : memref<1x32xf32, #tpu.memory_space<vmem>>, vector<1x32xf32>
    %43 = vector.broadcast %42 : vector<1x32xf32> to vector<16x32xf32>
    %44 = arith.addf %41, %43 : vector<16x32xf32>
    %c0_16 = arith.constant 0 : index
    %45 = arith.index_cast %1 : i32 to index
    %c0_17 = arith.constant 0 : index
    %46 = vector.load %arg2[%c0_16, %45, %c0_17] : memref<1x16x32xf32, #tpu.memory_space<vmem>>, vector<1x16x32xf32>
    %47 = vector.shape_cast %46 : vector<1x16x32xf32> to vector<16x32xf32>
    %48 = arith.addf %47, %44 : vector<16x32xf32>
    %c0_18 = arith.constant 0 : index
    %c0_19 = arith.constant 0 : index
    %49 = vector.load %arg10[%c0_18, %c0_19] : memref<1x32xf32, #tpu.memory_space<vmem>>, vector<1x32xf32>
    %c0_20 = arith.constant 0 : index
    %c0_21 = arith.constant 0 : index
    %50 = vector.load %arg11[%c0_20, %c0_21] : memref<1x32xf32, #tpu.memory_space<vmem>>, vector<1x32xf32>
    %cst_22 = arith.constant dense<0.000000e+00> : vector<16xf32>
    %51 = vector.multi_reduction <add>, %48, %cst_22 [1] : vector<16x32xf32> to vector<16xf32>
    %52 = vector.shape_cast %51 : vector<16xf32> to vector<16x1xf32>
    %cst_23 = arith.constant 3.200000e+01 : f32
    %53 = vector.broadcast %cst_23 : f32 to vector<16x1xf32>
    %54 = arith.divf %52, %53 : vector<16x1xf32>
    %55 = vector.broadcast %54 : vector<16x1xf32> to vector<16x32xf32>
    %56 = arith.subf %48, %55 : vector<16x32xf32>
    %57 = arith.mulf %56, %56 : vector<16x32xf32>
    %cst_24 = arith.constant dense<0.000000e+00> : vector<16xf32>
    %58 = vector.multi_reduction <add>, %57, %cst_24 [1] : vector<16x32xf32> to vector<16xf32>
    %59 = vector.shape_cast %58 : vector<16xf32> to vector<16x1xf32>
    %cst_25 = arith.constant 3.200000e+01 : f32
    %60 = vector.broadcast %cst_25 : f32 to vector<16x1xf32>
    %61 = arith.divf %59, %60 : vector<16x1xf32>
    %cst_26 = arith.constant 9.99999974E-6 : f32
    %62 = vector.broadcast %cst_26 : f32 to vector<16x1xf32>
    %63 = arith.addf %61, %62 : vector<16x1xf32>
    %64 = math.rsqrt %63 : vector<16x1xf32>
    %65 = vector.broadcast %64 : vector<16x1xf32> to vector<16x32xf32>
    %66 = arith.mulf %56, %65 : vector<16x32xf32>
    %67 = vector.broadcast %49 : vector<1x32xf32> to vector<16x32xf32>
    %68 = arith.mulf %66, %67 : vector<16x32xf32>
    %69 = vector.broadcast %50 : vector<1x32xf32> to vector<16x32xf32>
    %70 = arith.addf %68, %69 : vector<16x32xf32>
    %71 = arith.truncf %70 : vector<16x32xf32> to vector<16x32xbf16>
    %c0_27 = arith.constant 0 : index
    %c0_28 = arith.constant 0 : index
    %72 = vector.load %arg12[%c0_27, %c0_28] : memref<32x128xbf16, #tpu.memory_space<vmem>>, vector<32x128xbf16>
    %cst_29 = arith.constant dense<0.000000e+00> : vector<16x128xf32>
    %73 = tpu.matmul %71, %72, %cst_29 {dimension_numbers = #tpu.dot_dimension_numbers<[1], [0], [0], [1], [0, 0, 1, 1], [], []>} : vector<16x32xbf16>, vector<32x128xbf16>, vector<16x128xf32> -> vector<16x128xf32>
    %c0_30 = arith.constant 0 : index
    %c0_31 = arith.constant 0 : index
    %74 = vector.load %arg13[%c0_30, %c0_31] : memref<1x128xf32, #tpu.memory_space<vmem>>, vector<1x128xf32>
    %75 = vector.broadcast %74 : vector<1x128xf32> to vector<16x128xf32>
    %76 = arith.addf %73, %75 : vector<16x128xf32>
    %77 = arith.mulf %76, %76 : vector<16x128xf32>
    %78 = arith.mulf %76, %77 : vector<16x128xf32>
    %cst_32 = arith.constant 4.471500e-02 : f32
    %79 = vector.broadcast %cst_32 : f32 to vector<16x128xf32>
    %80 = arith.mulf %79, %78 : vector<16x128xf32>
    %81 = arith.addf %76, %80 : vector<16x128xf32>
    %cst_33 = arith.constant 0.797884583 : f32
    %82 = vector.broadcast %cst_33 : f32 to vector<16x128xf32>
    %83 = arith.mulf %82, %81 : vector<16x128xf32>
    %84 = math.tanh %83 : vector<16x128xf32>
    %cst_34 = arith.constant 1.000000e+00 : f32
    %85 = vector.broadcast %cst_34 : f32 to vector<16x128xf32>
    %86 = arith.addf %85, %84 : vector<16x128xf32>
    %cst_35 = arith.constant 5.000000e-01 : f32
    %87 = vector.broadcast %cst_35 : f32 to vector<16x128xf32>
    %88 = arith.mulf %87, %86 : vector<16x128xf32>
    %89 = arith.mulf %76, %88 : vector<16x128xf32>
    %90 = arith.truncf %89 : vector<16x128xf32> to vector<16x128xbf16>
    %c0_36 = arith.constant 0 : index
    %c0_37 = arith.constant 0 : index
    %91 = vector.load %arg14[%c0_36, %c0_37] : memref<128x32xbf16, #tpu.memory_space<vmem>>, vector<128x32xbf16>
    %cst_38 = arith.constant dense<0.000000e+00> : vector<16x32xf32>
    %92 = tpu.matmul %90, %91, %cst_38 {dimension_numbers = #tpu.dot_dimension_numbers<[1], [0], [0], [1], [0, 0, 1, 1], [], []>} : vector<16x128xbf16>, vector<128x32xbf16>, vector<16x32xf32> -> vector<16x32xf32>
    %c0_39 = arith.constant 0 : index
    %c0_40 = arith.constant 0 : index
    %93 = vector.load %arg15[%c0_39, %c0_40] : memref<1x32xf32, #tpu.memory_space<vmem>>, vector<1x32xf32>
    %94 = vector.broadcast %93 : vector<1x32xf32> to vector<16x32xf32>
    %95 = arith.addf %92, %94 : vector<16x32xf32>
    %96 = arith.addf %48, %95 : vector<16x32xf32>
    %c0_41 = arith.constant 0 : index
    %c0_42 = arith.constant 0 : index
    %c0_43 = arith.constant 0 : index
    %97 = vector.load %arg16[%c0_41, %c0_42, %c0_43] : memref<1x16x32xf32, #tpu.memory_space<vmem>>, vector<1x16x32xf32>
    %98 = vector.shape_cast %97 : vector<1x16x32xf32> to vector<16x32xf32>
    %99 = vector.shape_cast %96 : vector<16x32xf32> to vector<1x16x32xf32>
    tpu.vector_store %arg16[%c0_41, %c0_42, %c0_43], %99 {strides = array<i32>} : memref<1x16x32xf32, #tpu.memory_space<vmem>>, vector<1x16x32xf32>,
    return
  }
  func.func @transform_0(%arg0: i32, %arg1: i32) -> (i32, i32, i32) {
    %c0_i32 = arith.constant 0 : i32
    %c0_i32_0 = arith.constant 0 : i32
    %c0_i32_1 = arith.constant 0 : i32
    return %arg0, %c0_i32, %c0_i32_0 : i32, i32, i32
  }
  func.func @transform_1(%arg0: i32, %arg1: i32) -> (i32, i32) {
    %c0_i32 = arith.constant 0 : i32
    %c0_i32_0 = arith.constant 0 : i32
    %c0_i32_1 = arith.constant 0 : i32
    return %c0_i32, %c0_i32_0 : i32, i32
  }
  func.func @transform_2(%arg0: i32, %arg1: i32) -> (i32, i32) {
    %c0_i32 = arith.constant 0 : i32
    %c0_i32_0 = arith.constant 0 : i32
    %c0_i32_1 = arith.constant 0 : i32
    return %c0_i32, %c0_i32_0 : i32, i32
  }
  func.func @transform_3(%arg0: i32, %arg1: i32) -> (i32, i32, i32) {
    %c0_i32 = arith.constant 0 : i32
    %c0_i32_0 = arith.constant 0 : i32
    %c0_i32_1 = arith.constant 0 : i32
    %c0_i32_2 = arith.constant 0 : i32
    return %c0_i32, %c0_i32_0, %c0_i32_1 : i32, i32, i32
  }
  func.func @transform_4(%arg0: i32, %arg1: i32) -> (i32, i32, i32) {
    %c0_i32 = arith.constant 0 : i32
    %c0_i32_0 = arith.constant 0 : i32
    %c0_i32_1 = arith.constant 0 : i32
    %c0_i32_2 = arith.constant 0 : i32
    return %c0_i32, %c0_i32_0, %c0_i32_1 : i32, i32, i32
  }
  func.func @transform_5(%arg0: i32, %arg1: i32) -> (i32, i32, i32) {
    %c0_i32 = arith.constant 0 : i32
    %c0_i32_0 = arith.constant 0 : i32
    %c0_i32_1 = arith.constant 0 : i32
    %c0_i32_2 = arith.constant 0 : i32
    return %c0_i32, %c0_i32_0, %c0_i32_1 : i32, i32, i32
  }
  func.func @transform_6(%arg0: i32, %arg1: i32) -> (i32, i32) {
    %c0_i32 = arith.constant 0 : i32
    %c0_i32_0 = arith.constant 0 : i32
    %c0_i32_1 = arith.constant 0 : i32
    return %c0_i32, %c0_i32_0 : i32, i32
  }
  func.func @transform_7(%arg0: i32, %arg1: i32) -> (i32, i32) {
    %c0_i32 = arith.constant 0 : i32
    %c0_i32_0 = arith.constant 0 : i32
    %c0_i32_1 = arith.constant 0 : i32
    return %c0_i32, %c0_i32_0 : i32, i32
  }
  func.func @transform_8(%arg0: i32, %arg1: i32) -> (i32, i32) {
    %c0_i32 = arith.constant 0 : i32
    %c0_i32_0 = arith.constant 0 : i32
    %c0_i32_1 = arith.constant 0 : i32
    return %c0_i32, %c0_i32_0 : i32, i32
  }
  func.func @transform_9(%arg0: i32, %arg1: i32) -> (i32, i32) {
    %c0_i32 = arith.constant 0 : i32
    %c0_i32_0 = arith.constant 0 : i32
    %c0_i32_1 = arith.constant 0 : i32
    return %c0_i32, %c0_i32_0 : i32, i32
  }
  func.func @transform_10(%arg0: i32, %arg1: i32) -> (i32, i32) {
    %c0_i32 = arith.constant 0 : i32
    %c0_i32_0 = arith.constant 0 : i32
    %c0_i32_1 = arith.constant 0 : i32
    return %c0_i32, %c0_i32_0 : i32, i32
  }
  func.func @transform_11(%arg0: i32, %arg1: i32) -> (i32, i32) {
    %c0_i32 = arith.constant 0 : i32
    %c0_i32_0 = arith.constant 0 : i32
    %c0_i32_1 = arith.constant 0 : i32
    return %c0_i32, %c0_i32_0 : i32, i32
  }
  func.func @transform_12(%arg0: i32, %arg1: i32) -> (i32, i32) {
    %c0_i32 = arith.constant 0 : i32
    %c0_i32_0 = arith.constant 0 : i32
    %c0_i32_1 = arith.constant 0 : i32
    return %c0_i32, %c0_i32_0 : i32, i32
  }
  func.func @transform_13(%arg0: i32, %arg1: i32) -> (i32, i32) {
    %c0_i32 = arith.constant 0 : i32
    %c0_i32_0 = arith.constant 0 : i32
    %c0_i32_1 = arith.constant 0 : i32
    return %c0_i32, %c0_i32_0 : i32, i32
  }
  func.func @transform_14(%arg0: i32, %arg1: i32) -> (i32, i32, i32) {
    %c0_i32 = arith.constant 0 : i32
    %c0_i32_0 = arith.constant 0 : i32
    return %arg0, %arg1, %c0_i32 : i32, i32, i32
  }
}

</mosaic_0001>

<llo_original>
// kernel: tpu_custom_call.1
$region0: #{tpu_custom_call.1}
  #allocation0 [shape = 'u32[]', space=smem, size = 0x4, offset = 0x4, fixed_abs, tag = 'smem constant byte address 0x4 - core index']
  #allocation1 [shape = 'u32[144,128]{1,0:T(1,128)}', space=vmem, size = 0x12000, scoped, tag = 'internal scratch']
  #allocation2 [shape = 'bf16[8,16,4]{2,1,0:T(8,128)(2,1)}', space=vmem, size = 0x8000, scoped, tag = 'scratch operand']
  #allocation3 [shape = 'bf16[8,16,4]{2,1,0:T(8,128)(2,1)}', space=vmem, size = 0x8000, scoped, tag = 'scratch operand']
  #allocation4 [shape = 'bf16[8,16,4]{2,1,0:T(8,128)(2,1)}', space=vmem, size = 0x8000, scoped, tag = 'scratch operand']
  %s0 = inlined_call_operand.vmem [shape: f32[2,16,32], index: 0, kind: input, shape index: {}]
  %s1 = inlined_call_operand.vmem [shape: f32[1,32], index: 1, kind: input, shape index: {}]
  %s2 = inlined_call_operand.vmem [shape: f32[1,32], index: 2, kind: input, shape index: {}]
  %s3 = inlined_call_operand.vmem [shape: bf16[8,32,4], index: 3, kind: input, shape index: {}]
  %s4 = inlined_call_operand.vmem [shape: bf16[8,32,4], index: 4, kind: input, shape index: {}]
  %s5 = inlined_call_operand.vmem [shape: bf16[8,32,4], index: 5, kind: input, shape index: {}]
  %s6 = inlined_call_operand.vmem [shape: bf16[32,32], index: 6, kind: input, shape index: {}]
  %s7 = inlined_call_operand.vmem [shape: f32[1,32], index: 7, kind: input, shape index: {}]
  %s8 = inlined_call_operand.vmem [shape: f32[1,32], index: 8, kind: input, shape index: {}]
  %s9 = inlined_call_operand.vmem [shape: f32[1,32], index: 9, kind: input, shape index: {}]
  %s10 = inlined_call_operand.vmem [shape: bf16[32,128], index: 10, kind: input, shape index: {}]
  %s11 = inlined_call_operand.vmem [shape: f32[1,128], index: 11, kind: input, shape index: {}]
  %s12 = inlined_call_operand.vmem [shape: bf16[128,32], index: 12, kind: input, shape index: {}]
  %s13 = inlined_call_operand.vmem [shape: f32[1,32], index: 13, kind: input, shape index: {}]
  %s14 = inlined_call_operand.hbm [shape: f32[2,16,32], index: 14, kind: output, shape index: {}]
  %s15 = sld [smem:[#allocation0]]
  $region93: #{tpu_custom_call.1} parent=0
    _
  %s17 = ssub.s32 1, %s15
  %s18 = scalar_select 0, %s17, %s15
  $region1: #{tpu_custom_call.1} parent=0
    #allocation5 [shape = 'u8[16384]{0}', space=vmem, size = 0x4000, scoped, tag = 'output window, operand 0']
    #allocation6 [shape = 's32[2]{0}', space=sflag, size = 0x8, scoped, tag = 'scoped memory for tpu_custom_call.1']
    %19 = vsyncpa [#allocation6], 0
    %s20 = scalar_lea.sflag [#allocation6], 1
    %21 = vsyncpa %s20, 0
    loop: start=0, step=1, limit=4
    $region2: #{tpu_custom_call.1} parent=1 // loop_pre_header
      _
    $region3: #{tpu_custom_call.1} parent=1 // loop_header
      %s23 = sphi 0, %s27
      %p24 = scmp.ge.s32.totalorder %s23, 4
      %s30 = sphi 0, %s42
      %s31 = sphi 0, %s38
      %s32 = sphi 0, %s30
      %s33 = sphi 0, %s31
      %s34 = sphi 0, %s32
      %s35 = sphi 0, %s33
      %s45 = sphi 0, %s47
      %s48 = sphi 0, %s45
      %s49 = sphi 0, %s48
      %s65 = sphi 0, %s49
      %s69 = sphi 0, %s69
      %s71 = sphi 0, %s69
      %s72 = sphi 0, %s71
      %s86 = sphi 0, %s72
      %s90 = sphi 0, %s90
      %s92 = sphi 0, %s90
      %s93 = sphi 0, %s92
      %s107 = sphi 0, %s93
      %s111 = sphi 0, %s111
      %s113 = sphi 0, %s111
      %s114 = sphi 0, %s113
      %s128 = sphi 0, %s114
      %s132 = sphi 0, %s132
      %s134 = sphi 0, %s132
      %s135 = sphi 0, %s134
      %s149 = sphi 0, %s135
      %s153 = sphi 0, %s153
      %s155 = sphi 0, %s153
      %s156 = sphi 0, %s155
      %s170 = sphi 0, %s156
      %s174 = sphi 0, %s174
      %s176 = sphi 0, %s174
      %s177 = sphi 0, %s176
      %s191 = sphi 0, %s177
      %s195 = sphi 0, %s195
      %s197 = sphi 0, %s195
      %s198 = sphi 0, %s197
      %s212 = sphi 0, %s198
      %s216 = sphi 0, %s216
      %s218 = sphi 0, %s216
      %s219 = sphi 0, %s218
      %s233 = sphi 0, %s219
      %s237 = sphi 0, %s237
      %s239 = sphi 0, %s237
      %s240 = sphi 0, %s239
      %s254 = sphi 0, %s240
      %s258 = sphi 0, %s258
      %s260 = sphi 0, %s258
      %s261 = sphi 0, %s260
      %s275 = sphi 0, %s261
      %s279 = sphi 0, %s279
      %s281 = sphi 0, %s279
      %s282 = sphi 0, %s281
      %s296 = sphi 0, %s282
      %s300 = sphi 0, %s300
      %s302 = sphi 0, %s300
      %s303 = sphi 0, %s302
      %s317 = sphi 0, %s303
      %s321 = sphi 0, %s321
      %s323 = sphi 0, %s321
      %s324 = sphi 0, %s323
      %s338 = sphi 0, %s324
      %s346 = sphi 0, %s348
      %s349 = sphi 0, %s346
      %s350 = sphi 0, %s349
      %s366 = sphi 0, %s350
    $region4: #{tpu_custom_call.1} parent=1 // loop_header_branch
      %26 = sbr.rel (%p24) target = $region8
    $region5: #{tpu_custom_call.1} parent=1 // loop_body
      %s28 = ssub.s32 %s23, 1
      %s29 = ssub.s32 %s23, 2
      %s36 = sadd.s32 1, %s31
      %p37 = scmp.ge.s32.totalorder %s36, 1
      %s38 = scalar_select %p37, 0, %s36
      %s39 = sadd.s32 1, %s30
      %s40 = scalar_select %p37, %s39, %s30
      %p41 = scmp.ge.s32.totalorder %s40, 2
      %s42 = scalar_select %p41, 0, %s40
      %s43 = ssub.s32 %s30, %s42
      %p44 = scmp.eq.s32.totalorder %s43, 0
      %s46 = sadd.s32 %s45, 1
      %s47 = scalar_select %p44, %s45, %s46
      %p50 = pneg %p44
      %p51 = scmp.eq.s32.totalorder %s23, 1
      %p52 = por %p50, %p51
      %p53 = scmp.ne.s32.totalorder %s45, %s48
      %p54 = scmp.eq.s32.totalorder %s23, 0
      %p55 = por %p53, %p54
      %p56 = scmp.ne.s32.totalorder %s45, %s48
      %p57 = scmp.eq.s32.totalorder %s28, 1
      %p58 = por %p56, %p57
      %p59 = scmp.ne.s32.totalorder %s48, %s49
      %p60 = scmp.eq.s32.totalorder %s28, 0
      %p61 = por %p59, %p60
      %p62 = scmp.ne.s32.totalorder %s48, %s49
      %p63 = scmp.eq.s32.totalorder %s29, 1
      %p64 = por %p62, %p63
      %p66 = scmp.ne.s32.totalorder %s49, %s65
      %p67 = scmp.eq.s32.totalorder %s29, 0
      %p68 = por %p66, %p67
      %s70 = sadd.s32 %s69, 1
      %p73 = scmp.eq.s32.totalorder %s23, 1
      %p74 = scmp.ne.s32.totalorder %s69, %s71
      %p75 = scmp.eq.s32.totalorder %s23, 0
      %p76 = por %p74, %p75
      %p77 = scmp.ne.s32.totalorder %s69, %s71
      %p78 = scmp.eq.s32.totalorder %s28, 1
      %p79 = por %p77, %p78
      %p80 = scmp.ne.s32.totalorder %s71, %s72
      %p81 = scmp.eq.s32.totalorder %s28, 0
      %p82 = por %p80, %p81
      %p83 = scmp.ne.s32.totalorder %s71, %s72
      %p84 = scmp.eq.s32.totalorder %s29, 1
      %p85 = por %p83, %p84
      %p87 = scmp.ne.s32.totalorder %s72, %s86
      %p88 = scmp.eq.s32.totalorder %s29, 0
      %p89 = por %p87, %p88
      %s91 = sadd.s32 %s90, 1
      %p94 = scmp.eq.s32.totalorder %s23, 1
      %p95 = scmp.ne.s32.totalorder %s90, %s92
      %p96 = scmp.eq.s32.totalorder %s23, 0
      %p97 = por %p95, %p96
      %p98 = scmp.ne.s32.totalorder %s90, %s92
      %p99 = scmp.eq.s32.totalorder %s28, 1
      %p100 = por %p98, %p99
      %p101 = scmp.ne.s32.totalorder %s92, %s93
      %p102 = scmp.eq.s32.totalorder %s28, 0
      %p103 = por %p101, %p102
      %p104 = scmp.ne.s32.totalorder %s92, %s93
      %p105 = scmp.eq.s32.totalorder %s29, 1
      %p106 = por %p104, %p105
      %p108 = scmp.ne.s32.totalorder %s93, %s107
      %p109 = scmp.eq.s32.totalorder %s29, 0
      %p110 = por %p108, %p109
      %s112 = sadd.s32 %s111, 1
      %p115 = scmp.eq.s32.totalorder %s23, 1
      %p116 = scmp.ne.s32.totalorder %s111, %s113
      %p117 = scmp.eq.s32.totalorder %s23, 0
      %p118 = por %p116, %p117
      %p119 = scmp.ne.s32.totalorder %s111, %s113
      %p120 = scmp.eq.s32.totalorder %s28, 1
      %p121 = por %p119, %p120
      %p122 = scmp.ne.s32.totalorder %s113, %s114
      %p123 = scmp.eq.s32.totalorder %s28, 0
      %p124 = por %p122, %p123
      %p125 = scmp.ne.s32.totalorder %s113, %s114
      %p126 = scmp.eq.s32.totalorder %s29, 1
      %p127 = por %p125, %p126
      %p129 = scmp.ne.s32.totalorder %s114, %s128
      %p130 = scmp.eq.s32.totalorder %s29, 0
      %p131 = por %p129, %p130
      %s133 = sadd.s32 %s132, 1
      %p136 = scmp.eq.s32.totalorder %s23, 1
      %p137 = scmp.ne.s32.totalorder %s132, %s134
      %p138 = scmp.eq.s32.totalorder %s23, 0
      %p139 = por %p137, %p138
      %p140 = scmp.ne.s32.totalorder %s132, %s134
      %p141 = scmp.eq.s32.totalorder %s28, 1
      %p142 = por %p140, %p141
      %p143 = scmp.ne.s32.totalorder %s134, %s135
      %p144 = scmp.eq.s32.totalorder %s28, 0
      %p145 = por %p143, %p144
      %p146 = scmp.ne.s32.totalorder %s134, %s135
      %p147 = scmp.eq.s32.totalorder %s29, 1
      %p148 = por %p146, %p147
      %p150 = scmp.ne.s32.totalorder %s135, %s149
      %p151 = scmp.eq.s32.totalorder %s29, 0
      %p152 = por %p150, %p151
      %s154 = sadd.s32 %s153, 1
      %p157 = scmp.eq.s32.totalorder %s23, 1
      %p158 = scmp.ne.s32.totalorder %s153, %s155
      %p159 = scmp.eq.s32.totalorder %s23, 0
      %p160 = por %p158, %p159
      %p161 = scmp.ne.s32.totalorder %s153, %s155
      %p162 = scmp.eq.s32.totalorder %s28, 1
      %p163 = por %p161, %p162
      %p164 = scmp.ne.s32.totalorder %s155, %s156
      %p165 = scmp.eq.s32.totalorder %s28, 0
      %p166 = por %p164, %p165
      %p167 = scmp.ne.s32.totalorder %s155, %s156
      %p168 = scmp.eq.s32.totalorder %s29, 1
      %p169 = por %p167, %p168
      %p171 = scmp.ne.s32.totalorder %s156, %s170
      %p172 = scmp.eq.s32.totalorder %s29, 0
      %p173 = por %p171, %p172
      %s175 = sadd.s32 %s174, 1
      %p178 = scmp.eq.s32.totalorder %s23, 1
      %p179 = scmp.ne.s32.totalorder %s174, %s176
      %p180 = scmp.eq.s32.totalorder %s23, 0
      %p181 = por %p179, %p180
      %p182 = scmp.ne.s32.totalorder %s174, %s176
      %p183 = scmp.eq.s32.totalorder %s28, 1
      %p184 = por %p182, %p183
      %p185 = scmp.ne.s32.totalorder %s176, %s177
      %p186 = scmp.eq.s32.totalorder %s28, 0
      %p187 = por %p185, %p186
      %p188 = scmp.ne.s32.totalorder %s176, %s177
      %p189 = scmp.eq.s32.totalorder %s29, 1
      %p190 = por %p188, %p189
      %p192 = scmp.ne.s32.totalorder %s177, %s191
      %p193 = scmp.eq.s32.totalorder %s29, 0
      %p194 = por %p192, %p193
      %s196 = sadd.s32 %s195, 1
      %p199 = scmp.eq.s32.totalorder %s23, 1
      %p200 = scmp.ne.s32.totalorder %s195, %s197
      %p201 = scmp.eq.s32.totalorder %s23, 0
      %p202 = por %p200, %p201
      %p203 = scmp.ne.s32.totalorder %s195, %s197
      %p204 = scmp.eq.s32.totalorder %s28, 1
      %p205 = por %p203, %p204
      %p206 = scmp.ne.s32.totalorder %s197, %s198
      %p207 = scmp.eq.s32.totalorder %s28, 0
      %p208 = por %p206, %p207
      %p209 = scmp.ne.s32.totalorder %s197, %s198
      %p210 = scmp.eq.s32.totalorder %s29, 1
      %p211 = por %p209, %p210
      %p213 = scmp.ne.s32.totalorder %s198, %s212
      %p214 = scmp.eq.s32.totalorder %s29, 0
      %p215 = por %p213, %p214
      %s217 = sadd.s32 %s216, 1
      %p220 = scmp.eq.s32.totalorder %s23, 1
      %p221 = scmp.ne.s32.totalorder %s216, %s218
      %p222 = scmp.eq.s32.totalorder %s23, 0
      %p223 = por %p221, %p222
      %p224 = scmp.ne.s32.totalorder %s216, %s218
      %p225 = scmp.eq.s32.totalorder %s28, 1
      %p226 = por %p224, %p225
      %p227 = scmp.ne.s32.totalorder %s218, %s219
      %p228 = scmp.eq.s32.totalorder %s28, 0
      %p229 = por %p227, %p228
      %p230 = scmp.ne.s32.totalorder %s218, %s219
      %p231 = scmp.eq.s32.totalorder %s29, 1
      %p232 = por %p230, %p231
      %p234 = scmp.ne.s32.totalorder %s219, %s233
      %p235 = scmp.eq.s32.totalorder %s29, 0
      %p236 = por %p234, %p235
      %s238 = sadd.s32 %s237, 1
      %p241 = scmp.eq.s32.totalorder %s23, 1
      %p242 = scmp.ne.s32.totalorder %s237, %s239
      %p243 = scmp.eq.s32.totalorder %s23, 0
      %p244 = por %p242, %p243
      %p245 = scmp.ne.s32.totalorder %s237, %s239
      %p246 = scmp.eq.s32.totalorder %s28, 1
      %p247 = por %p245, %p246
      %p248 = scmp.ne.s32.totalorder %s239, %s240
      %p249 = scmp.eq.s32.totalorder %s28, 0
      %p250 = por %p248, %p249
      %p251 = scmp.ne.s32.totalorder %s239, %s240
      %p252 = scmp.eq.s32.totalorder %s29, 1
      %p253 = por %p251, %p252
      %p255 = scmp.ne.s32.totalorder %s240, %s254
      %p256 = scmp.eq.s32.totalorder %s29, 0
      %p257 = por %p255, %p256
      %s259 = sadd.s32 %s258, 1
      %p262 = scmp.eq.s32.totalorder %s23, 1
      %p263 = scmp.ne.s32.totalorder %s258, %s260
      %p264 = scmp.eq.s32.totalorder %s23, 0
      %p265 = por %p263, %p264
      %p266 = scmp.ne.s32.totalorder %s258, %s260
      %p267 = scmp.eq.s32.totalorder %s28, 1
      %p268 = por %p266, %p267
      %p269 = scmp.ne.s32.totalorder %s260, %s261
      %p270 = scmp.eq.s32.totalorder %s28, 0
      %p271 = por %p269, %p270
      %p272 = scmp.ne.s32.totalorder %s260, %s261
      %p273 = scmp.eq.s32.totalorder %s29, 1
      %p274 = por %p272, %p273
      %p276 = scmp.ne.s32.totalorder %s261, %s275
      %p277 = scmp.eq.s32.totalorder %s29, 0
      %p278 = por %p276, %p277
      %s280 = sadd.s32 %s279, 1
      %p283 = scmp.eq.s32.totalorder %s23, 1
      %p284 = scmp.ne.s32.totalorder %s279, %s281
      %p285 = scmp.eq.s32.totalorder %s23, 0
      %p286 = por %p284, %p285
      %p287 = scmp.ne.s32.totalorder %s279, %s281
      %p288 = scmp.eq.s32.totalorder %s28, 1
      %p289 = por %p287, %p288
      %p290 = scmp.ne.s32.totalorder %s281, %s282
      %p291 = scmp.eq.s32.totalorder %s28, 0
      %p292 = por %p290, %p291
      %p293 = scmp.ne.s32.totalorder %s281, %s282
      %p294 = scmp.eq.s32.totalorder %s29, 1
      %p295 = por %p293, %p294
      %p297 = scmp.ne.s32.totalorder %s282, %s296
      %p298 = scmp.eq.s32.totalorder %s29, 0
      %p299 = por %p297, %p298
      %s301 = sadd.s32 %s300, 1
      %p304 = scmp.eq.s32.totalorder %s23, 1
      %p305 = scmp.ne.s32.totalorder %s300, %s302
      %p306 = scmp.eq.s32.totalorder %s23, 0
      %p307 = por %p305, %p306
      %p308 = scmp.ne.s32.totalorder %s300, %s302
      %p309 = scmp.eq.s32.totalorder %s28, 1
      %p310 = por %p308, %p309
      %p311 = scmp.ne.s32.totalorder %s302, %s303
      %p312 = scmp.eq.s32.totalorder %s28, 0
      %p313 = por %p311, %p312
      %p314 = scmp.ne.s32.totalorder %s302, %s303
      %p315 = scmp.eq.s32.totalorder %s29, 1
      %p316 = por %p314, %p315
      %p318 = scmp.ne.s32.totalorder %s303, %s317
      %p319 = scmp.eq.s32.totalorder %s29, 0
      %p320 = por %p318, %p319
      %s322 = sadd.s32 %s321, 1
      %p325 = scmp.eq.s32.totalorder %s23, 1
      %p326 = scmp.ne.s32.totalorder %s321, %s323
      %p327 = scmp.eq.s32.totalorder %s23, 0
      %p328 = por %p326, %p327
      %p329 = scmp.ne.s32.totalorder %s321, %s323
      %p330 = scmp.eq.s32.totalorder %s28, 1
      %p331 = por %p329, %p330
      %p332 = scmp.ne.s32.totalorder %s323, %s324
      %p333 = scmp.eq.s32.totalorder %s28, 0
      %p334 = por %p332, %p333
      %p335 = scmp.ne.s32.totalorder %s323, %s324
      %p336 = scmp.eq.s32.totalorder %s29, 1
      %p337 = por %p335, %p336
      %p339 = scmp.ne.s32.totalorder %s324, %s338
      %p340 = scmp.eq.s32.totalorder %s29, 0
      %p341 = por %p339, %p340
      %s342 = ssub.s32 %s30, %s42
      %s343 = ssub.s32 %s31, %s38
      %s344 = sor.u32 %s342, %s343
      %p345 = scmp.eq.s32.totalorder %s344, 0
      %s347 = sadd.s32 %s346, 1
      %s348 = scalar_select %p345, %s346, %s347
      %p351 = pneg %p345
      %p352 = scmp.eq.s32.totalorder %s23, 1
      %p353 = por %p351, %p352
      %p354 = scmp.ne.s32.totalorder %s346, %s349
      %p355 = scmp.eq.s32.totalorder %s23, 0
      %p356 = por %p354, %p355
      %p357 = scmp.ne.s32.totalorder %s346, %s349
      %p358 = scmp.eq.s32.totalorder %s28, 1
      %p359 = por %p357, %p358
      %p360 = scmp.ne.s32.totalorder %s349, %s350
      %p361 = scmp.eq.s32.totalorder %s28, 0
      %p362 = por %p360, %p361
      %p363 = scmp.ne.s32.totalorder %s349, %s350
      %p364 = scmp.eq.s32.totalorder %s29, 1
      %p365 = por %p363, %p364
      %p367 = scmp.ne.s32.totalorder %s350, %s366
      %p368 = scmp.eq.s32.totalorder %s29, 0
      %p369 = por %p367, %p368
      %p370 = scmp.le.s32.totalorder 1, %s23
      %p371 = scmp.lt.s32.totalorder %s23, 3
      %p372 = pnand %p370, %p371
      %p373 = pneg %p372
      // Predicated region
      $region9: #{tpu_custom_call.1} parent=5 // pred_check
        _
      $region10: #{tpu_custom_call.1} parent=5 // pred_check_branch
        %375 = sbr.rel (%p372) target = $region12
      $region11: #{tpu_custom_call.1} parent=5 // pred_region
        %s376 = ssub.s32 %s23, 1
        // Predicated region
        $region13: #{tpu_custom_call.1} parent=11 // pred_check
          %p377 = pneg %p82
        $region14: #{tpu_custom_call.1} parent=11 // pred_check_branch
          %379 = sbr.rel (%p377) target = $region16
        $region15: #{tpu_custom_call.1} parent=11 // pred_region
          _
        $region16: #{tpu_custom_call.1} parent=11 // pred_fallthru
          _
        // Predicated region
        $region17: #{tpu_custom_call.1} parent=11 // pred_check
          %p380 = pneg %p103
        $region18: #{tpu_custom_call.1} parent=11 // pred_check_branch
          %382 = sbr.rel (%p380) target = $region20
        $region19: #{tpu_custom_call.1} parent=11 // pred_region
          _
        $region20: #{tpu_custom_call.1} parent=11 // pred_fallthru
          _
        // Predicated region
        $region21: #{tpu_custom_call.1} parent=11 // pred_check
          %p383 = pneg %p124
        $region22: #{tpu_custom_call.1} parent=11 // pred_check_branch
          %385 = sbr.rel (%p383) target = $region24
        $region23: #{tpu_custom_call.1} parent=11 // pred_region
          _
        $region24: #{tpu_custom_call.1} parent=11 // pred_fallthru
          _
        // Predicated region
        $region25: #{tpu_custom_call.1} parent=11 // pred_check
          %p386 = pneg %p145
        $region26: #{tpu_custom_call.1} parent=11 // pred_check_branch
          %388 = sbr.rel (%p386) target = $region28
        $region27: #{tpu_custom_call.1} parent=11 // pred_region
          _
        $region28: #{tpu_custom_call.1} parent=11 // pred_fallthru
          _
        // Predicated region
        $region29: #{tpu_custom_call.1} parent=11 // pred_check
          %p389 = pneg %p166
        $region30: #{tpu_custom_call.1} parent=11 // pred_check_branch
          %391 = sbr.rel (%p389) target = $region32
        $region31: #{tpu_custom_call.1} parent=11 // pred_region
          _
        $region32: #{tpu_custom_call.1} parent=11 // pred_fallthru
          _
        // Predicated region
        $region33: #{tpu_custom_call.1} parent=11 // pred_check
          %p392 = pneg %p187
        $region34: #{tpu_custom_call.1} parent=11 // pred_check_branch
          %394 = sbr.rel (%p392) target = $region36
        $region35: #{tpu_custom_call.1} parent=11 // pred_region
          _
        $region36: #{tpu_custom_call.1} parent=11 // pred_fallthru
          _
        // Predicated region
        $region37: #{tpu_custom_call.1} parent=11 // pred_check
          %p395 = pneg %p208
        $region38: #{tpu_custom_call.1} parent=11 // pred_check_branch
          %397 = sbr.rel (%p395) target = $region40
        $region39: #{tpu_custom_call.1} parent=11 // pred_region
          _
        $region40: #{tpu_custom_call.1} parent=11 // pred_fallthru
          _
        // Predicated region
        $region41: #{tpu_custom_call.1} parent=11 // pred_check
          %p398 = pneg %p229
        $region42: #{tpu_custom_call.1} parent=11 // pred_check_branch
          %400 = sbr.rel (%p398) target = $region44
        $region43: #{tpu_custom_call.1} parent=11 // pred_region
          _
        $region44: #{tpu_custom_call.1} parent=11 // pred_fallthru
          _
        // Predicated region
        $region45: #{tpu_custom_call.1} parent=11 // pred_check
          %p401 = pneg %p250
        $region46: #{tpu_custom_call.1} parent=11 // pred_check_branch
          %403 = sbr.rel (%p401) target = $region48
        $region47: #{tpu_custom_call.1} parent=11 // pred_region
          _
        $region48: #{tpu_custom_call.1} parent=11 // pred_fallthru
          _
        // Predicated region
        $region49: #{tpu_custom_call.1} parent=11 // pred_check
          %p404 = pneg %p271
        $region50: #{tpu_custom_call.1} parent=11 // pred_check_branch
          %406 = sbr.rel (%p404) target = $region52
        $region51: #{tpu_custom_call.1} parent=11 // pred_region
          _
        $region52: #{tpu_custom_call.1} parent=11 // pred_fallthru
          _
        // Predicated region
        $region53: #{tpu_custom_call.1} parent=11 // pred_check
          %p407 = pneg %p292
        $region54: #{tpu_custom_call.1} parent=11 // pred_check_branch
          %409 = sbr.rel (%p407) target = $region56
        $region55: #{tpu_custom_call.1} parent=11 // pred_region
          _
        $region56: #{tpu_custom_call.1} parent=11 // pred_fallthru
          _
        // Predicated region
        $region57: #{tpu_custom_call.1} parent=11 // pred_check
          %p410 = pneg %p313
        $region58: #{tpu_custom_call.1} parent=11 // pred_check_branch
          %412 = sbr.rel (%p410) target = $region60
        $region59: #{tpu_custom_call.1} parent=11 // pred_region
          _
        $region60: #{tpu_custom_call.1} parent=11 // pred_fallthru
          _
        // Predicated region
        $region61: #{tpu_custom_call.1} parent=11 // pred_check
          %p413 = pneg %p334
        $region62: #{tpu_custom_call.1} parent=11 // pred_check_branch
          %415 = sbr.rel (%p413) target = $region64
        $region63: #{tpu_custom_call.1} parent=11 // pred_region
          _
        $region64: #{tpu_custom_call.1} parent=11 // pred_fallthru
          _
      $region12: #{tpu_custom_call.1} parent=5 // pred_fallthru
        _
      %p416 = scmp.lt.s32.totalorder %s23, 2
      // Predicated region
      $region65: #{tpu_custom_call.1} parent=5 // pred_check
        %p417 = pneg %p416
      $region66: #{tpu_custom_call.1} parent=5 // pred_check_branch
        %419 = sbr.rel (%p417) target = $region68
      $region67: #{tpu_custom_call.1} parent=5 // pred_region
        // Predicated region
        $region69: #{tpu_custom_call.1} parent=67 // pred_check
          %p420 = pneg %p55
        $region70: #{tpu_custom_call.1} parent=67 // pred_check_branch
          %422 = sbr.rel (%p420) target = $region72
        $region71: #{tpu_custom_call.1} parent=67 // pred_region
          %p423 = scmp.lt.s32.totalorder %s30, 1
          %s424 = scalar_select %p423, %s30, 1
          %s425 = smul.addr %s424, 2
          %s426 = smul.addr %s425, 8
          %s427 = scalar_lea.vmem %s0, %s426
        $region72: #{tpu_custom_call.1} parent=67 // pred_fallthru
          _
      $region68: #{tpu_custom_call.1} parent=5 // pred_fallthru
        _
      %p428 = scmp.le.s32.totalorder 1, %s23
      %p429 = scmp.lt.s32.totalorder %s23, 3
      %p430 = pnand %p428, %p429
      %p431 = pneg %p430
      // Predicated region
      $region73: #{tpu_custom_call.1} parent=5 // pred_check
        _
      $region74: #{tpu_custom_call.1} parent=5 // pred_check_branch
        %433 = sbr.rel (%p430) target = $region76
      $region75: #{tpu_custom_call.1} parent=5 // pred_region
        %s434 = ssub.s32 %s23, 1
        %p435 = scmp.lt.s32.totalorder %s32, 1
        %s436 = scalar_select %p435, %s32, 1
        %s437 = smul.addr %s436, 2
        %s438 = smul.addr %s437, 8
        %s439 = scalar_lea.vmem %s0, %s438
        %p440 = pneg %p61
        %p441 = pneg %p58
        %p442 = pneg %p82
        %p443 = pneg %p79
        %p444 = pneg %p103
        %p445 = pneg %p100
        %p446 = pneg %p124
        %p447 = pneg %p121
        %p448 = pneg %p145
        %p449 = pneg %p142
        %p450 = pneg %p166
        %p451 = pneg %p163
        %p452 = pneg %p187
        %p453 = pneg %p184
        %p454 = pneg %p208
        %p455 = pneg %p205
        %p456 = pneg %p229
        %p457 = pneg %p226
        %p458 = pneg %p250
        %p459 = pneg %p247
        %p460 = pneg %p271
        %p461 = pneg %p268
        %p462 = pneg %p292
        %p463 = pneg %p289
        %p464 = pneg %p313
        %p465 = pneg %p310
        %p466 = pneg %p334
        %p467 = pneg %p331
        %p468 = pneg %p362
        %p469 = pneg %p359
        %s470 = sand.u32 %s349, 1
        %s471 = scalar_lea.sflag [#allocation6], %s470
        %s472 = sand.u32 %s349, 1
        %s473 = smul.addr %s472, 16
        %s474 = scalar_lea.vmem [#allocation5], %s473
        %p475 = scmp.lt.s32.totalorder %s32, 1
        %s476 = scalar_select %p475, %s32, 1
        %s477 = smul.addr %s476, 2
        %s478 = smul.addr %s477, 8
        %s479 = scalar_lea.vmem %s0, %s478
        %s480 = smul.u32 2, %s33
        %s482 = smul.u32 %s33, 16
        %p483 = scmp.eq.s32.totalorder %s33, 0
        // Predicated region
        $region77: #{tpu_custom_call.1} parent=75 // pred_check
          %p484 = pneg %p483
        $region78: #{tpu_custom_call.1} parent=75 // pred_check_branch
          %486 = sbr.rel (%p484) target = $region80
        $region79: #{tpu_custom_call.1} parent=75 // pred_region
          %v487 = vld [vmem:[%s479] sm:$0xff]
          %v488 = vld [vmem:[%s479 + $0x8] sm:$0xff]
          %v489 = vld [vmem:[%s1] sm:$0x1]
          %v490 = vld [vmem:[%s2] sm:$0x1]
          %vm491 = vcmask 261120
          %v492 = vsel %vm491, %v487, 0.0
          %493 = vadd.xlane.f32.xlu0 %v492
          %v494 = vpop.xlane.xlu0 %493
          %v495 = vsel %vm491, %v488, 0.0
          %496 = vadd.xlane.f32.xlu0 %v495
          %v497 = vpop.xlane.xlu0 %496
          %v498 = vrcp.pop 32.0
          %v499 = vmul.f32 %v494, %v498
          %v500 = vmul.f32 %v497, %v498
          %v501 = vsub.f32 %v487, %v499
          %v502 = vsub.f32 %v488, %v500
          %v503 = vmul.f32 %v501, %v501
          %v504 = vmul.f32 %v502, %v502
          %v505 = vsel %vm491, %v503, 0.0
          %506 = vadd.xlane.f32.xlu0 %v505
          %v507 = vpop.xlane.xlu0 %506
          %v508 = vsel %vm491, %v504, 0.0
          %509 = vadd.xlane.f32.xlu0 %v508
          %v510 = vpop.xlane.xlu0 %509
          %v511 = vmul.f32 %v507, %v498
          %v512 = vmul.f32 %v510, %v498
          %v513 = vadd.f32 %v511, 1e-05
          %v514 = vadd.f32 %v512, 1e-05
          %v515 = vrsqrt.pop %v513
          %v516 = vrsqrt.pop %v514
          %v517 = vmul.f32 %v501, %v515
          %v518 = vmul.f32 %v502, %v516
          %v520 = vlaneseq
          %v521 = vshrl.u32 %v520, 7
          %v522 = vsub.s32 0, %v521
          %v523 = vrot.slane %v489, %v522
          %v525 = vmul.f32 %v517, %v523
          %v526 = vmul.f32 %v518, %v523
          %v528 = vlaneseq
          %v529 = vshrl.u32 %v528, 7
          %v530 = vsub.s32 0, %v529
          %v531 = vrot.slane %v490, %v530
          %v533 = vadd.f32 %v525, %v531
          %v534 = vadd.f32 %v526, %v531
          %v535 = vpack.c.bf16 %v534, %v533
          %v536 = vld [vmem:[%s3] sm:$0xf]
          %v537 = vld [vmem:[%s3 + $0x4] sm:$0xf]
          %v538 = vld [vmem:[%s3 + $0x8] sm:$0xf]
          %v539 = vld [vmem:[%s3 + $0xc] sm:$0xf]
          %v544 = vunpack.c.l.b16 %v536
          %v545 = vunpack.c.l.b16 %v537
          %v546 = vunpack.c.l.b16 %v538
          %v547 = vunpack.c.l.b16 %v539
          %v548 = vpack.c.b16 %v545, %v544
          %v549 = vpack.c.b16 %v547, %v546
          %v553 = vsel %vm491, %v535, 0
          %555 = vmatprep.subr.bf16.mxu0 0
          %556 = vmatpush1.bf16.msra.mxu0 0
          %557 = vmatprep.subr.bf16.mxu0 0
          %558 = vmatpush1.bf16.msra.mxu0 0
          %559 = vmatprep.subr.bf16.mxu0 0
          %560 = vmatpush1.bf16.msra.mxu0 0
          %561 = vmatprep.subr.bf16.mxu0 0
          %562 = vmatpush1.bf16.msra.mxu0 0
          %563 = vmatprep.subr.bf16.mxu0 0
          %564 = vmatpush1.bf16.msra.mxu0 0
          %565 = vmatprep.subr.bf16.mxu0 0
          %566 = vmatpush1.bf16.msra.mxu0 0
          %567 = vmatprep.subr.bf16.mxu0 0
          %568 = vmatpush1.bf16.msra.mxu0 %v549
          %569 = vmatprep.subr.bf16.mxu0 0
          %570 = vmatpush1.bf16.msra.mxu0 %v548
          %571 = vmatprep.subr.bf16.mxu0 0
          %572 = vmatpush2.bf16.msra.mxu0 0
          %573 = vmatprep.subr.bf16.mxu0 0
          %574 = vmatpush2.bf16.msra.mxu0 0
          %575 = vmatprep.subr.bf16.mxu0 0
          %576 = vmatpush2.bf16.msra.mxu0 0
          %577 = vmatprep.subr.bf16.mxu0 0
          %578 = vmatpush2.bf16.msra.mxu0 0
          %579 = vmatprep.subr.bf16.mxu0 0
          %580 = vmatpush2.bf16.msra.mxu0 0
          %581 = vmatprep.subr.bf16.mxu0 0
          %582 = vmatpush2.bf16.msra.mxu0 0
          %583 = vmatprep.subr.bf16.mxu0 0
          %584 = vmatpush2.bf16.msra.mxu0 0
          %585 = vmatprep.subr.bf16.mxu0 0
          %586 = vmatpush2.bf16.msra.mxu0 0
          %587 = vmatprep.mubr.bf16.mxu0 0
          %588 = vmatmul.mubr.bf16.gmra.mxu0 %v553
          %v589 = vpop.f32.mrf.mxu0
          %v590 = vadd.f32 0.0, %v589
          %v591 = vpop.f32.mrf.mxu0
          %v592 = vpop.f32.mrf.mxu0
          %v593 = vadd.f32 0.0, %v592
          %v594 = vpop.f32.mrf.mxu0
          %595 = vdwg.mxu0
          %v596 = vpack.c.bf16 %v593, %v590
          %v598 = vunpack.c.l.b16 %v596
          %v599 = vunpack.c.h.b16 %v596
          %v600 = vpack.c.b16 %v598, %v598
          %v601 = vpack.c.b16 %v599, %v599
          %vm604 = vcmask 27648
          %605 = vst.msk [vmem:[#allocation2] sm:$0xf] %vm604, %v600
          %606 = vst.msk [vmem:[#allocation2 + $0x4] sm:$0xf] %vm604, %v601
          %v607 = vld [vmem:[%s4] sm:$0xf]
          %v608 = vld [vmem:[%s4 + $0x4] sm:$0xf]
          %v609 = vld [vmem:[%s4 + $0x8] sm:$0xf]
          %v610 = vld [vmem:[%s4 + $0xc] sm:$0xf]
          %v615 = vunpack.c.l.b16 %v607
          %v616 = vunpack.c.l.b16 %v608
          %v617 = vunpack.c.l.b16 %v609
          %v618 = vunpack.c.l.b16 %v610
          %v619 = vpack.c.b16 %v616, %v615
          %v620 = vpack.c.b16 %v618, %v617
          %623 = vmatprep.subr.bf16.mxu0 0
          %624 = vmatpush1.bf16.msra.mxu0 0
          %625 = vmatprep.subr.bf16.mxu0 0
          %626 = vmatpush1.bf16.msra.mxu0 0
          %627 = vmatprep.subr.bf16.mxu0 0
          %628 = vmatpush1.bf16.msra.mxu0 0
          %629 = vmatprep.subr.bf16.mxu0 0
          %630 = vmatpush1.bf16.msra.mxu0 0
          %631 = vmatprep.subr.bf16.mxu0 0
          %632 = vmatpush1.bf16.msra.mxu0 0
          %633 = vmatprep.subr.bf16.mxu0 0
          %634 = vmatpush1.bf16.msra.mxu0 0
          %635 = vmatprep.subr.bf16.mxu0 0
          %636 = vmatpush1.bf16.msra.mxu0 %v620
          %637 = vmatprep.subr.bf16.mxu0 0
          %638 = vmatpush1.bf16.msra.mxu0 %v619
          %639 = vmatprep.subr.bf16.mxu0 0
          %640 = vmatpush2.bf16.msra.mxu0 0
          %641 = vmatprep.subr.bf16.mxu0 0
          %642 = vmatpush2.bf16.msra.mxu0 0
          %643 = vmatprep.subr.bf16.mxu0 0
          %644 = vmatpush2.bf16.msra.mxu0 0
          %645 = vmatprep.subr.bf16.mxu0 0
          %646 = vmatpush2.bf16.msra.mxu0 0
          %647 = vmatprep.subr.bf16.mxu0 0
          %648 = vmatpush2.bf16.msra.mxu0 0
          %649 = vmatprep.subr.bf16.mxu0 0
          %650 = vmatpush2.bf16.msra.mxu0 0
          %651 = vmatprep.subr.bf16.mxu0 0
          %652 = vmatpush2.bf16.msra.mxu0 0
          %653 = vmatprep.subr.bf16.mxu0 0
          %654 = vmatpush2.bf16.msra.mxu0 0
          %655 = vmatprep.mubr.bf16.mxu0 0
          %656 = vmatmul.mubr.bf16.gmra.mxu0 %v553
          %v657 = vpop.f32.mrf.mxu0
          %v658 = vadd.f32 0.0, %v657
          %v659 = vpop.f32.mrf.mxu0
          %v660 = vpop.f32.mrf.mxu0
          %v661 = vadd.f32 0.0, %v660
          %v662 = vpop.f32.mrf.mxu0
          %663 = vdwg.mxu0
          %v664 = vpack.c.bf16 %v661, %v658
          %v666 = vunpack.c.l.b16 %v664
          %v667 = vunpack.c.h.b16 %v664
          %v668 = vpack.c.b16 %v666, %v666
          %v669 = vpack.c.b16 %v667, %v667
          %672 = vst.msk [vmem:[#allocation3] sm:$0xf] %vm604, %v668
          %673 = vst.msk [vmem:[#allocation3 + $0x4] sm:$0xf] %vm604, %v669
          %v674 = vld [vmem:[%s5] sm:$0xf]
          %v675 = vld [vmem:[%s5 + $0x4] sm:$0xf]
          %v676 = vld [vmem:[%s5 + $0x8] sm:$0xf]
          %v677 = vld [vmem:[%s5 + $0xc] sm:$0xf]
          %v682 = vunpack.c.l.b16 %v674
          %v683 = vunpack.c.l.b16 %v675
          %v684 = vunpack.c.l.b16 %v676
          %v685 = vunpack.c.l.b16 %v677
          %v686 = vpack.c.b16 %v683, %v682
          %v687 = vpack.c.b16 %v685, %v684
          %690 = vmatprep.subr.bf16.mxu0 0
          %691 = vmatpush1.bf16.msra.mxu0 0
          %692 = vmatprep.subr.bf16.mxu0 0
          %693 = vmatpush1.bf16.msra.mxu0 0
          %694 = vmatprep.subr.bf16.mxu0 0
          %695 = vmatpush1.bf16.msra.mxu0 0
          %696 = vmatprep.subr.bf16.mxu0 0
          %697 = vmatpush1.bf16.msra.mxu0 0
          %698 = vmatprep.subr.bf16.mxu0 0
          %699 = vmatpush1.bf16.msra.mxu0 0
          %700 = vmatprep.subr.bf16.mxu0 0
          %701 = vmatpush1.bf16.msra.mxu0 0
          %702 = vmatprep.subr.bf16.mxu0 0
          %703 = vmatpush1.bf16.msra.mxu0 %v687
          %704 = vmatprep.subr.bf16.mxu0 0
          %705 = vmatpush1.bf16.msra.mxu0 %v686
          %706 = vmatprep.subr.bf16.mxu0 0
          %707 = vmatpush2.bf16.msra.mxu0 0
          %708 = vmatprep.subr.bf16.mxu0 0
          %709 = vmatpush2.bf16.msra.mxu0 0
          %710 = vmatprep.subr.bf16.mxu0 0
          %711 = vmatpush2.bf16.msra.mxu0 0
          %712 = vmatprep.subr.bf16.mxu0 0
          %713 = vmatpush2.bf16.msra.mxu0 0
          %714 = vmatprep.subr.bf16.mxu0 0
          %715 = vmatpush2.bf16.msra.mxu0 0
          %716 = vmatprep.subr.bf16.mxu0 0
          %717 = vmatpush2.bf16.msra.mxu0 0
          %718 = vmatprep.subr.bf16.mxu0 0
          %719 = vmatpush2.bf16.msra.mxu0 0
          %720 = vmatprep.subr.bf16.mxu0 0
          %721 = vmatpush2.bf16.msra.mxu0 0
          %722 = vmatprep.mubr.bf16.mxu0 0
          %723 = vmatmul.mubr.bf16.gmra.mxu0 %v553
          %v724 = vpop.f32.mrf.mxu0
          %v725 = vadd.f32 0.0, %v724
          %v726 = vpop.f32.mrf.mxu0
          %v727 = vpop.f32.mrf.mxu0
          %v728 = vadd.f32 0.0, %v727
          %v729 = vpop.f32.mrf.mxu0
          %730 = vdwg.mxu0
          %v731 = vpack.c.bf16 %v728, %v725
          %v733 = vunpack.c.l.b16 %v731
          %v734 = vunpack.c.h.b16 %v731
          %v735 = vpack.c.b16 %v733, %v733
          %v736 = vpack.c.b16 %v734, %v734
          %739 = vst.msk [vmem:[#allocation4] sm:$0xf] %vm604, %v735
          %740 = vst.msk [vmem:[#allocation4 + $0x4] sm:$0xf] %vm604, %v736
          %s741 = scalar_lea.vmem %s3, 16
          %v742 = vld [vmem:[%s741] sm:$0xf]
          %v743 = vld [vmem:[%s741 + $0x4] sm:$0xf]
          %v744 = vld [vmem:[%s741 + $0x8] sm:$0xf]
          %v745 = vld [vmem:[%s741 + $0xc] sm:$0xf]
          %v750 = vunpack.c.l.b16 %v742
          %v751 = vunpack.c.l.b16 %v743
          %v752 = vunpack.c.l.b16 %v744
          %v753 = vunpack.c.l.b16 %v745
          %v754 = vpack.c.b16 %v751, %v750
          %v755 = vpack.c.b16 %v753, %v752
          %758 = vmatprep.subr.bf16.mxu0 0
          %759 = vmatpush1.bf16.msra.mxu0 0
          %760 = vmatprep.subr.bf16.mxu0 0
          %761 = vmatpush1.bf16.msra.mxu0 0
          %762 = vmatprep.subr.bf16.mxu0 0
          %763 = vmatpush1.bf16.msra.mxu0 0
          %764 = vmatprep.subr.bf16.mxu0 0
          %765 = vmatpush1.bf16.msra.mxu0 0
          %766 = vmatprep.subr.bf16.mxu0 0
          %767 = vmatpush1.bf16.msra.mxu0 0
          %768 = vmatprep.subr.bf16.mxu0 0
          %769 = vmatpush1.bf16.msra.mxu0 0
          %770 = vmatprep.subr.bf16.mxu0 0
          %771 = vmatpush1.bf16.msra.mxu0 %v755
          %772 = vmatprep.subr.bf16.mxu0 0
          %773 = vmatpush1.bf16.msra.mxu0 %v754
          %774 = vmatprep.subr.bf16.mxu0 0
          %775 = vmatpush2.bf16.msra.mxu0 0
          %776 = vmatprep.subr.bf16.mxu0 0
          %777 = vmatpush2.bf16.msra.mxu0 0
          %778 = vmatprep.subr.bf16.mxu0 0
          %779 = vmatpush2.bf16.msra.mxu0 0
          %780 = vmatprep.subr.bf16.mxu0 0
          %781 = vmatpush2.bf16.msra.mxu0 0
          %782 = vmatprep.subr.bf16.mxu0 0
          %783 = vmatpush2.bf16.msra.mxu0 0
          %784 = vmatprep.subr.bf16.mxu0 0
          %785 = vmatpush2.bf16.msra.mxu0 0
          %786 = vmatprep.subr.bf16.mxu0 0
          %787 = vmatpush2.bf16.msra.mxu0 0
          %788 = vmatprep.subr.bf16.mxu0 0
          %789 = vmatpush2.bf16.msra.mxu0 0
          %790 = vmatprep.mubr.bf16.mxu0 0
          %791 = vmatmul.mubr.bf16.gmra.mxu0 %v553
          %v792 = vpop.f32.mrf.mxu0
          %v793 = vadd.f32 0.0, %v792
          %v794 = vpop.f32.mrf.mxu0
          %v795 = vpop.f32.mrf.mxu0
          %v796 = vadd.f32 0.0, %v795
          %v797 = vpop.f32.mrf.mxu0
          %798 = vdwg.mxu0
          %v799 = vpack.c.bf16 %v796, %v793
          %v801 = vunpack.c.l.b16 %v799
          %v802 = vunpack.c.h.b16 %v799
          %v803 = vpack.c.b16 %v801, %v801
          %v804 = vpack.c.b16 %v802, %v802
          %s807 = scalar_lea.vmem [#allocation2], 8
          %808 = vst.msk [vmem:[%s807] sm:$0xf] %vm604, %v803
          %809 = vst.msk [vmem:[%s807 + $0x4] sm:$0xf] %vm604, %v804
          %s810 = scalar_lea.vmem %s4, 16
          %v811 = vld [vmem:[%s810] sm:$0xf]
          %v812 = vld [vmem:[%s810 + $0x4] sm:$0xf]
          %v813 = vld [vmem:[%s810 + $0x8] sm:$0xf]
          %v814 = vld [vmem:[%s810 + $0xc] sm:$0xf]
          %v819 = vunpack.c.l.b16 %v811
          %v820 = vunpack.c.l.b16 %v812
          %v821 = vunpack.c.l.b16 %v813
          %v822 = vunpack.c.l.b16 %v814
          %v823 = vpack.c.b16 %v820, %v819
          %v824 = vpack.c.b16 %v822, %v821
          %827 = vmatprep.subr.bf16.mxu0 0
          %828 = vmatpush1.bf16.msra.mxu0 0
          %829 = vmatprep.subr.bf16.mxu0 0
          %830 = vmatpush1.bf16.msra.mxu0 0
          %831 = vmatprep.subr.bf16.mxu0 0
          %832 = vmatpush1.bf16.msra.mxu0 0
          %833 = vmatprep.subr.bf16.mxu0 0
          %834 = vmatpush1.bf16.msra.mxu0 0
          %835 = vmatprep.subr.bf16.mxu0 0
          %836 = vmatpush1.bf16.msra.mxu0 0
          %837 = vmatprep.subr.bf16.mxu0 0
          %838 = vmatpush1.bf16.msra.mxu0 0
          %839 = vmatprep.subr.bf16.mxu0 0
          %840 = vmatpush1.bf16.msra.mxu0 %v824
          %841 = vmatprep.subr.bf16.mxu0 0
          %842 = vmatpush1.bf16.msra.mxu0 %v823
          %843 = vmatprep.subr.bf16.mxu0 0
          %844 = vmatpush2.bf16.msra.mxu0 0
          %845 = vmatprep.subr.bf16.mxu0 0
          %846 = vmatpush2.bf16.msra.mxu0 0
          %847 = vmatprep.subr.bf16.mxu0 0
          %848 = vmatpush2.bf16.msra.mxu0 0
          %849 = vmatprep.subr.bf16.mxu0 0
          %850 = vmatpush2.bf16.msra.mxu0 0
          %851 = vmatprep.subr.bf16.mxu0 0
          %852 = vmatpush2.bf16.msra.mxu0 0
          %853 = vmatprep.subr.bf16.mxu0 0
          %854 = vmatpush2.bf16.msra.mxu0 0
          %855 = vmatprep.subr.bf16.mxu0 0
          %856 = vmatpush2.bf16.msra.mxu0 0
          %857 = vmatprep.subr.bf16.mxu0 0
          %858 = vmatpush2.bf16.msra.mxu0 0
          %859 = vmatprep.mubr.bf16.mxu0 0
          %860 = vmatmul.mubr.bf16.gmra.mxu0 %v553
          %v861 = vpop.f32.mrf.mxu0
          %v862 = vadd.f32 0.0, %v861
          %v863 = vpop.f32.mrf.mxu0
          %v864 = vpop.f32.mrf.mxu0
          %v865 = vadd.f32 0.0, %v864
          %v866 = vpop.f32.mrf.mxu0
          %867 = vdwg.mxu0
          %v868 = vpack.c.bf16 %v865, %v862
          %v870 = vunpack.c.l.b16 %v868
          %v871 = vunpack.c.h.b16 %v868
          %v872 = vpack.c.b16 %v870, %v870
          %v873 = vpack.c.b16 %v871, %v871
          %s876 = scalar_lea.vmem [#allocation3], 8
          %877 = vst.msk [vmem:[%s876] sm:$0xf] %vm604, %v872
          %878 = vst.msk [vmem:[%s876 + $0x4] sm:$0xf] %vm604, %v873
          %s879 = scalar_lea.vmem %s5, 16
          %v880 = vld [vmem:[%s879] sm:$0xf]
          %v881 = vld [vmem:[%s879 + $0x4] sm:$0xf]
          %v882 = vld [vmem:[%s879 + $0x8] sm:$0xf]
          %v883 = vld [vmem:[%s879 + $0xc] sm:$0xf]
          %v888 = vunpack.c.l.b16 %v880
          %v889 = vunpack.c.l.b16 %v881
          %v890 = vunpack.c.l.b16 %v882
          %v891 = vunpack.c.l.b16 %v883
          %v892 = vpack.c.b16 %v889, %v888
          %v893 = vpack.c.b16 %v891, %v890
          %896 = vmatprep.subr.bf16.mxu0 0
          %897 = vmatpush1.bf16.msra.mxu0 0
          %898 = vmatprep.subr.bf16.mxu0 0
          %899 = vmatpush1.bf16.msra.mxu0 0
          %900 = vmatprep.subr.bf16.mxu0 0
          %901 = vmatpush1.bf16.msra.mxu0 0
          %902 = vmatprep.subr.bf16.mxu0 0
          %903 = vmatpush1.bf16.msra.mxu0 0
          %904 = vmatprep.subr.bf16.mxu0 0
          %905 = vmatpush1.bf16.msra.mxu0 0
          %906 = vmatprep.subr.bf16.mxu0 0
          %907 = vmatpush1.bf16.msra.mxu0 0
          %908 = vmatprep.subr.bf16.mxu0 0
          %909 = vmatpush1.bf16.msra.mxu0 %v893
          %910 = vmatprep.subr.bf16.mxu0 0
          %911 = vmatpush1.bf16.msra.mxu0 %v892
          %912 = vmatprep.subr.bf16.mxu0 0
          %913 = vmatpush2.bf16.msra.mxu0 0
          %914 = vmatprep.subr.bf16.mxu0 0
          %915 = vmatpush2.bf16.msra.mxu0 0
          %916 = vmatprep.subr.bf16.mxu0 0
          %917 = vmatpush2.bf16.msra.mxu0 0
          %918 = vmatprep.subr.bf16.mxu0 0
          %919 = vmatpush2.bf16.msra.mxu0 0
          %920 = vmatprep.subr.bf16.mxu0 0
          %921 = vmatpush2.bf16.msra.mxu0 0
          %922 = vmatprep.subr.bf16.mxu0 0
          %923 = vmatpush2.bf16.msra.mxu0 0
          %924 = vmatprep.subr.bf16.mxu0 0
          %925 = vmatpush2.bf16.msra.mxu0 0
          %926 = vmatprep.subr.bf16.mxu0 0
          %927 = vmatpush2.bf16.msra.mxu0 0
          %928 = vmatprep.mubr.bf16.mxu0 0
          %929 = vmatmul.mubr.bf16.gmra.mxu0 %v553
          %v930 = vpop.f32.mrf.mxu0
          %v931 = vadd.f32 0.0, %v930
          %v932 = vpop.f32.mrf.mxu0
          %v933 = vpop.f32.mrf.mxu0
          %v934 = vadd.f32 0.0, %v933
          %v935 = vpop.f32.mrf.mxu0
          %936 = vdwg.mxu0
          %v937 = vpack.c.bf16 %v934, %v931
          %v939 = vunpack.c.l.b16 %v937
          %v940 = vunpack.c.h.b16 %v937
          %v941 = vpack.c.b16 %v939, %v939
          %v942 = vpack.c.b16 %v940, %v940
          %s945 = scalar_lea.vmem [#allocation4], 8
          %946 = vst.msk [vmem:[%s945] sm:$0xf] %vm604, %v941
          %947 = vst.msk [vmem:[%s945 + $0x4] sm:$0xf] %vm604, %v942
          %s948 = scalar_lea.vmem %s3, 32
          %v949 = vld [vmem:[%s948] sm:$0xf]
          %v950 = vld [vmem:[%s948 + $0x4] sm:$0xf]
          %v951 = vld [vmem:[%s948 + $0x8] sm:$0xf]
          %v952 = vld [vmem:[%s948 + $0xc] sm:$0xf]
          %v957 = vunpack.c.l.b16 %v949
          %v958 = vunpack.c.l.b16 %v950
          %v959 = vunpack.c.l.b16 %v951
          %v960 = vunpack.c.l.b16 %v952
          %v961 = vpack.c.b16 %v958, %v957
          %v962 = vpack.c.b16 %v960, %v959
          %965 = vmatprep.subr.bf16.mxu0 0
          %966 = vmatpush1.bf16.msra.mxu0 0
          %967 = vmatprep.subr.bf16.mxu0 0
          %968 = vmatpush1.bf16.msra.mxu0 0
          %969 = vmatprep.subr.bf16.mxu0 0
          %970 = vmatpush1.bf16.msra.mxu0 0
          %971 = vmatprep.subr.bf16.mxu0 0
          %972 = vmatpush1.bf16.msra.mxu0 0
          %973 = vmatprep.subr.bf16.mxu0 0
          %974 = vmatpush1.bf16.msra.mxu0 0
          %975 = vmatprep.subr.bf16.mxu0 0
          %976 = vmatpush1.bf16.msra.mxu0 0
          %977 = vmatprep.subr.bf16.mxu0 0
          %978 = vmatpush1.bf16.msra.mxu0 %v962
          %979 = vmatprep.subr.bf16.mxu0 0
          %980 = vmatpush1.bf16.msra.mxu0 %v961
          %981 = vmatprep.subr.bf16.mxu0 0
          %982 = vmatpush2.bf16.msra.mxu0 0
          %983 = vmatprep.subr.bf16.mxu0 0
          %984 = vmatpush2.bf16.msra.mxu0 0
          %985 = vmatprep.subr.bf16.mxu0 0
          %986 = vmatpush2.bf16.msra.mxu0 0
          %987 = vmatprep.subr.bf16.mxu0 0
          %988 = vmatpush2.bf16.msra.mxu0 0
          %989 = vmatprep.subr.bf16.mxu0 0
          %990 = vmatpush2.bf16.msra.mxu0 0
          %991 = vmatprep.subr.bf16.mxu0 0
          %992 = vmatpush2.bf16.msra.mxu0 0
          %993 = vmatprep.subr.bf16.mxu0 0
          %994 = vmatpush2.bf16.msra.mxu0 0
          %995 = vmatprep.subr.bf16.mxu0 0
          %996 = vmatpush2.bf16.msra.mxu0 0
          %997 = vmatprep.mubr.bf16.mxu0 0
          %998 = vmatmul.mubr.bf16.gmra.mxu0 %v553
          %v999 = vpop.f32.mrf.mxu0
          %v1000 = vadd.f32 0.0, %v999
          %v1001 = vpop.f32.mrf.mxu0
          %v1002 = vpop.f32.mrf.mxu0
          %v1003 = vadd.f32 0.0, %v1002
          %v1004 = vpop.f32.mrf.mxu0
          %1005 = vdwg.mxu0
          %v1006 = vpack.c.bf16 %v1003, %v1000
          %v1008 = vunpack.c.l.b16 %v1006
          %v1009 = vunpack.c.h.b16 %v1006
          %v1010 = vpack.c.b16 %v1008, %v1008
          %v1011 = vpack.c.b16 %v1009, %v1009
          %s1014 = scalar_lea.vmem [#allocation2], 16
          %1015 = vst.msk [vmem:[%s1014] sm:$0xf] %vm604, %v1010
          %1016 = vst.msk [vmem:[%s1014 + $0x4] sm:$0xf] %vm604, %v1011
          %s1017 = scalar_lea.vmem %s4, 32
          %v1018 = vld [vmem:[%s1017] sm:$0xf]
          %v1019 = vld [vmem:[%s1017 + $0x4] sm:$0xf]
          %v1020 = vld [vmem:[%s1017 + $0x8] sm:$0xf]
          %v1021 = vld [vmem:[%s1017 + $0xc] sm:$0xf]
          %v1026 = vunpack.c.l.b16 %v1018
          %v1027 = vunpack.c.l.b16 %v1019
          %v1028 = vunpack.c.l.b16 %v1020
          %v1029 = vunpack.c.l.b16 %v1021
          %v1030 = vpack.c.b16 %v1027, %v1026
          %v1031 = vpack.c.b16 %v1029, %v1028
          %1034 = vmatprep.subr.bf16.mxu0 0
          %1035 = vmatpush1.bf16.msra.mxu0 0
          %1036 = vmatprep.subr.bf16.mxu0 0
          %1037 = vmatpush1.bf16.msra.mxu0 0
          %1038 = vmatprep.subr.bf16.mxu0 0
          %1039 = vmatpush1.bf16.msra.mxu0 0
          %1040 = vmatprep.subr.bf16.mxu0 0
          %1041 = vmatpush1.bf16.msra.mxu0 0
          %1042 = vmatprep.subr.bf16.mxu0 0
          %1043 = vmatpush1.bf16.msra.mxu0 0
          %1044 = vmatprep.subr.bf16.mxu0 0
          %1045 = vmatpush1.bf16.msra.mxu0 0
          %1046 = vmatprep.subr.bf16.mxu0 0
          %1047 = vmatpush1.bf16.msra.mxu0 %v1031
          %1048 = vmatprep.subr.bf16.mxu0 0
          %1049 = vmatpush1.bf16.msra.mxu0 %v1030
          %1050 = vmatprep.subr.bf16.mxu0 0
          %1051 = vmatpush2.bf16.msra.mxu0 0
          %1052 = vmatprep.subr.bf16.mxu0 0
          %1053 = vmatpush2.bf16.msra.mxu0 0
          %1054 = vmatprep.subr.bf16.mxu0 0
          %1055 = vmatpush2.bf16.msra.mxu0 0
          %1056 = vmatprep.subr.bf16.mxu0 0
          %1057 = vmatpush2.bf16.msra.mxu0 0
          %1058 = vmatprep.subr.bf16.mxu0 0
          %1059 = vmatpush2.bf16.msra.mxu0 0
          %1060 = vmatprep.subr.bf16.mxu0 0
          %1061 = vmatpush2.bf16.msra.mxu0 0
          %1062 = vmatprep.subr.bf16.mxu0 0
          %1063 = vmatpush2.bf16.msra.mxu0 0
          %1064 = vmatprep.subr.bf16.mxu0 0
          %1065 = vmatpush2.bf16.msra.mxu0 0
          %1066 = vmatprep.mubr.bf16.mxu0 0
          %1067 = vmatmul.mubr.bf16.gmra.mxu0 %v553
          %v1068 = vpop.f32.mrf.mxu0
          %v1069 = vadd.f32 0.0, %v1068
          %v1070 = vpop.f32.mrf.mxu0
          %v1071 = vpop.f32.mrf.mxu0
          %v1072 = vadd.f32 0.0, %v1071
          %v1073 = vpop.f32.mrf.mxu0
          %1074 = vdwg.mxu0
          %v1075 = vpack.c.bf16 %v1072, %v1069
          %v1077 = vunpack.c.l.b16 %v1075
          %v1078 = vunpack.c.h.b16 %v1075
          %v1079 = vpack.c.b16 %v1077, %v1077
          %v1080 = vpack.c.b16 %v1078, %v1078
          %s1083 = scalar_lea.vmem [#allocation3], 16
          %1084 = vst.msk [vmem:[%s1083] sm:$0xf] %vm604, %v1079
          %1085 = vst.msk [vmem:[%s1083 + $0x4] sm:$0xf] %vm604, %v1080
          %s1086 = scalar_lea.vmem %s5, 32
          %v1087 = vld [vmem:[%s1086] sm:$0xf]
          %v1088 = vld [vmem:[%s1086 + $0x4] sm:$0xf]
          %v1089 = vld [vmem:[%s1086 + $0x8] sm:$0xf]
          %v1090 = vld [vmem:[%s1086 + $0xc] sm:$0xf]
          %v1095 = vunpack.c.l.b16 %v1087
          %v1096 = vunpack.c.l.b16 %v1088
          %v1097 = vunpack.c.l.b16 %v1089
          %v1098 = vunpack.c.l.b16 %v1090
          %v1099 = vpack.c.b16 %v1096, %v1095
          %v1100 = vpack.c.b16 %v1098, %v1097
          %1103 = vmatprep.subr.bf16.mxu0 0
          %1104 = vmatpush1.bf16.msra.mxu0 0
          %1105 = vmatprep.subr.bf16.mxu0 0
          %1106 = vmatpush1.bf16.msra.mxu0 0
          %1107 = vmatprep.subr.bf16.mxu0 0
          %1108 = vmatpush1.bf16.msra.mxu0 0
          %1109 = vmatprep.subr.bf16.mxu0 0
          %1110 = vmatpush1.bf16.msra.mxu0 0
          %1111 = vmatprep.subr.bf16.mxu0 0
          %1112 = vmatpush1.bf16.msra.mxu0 0
          %1113 = vmatprep.subr.bf16.mxu0 0
          %1114 = vmatpush1.bf16.msra.mxu0 0
          %1115 = vmatprep.subr.bf16.mxu0 0
          %1116 = vmatpush1.bf16.msra.mxu0 %v1100
          %1117 = vmatprep.subr.bf16.mxu0 0
          %1118 = vmatpush1.bf16.msra.mxu0 %v1099
          %1119 = vmatprep.subr.bf16.mxu0 0
          %1120 = vmatpush2.bf16.msra.mxu0 0
          %1121 = vmatprep.subr.bf16.mxu0 0
          %1122 = vmatpush2.bf16.msra.mxu0 0
          %1123 = vmatprep.subr.bf16.mxu0 0
          %1124 = vmatpush2.bf16.msra.mxu0 0
          %1125 = vmatprep.subr.bf16.mxu0 0
          %1126 = vmatpush2.bf16.msra.mxu0 0
          %1127 = vmatprep.subr.bf16.mxu0 0
          %1128 = vmatpush2.bf16.msra.mxu0 0
          %1129 = vmatprep.subr.bf16.mxu0 0
          %1130 = vmatpush2.bf16.msra.mxu0 0
          %1131 = vmatprep.subr.bf16.mxu0 0
          %1132 = vmatpush2.bf16.msra.mxu0 0
          %1133 = vmatprep.subr.bf16.mxu0 0
          %1134 = vmatpush2.bf16.msra.mxu0 0
          %1135 = vmatprep.mubr.bf16.mxu0 0
          %1136 = vmatmul.mubr.bf16.gmra.mxu0 %v553
          %v1137 = vpop.f32.mrf.mxu0
          %v1138 = vadd.f32 0.0, %v1137
          %v1139 = vpop.f32.mrf.mxu0
          %v1140 = vpop.f32.mrf.mxu0
          %v1141 = vadd.f32 0.0, %v1140
          %v1142 = vpop.f32.mrf.mxu0
          %1143 = vdwg.mxu0
          %v1144 = vpack.c.bf16 %v1141, %v1138
          %v1146 = vunpack.c.l.b16 %v1144
          %v1147 = vunpack.c.h.b16 %v1144
          %v1148 = vpack.c.b16 %v1146, %v1146
          %v1149 = vpack.c.b16 %v1147, %v1147
          %s1152 = scalar_lea.vmem [#allocation4], 16
          %1153 = vst.msk [vmem:[%s1152] sm:$0xf] %vm604, %v1148
          %1154 = vst.msk [vmem:[%s1152 + $0x4] sm:$0xf] %vm604, %v1149
          %s1155 = scalar_lea.vmem %s3, 48
          %v1156 = vld [vmem:[%s1155] sm:$0xf]
          %v1157 = vld [vmem:[%s1155 + $0x4] sm:$0xf]
          %v1158 = vld [vmem:[%s1155 + $0x8] sm:$0xf]
          %v1159 = vld [vmem:[%s1155 + $0xc] sm:$0xf]
          %v1164 = vunpack.c.l.b16 %v1156
          %v1165 = vunpack.c.l.b16 %v1157
          %v1166 = vunpack.c.l.b16 %v1158
          %v1167 = vunpack.c.l.b16 %v1159
          %v1168 = vpack.c.b16 %v1165, %v1164
          %v1169 = vpack.c.b16 %v1167, %v1166
          %1172 = vmatprep.subr.bf16.mxu0 0
          %1173 = vmatpush1.bf16.msra.mxu0 0
          %1174 = vmatprep.subr.bf16.mxu0 0
          %1175 = vmatpush1.bf16.msra.mxu0 0
          %1176 = vmatprep.subr.bf16.mxu0 0
          %1177 = vmatpush1.bf16.msra.mxu0 0
          %1178 = vmatprep.subr.bf16.mxu0 0
          %1179 = vmatpush1.bf16.msra.mxu0 0
          %1180 = vmatprep.subr.bf16.mxu0 0
          %1181 = vmatpush1.bf16.msra.mxu0 0
          %1182 = vmatprep.subr.bf16.mxu0 0
          %1183 = vmatpush1.bf16.msra.mxu0 0
          %1184 = vmatprep.subr.bf16.mxu0 0
          %1185 = vmatpush1.bf16.msra.mxu0 %v1169
          %1186 = vmatprep.subr.bf16.mxu0 0
          %1187 = vmatpush1.bf16.msra.mxu0 %v1168
          %1188 = vmatprep.subr.bf16.mxu0 0
          %1189 = vmatpush2.bf16.msra.mxu0 0
          %1190 = vmatprep.subr.bf16.mxu0 0
          %1191 = vmatpush2.bf16.msra.mxu0 0
          %1192 = vmatprep.subr.bf16.mxu0 0
          %1193 = vmatpush2.bf16.msra.mxu0 0
          %1194 = vmatprep.subr.bf16.mxu0 0
          %1195 = vmatpush2.bf16.msra.mxu0 0
          %1196 = vmatprep.subr.bf16.mxu0 0
          %1197 = vmatpush2.bf16.msra.mxu0 0
          %1198 = vmatprep.subr.bf16.mxu0 0
          %1199 = vmatpush2.bf16.msra.mxu0 0
          %1200 = vmatprep.subr.bf16.mxu0 0
          %1201 = vmatpush2.bf16.msra.mxu0 0
          %1202 = vmatprep.subr.bf16.mxu0 0
          %1203 = vmatpush2.bf16.msra.mxu0 0
          %1204 = vmatprep.mubr.bf16.mxu0 0
          %1205 = vmatmul.mubr.bf16.gmra.mxu0 %v553
          %v1206 = vpop.f32.mrf.mxu0
          %v1207 = vadd.f32 0.0, %v1206
          %v1208 = vpop.f32.mrf.mxu0
          %v1209 = vpop.f32.mrf.mxu0
          %v1210 = vadd.f32 0.0, %v1209
          %v1211 = vpop.f32.mrf.mxu0
          %1212 = vdwg.mxu0
          %v1213 = vpack.c.bf16 %v1210, %v1207
          %v1215 = vunpack.c.l.b16 %v1213
          %v1216 = vunpack.c.h.b16 %v1213
          %v1217 = vpack.c.b16 %v1215, %v1215
          %v1218 = vpack.c.b16 %v1216, %v1216
          %s1221 = scalar_lea.vmem [#allocation2], 24
          %1222 = vst.msk [vmem:[%s1221] sm:$0xf] %vm604, %v1217
          %1223 = vst.msk [vmem:[%s1221 + $0x4] sm:$0xf] %vm604, %v1218
          %s1224 = scalar_lea.vmem %s4, 48
          %v1225 = vld [vmem:[%s1224] sm:$0xf]
          %v1226 = vld [vmem:[%s1224 + $0x4] sm:$0xf]
          %v1227 = vld [vmem:[%s1224 + $0x8] sm:$0xf]
          %v1228 = vld [vmem:[%s1224 + $0xc] sm:$0xf]
          %v1233 = vunpack.c.l.b16 %v1225
          %v1234 = vunpack.c.l.b16 %v1226
          %v1235 = vunpack.c.l.b16 %v1227
          %v1236 = vunpack.c.l.b16 %v1228
          %v1237 = vpack.c.b16 %v1234, %v1233
          %v1238 = vpack.c.b16 %v1236, %v1235
          %1241 = vmatprep.subr.bf16.mxu0 0
          %1242 = vmatpush1.bf16.msra.mxu0 0
          %1243 = vmatprep.subr.bf16.mxu0 0
          %1244 = vmatpush1.bf16.msra.mxu0 0
          %1245 = vmatprep.subr.bf16.mxu0 0
          %1246 = vmatpush1.bf16.msra.mxu0 0
          %1247 = vmatprep.subr.bf16.mxu0 0
          %1248 = vmatpush1.bf16.msra.mxu0 0
          %1249 = vmatprep.subr.bf16.mxu0 0
          %1250 = vmatpush1.bf16.msra.mxu0 0
          %1251 = vmatprep.subr.bf16.mxu0 0
          %1252 = vmatpush1.bf16.msra.mxu0 0
          %1253 = vmatprep.subr.bf16.mxu0 0
          %1254 = vmatpush1.bf16.msra.mxu0 %v1238
          %1255 = vmatprep.subr.bf16.mxu0 0
          %1256 = vmatpush1.bf16.msra.mxu0 %v1237
          %1257 = vmatprep.subr.bf16.mxu0 0
          %1258 = vmatpush2.bf16.msra.mxu0 0
          %1259 = vmatprep.subr.bf16.mxu0 0
          %1260 = vmatpush2.bf16.msra.mxu0 0
          %1261 = vmatprep.subr.bf16.mxu0 0
          %1262 = vmatpush2.bf16.msra.mxu0 0
          %1263 = vmatprep.subr.bf16.mxu0 0
          %1264 = vmatpush2.bf16.msra.mxu0 0
          %1265 = vmatprep.subr.bf16.mxu0 0
          %1266 = vmatpush2.bf16.msra.mxu0 0
          %1267 = vmatprep.subr.bf16.mxu0 0
          %1268 = vmatpush2.bf16.msra.mxu0 0
          %1269 = vmatprep.subr.bf16.mxu0 0
          %1270 = vmatpush2.bf16.msra.mxu0 0
          %1271 = vmatprep.subr.bf16.mxu0 0
          %1272 = vmatpush2.bf16.msra.mxu0 0
          %1273 = vmatprep.mubr.bf16.mxu0 0
          %1274 = vmatmul.mubr.bf16.gmra.mxu0 %v553
          %v1275 = vpop.f32.mrf.mxu0
          %v1276 = vadd.f32 0.0, %v1275
          %v1277 = vpop.f32.mrf.mxu0
          %v1278 = vpop.f32.mrf.mxu0
          %v1279 = vadd.f32 0.0, %v1278
          %v1280 = vpop.f32.mrf.mxu0
          %1281 = vdwg.mxu0
          %v1282 = vpack.c.bf16 %v1279, %v1276
          %v1284 = vunpack.c.l.b16 %v1282
          %v1285 = vunpack.c.h.b16 %v1282
          %v1286 = vpack.c.b16 %v1284, %v1284
          %v1287 = vpack.c.b16 %v1285, %v1285
          %s1290 = scalar_lea.vmem [#allocation3], 24
          %1291 = vst.msk [vmem:[%s1290] sm:$0xf] %vm604, %v1286
          %1292 = vst.msk [vmem:[%s1290 + $0x4] sm:$0xf] %vm604, %v1287
          %s1293 = scalar_lea.vmem %s5, 48
          %v1294 = vld [vmem:[%s1293] sm:$0xf]
          %v1295 = vld [vmem:[%s1293 + $0x4] sm:$0xf]
          %v1296 = vld [vmem:[%s1293 + $0x8] sm:$0xf]
          %v1297 = vld [vmem:[%s1293 + $0xc] sm:$0xf]
          %v1302 = vunpack.c.l.b16 %v1294
          %v1303 = vunpack.c.l.b16 %v1295
          %v1304 = vunpack.c.l.b16 %v1296
          %v1305 = vunpack.c.l.b16 %v1297
          %v1306 = vpack.c.b16 %v1303, %v1302
          %v1307 = vpack.c.b16 %v1305, %v1304
          %1310 = vmatprep.subr.bf16.mxu0 0
          %1311 = vmatpush1.bf16.msra.mxu0 0
          %1312 = vmatprep.subr.bf16.mxu0 0
          %1313 = vmatpush1.bf16.msra.mxu0 0
          %1314 = vmatprep.subr.bf16.mxu0 0
          %1315 = vmatpush1.bf16.msra.mxu0 0
          %1316 = vmatprep.subr.bf16.mxu0 0
          %1317 = vmatpush1.bf16.msra.mxu0 0
          %1318 = vmatprep.subr.bf16.mxu0 0
          %1319 = vmatpush1.bf16.msra.mxu0 0
          %1320 = vmatprep.subr.bf16.mxu0 0
          %1321 = vmatpush1.bf16.msra.mxu0 0
          %1322 = vmatprep.subr.bf16.mxu0 0
          %1323 = vmatpush1.bf16.msra.mxu0 %v1307
          %1324 = vmatprep.subr.bf16.mxu0 0
          %1325 = vmatpush1.bf16.msra.mxu0 %v1306
          %1326 = vmatprep.subr.bf16.mxu0 0
          %1327 = vmatpush2.bf16.msra.mxu0 0
          %1328 = vmatprep.subr.bf16.mxu0 0
          %1329 = vmatpush2.bf16.msra.mxu0 0
          %1330 = vmatprep.subr.bf16.mxu0 0
          %1331 = vmatpush2.bf16.msra.mxu0 0
          %1332 = vmatprep.subr.bf16.mxu0 0
          %1333 = vmatpush2.bf16.msra.mxu0 0
          %1334 = vmatprep.subr.bf16.mxu0 0
          %1335 = vmatpush2.bf16.msra.mxu0 0
          %1336 = vmatprep.subr.bf16.mxu0 0
          %1337 = vmatpush2.bf16.msra.mxu0 0
          %1338 = vmatprep.subr.bf16.mxu0 0
          %1339 = vmatpush2.bf16.msra.mxu0 0
          %1340 = vmatprep.subr.bf16.mxu0 0
          %1341 = vmatpush2.bf16.msra.mxu0 0
          %1342 = vmatprep.mubr.bf16.mxu0 0
          %1343 = vmatmul.mubr.bf16.gmra.mxu0 %v553
          %v1344 = vpop.f32.mrf.mxu0
          %v1345 = vadd.f32 0.0, %v1344
          %v1346 = vpop.f32.mrf.mxu0
          %v1347 = vpop.f32.mrf.mxu0
          %v1348 = vadd.f32 0.0, %v1347
          %v1349 = vpop.f32.mrf.mxu0
          %1350 = vdwg.mxu0
          %v1351 = vpack.c.bf16 %v1348, %v1345
          %v1353 = vunpack.c.l.b16 %v1351
          %v1354 = vunpack.c.h.b16 %v1351
          %v1355 = vpack.c.b16 %v1353, %v1353
          %v1356 = vpack.c.b16 %v1354, %v1354
          %s1359 = scalar_lea.vmem [#allocation4], 24
          %1360 = vst.msk [vmem:[%s1359] sm:$0xf] %vm604, %v1355
          %1361 = vst.msk [vmem:[%s1359 + $0x4] sm:$0xf] %vm604, %v1356
          %s1362 = scalar_lea.vmem %s3, 64
          %v1363 = vld [vmem:[%s1362] sm:$0xf]
          %v1364 = vld [vmem:[%s1362 + $0x4] sm:$0xf]
          %v1365 = vld [vmem:[%s1362 + $0x8] sm:$0xf]
          %v1366 = vld [vmem:[%s1362 + $0xc] sm:$0xf]
          %v1371 = vunpack.c.l.b16 %v1363
          %v1372 = vunpack.c.l.b16 %v1364
          %v1373 = vunpack.c.l.b16 %v1365
          %v1374 = vunpack.c.l.b16 %v1366
          %v1375 = vpack.c.b16 %v1372, %v1371
          %v1376 = vpack.c.b16 %v1374, %v1373
          %1379 = vmatprep.subr.bf16.mxu0 0
          %1380 = vmatpush1.bf16.msra.mxu0 0
          %1381 = vmatprep.subr.bf16.mxu0 0
          %1382 = vmatpush1.bf16.msra.mxu0 0
          %1383 = vmatprep.subr.bf16.mxu0 0
          %1384 = vmatpush1.bf16.msra.mxu0 0
          %1385 = vmatprep.subr.bf16.mxu0 0
          %1386 = vmatpush1.bf16.msra.mxu0 0
          %1387 = vmatprep.subr.bf16.mxu0 0
          %1388 = vmatpush1.bf16.msra.mxu0 0
          %1389 = vmatprep.subr.bf16.mxu0 0
          %1390 = vmatpush1.bf16.msra.mxu0 0
          %1391 = vmatprep.subr.bf16.mxu0 0
          %1392 = vmatpush1.bf16.msra.mxu0 %v1376
          %1393 = vmatprep.subr.bf16.mxu0 0
          %1394 = vmatpush1.bf16.msra.mxu0 %v1375
          %1395 = vmatprep.subr.bf16.mxu0 0
          %1396 = vmatpush2.bf16.msra.mxu0 0
          %1397 = vmatprep.subr.bf16.mxu0 0
          %1398 = vmatpush2.bf16.msra.mxu0 0
          %1399 = vmatprep.subr.bf16.mxu0 0
          %1400 = vmatpush2.bf16.msra.mxu0 0
          %1401 = vmatprep.subr.bf16.mxu0 0
          %1402 = vmatpush2.bf16.msra.mxu0 0
          %1403 = vmatprep.subr.bf16.mxu0 0
          %1404 = vmatpush2.bf16.msra.mxu0 0
          %1405 = vmatprep.subr.bf16.mxu0 0
          %1406 = vmatpush2.bf16.msra.mxu0 0
          %1407 = vmatprep.subr.bf16.mxu0 0
          %1408 = vmatpush2.bf16.msra.mxu0 0
          %1409 = vmatprep.subr.bf16.mxu0 0
          %1410 = vmatpush2.bf16.msra.mxu0 0
          %1411 = vmatprep.mubr.bf16.mxu0 0
          %1412 = vmatmul.mubr.bf16.gmra.mxu0 %v553
          %v1413 = vpop.f32.mrf.mxu0
          %v1414 = vadd.f32 0.0, %v1413
          %v1415 = vpop.f32.mrf.mxu0
          %v1416 = vpop.f32.mrf.mxu0
          %v1417 = vadd.f32 0.0, %v1416
          %v1418 = vpop.f32.mrf.mxu0
          %1419 = vdwg.mxu0
          %v1420 = vpack.c.bf16 %v1417, %v1414
          %v1422 = vunpack.c.l.b16 %v1420
          %v1423 = vunpack.c.h.b16 %v1420
          %v1424 = vpack.c.b16 %v1422, %v1422
          %v1425 = vpack.c.b16 %v1423, %v1423
          %s1428 = scalar_lea.vmem [#allocation2], 32
          %1429 = vst.msk [vmem:[%s1428] sm:$0xf] %vm604, %v1424
          %1430 = vst.msk [vmem:[%s1428 + $0x4] sm:$0xf] %vm604, %v1425
          %s1431 = scalar_lea.vmem %s4, 64
          %v1432 = vld [vmem:[%s1431] sm:$0xf]
          %v1433 = vld [vmem:[%s1431 + $0x4] sm:$0xf]
          %v1434 = vld [vmem:[%s1431 + $0x8] sm:$0xf]
          %v1435 = vld [vmem:[%s1431 + $0xc] sm:$0xf]
          %v1440 = vunpack.c.l.b16 %v1432
          %v1441 = vunpack.c.l.b16 %v1433
          %v1442 = vunpack.c.l.b16 %v1434
          %v1443 = vunpack.c.l.b16 %v1435
          %v1444 = vpack.c.b16 %v1441, %v1440
          %v1445 = vpack.c.b16 %v1443, %v1442
          %1448 = vmatprep.subr.bf16.mxu0 0
          %1449 = vmatpush1.bf16.msra.mxu0 0
          %1450 = vmatprep.subr.bf16.mxu0 0
          %1451 = vmatpush1.bf16.msra.mxu0 0
          %1452 = vmatprep.subr.bf16.mxu0 0
          %1453 = vmatpush1.bf16.msra.mxu0 0
          %1454 = vmatprep.subr.bf16.mxu0 0
          %1455 = vmatpush1.bf16.msra.mxu0 0
          %1456 = vmatprep.subr.bf16.mxu0 0
          %1457 = vmatpush1.bf16.msra.mxu0 0
          %1458 = vmatprep.subr.bf16.mxu0 0
          %1459 = vmatpush1.bf16.msra.mxu0 0
          %1460 = vmatprep.subr.bf16.mxu0 0
          %1461 = vmatpush1.bf16.msra.mxu0 %v1445
          %1462 = vmatprep.subr.bf16.mxu0 0
          %1463 = vmatpush1.bf16.msra.mxu0 %v1444
          %1464 = vmatprep.subr.bf16.mxu0 0
          %1465 = vmatpush2.bf16.msra.mxu0 0
          %1466 = vmatprep.subr.bf16.mxu0 0
          %1467 = vmatpush2.bf16.msra.mxu0 0
          %1468 = vmatprep.subr.bf16.mxu0 0
          %1469 = vmatpush2.bf16.msra.mxu0 0
          %1470 = vmatprep.subr.bf16.mxu0 0
          %1471 = vmatpush2.bf16.msra.mxu0 0
          %1472 = vmatprep.subr.bf16.mxu0 0
          %1473 = vmatpush2.bf16.msra.mxu0 0
          %1474 = vmatprep.subr.bf16.mxu0 0
          %1475 = vmatpush2.bf16.msra.mxu0 0
          %1476 = vmatprep.subr.bf16.mxu0 0
          %1477 = vmatpush2.bf16.msra.mxu0 0
          %1478 = vmatprep.subr.bf16.mxu0 0
          %1479 = vmatpush2.bf16.msra.mxu0 0
          %1480 = vmatprep.mubr.bf16.mxu0 0
          %1481 = vmatmul.mubr.bf16.gmra.mxu0 %v553
          %v1482 = vpop.f32.mrf.mxu0
          %v1483 = vadd.f32 0.0, %v1482
          %v1484 = vpop.f32.mrf.mxu0
          %v1485 = vpop.f32.mrf.mxu0
          %v1486 = vadd.f32 0.0, %v1485
          %v1487 = vpop.f32.mrf.mxu0
          %1488 = vdwg.mxu0
          %v1489 = vpack.c.bf16 %v1486, %v1483
          %v1491 = vunpack.c.l.b16 %v1489
          %v1492 = vunpack.c.h.b16 %v1489
          %v1493 = vpack.c.b16 %v1491, %v1491
          %v1494 = vpack.c.b16 %v1492, %v1492
          %s1497 = scalar_lea.vmem [#allocation3], 32
          %1498 = vst.msk [vmem:[%s1497] sm:$0xf] %vm604, %v1493
          %1499 = vst.msk [vmem:[%s1497 + $0x4] sm:$0xf] %vm604, %v1494
          %s1500 = scalar_lea.vmem %s5, 64
          %v1501 = vld [vmem:[%s1500] sm:$0xf]
          %v1502 = vld [vmem:[%s1500 + $0x4] sm:$0xf]
          %v1503 = vld [vmem:[%s1500 + $0x8] sm:$0xf]
          %v1504 = vld [vmem:[%s1500 + $0xc] sm:$0xf]
          %v1509 = vunpack.c.l.b16 %v1501
          %v1510 = vunpack.c.l.b16 %v1502
          %v1511 = vunpack.c.l.b16 %v1503
          %v1512 = vunpack.c.l.b16 %v1504
          %v1513 = vpack.c.b16 %v1510, %v1509
          %v1514 = vpack.c.b16 %v1512, %v1511
          %1517 = vmatprep.subr.bf16.mxu0 0
          %1518 = vmatpush1.bf16.msra.mxu0 0
          %1519 = vmatprep.subr.bf16.mxu0 0
          %1520 = vmatpush1.bf16.msra.mxu0 0
          %1521 = vmatprep.subr.bf16.mxu0 0
          %1522 = vmatpush1.bf16.msra.mxu0 0
          %1523 = vmatprep.subr.bf16.mxu0 0
          %1524 = vmatpush1.bf16.msra.mxu0 0
          %1525 = vmatprep.subr.bf16.mxu0 0
          %1526 = vmatpush1.bf16.msra.mxu0 0
          %1527 = vmatprep.subr.bf16.mxu0 0
          %1528 = vmatpush1.bf16.msra.mxu0 0
          %1529 = vmatprep.subr.bf16.mxu0 0
          %1530 = vmatpush1.bf16.msra.mxu0 %v1514
          %1531 = vmatprep.subr.bf16.mxu0 0
          %1532 = vmatpush1.bf16.msra.mxu0 %v1513
          %1533 = vmatprep.subr.bf16.mxu0 0
          %1534 = vmatpush2.bf16.msra.mxu0 0
          %1535 = vmatprep.subr.bf16.mxu0 0
          %1536 = vmatpush2.bf16.msra.mxu0 0
          %1537 = vmatprep.subr.bf16.mxu0 0
          %1538 = vmatpush2.bf16.msra.mxu0 0
          %1539 = vmatprep.subr.bf16.mxu0 0
          %1540 = vmatpush2.bf16.msra.mxu0 0
          %1541 = vmatprep.subr.bf16.mxu0 0
          %1542 = vmatpush2.bf16.msra.mxu0 0
          %1543 = vmatprep.subr.bf16.mxu0 0
          %1544 = vmatpush2.bf16.msra.mxu0 0
          %1545 = vmatprep.subr.bf16.mxu0 0
          %1546 = vmatpush2.bf16.msra.mxu0 0
          %1547 = vmatprep.subr.bf16.mxu0 0
          %1548 = vmatpush2.bf16.msra.mxu0 0
          %1549 = vmatprep.mubr.bf16.mxu0 0
          %1550 = vmatmul.mubr.bf16.gmra.mxu0 %v553
          %v1551 = vpop.f32.mrf.mxu0
          %v1552 = vadd.f32 0.0, %v1551
          %v1553 = vpop.f32.mrf.mxu0
          %v1554 = vpop.f32.mrf.mxu0
          %v1555 = vadd.f32 0.0, %v1554
          %v1556 = vpop.f32.mrf.mxu0
          %1557 = vdwg.mxu0
          %v1558 = vpack.c.bf16 %v1555, %v1552
          %v1560 = vunpack.c.l.b16 %v1558
          %v1561 = vunpack.c.h.b16 %v1558
          %v1562 = vpack.c.b16 %v1560, %v1560
          %v1563 = vpack.c.b16 %v1561, %v1561
          %s1566 = scalar_lea.vmem [#allocation4], 32
          %1567 = vst.msk [vmem:[%s1566] sm:$0xf] %vm604, %v1562
          %1568 = vst.msk [vmem:[%s1566 + $0x4] sm:$0xf] %vm604, %v1563
          %s1569 = scalar_lea.vmem %s3, 80
          %v1570 = vld [vmem:[%s1569] sm:$0xf]
          %v1571 = vld [vmem:[%s1569 + $0x4] sm:$0xf]
          %v1572 = vld [vmem:[%s1569 + $0x8] sm:$0xf]
          %v1573 = vld [vmem:[%s1569 + $0xc] sm:$0xf]
          %v1578 = vunpack.c.l.b16 %v1570
          %v1579 = vunpack.c.l.b16 %v1571
          %v1580 = vunpack.c.l.b16 %v1572
          %v1581 = vunpack.c.l.b16 %v1573
          %v1582 = vpack.c.b16 %v1579, %v1578
          %v1583 = vpack.c.b16 %v1581, %v1580
          %1586 = vmatprep.subr.bf16.mxu0 0
          %1587 = vmatpush1.bf16.msra.mxu0 0
          %1588 = vmatprep.subr.bf16.mxu0 0
          %1589 = vmatpush1.bf16.msra.mxu0 0
          %1590 = vmatprep.subr.bf16.mxu0 0
          %1591 = vmatpush1.bf16.msra.mxu0 0
          %1592 = vmatprep.subr.bf16.mxu0 0
          %1593 = vmatpush1.bf16.msra.mxu0 0
          %1594 = vmatprep.subr.bf16.mxu0 0
          %1595 = vmatpush1.bf16.msra.mxu0 0
          %1596 = vmatprep.subr.bf16.mxu0 0
          %1597 = vmatpush1.bf16.msra.mxu0 0
          %1598 = vmatprep.subr.bf16.mxu0 0
          %1599 = vmatpush1.bf16.msra.mxu0 %v1583
          %1600 = vmatprep.subr.bf16.mxu0 0
          %1601 = vmatpush1.bf16.msra.mxu0 %v1582
          %1602 = vmatprep.subr.bf16.mxu0 0
          %1603 = vmatpush2.bf16.msra.mxu0 0
          %1604 = vmatprep.subr.bf16.mxu0 0
          %1605 = vmatpush2.bf16.msra.mxu0 0
          %1606 = vmatprep.subr.bf16.mxu0 0
          %1607 = vmatpush2.bf16.msra.mxu0 0
          %1608 = vmatprep.subr.bf16.mxu0 0
          %1609 = vmatpush2.bf16.msra.mxu0 0
          %1610 = vmatprep.subr.bf16.mxu0 0
          %1611 = vmatpush2.bf16.msra.mxu0 0
          %1612 = vmatprep.subr.bf16.mxu0 0
          %1613 = vmatpush2.bf16.msra.mxu0 0
          %1614 = vmatprep.subr.bf16.mxu0 0
          %1615 = vmatpush2.bf16.msra.mxu0 0
          %1616 = vmatprep.subr.bf16.mxu0 0
          %1617 = vmatpush2.bf16.msra.mxu0 0
          %1618 = vmatprep.mubr.bf16.mxu0 0
          %1619 = vmatmul.mubr.bf16.gmra.mxu0 %v553
          %v1620 = vpop.f32.mrf.mxu0
          %v1621 = vadd.f32 0.0, %v1620
          %v1622 = vpop.f32.mrf.mxu0
          %v1623 = vpop.f32.mrf.mxu0
          %v1624 = vadd.f32 0.0, %v1623
          %v1625 = vpop.f32.mrf.mxu0
          %1626 = vdwg.mxu0
          %v1627 = vpack.c.bf16 %v1624, %v1621
          %v1629 = vunpack.c.l.b16 %v1627
          %v1630 = vunpack.c.h.b16 %v1627
          %v1631 = vpack.c.b16 %v1629, %v1629
          %v1632 = vpack.c.b16 %v1630, %v1630
          %s1635 = scalar_lea.vmem [#allocation2], 40
          %1636 = vst.msk [vmem:[%s1635] sm:$0xf] %vm604, %v1631
          %1637 = vst.msk [vmem:[%s1635 + $0x4] sm:$0xf] %vm604, %v1632
          %s1638 = scalar_lea.vmem %s4, 80
          %v1639 = vld [vmem:[%s1638] sm:$0xf]
          %v1640 = vld [vmem:[%s1638 + $0x4] sm:$0xf]
          %v1641 = vld [vmem:[%s1638 + $0x8] sm:$0xf]
          %v1642 = vld [vmem:[%s1638 + $0xc] sm:$0xf]
          %v1647 = vunpack.c.l.b16 %v1639
          %v1648 = vunpack.c.l.b16 %v1640
          %v1649 = vunpack.c.l.b16 %v1641
          %v1650 = vunpack.c.l.b16 %v1642
          %v1651 = vpack.c.b16 %v1648, %v1647
          %v1652 = vpack.c.b16 %v1650, %v1649
          %1655 = vmatprep.subr.bf16.mxu0 0
          %1656 = vmatpush1.bf16.msra.mxu0 0
          %1657 = vmatprep.subr.bf16.mxu0 0
          %1658 = vmatpush1.bf16.msra.mxu0 0
          %1659 = vmatprep.subr.bf16.mxu0 0
          %1660 = vmatpush1.bf16.msra.mxu0 0
          %1661 = vmatprep.subr.bf16.mxu0 0
          %1662 = vmatpush1.bf16.msra.mxu0 0
          %1663 = vmatprep.subr.bf16.mxu0 0
          %1664 = vmatpush1.bf16.msra.mxu0 0
          %1665 = vmatprep.subr.bf16.mxu0 0
          %1666 = vmatpush1.bf16.msra.mxu0 0
          %1667 = vmatprep.subr.bf16.mxu0 0
          %1668 = vmatpush1.bf16.msra.mxu0 %v1652
          %1669 = vmatprep.subr.bf16.mxu0 0
          %1670 = vmatpush1.bf16.msra.mxu0 %v1651
          %1671 = vmatprep.subr.bf16.mxu0 0
          %1672 = vmatpush2.bf16.msra.mxu0 0
          %1673 = vmatprep.subr.bf16.mxu0 0
          %1674 = vmatpush2.bf16.msra.mxu0 0
          %1675 = vmatprep.subr.bf16.mxu0 0
          %1676 = vmatpush2.bf16.msra.mxu0 0
          %1677 = vmatprep.subr.bf16.mxu0 0
          %1678 = vmatpush2.bf16.msra.mxu0 0
          %1679 = vmatprep.subr.bf16.mxu0 0
          %1680 = vmatpush2.bf16.msra.mxu0 0
          %1681 = vmatprep.subr.bf16.mxu0 0
          %1682 = vmatpush2.bf16.msra.mxu0 0
          %1683 = vmatprep.subr.bf16.mxu0 0
          %1684 = vmatpush2.bf16.msra.mxu0 0
          %1685 = vmatprep.subr.bf16.mxu0 0
          %1686 = vmatpush2.bf16.msra.mxu0 0
          %1687 = vmatprep.mubr.bf16.mxu0 0
          %1688 = vmatmul.mubr.bf16.gmra.mxu0 %v553
          %v1689 = vpop.f32.mrf.mxu0
          %v1690 = vadd.f32 0.0, %v1689
          %v1691 = vpop.f32.mrf.mxu0
          %v1692 = vpop.f32.mrf.mxu0
          %v1693 = vadd.f32 0.0, %v1692
          %v1694 = vpop.f32.mrf.mxu0
          %1695 = vdwg.mxu0
          %v1696 = vpack.c.bf16 %v1693, %v1690
          %v1698 = vunpack.c.l.b16 %v1696
          %v1699 = vunpack.c.h.b16 %v1696
          %v1700 = vpack.c.b16 %v1698, %v1698
          %v1701 = vpack.c.b16 %v1699, %v1699
          %s1704 = scalar_lea.vmem [#allocation3], 40
          %1705 = vst.msk [vmem:[%s1704] sm:$0xf] %vm604, %v1700
          %1706 = vst.msk [vmem:[%s1704 + $0x4] sm:$0xf] %vm604, %v1701
          %s1707 = scalar_lea.vmem %s5, 80
          %v1708 = vld [vmem:[%s1707] sm:$0xf]
          %v1709 = vld [vmem:[%s1707 + $0x4] sm:$0xf]
          %v1710 = vld [vmem:[%s1707 + $0x8] sm:$0xf]
          %v1711 = vld [vmem:[%s1707 + $0xc] sm:$0xf]
          %v1716 = vunpack.c.l.b16 %v1708
          %v1717 = vunpack.c.l.b16 %v1709
          %v1718 = vunpack.c.l.b16 %v1710
          %v1719 = vunpack.c.l.b16 %v1711
          %v1720 = vpack.c.b16 %v1717, %v1716
          %v1721 = vpack.c.b16 %v1719, %v1718
          %1724 = vmatprep.subr.bf16.mxu0 0
          %1725 = vmatpush1.bf16.msra.mxu0 0
          %1726 = vmatprep.subr.bf16.mxu0 0
          %1727 = vmatpush1.bf16.msra.mxu0 0
          %1728 = vmatprep.subr.bf16.mxu0 0
          %1729 = vmatpush1.bf16.msra.mxu0 0
          %1730 = vmatprep.subr.bf16.mxu0 0
          %1731 = vmatpush1.bf16.msra.mxu0 0
          %1732 = vmatprep.subr.bf16.mxu0 0
          %1733 = vmatpush1.bf16.msra.mxu0 0
          %1734 = vmatprep.subr.bf16.mxu0 0
          %1735 = vmatpush1.bf16.msra.mxu0 0
          %1736 = vmatprep.subr.bf16.mxu0 0
          %1737 = vmatpush1.bf16.msra.mxu0 %v1721
          %1738 = vmatprep.subr.bf16.mxu0 0
          %1739 = vmatpush1.bf16.msra.mxu0 %v1720
          %1740 = vmatprep.subr.bf16.mxu0 0
          %1741 = vmatpush2.bf16.msra.mxu0 0
          %1742 = vmatprep.subr.bf16.mxu0 0
          %1743 = vmatpush2.bf16.msra.mxu0 0
          %1744 = vmatprep.subr.bf16.mxu0 0
          %1745 = vmatpush2.bf16.msra.mxu0 0
          %1746 = vmatprep.subr.bf16.mxu0 0
          %1747 = vmatpush2.bf16.msra.mxu0 0
          %1748 = vmatprep.subr.bf16.mxu0 0
          %1749 = vmatpush2.bf16.msra.mxu0 0
          %1750 = vmatprep.subr.bf16.mxu0 0
          %1751 = vmatpush2.bf16.msra.mxu0 0
          %1752 = vmatprep.subr.bf16.mxu0 0
          %1753 = vmatpush2.bf16.msra.mxu0 0
          %1754 = vmatprep.subr.bf16.mxu0 0
          %1755 = vmatpush2.bf16.msra.mxu0 0
          %1756 = vmatprep.mubr.bf16.mxu0 0
          %1757 = vmatmul.mubr.bf16.gmra.mxu0 %v553
          %v1758 = vpop.f32.mrf.mxu0
          %v1759 = vadd.f32 0.0, %v1758
          %v1760 = vpop.f32.mrf.mxu0
          %v1761 = vpop.f32.mrf.mxu0
          %v1762 = vadd.f32 0.0, %v1761
          %v1763 = vpop.f32.mrf.mxu0
          %1764 = vdwg.mxu0
          %v1765 = vpack.c.bf16 %v1762, %v1759
          %v1767 = vunpack.c.l.b16 %v1765
          %v1768 = vunpack.c.h.b16 %v1765
          %v1769 = vpack.c.b16 %v1767, %v1767
          %v1770 = vpack.c.b16 %v1768, %v1768
          %s1773 = scalar_lea.vmem [#allocation4], 40
          %1774 = vst.msk [vmem:[%s1773] sm:$0xf] %vm604, %v1769
          %1775 = vst.msk [vmem:[%s1773 + $0x4] sm:$0xf] %vm604, %v1770
          %s1776 = scalar_lea.vmem %s3, 96
          %v1777 = vld [vmem:[%s1776] sm:$0xf]
          %v1778 = vld [vmem:[%s1776 + $0x4] sm:$0xf]
          %v1779 = vld [vmem:[%s1776 + $0x8] sm:$0xf]
          %v1780 = vld [vmem:[%s1776 + $0xc] sm:$0xf]
          %v1785 = vunpack.c.l.b16 %v1777
          %v1786 = vunpack.c.l.b16 %v1778
          %v1787 = vunpack.c.l.b16 %v1779
          %v1788 = vunpack.c.l.b16 %v1780
          %v1789 = vpack.c.b16 %v1786, %v1785
          %v1790 = vpack.c.b16 %v1788, %v1787
          %1793 = vmatprep.subr.bf16.mxu0 0
          %1794 = vmatpush1.bf16.msra.mxu0 0
          %1795 = vmatprep.subr.bf16.mxu0 0
          %1796 = vmatpush1.bf16.msra.mxu0 0
          %1797 = vmatprep.subr.bf16.mxu0 0
          %1798 = vmatpush1.bf16.msra.mxu0 0
          %1799 = vmatprep.subr.bf16.mxu0 0
          %1800 = vmatpush1.bf16.msra.mxu0 0
          %1801 = vmatprep.subr.bf16.mxu0 0
          %1802 = vmatpush1.bf16.msra.mxu0 0
          %1803 = vmatprep.subr.bf16.mxu0 0
          %1804 = vmatpush1.bf16.msra.mxu0 0
          %1805 = vmatprep.subr.bf16.mxu0 0
          %1806 = vmatpush1.bf16.msra.mxu0 %v1790
          %1807 = vmatprep.subr.bf16.mxu0 0
          %1808 = vmatpush1.bf16.msra.mxu0 %v1789
          %1809 = vmatprep.subr.bf16.mxu0 0
          %1810 = vmatpush2.bf16.msra.mxu0 0
          %1811 = vmatprep.subr.bf16.mxu0 0
          %1812 = vmatpush2.bf16.msra.mxu0 0
          %1813 = vmatprep.subr.bf16.mxu0 0
          %1814 = vmatpush2.bf16.msra.mxu0 0
          %1815 = vmatprep.subr.bf16.mxu0 0
          %1816 = vmatpush2.bf16.msra.mxu0 0
          %1817 = vmatprep.subr.bf16.mxu0 0
          %1818 = vmatpush2.bf16.msra.mxu0 0
          %1819 = vmatprep.subr.bf16.mxu0 0
          %1820 = vmatpush2.bf16.msra.mxu0 0
          %1821 = vmatprep.subr.bf16.mxu0 0
          %1822 = vmatpush2.bf16.msra.mxu0 0
          %1823 = vmatprep.subr.bf16.mxu0 0
          %1824 = vmatpush2.bf16.msra.mxu0 0
          %1825 = vmatprep.mubr.bf16.mxu0 0
          %1826 = vmatmul.mubr.bf16.gmra.mxu0 %v553
          %v1827 = vpop.f32.mrf.mxu0
          %v1828 = vadd.f32 0.0, %v1827
          %v1829 = vpop.f32.mrf.mxu0
          %v1830 = vpop.f32.mrf.mxu0
          %v1831 = vadd.f32 0.0, %v1830
          %v1832 = vpop.f32.mrf.mxu0
          %1833 = vdwg.mxu0
          %v1834 = vpack.c.bf16 %v1831, %v1828
          %v1836 = vunpack.c.l.b16 %v1834
          %v1837 = vunpack.c.h.b16 %v1834
          %v1838 = vpack.c.b16 %v1836, %v1836
          %v1839 = vpack.c.b16 %v1837, %v1837
          %s1842 = scalar_lea.vmem [#allocation2], 48
          %1843 = vst.msk [vmem:[%s1842] sm:$0xf] %vm604, %v1838
          %1844 = vst.msk [vmem:[%s1842 + $0x4] sm:$0xf] %vm604, %v1839
          %s1845 = scalar_lea.vmem %s4, 96
          %v1846 = vld [vmem:[%s1845] sm:$0xf]
          %v1847 = vld [vmem:[%s1845 + $0x4] sm:$0xf]
          %v1848 = vld [vmem:[%s1845 + $0x8] sm:$0xf]
          %v1849 = vld [vmem:[%s1845 + $0xc] sm:$0xf]
          %v1854 = vunpack.c.l.b16 %v1846
          %v1855 = vunpack.c.l.b16 %v1847
          %v1856 = vunpack.c.l.b16 %v1848
          %v1857 = vunpack.c.l.b16 %v1849
          %v1858 = vpack.c.b16 %v1855, %v1854
          %v1859 = vpack.c.b16 %v1857, %v1856
          %1862 = vmatprep.subr.bf16.mxu0 0
          %1863 = vmatpush1.bf16.msra.mxu0 0
          %1864 = vmatprep.subr.bf16.mxu0 0
          %1865 = vmatpush1.bf16.msra.mxu0 0
          %1866 = vmatprep.subr.bf16.mxu0 0
          %1867 = vmatpush1.bf16.msra.mxu0 0
          %1868 = vmatprep.subr.bf16.mxu0 0
          %1869 = vmatpush1.bf16.msra.mxu0 0
          %1870 = vmatprep.subr.bf16.mxu0 0
          %1871 = vmatpush1.bf16.msra.mxu0 0
          %1872 = vmatprep.subr.bf16.mxu0 0
          %1873 = vmatpush1.bf16.msra.mxu0 0
          %1874 = vmatprep.subr.bf16.mxu0 0
          %1875 = vmatpush1.bf16.msra.mxu0 %v1859
          %1876 = vmatprep.subr.bf16.mxu0 0
          %1877 = vmatpush1.bf16.msra.mxu0 %v1858
          %1878 = vmatprep.subr.bf16.mxu0 0
          %1879 = vmatpush2.bf16.msra.mxu0 0
          %1880 = vmatprep.subr.bf16.mxu0 0
          %1881 = vmatpush2.bf16.msra.mxu0 0
          %1882 = vmatprep.subr.bf16.mxu0 0
          %1883 = vmatpush2.bf16.msra.mxu0 0
          %1884 = vmatprep.subr.bf16.mxu0 0
          %1885 = vmatpush2.bf16.msra.mxu0 0
          %1886 = vmatprep.subr.bf16.mxu0 0
          %1887 = vmatpush2.bf16.msra.mxu0 0
          %1888 = vmatprep.subr.bf16.mxu0 0
          %1889 = vmatpush2.bf16.msra.mxu0 0
          %1890 = vmatprep.subr.bf16.mxu0 0
          %1891 = vmatpush2.bf16.msra.mxu0 0
          %1892 = vmatprep.subr.bf16.mxu0 0
          %1893 = vmatpush2.bf16.msra.mxu0 0
          %1894 = vmatprep.mubr.bf16.mxu0 0
          %1895 = vmatmul.mubr.bf16.gmra.mxu0 %v553
          %v1896 = vpop.f32.mrf.mxu0
          %v1897 = vadd.f32 0.0, %v1896
          %v1898 = vpop.f32.mrf.mxu0
          %v1899 = vpop.f32.mrf.mxu0
          %v1900 = vadd.f32 0.0, %v1899
          %v1901 = vpop.f32.mrf.mxu0
          %1902 = vdwg.mxu0
          %v1903 = vpack.c.bf16 %v1900, %v1897
          %v1905 = vunpack.c.l.b16 %v1903
          %v1906 = vunpack.c.h.b16 %v1903
          %v1907 = vpack.c.b16 %v1905, %v1905
          %v1908 = vpack.c.b16 %v1906, %v1906
          %s1911 = scalar_lea.vmem [#allocation3], 48
          %1912 = vst.msk [vmem:[%s1911] sm:$0xf] %vm604, %v1907
          %1913 = vst.msk [vmem:[%s1911 + $0x4] sm:$0xf] %vm604, %v1908
          %s1914 = scalar_lea.vmem %s5, 96
          %v1915 = vld [vmem:[%s1914] sm:$0xf]
          %v1916 = vld [vmem:[%s1914 + $0x4] sm:$0xf]
          %v1917 = vld [vmem:[%s1914 + $0x8] sm:$0xf]
          %v1918 = vld [vmem:[%s1914 + $0xc] sm:$0xf]
          %v1923 = vunpack.c.l.b16 %v1915
          %v1924 = vunpack.c.l.b16 %v1916
          %v1925 = vunpack.c.l.b16 %v1917
          %v1926 = vunpack.c.l.b16 %v1918
          %v1927 = vpack.c.b16 %v1924, %v1923
          %v1928 = vpack.c.b16 %v1926, %v1925
          %1931 = vmatprep.subr.bf16.mxu0 0
          %1932 = vmatpush1.bf16.msra.mxu0 0
          %1933 = vmatprep.subr.bf16.mxu0 0
          %1934 = vmatpush1.bf16.msra.mxu0 0
          %1935 = vmatprep.subr.bf16.mxu0 0
          %1936 = vmatpush1.bf16.msra.mxu0 0
          %1937 = vmatprep.subr.bf16.mxu0 0
          %1938 = vmatpush1.bf16.msra.mxu0 0
          %1939 = vmatprep.subr.bf16.mxu0 0
          %1940 = vmatpush1.bf16.msra.mxu0 0
          %1941 = vmatprep.subr.bf16.mxu0 0
          %1942 = vmatpush1.bf16.msra.mxu0 0
          %1943 = vmatprep.subr.bf16.mxu0 0
          %1944 = vmatpush1.bf16.msra.mxu0 %v1928
          %1945 = vmatprep.subr.bf16.mxu0 0
          %1946 = vmatpush1.bf16.msra.mxu0 %v1927
          %1947 = vmatprep.subr.bf16.mxu0 0
          %1948 = vmatpush2.bf16.msra.mxu0 0
          %1949 = vmatprep.subr.bf16.mxu0 0
          %1950 = vmatpush2.bf16.msra.mxu0 0
          %1951 = vmatprep.subr.bf16.mxu0 0
          %1952 = vmatpush2.bf16.msra.mxu0 0
          %1953 = vmatprep.subr.bf16.mxu0 0
          %1954 = vmatpush2.bf16.msra.mxu0 0
          %1955 = vmatprep.subr.bf16.mxu0 0
          %1956 = vmatpush2.bf16.msra.mxu0 0
          %1957 = vmatprep.subr.bf16.mxu0 0
          %1958 = vmatpush2.bf16.msra.mxu0 0
          %1959 = vmatprep.subr.bf16.mxu0 0
          %1960 = vmatpush2.bf16.msra.mxu0 0
          %1961 = vmatprep.subr.bf16.mxu0 0
          %1962 = vmatpush2.bf16.msra.mxu0 0
          %1963 = vmatprep.mubr.bf16.mxu0 0
          %1964 = vmatmul.mubr.bf16.gmra.mxu0 %v553
          %v1965 = vpop.f32.mrf.mxu0
          %v1966 = vadd.f32 0.0, %v1965
          %v1967 = vpop.f32.mrf.mxu0
          %v1968 = vpop.f32.mrf.mxu0
          %v1969 = vadd.f32 0.0, %v1968
          %v1970 = vpop.f32.mrf.mxu0
          %1971 = vdwg.mxu0
          %v1972 = vpack.c.bf16 %v1969, %v1966
          %v1974 = vunpack.c.l.b16 %v1972
          %v1975 = vunpack.c.h.b16 %v1972
          %v1976 = vpack.c.b16 %v1974, %v1974
          %v1977 = vpack.c.b16 %v1975, %v1975
          %s1980 = scalar_lea.vmem [#allocation4], 48
          %1981 = vst.msk [vmem:[%s1980] sm:$0xf] %vm604, %v1976
          %1982 = vst.msk [vmem:[%s1980 + $0x4] sm:$0xf] %vm604, %v1977
          %s1983 = scalar_lea.vmem %s3, 112
          %v1984 = vld [vmem:[%s1983] sm:$0xf]
          %v1985 = vld [vmem:[%s1983 + $0x4] sm:$0xf]
          %v1986 = vld [vmem:[%s1983 + $0x8] sm:$0xf]
          %v1987 = vld [vmem:[%s1983 + $0xc] sm:$0xf]
          %v1992 = vunpack.c.l.b16 %v1984
          %v1993 = vunpack.c.l.b16 %v1985
          %v1994 = vunpack.c.l.b16 %v1986
          %v1995 = vunpack.c.l.b16 %v1987
          %v1996 = vpack.c.b16 %v1993, %v1992
          %v1997 = vpack.c.b16 %v1995, %v1994
          %2000 = vmatprep.subr.bf16.mxu0 0
          %2001 = vmatpush1.bf16.msra.mxu0 0
          %2002 = vmatprep.subr.bf16.mxu0 0
          %2003 = vmatpush1.bf16.msra.mxu0 0
          %2004 = vmatprep.subr.bf16.mxu0 0
          %2005 = vmatpush1.bf16.msra.mxu0 0
          %2006 = vmatprep.subr.bf16.mxu0 0
          %2007 = vmatpush1.bf16.msra.mxu0 0
          %2008 = vmatprep.subr.bf16.mxu0 0
          %2009 = vmatpush1.bf16.msra.mxu0 0
          %2010 = vmatprep.subr.bf16.mxu0 0
          %2011 = vmatpush1.bf16.msra.mxu0 0
          %2012 = vmatprep.subr.bf16.mxu0 0
          %2013 = vmatpush1.bf16.msra.mxu0 %v1997
          %2014 = vmatprep.subr.bf16.mxu0 0
          %2015 = vmatpush1.bf16.msra.mxu0 %v1996
          %2016 = vmatprep.subr.bf16.mxu0 0
          %2017 = vmatpush2.bf16.msra.mxu0 0
          %2018 = vmatprep.subr.bf16.mxu0 0
          %2019 = vmatpush2.bf16.msra.mxu0 0
          %2020 = vmatprep.subr.bf16.mxu0 0
          %2021 = vmatpush2.bf16.msra.mxu0 0
          %2022 = vmatprep.subr.bf16.mxu0 0
          %2023 = vmatpush2.bf16.msra.mxu0 0
          %2024 = vmatprep.subr.bf16.mxu0 0
          %2025 = vmatpush2.bf16.msra.mxu0 0
          %2026 = vmatprep.subr.bf16.mxu0 0
          %2027 = vmatpush2.bf16.msra.mxu0 0
          %2028 = vmatprep.subr.bf16.mxu0 0
          %2029 = vmatpush2.bf16.msra.mxu0 0
          %2030 = vmatprep.subr.bf16.mxu0 0
          %2031 = vmatpush2.bf16.msra.mxu0 0
          %2032 = vmatprep.mubr.bf16.mxu0 0
          %2033 = vmatmul.mubr.bf16.gmra.mxu0 %v553
          %v2034 = vpop.f32.mrf.mxu0
          %v2035 = vadd.f32 0.0, %v2034
          %v2036 = vpop.f32.mrf.mxu0
          %v2037 = vpop.f32.mrf.mxu0
          %v2038 = vadd.f32 0.0, %v2037
          %v2039 = vpop.f32.mrf.mxu0
          %2040 = vdwg.mxu0
          %v2041 = vpack.c.bf16 %v2038, %v2035
          %v2043 = vunpack.c.l.b16 %v2041
          %v2044 = vunpack.c.h.b16 %v2041
          %v2045 = vpack.c.b16 %v2043, %v2043
          %v2046 = vpack.c.b16 %v2044, %v2044
          %s2049 = scalar_lea.vmem [#allocation2], 56
          %2050 = vst.msk [vmem:[%s2049] sm:$0xf] %vm604, %v2045
          %2051 = vst.msk [vmem:[%s2049 + $0x4] sm:$0xf] %vm604, %v2046
          %s2052 = scalar_lea.vmem %s4, 112
          %v2053 = vld [vmem:[%s2052] sm:$0xf]
          %v2054 = vld [vmem:[%s2052 + $0x4] sm:$0xf]
          %v2055 = vld [vmem:[%s2052 + $0x8] sm:$0xf]
          %v2056 = vld [vmem:[%s2052 + $0xc] sm:$0xf]
          %v2061 = vunpack.c.l.b16 %v2053
          %v2062 = vunpack.c.l.b16 %v2054
          %v2063 = vunpack.c.l.b16 %v2055
          %v2064 = vunpack.c.l.b16 %v2056
          %v2065 = vpack.c.b16 %v2062, %v2061
          %v2066 = vpack.c.b16 %v2064, %v2063
          %2069 = vmatprep.subr.bf16.mxu0 0
          %2070 = vmatpush1.bf16.msra.mxu0 0
          %2071 = vmatprep.subr.bf16.mxu0 0
          %2072 = vmatpush1.bf16.msra.mxu0 0
          %2073 = vmatprep.subr.bf16.mxu0 0
          %2074 = vmatpush1.bf16.msra.mxu0 0
          %2075 = vmatprep.subr.bf16.mxu0 0
          %2076 = vmatpush1.bf16.msra.mxu0 0
          %2077 = vmatprep.subr.bf16.mxu0 0
          %2078 = vmatpush1.bf16.msra.mxu0 0
          %2079 = vmatprep.subr.bf16.mxu0 0
          %2080 = vmatpush1.bf16.msra.mxu0 0
          %2081 = vmatprep.subr.bf16.mxu0 0
          %2082 = vmatpush1.bf16.msra.mxu0 %v2066
          %2083 = vmatprep.subr.bf16.mxu0 0
          %2084 = vmatpush1.bf16.msra.mxu0 %v2065
          %2085 = vmatprep.subr.bf16.mxu0 0
          %2086 = vmatpush2.bf16.msra.mxu0 0
          %2087 = vmatprep.subr.bf16.mxu0 0
          %2088 = vmatpush2.bf16.msra.mxu0 0
          %2089 = vmatprep.subr.bf16.mxu0 0
          %2090 = vmatpush2.bf16.msra.mxu0 0
          %2091 = vmatprep.subr.bf16.mxu0 0
          %2092 = vmatpush2.bf16.msra.mxu0 0
          %2093 = vmatprep.subr.bf16.mxu0 0
          %2094 = vmatpush2.bf16.msra.mxu0 0
          %2095 = vmatprep.subr.bf16.mxu0 0
          %2096 = vmatpush2.bf16.msra.mxu0 0
          %2097 = vmatprep.subr.bf16.mxu0 0
          %2098 = vmatpush2.bf16.msra.mxu0 0
          %2099 = vmatprep.subr.bf16.mxu0 0
          %2100 = vmatpush2.bf16.msra.mxu0 0
          %2101 = vmatprep.mubr.bf16.mxu0 0
          %2102 = vmatmul.mubr.bf16.gmra.mxu0 %v553
          %v2103 = vpop.f32.mrf.mxu0
          %v2104 = vadd.f32 0.0, %v2103
          %v2105 = vpop.f32.mrf.mxu0
          %v2106 = vpop.f32.mrf.mxu0
          %v2107 = vadd.f32 0.0, %v2106
          %v2108 = vpop.f32.mrf.mxu0
          %2109 = vdwg.mxu0
          %v2110 = vpack.c.bf16 %v2107, %v2104
          %v2112 = vunpack.c.l.b16 %v2110
          %v2113 = vunpack.c.h.b16 %v2110
          %v2114 = vpack.c.b16 %v2112, %v2112
          %v2115 = vpack.c.b16 %v2113, %v2113
          %s2118 = scalar_lea.vmem [#allocation3], 56
          %2119 = vst.msk [vmem:[%s2118] sm:$0xf] %vm604, %v2114
          %2120 = vst.msk [vmem:[%s2118 + $0x4] sm:$0xf] %vm604, %v2115
          %s2121 = scalar_lea.vmem %s5, 112
          %v2122 = vld [vmem:[%s2121] sm:$0xf]
          %v2123 = vld [vmem:[%s2121 + $0x4] sm:$0xf]
          %v2124 = vld [vmem:[%s2121 + $0x8] sm:$0xf]
          %v2125 = vld [vmem:[%s2121 + $0xc] sm:$0xf]
          %v2130 = vunpack.c.l.b16 %v2122
          %v2131 = vunpack.c.l.b16 %v2123
          %v2132 = vunpack.c.l.b16 %v2124
          %v2133 = vunpack.c.l.b16 %v2125
          %v2134 = vpack.c.b16 %v2131, %v2130
          %v2135 = vpack.c.b16 %v2133, %v2132
          %2138 = vmatprep.subr.bf16.mxu0 0
          %2139 = vmatpush1.bf16.msra.mxu0 0
          %2140 = vmatprep.subr.bf16.mxu0 0
          %2141 = vmatpush1.bf16.msra.mxu0 0
          %2142 = vmatprep.subr.bf16.mxu0 0
          %2143 = vmatpush1.bf16.msra.mxu0 0
          %2144 = vmatprep.subr.bf16.mxu0 0
          %2145 = vmatpush1.bf16.msra.mxu0 0
          %2146 = vmatprep.subr.bf16.mxu0 0
          %2147 = vmatpush1.bf16.msra.mxu0 0
          %2148 = vmatprep.subr.bf16.mxu0 0
          %2149 = vmatpush1.bf16.msra.mxu0 0
          %2150 = vmatprep.subr.bf16.mxu0 0
          %2151 = vmatpush1.bf16.msra.mxu0 %v2135
          %2152 = vmatprep.subr.bf16.mxu0 0
          %2153 = vmatpush1.bf16.msra.mxu0 %v2134
          %2154 = vmatprep.subr.bf16.mxu0 0
          %2155 = vmatpush2.bf16.msra.mxu0 0
          %2156 = vmatprep.subr.bf16.mxu0 0
          %2157 = vmatpush2.bf16.msra.mxu0 0
          %2158 = vmatprep.subr.bf16.mxu0 0
          %2159 = vmatpush2.bf16.msra.mxu0 0
          %2160 = vmatprep.subr.bf16.mxu0 0
          %2161 = vmatpush2.bf16.msra.mxu0 0
          %2162 = vmatprep.subr.bf16.mxu0 0
          %2163 = vmatpush2.bf16.msra.mxu0 0
          %2164 = vmatprep.subr.bf16.mxu0 0
          %2165 = vmatpush2.bf16.msra.mxu0 0
          %2166 = vmatprep.subr.bf16.mxu0 0
          %2167 = vmatpush2.bf16.msra.mxu0 0
          %2168 = vmatprep.subr.bf16.mxu0 0
          %2169 = vmatpush2.bf16.msra.mxu0 0
          %2170 = vmatprep.mubr.bf16.mxu0 0
          %2171 = vmatmul.mubr.bf16.gmra.mxu0 %v553
          %v2172 = vpop.f32.mrf.mxu0
          %v2173 = vadd.f32 0.0, %v2172
          %v2174 = vpop.f32.mrf.mxu0
          %v2175 = vpop.f32.mrf.mxu0
          %v2176 = vadd.f32 0.0, %v2175
          %v2177 = vpop.f32.mrf.mxu0
          %2178 = vdwg.mxu0
          %v2179 = vpack.c.bf16 %v2176, %v2173
          %v2181 = vunpack.c.l.b16 %v2179
          %v2182 = vunpack.c.h.b16 %v2179
          %v2183 = vpack.c.b16 %v2181, %v2181
          %v2184 = vpack.c.b16 %v2182, %v2182
          %s2187 = scalar_lea.vmem [#allocation4], 56
          %2188 = vst.msk [vmem:[%s2187] sm:$0xf] %vm604, %v2183
          %2189 = vst.msk [vmem:[%s2187 + $0x4] sm:$0xf] %vm604, %v2184
        $region80: #{tpu_custom_call.1} parent=75 // pred_fallthru
          _
        %s2190 = sshra.s32 %s482, 3
        %s2191 = sand.u32 %s482, 7
        %s2192 = smul.addr %s2190, 4
        %s2193 = scalar_lea.vmem [#allocation2], %s2192
        %v2194 = vld [vmem:[%s2193] sm:$0xf]
        %v2195 = vld [vmem:[%s2193 + $0x4] sm:$0xf]
        %v2196 = vld [vmem:[%s2193 + $0x8] sm:$0xf]
        %v2197 = vld [vmem:[%s2193 + $0xc] sm:$0xf]
        %v2198 = vld [vmem:[%s2193 + $0x10] sm:$0xf]
        %v2199 = vld [vmem:[%s2193 + $0x14] sm:$0xf]
        %v2200 = vld [vmem:[%s2193 + $0x18] sm:$0xf]
        %v2201 = vld [vmem:[%s2193 + $0x1c] sm:$0xf]
        %v2202 = vld [vmem:[%s2193 + $0x20] sm:$0xf]
        %v2203 = vld [vmem:[%s2193 + $0x24] sm:$0xf]
        %v2204 = vld [vmem:[%s2193 + $0x28] sm:$0xf]
        %v2205 = vld [vmem:[%s2193 + $0x2c] sm:$0xf]
        %v2206 = vld [vmem:[%s2193 + $0x30] sm:$0xf]
        %v2207 = vld [vmem:[%s2193 + $0x34] sm:$0xf]
        %v2208 = vld [vmem:[%s2193 + $0x38] sm:$0xf]
        %v2209 = vld [vmem:[%s2193 + $0x3c] sm:$0xf]
        %v2210 = vld [vmem:[#allocation3] sm:$0xf]
        %v2211 = vld [vmem:[#allocation3 + $0x4] sm:$0xf]
        %v2212 = vld [vmem:[#allocation3 + $0x8] sm:$0xf]
        %v2213 = vld [vmem:[#allocation3 + $0xc] sm:$0xf]
        %v2214 = vld [vmem:[#allocation3 + $0x10] sm:$0xf]
        %v2215 = vld [vmem:[#allocation3 + $0x14] sm:$0xf]
        %v2216 = vld [vmem:[#allocation3 + $0x18] sm:$0xf]
        %v2217 = vld [vmem:[#allocation3 + $0x1c] sm:$0xf]
        %v2218 = vld [vmem:[#allocation3 + $0x20] sm:$0xf]
        %v2219 = vld [vmem:[#allocation3 + $0x24] sm:$0xf]
        %v2220 = vld [vmem:[#allocation3 + $0x28] sm:$0xf]
        %v2221 = vld [vmem:[#allocation3 + $0x2c] sm:$0xf]
        %v2222 = vld [vmem:[#allocation3 + $0x30] sm:$0xf]
        %v2223 = vld [vmem:[#allocation3 + $0x34] sm:$0xf]
        %v2224 = vld [vmem:[#allocation3 + $0x38] sm:$0xf]
        %v2225 = vld [vmem:[#allocation3 + $0x3c] sm:$0xf]
        %v2226 = vld [vmem:[#allocation4] sm:$0xf]
        %v2227 = vld [vmem:[#allocation4 + $0x4] sm:$0xf]
        %v2228 = vld [vmem:[#allocation4 + $0x8] sm:$0xf]
        %v2229 = vld [vmem:[#allocation4 + $0xc] sm:$0xf]
        %v2230 = vld [vmem:[#allocation4 + $0x10] sm:$0xf]
        %v2231 = vld [vmem:[#allocation4 + $0x14] sm:$0xf]
        %v2232 = vld [vmem:[#allocation4 + $0x18] sm:$0xf]
        %v2233 = vld [vmem:[#allocation4 + $0x1c] sm:$0xf]
        %v2234 = vld [vmem:[#allocation4 + $0x20] sm:$0xf]
        %v2235 = vld [vmem:[#allocation4 + $0x24] sm:$0xf]
        %v2236 = vld [vmem:[#allocation4 + $0x28] sm:$0xf]
        %v2237 = vld [vmem:[#allocation4 + $0x2c] sm:$0xf]
        %v2238 = vld [vmem:[#allocation4 + $0x30] sm:$0xf]
        %v2239 = vld [vmem:[#allocation4 + $0x34] sm:$0xf]
        %v2240 = vld [vmem:[#allocation4 + $0x38] sm:$0xf]
        %v2241 = vld [vmem:[#allocation4 + $0x3c] sm:$0xf]
        %v2244 = vunpack.c.l.b16 %v2194
        %v2245 = vunpack.c.l.b16 %v2195
        %v2246 = vpack.c.b16 %v2245, %v2244
        %v2249 = vunpack.c.l.b16 %v2210
        %v2250 = vunpack.c.l.b16 %v2211
        %v2251 = vpack.c.b16 %v2250, %v2249
        %vm2252 = vcmask 31744
        %v2254 = vsel %vm2252, %v2246, 0
        %v2257 = vsel %vm2252, %v2251, 0
        %2259 = vmatprep.subr.bf16.mxu0 0
        %2260 = vmatpush1.bf16.xpose.msra.mxu0 0
        %2261 = vmatprep.subr.bf16.mxu0 0
        %2262 = vmatpush1.bf16.xpose.msra.mxu0 0
        %2263 = vmatprep.subr.bf16.mxu0 0
        %2264 = vmatpush1.bf16.xpose.msra.mxu0 0
        %2265 = vmatprep.subr.bf16.mxu0 0
        %2266 = vmatpush1.bf16.xpose.msra.mxu0 0
        %2267 = vmatprep.subr.bf16.mxu0 0
        %2268 = vmatpush1.bf16.xpose.msra.mxu0 0
        %2269 = vmatprep.subr.bf16.mxu0 0
        %2270 = vmatpush1.bf16.xpose.msra.mxu0 0
        %2271 = vmatprep.subr.bf16.mxu0 0
        %2272 = vmatpush1.bf16.xpose.msra.mxu0 0
        %2273 = vmatprep.subr.bf16.mxu0 0
        %2274 = vmatpush1.bf16.xpose.msra.mxu0 %v2257
        %2275 = vmatprep.subr.bf16.mxu0 0
        %2276 = vmatpush2.bf16.xpose.msra.mxu0 0
        %2277 = vmatprep.subr.bf16.mxu0 0
        %2278 = vmatpush2.bf16.xpose.msra.mxu0 0
        %2279 = vmatprep.subr.bf16.mxu0 0
        %2280 = vmatpush2.bf16.xpose.msra.mxu0 0
        %2281 = vmatprep.subr.bf16.mxu0 0
        %2282 = vmatpush2.bf16.xpose.msra.mxu0 0
        %2283 = vmatprep.subr.bf16.mxu0 0
        %2284 = vmatpush2.bf16.xpose.msra.mxu0 0
        %2285 = vmatprep.subr.bf16.mxu0 0
        %2286 = vmatpush2.bf16.xpose.msra.mxu0 0
        %2287 = vmatprep.subr.bf16.mxu0 0
        %2288 = vmatpush2.bf16.xpose.msra.mxu0 0
        %2289 = vmatprep.subr.bf16.mxu0 0
        %2290 = vmatpush2.bf16.xpose.msra.mxu0 0
        %2291 = vmatprep.mubr.bf16.mxu0 0
        %2292 = vmatmul.mubr.bf16.gmra.mxu0 %v2254
        %v2293 = vpop.f32.mrf.mxu0
        %v2294 = vadd.f32 0.0, %v2293
        %v2295 = vpop.f32.mrf.mxu0
        %v2296 = vpop.f32.mrf.mxu0
        %v2297 = vadd.f32 0.0, %v2296
        %v2298 = vpop.f32.mrf.mxu0
        %2299 = vdwg.mxu0
        %v2302 = vunpack.c.l.b16 %v2196
        %v2303 = vunpack.c.l.b16 %v2197
        %v2304 = vpack.c.b16 %v2303, %v2302
        %v2307 = vunpack.c.l.b16 %v2212
        %v2308 = vunpack.c.l.b16 %v2213
        %v2309 = vpack.c.b16 %v2308, %v2307
        %v2311 = vsel %vm2252, %v2304, 0
        %v2314 = vsel %vm2252, %v2309, 0
        %2316 = vmatprep.subr.bf16.mxu0 0
        %2317 = vmatpush1.bf16.xpose.msra.mxu0 0
        %2318 = vmatprep.subr.bf16.mxu0 0
        %2319 = vmatpush1.bf16.xpose.msra.mxu0 0
        %2320 = vmatprep.subr.bf16.mxu0 0
        %2321 = vmatpush1.bf16.xpose.msra.mxu0 0
        %2322 = vmatprep.subr.bf16.mxu0 0
        %2323 = vmatpush1.bf16.xpose.msra.mxu0 0
        %2324 = vmatprep.subr.bf16.mxu0 0
        %2325 = vmatpush1.bf16.xpose.msra.mxu0 0
        %2326 = vmatprep.subr.bf16.mxu0 0
        %2327 = vmatpush1.bf16.xpose.msra.mxu0 0
        %2328 = vmatprep.subr.bf16.mxu0 0
        %2329 = vmatpush1.bf16.xpose.msra.mxu0 0
        %2330 = vmatprep.subr.bf16.mxu0 0
        %2331 = vmatpush1.bf16.xpose.msra.mxu0 %v2314
        %2332 = vmatprep.subr.bf16.mxu0 0
        %2333 = vmatpush2.bf16.xpose.msra.mxu0 0
        %2334 = vmatprep.subr.bf16.mxu0 0
        %2335 = vmatpush2.bf16.xpose.msra.mxu0 0
        %2336 = vmatprep.subr.bf16.mxu0 0
        %2337 = vmatpush2.bf16.xpose.msra.mxu0 0
        %2338 = vmatprep.subr.bf16.mxu0 0
        %2339 = vmatpush2.bf16.xpose.msra.mxu0 0
        %2340 = vmatprep.subr.bf16.mxu0 0
        %2341 = vmatpush2.bf16.xpose.msra.mxu0 0
        %2342 = vmatprep.subr.bf16.mxu0 0
        %2343 = vmatpush2.bf16.xpose.msra.mxu0 0
        %2344 = vmatprep.subr.bf16.mxu0 0
        %2345 = vmatpush2.bf16.xpose.msra.mxu0 0
        %2346 = vmatprep.subr.bf16.mxu0 0
        %2347 = vmatpush2.bf16.xpose.msra.mxu0 0
        %2348 = vmatprep.mubr.bf16.mxu0 0
        %2349 = vmatmul.mubr.bf16.gmra.mxu0 %v2311
        %v2350 = vpop.f32.mrf.mxu0
        %v2351 = vadd.f32 0.0, %v2350
        %v2352 = vpop.f32.mrf.mxu0
        %v2353 = vpop.f32.mrf.mxu0
        %v2354 = vadd.f32 0.0, %v2353
        %v2355 = vpop.f32.mrf.mxu0
        %2356 = vdwg.mxu0
        %v2359 = vunpack.c.l.b16 %v2198
        %v2360 = vunpack.c.l.b16 %v2199
        %v2361 = vpack.c.b16 %v2360, %v2359
        %v2364 = vunpack.c.l.b16 %v2214
        %v2365 = vunpack.c.l.b16 %v2215
        %v2366 = vpack.c.b16 %v2365, %v2364
        %v2368 = vsel %vm2252, %v2361, 0
        %v2371 = vsel %vm2252, %v2366, 0
        %2373 = vmatprep.subr.bf16.mxu0 0
        %2374 = vmatpush1.bf16.xpose.msra.mxu0 0
        %2375 = vmatprep.subr.bf16.mxu0 0
        %2376 = vmatpush1.bf16.xpose.msra.mxu0 0
        %2377 = vmatprep.subr.bf16.mxu0 0
        %2378 = vmatpush1.bf16.xpose.msra.mxu0 0
        %2379 = vmatprep.subr.bf16.mxu0 0
        %2380 = vmatpush1.bf16.xpose.msra.mxu0 0
        %2381 = vmatprep.subr.bf16.mxu0 0
        %2382 = vmatpush1.bf16.xpose.msra.mxu0 0
        %2383 = vmatprep.subr.bf16.mxu0 0
        %2384 = vmatpush1.bf16.xpose.msra.mxu0 0
        %2385 = vmatprep.subr.bf16.mxu0 0
        %2386 = vmatpush1.bf16.xpose.msra.mxu0 0
        %2387 = vmatprep.subr.bf16.mxu0 0
        %2388 = vmatpush1.bf16.xpose.msra.mxu0 %v2371
        %2389 = vmatprep.subr.bf16.mxu0 0
        %2390 = vmatpush2.bf16.xpose.msra.mxu0 0
        %2391 = vmatprep.subr.bf16.mxu0 0
        %2392 = vmatpush2.bf16.xpose.msra.mxu0 0
        %2393 = vmatprep.subr.bf16.mxu0 0
        %2394 = vmatpush2.bf16.xpose.msra.mxu0 0
        %2395 = vmatprep.subr.bf16.mxu0 0
        %2396 = vmatpush2.bf16.xpose.msra.mxu0 0
        %2397 = vmatprep.subr.bf16.mxu0 0
        %2398 = vmatpush2.bf16.xpose.msra.mxu0 0
        %2399 = vmatprep.subr.bf16.mxu0 0
        %2400 = vmatpush2.bf16.xpose.msra.mxu0 0
        %2401 = vmatprep.subr.bf16.mxu0 0
        %2402 = vmatpush2.bf16.xpose.msra.mxu0 0
        %2403 = vmatprep.subr.bf16.mxu0 0
        %2404 = vmatpush2.bf16.xpose.msra.mxu0 0
        %2405 = vmatprep.mubr.bf16.mxu0 0
        %2406 = vmatmul.mubr.bf16.gmra.mxu0 %v2368
        %v2407 = vpop.f32.mrf.mxu0
        %v2408 = vadd.f32 0.0, %v2407
        %v2409 = vpop.f32.mrf.mxu0
        %v2410 = vpop.f32.mrf.mxu0
        %v2411 = vadd.f32 0.0, %v2410
        %v2412 = vpop.f32.mrf.mxu0
        %2413 = vdwg.mxu0
        %v2416 = vunpack.c.l.b16 %v2200
        %v2417 = vunpack.c.l.b16 %v2201
        %v2418 = vpack.c.b16 %v2417, %v2416
        %v2421 = vunpack.c.l.b16 %v2216
        %v2422 = vunpack.c.l.b16 %v2217
        %v2423 = vpack.c.b16 %v2422, %v2421
        %v2425 = vsel %vm2252, %v2418, 0
        %v2428 = vsel %vm2252, %v2423, 0
        %2430 = vmatprep.subr.bf16.mxu0 0
        %2431 = vmatpush1.bf16.xpose.msra.mxu0 0
        %2432 = vmatprep.subr.bf16.mxu0 0
        %2433 = vmatpush1.bf16.xpose.msra.mxu0 0
        %2434 = vmatprep.subr.bf16.mxu0 0
        %2435 = vmatpush1.bf16.xpose.msra.mxu0 0
        %2436 = vmatprep.subr.bf16.mxu0 0
        %2437 = vmatpush1.bf16.xpose.msra.mxu0 0
        %2438 = vmatprep.subr.bf16.mxu0 0
        %2439 = vmatpush1.bf16.xpose.msra.mxu0 0
        %2440 = vmatprep.subr.bf16.mxu0 0
        %2441 = vmatpush1.bf16.xpose.msra.mxu0 0
        %2442 = vmatprep.subr.bf16.mxu0 0
        %2443 = vmatpush1.bf16.xpose.msra.mxu0 0
        %2444 = vmatprep.subr.bf16.mxu0 0
        %2445 = vmatpush1.bf16.xpose.msra.mxu0 %v2428
        %2446 = vmatprep.subr.bf16.mxu0 0
        %2447 = vmatpush2.bf16.xpose.msra.mxu0 0
        %2448 = vmatprep.subr.bf16.mxu0 0
        %2449 = vmatpush2.bf16.xpose.msra.mxu0 0
        %2450 = vmatprep.subr.bf16.mxu0 0
        %2451 = vmatpush2.bf16.xpose.msra.mxu0 0
        %2452 = vmatprep.subr.bf16.mxu0 0
        %2453 = vmatpush2.bf16.xpose.msra.mxu0 0
        %2454 = vmatprep.subr.bf16.mxu0 0
        %2455 = vmatpush2.bf16.xpose.msra.mxu0 0
        %2456 = vmatprep.subr.bf16.mxu0 0
        %2457 = vmatpush2.bf16.xpose.msra.mxu0 0
        %2458 = vmatprep.subr.bf16.mxu0 0
        %2459 = vmatpush2.bf16.xpose.msra.mxu0 0
        %2460 = vmatprep.subr.bf16.mxu0 0
        %2461 = vmatpush2.bf16.xpose.msra.mxu0 0
        %2462 = vmatprep.mubr.bf16.mxu0 0
        %2463 = vmatmul.mubr.bf16.gmra.mxu0 %v2425
        %v2464 = vpop.f32.mrf.mxu0
        %v2465 = vadd.f32 0.0, %v2464
        %v2466 = vpop.f32.mrf.mxu0
        %v2467 = vpop.f32.mrf.mxu0
        %v2468 = vadd.f32 0.0, %v2467
        %v2469 = vpop.f32.mrf.mxu0
        %2470 = vdwg.mxu0
        %v2473 = vunpack.c.l.b16 %v2202
        %v2474 = vunpack.c.l.b16 %v2203
        %v2475 = vpack.c.b16 %v2474, %v2473
        %v2478 = vunpack.c.l.b16 %v2218
        %v2479 = vunpack.c.l.b16 %v2219
        %v2480 = vpack.c.b16 %v2479, %v2478
        %v2482 = vsel %vm2252, %v2475, 0
        %v2485 = vsel %vm2252, %v2480, 0
        %2487 = vmatprep.subr.bf16.mxu0 0
        %2488 = vmatpush1.bf16.xpose.msra.mxu0 0
        %2489 = vmatprep.subr.bf16.mxu0 0
        %2490 = vmatpush1.bf16.xpose.msra.mxu0 0
        %2491 = vmatprep.subr.bf16.mxu0 0
        %2492 = vmatpush1.bf16.xpose.msra.mxu0 0
        %2493 = vmatprep.subr.bf16.mxu0 0
        %2494 = vmatpush1.bf16.xpose.msra.mxu0 0
        %2495 = vmatprep.subr.bf16.mxu0 0
        %2496 = vmatpush1.bf16.xpose.msra.mxu0 0
        %2497 = vmatprep.subr.bf16.mxu0 0
        %2498 = vmatpush1.bf16.xpose.msra.mxu0 0
        %2499 = vmatprep.subr.bf16.mxu0 0
        %2500 = vmatpush1.bf16.xpose.msra.mxu0 0
        %2501 = vmatprep.subr.bf16.mxu0 0
        %2502 = vmatpush1.bf16.xpose.msra.mxu0 %v2485
        %2503 = vmatprep.subr.bf16.mxu0 0
        %2504 = vmatpush2.bf16.xpose.msra.mxu0 0
        %2505 = vmatprep.subr.bf16.mxu0 0
        %2506 = vmatpush2.bf16.xpose.msra.mxu0 0
        %2507 = vmatprep.subr.bf16.mxu0 0
        %2508 = vmatpush2.bf16.xpose.msra.mxu0 0
        %2509 = vmatprep.subr.bf16.mxu0 0
        %2510 = vmatpush2.bf16.xpose.msra.mxu0 0
        %2511 = vmatprep.subr.bf16.mxu0 0
        %2512 = vmatpush2.bf16.xpose.msra.mxu0 0
        %2513 = vmatprep.subr.bf16.mxu0 0
        %2514 = vmatpush2.bf16.xpose.msra.mxu0 0
        %2515 = vmatprep.subr.bf16.mxu0 0
        %2516 = vmatpush2.bf16.xpose.msra.mxu0 0
        %2517 = vmatprep.subr.bf16.mxu0 0
        %2518 = vmatpush2.bf16.xpose.msra.mxu0 0
        %2519 = vmatprep.mubr.bf16.mxu0 0
        %2520 = vmatmul.mubr.bf16.gmra.mxu0 %v2482
        %v2521 = vpop.f32.mrf.mxu0
        %v2522 = vadd.f32 0.0, %v2521
        %v2523 = vpop.f32.mrf.mxu0
        %v2524 = vpop.f32.mrf.mxu0
        %v2525 = vadd.f32 0.0, %v2524
        %v2526 = vpop.f32.mrf.mxu0
        %2527 = vdwg.mxu0
        %v2530 = vunpack.c.l.b16 %v2204
        %v2531 = vunpack.c.l.b16 %v2205
        %v2532 = vpack.c.b16 %v2531, %v2530
        %v2535 = vunpack.c.l.b16 %v2220
        %v2536 = vunpack.c.l.b16 %v2221
        %v2537 = vpack.c.b16 %v2536, %v2535
        %v2539 = vsel %vm2252, %v2532, 0
        %v2542 = vsel %vm2252, %v2537, 0
        %2544 = vmatprep.subr.bf16.mxu0 0
        %2545 = vmatpush1.bf16.xpose.msra.mxu0 0
        %2546 = vmatprep.subr.bf16.mxu0 0
        %2547 = vmatpush1.bf16.xpose.msra.mxu0 0
        %2548 = vmatprep.subr.bf16.mxu0 0
        %2549 = vmatpush1.bf16.xpose.msra.mxu0 0
        %2550 = vmatprep.subr.bf16.mxu0 0
        %2551 = vmatpush1.bf16.xpose.msra.mxu0 0
        %2552 = vmatprep.subr.bf16.mxu0 0
        %2553 = vmatpush1.bf16.xpose.msra.mxu0 0
        %2554 = vmatprep.subr.bf16.mxu0 0
        %2555 = vmatpush1.bf16.xpose.msra.mxu0 0
        %2556 = vmatprep.subr.bf16.mxu0 0
        %2557 = vmatpush1.bf16.xpose.msra.mxu0 0
        %2558 = vmatprep.subr.bf16.mxu0 0
        %2559 = vmatpush1.bf16.xpose.msra.mxu0 %v2542
        %2560 = vmatprep.subr.bf16.mxu0 0
        %2561 = vmatpush2.bf16.xpose.msra.mxu0 0
        %2562 = vmatprep.subr.bf16.mxu0 0
        %2563 = vmatpush2.bf16.xpose.msra.mxu0 0
        %2564 = vmatprep.subr.bf16.mxu0 0
        %2565 = vmatpush2.bf16.xpose.msra.mxu0 0
        %2566 = vmatprep.subr.bf16.mxu0 0
        %2567 = vmatpush2.bf16.xpose.msra.mxu0 0
        %2568 = vmatprep.subr.bf16.mxu0 0
        %2569 = vmatpush2.bf16.xpose.msra.mxu0 0
        %2570 = vmatprep.subr.bf16.mxu0 0
        %2571 = vmatpush2.bf16.xpose.msra.mxu0 0
        %2572 = vmatprep.subr.bf16.mxu0 0
        %2573 = vmatpush2.bf16.xpose.msra.mxu0 0
        %2574 = vmatprep.subr.bf16.mxu0 0
        %2575 = vmatpush2.bf16.xpose.msra.mxu0 0
        %2576 = vmatprep.mubr.bf16.mxu0 0
        %2577 = vmatmul.mubr.bf16.gmra.mxu0 %v2539
        %v2578 = vpop.f32.mrf.mxu0
        %v2579 = vadd.f32 0.0, %v2578
        %v2580 = vpop.f32.mrf.mxu0
        %v2581 = vpop.f32.mrf.mxu0
        %v2582 = vadd.f32 0.0, %v2581
        %v2583 = vpop.f32.mrf.mxu0
        %2584 = vdwg.mxu0
        %v2587 = vunpack.c.l.b16 %v2206
        %v2588 = vunpack.c.l.b16 %v2207
        %v2589 = vpack.c.b16 %v2588, %v2587
        %v2592 = vunpack.c.l.b16 %v2222
        %v2593 = vunpack.c.l.b16 %v2223
        %v2594 = vpack.c.b16 %v2593, %v2592
        %v2596 = vsel %vm2252, %v2589, 0
        %v2599 = vsel %vm2252, %v2594, 0
        %2601 = vmatprep.subr.bf16.mxu0 0
        %2602 = vmatpush1.bf16.xpose.msra.mxu0 0
        %2603 = vmatprep.subr.bf16.mxu0 0
        %2604 = vmatpush1.bf16.xpose.msra.mxu0 0
        %2605 = vmatprep.subr.bf16.mxu0 0
        %2606 = vmatpush1.bf16.xpose.msra.mxu0 0
        %2607 = vmatprep.subr.bf16.mxu0 0
        %2608 = vmatpush1.bf16.xpose.msra.mxu0 0
        %2609 = vmatprep.subr.bf16.mxu0 0
        %2610 = vmatpush1.bf16.xpose.msra.mxu0 0
        %2611 = vmatprep.subr.bf16.mxu0 0
        %2612 = vmatpush1.bf16.xpose.msra.mxu0 0
        %2613 = vmatprep.subr.bf16.mxu0 0
        %2614 = vmatpush1.bf16.xpose.msra.mxu0 0
        %2615 = vmatprep.subr.bf16.mxu0 0
        %2616 = vmatpush1.bf16.xpose.msra.mxu0 %v2599
        %2617 = vmatprep.subr.bf16.mxu0 0
        %2618 = vmatpush2.bf16.xpose.msra.mxu0 0
        %2619 = vmatprep.subr.bf16.mxu0 0
        %2620 = vmatpush2.bf16.xpose.msra.mxu0 0
        %2621 = vmatprep.subr.bf16.mxu0 0
        %2622 = vmatpush2.bf16.xpose.msra.mxu0 0
        %2623 = vmatprep.subr.bf16.mxu0 0
        %2624 = vmatpush2.bf16.xpose.msra.mxu0 0
        %2625 = vmatprep.subr.bf16.mxu0 0
        %2626 = vmatpush2.bf16.xpose.msra.mxu0 0
        %2627 = vmatprep.subr.bf16.mxu0 0
        %2628 = vmatpush2.bf16.xpose.msra.mxu0 0
        %2629 = vmatprep.subr.bf16.mxu0 0
        %2630 = vmatpush2.bf16.xpose.msra.mxu0 0
        %2631 = vmatprep.subr.bf16.mxu0 0
        %2632 = vmatpush2.bf16.xpose.msra.mxu0 0
        %2633 = vmatprep.mubr.bf16.mxu0 0
        %2634 = vmatmul.mubr.bf16.gmra.mxu0 %v2596
        %v2635 = vpop.f32.mrf.mxu0
        %v2636 = vadd.f32 0.0, %v2635
        %v2637 = vpop.f32.mrf.mxu0
        %v2638 = vpop.f32.mrf.mxu0
        %v2639 = vadd.f32 0.0, %v2638
        %v2640 = vpop.f32.mrf.mxu0
        %2641 = vdwg.mxu0
        %v2644 = vunpack.c.l.b16 %v2208
        %v2645 = vunpack.c.l.b16 %v2209
        %v2646 = vpack.c.b16 %v2645, %v2644
        %v2649 = vunpack.c.l.b16 %v2224
        %v2650 = vunpack.c.l.b16 %v2225
        %v2651 = vpack.c.b16 %v2650, %v2649
        %v2653 = vsel %vm2252, %v2646, 0
        %v2656 = vsel %vm2252, %v2651, 0
        %2658 = vmatprep.subr.bf16.mxu0 0
        %2659 = vmatpush1.bf16.xpose.msra.mxu0 0
        %2660 = vmatprep.subr.bf16.mxu0 0
        %2661 = vmatpush1.bf16.xpose.msra.mxu0 0
        %2662 = vmatprep.subr.bf16.mxu0 0
        %2663 = vmatpush1.bf16.xpose.msra.mxu0 0
        %2664 = vmatprep.subr.bf16.mxu0 0
        %2665 = vmatpush1.bf16.xpose.msra.mxu0 0
        %2666 = vmatprep.subr.bf16.mxu0 0
        %2667 = vmatpush1.bf16.xpose.msra.mxu0 0
        %2668 = vmatprep.subr.bf16.mxu0 0
        %2669 = vmatpush1.bf16.xpose.msra.mxu0 0
        %2670 = vmatprep.subr.bf16.mxu0 0
        %2671 = vmatpush1.bf16.xpose.msra.mxu0 0
        %2672 = vmatprep.subr.bf16.mxu0 0
        %2673 = vmatpush1.bf16.xpose.msra.mxu0 %v2656
        %2674 = vmatprep.subr.bf16.mxu0 0
        %2675 = vmatpush2.bf16.xpose.msra.mxu0 0
        %2676 = vmatprep.subr.bf16.mxu0 0
        %2677 = vmatpush2.bf16.xpose.msra.mxu0 0
        %2678 = vmatprep.subr.bf16.mxu0 0
        %2679 = vmatpush2.bf16.xpose.msra.mxu0 0
        %2680 = vmatprep.subr.bf16.mxu0 0
        %2681 = vmatpush2.bf16.xpose.msra.mxu0 0
        %2682 = vmatprep.subr.bf16.mxu0 0
        %2683 = vmatpush2.bf16.xpose.msra.mxu0 0
        %2684 = vmatprep.subr.bf16.mxu0 0
        %2685 = vmatpush2.bf16.xpose.msra.mxu0 0
        %2686 = vmatprep.subr.bf16.mxu0 0
        %2687 = vmatpush2.bf16.xpose.msra.mxu0 0
        %2688 = vmatprep.subr.bf16.mxu0 0
        %2689 = vmatpush2.bf16.xpose.msra.mxu0 0
        %2690 = vmatprep.mubr.bf16.mxu0 0
        %2691 = vmatmul.mubr.bf16.gmra.mxu0 %v2653
        %v2692 = vpop.f32.mrf.mxu0
        %v2693 = vadd.f32 0.0, %v2692
        %v2694 = vpop.f32.mrf.mxu0
        %v2695 = vpop.f32.mrf.mxu0
        %v2696 = vadd.f32 0.0, %v2695
        %v2697 = vpop.f32.mrf.mxu0
        %2698 = vdwg.mxu0
        %vm2699 = vcmask 130048
        %v2700 = vsel %vm2699, %v2294, -inf
        %2701 = vmax.xlane.f32.xlu0 %v2700
        %v2702 = vpop.xlane.xlu0 %2701
        %v2703 = vsel %vm2699, %v2297, -inf
        %2704 = vmax.xlane.f32.xlu0 %v2703
        %v2705 = vpop.xlane.xlu0 %2704
        %v2706 = vsel %vm2699, %v2351, -inf
        %2707 = vmax.xlane.f32.xlu0 %v2706
        %v2708 = vpop.xlane.xlu0 %2707
        %v2709 = vsel %vm2699, %v2354, -inf
        %2710 = vmax.xlane.f32.xlu0 %v2709
        %v2711 = vpop.xlane.xlu0 %2710
        %v2712 = vsel %vm2699, %v2408, -inf
        %2713 = vmax.xlane.f32.xlu0 %v2712
        %v2714 = vpop.xlane.xlu0 %2713
        %v2715 = vsel %vm2699, %v2411, -inf
        %2716 = vmax.xlane.f32.xlu0 %v2715
        %v2717 = vpop.xlane.xlu0 %2716
        %v2718 = vsel %vm2699, %v2465, -inf
        %2719 = vmax.xlane.f32.xlu0 %v2718
        %v2720 = vpop.xlane.xlu0 %2719
        %v2721 = vsel %vm2699, %v2468, -inf
        %2722 = vmax.xlane.f32.xlu0 %v2721
        %v2723 = vpop.xlane.xlu0 %2722
        %v2724 = vsel %vm2699, %v2522, -inf
        %2725 = vmax.xlane.f32.xlu0 %v2724
        %v2726 = vpop.xlane.xlu0 %2725
        %v2727 = vsel %vm2699, %v2525, -inf
        %2728 = vmax.xlane.f32.xlu0 %v2727
        %v2729 = vpop.xlane.xlu0 %2728
        %v2730 = vsel %vm2699, %v2579, -inf
        %2731 = vmax.xlane.f32.xlu0 %v2730
        %v2732 = vpop.xlane.xlu0 %2731
        %v2733 = vsel %vm2699, %v2582, -inf
        %2734 = vmax.xlane.f32.xlu0 %v2733
        %v2735 = vpop.xlane.xlu0 %2734
        %v2736 = vsel %vm2699, %v2636, -inf
        %2737 = vmax.xlane.f32.xlu0 %v2736
        %v2738 = vpop.xlane.xlu0 %2737
        %v2739 = vsel %vm2699, %v2639, -inf
        %2740 = vmax.xlane.f32.xlu0 %v2739
        %v2741 = vpop.xlane.xlu0 %2740
        %v2742 = vsel %vm2699, %v2693, -inf
        %2743 = vmax.xlane.f32.xlu0 %v2742
        %v2744 = vpop.xlane.xlu0 %2743
        %v2745 = vsel %vm2699, %v2696, -inf
        %2746 = vmax.xlane.f32.xlu0 %v2745
        %v2747 = vpop.xlane.xlu0 %2746
        %v2748 = vsub.f32 %v2294, %v2702
        %v2749 = vsub.f32 %v2297, %v2705
        %v2750 = vsub.f32 %v2351, %v2708
        %v2751 = vsub.f32 %v2354, %v2711
        %v2752 = vsub.f32 %v2408, %v2714
        %v2753 = vsub.f32 %v2411, %v2717
        %v2754 = vsub.f32 %v2465, %v2720
        %v2755 = vsub.f32 %v2468, %v2723
        %v2756 = vsub.f32 %v2522, %v2726
        %v2757 = vsub.f32 %v2525, %v2729
        %v2758 = vsub.f32 %v2579, %v2732
        %v2759 = vsub.f32 %v2582, %v2735
        %v2760 = vsub.f32 %v2636, %v2738
        %v2761 = vsub.f32 %v2639, %v2741
        %v2762 = vsub.f32 %v2693, %v2744
        %v2763 = vsub.f32 %v2696, %v2747
        %v2764 = vmul.f32 %v2748, 1.442695
        %v2765 = vpow.pop %v2764
        %v2766 = vmul.f32 %v2749, 1.442695
        %v2767 = vpow.pop %v2766
        %v2768 = vmul.f32 %v2750, 1.442695
        %v2769 = vpow.pop %v2768
        %v2770 = vmul.f32 %v2751, 1.442695
        %v2771 = vpow.pop %v2770
        %v2772 = vmul.f32 %v2752, 1.442695
        %v2773 = vpow.pop %v2772
        %v2774 = vmul.f32 %v2753, 1.442695
        %v2775 = vpow.pop %v2774
        %v2776 = vmul.f32 %v2754, 1.442695
        %v2777 = vpow.pop %v2776
        %v2778 = vmul.f32 %v2755, 1.442695
        %v2779 = vpow.pop %v2778
        %v2780 = vmul.f32 %v2756, 1.442695
        %v2781 = vpow.pop %v2780
        %v2782 = vmul.f32 %v2757, 1.442695
        %v2783 = vpow.pop %v2782
        %v2784 = vmul.f32 %v2758, 1.442695
        %v2785 = vpow.pop %v2784
        %v2786 = vmul.f32 %v2759, 1.442695
        %v2787 = vpow.pop %v2786
        %v2788 = vmul.f32 %v2760, 1.442695
        %v2789 = vpow.pop %v2788
        %v2790 = vmul.f32 %v2761, 1.442695
        %v2791 = vpow.pop %v2790
        %v2792 = vmul.f32 %v2762, 1.442695
        %v2793 = vpow.pop %v2792
        %v2794 = vmul.f32 %v2763, 1.442695
        %v2795 = vpow.pop %v2794
        %v2796 = vsel %vm2699, %v2765, 0.0
        %2797 = vadd.xlane.f32.xlu0 %v2796
        %v2798 = vpop.xlane.xlu0 %2797
        %v2799 = vsel %vm2699, %v2767, 0.0
        %2800 = vadd.xlane.f32.xlu0 %v2799
        %v2801 = vpop.xlane.xlu0 %2800
        %v2802 = vsel %vm2699, %v2769, 0.0
        %2803 = vadd.xlane.f32.xlu0 %v2802
        %v2804 = vpop.xlane.xlu0 %2803
        %v2805 = vsel %vm2699, %v2771, 0.0
        %2806 = vadd.xlane.f32.xlu0 %v2805
        %v2807 = vpop.xlane.xlu0 %2806
        %v2808 = vsel %vm2699, %v2773, 0.0
        %2809 = vadd.xlane.f32.xlu0 %v2808
        %v2810 = vpop.xlane.xlu0 %2809
        %v2811 = vsel %vm2699, %v2775, 0.0
        %2812 = vadd.xlane.f32.xlu0 %v2811
        %v2813 = vpop.xlane.xlu0 %2812
        %v2814 = vsel %vm2699, %v2777, 0.0
        %2815 = vadd.xlane.f32.xlu0 %v2814
        %v2816 = vpop.xlane.xlu0 %2815
        %v2817 = vsel %vm2699, %v2779, 0.0
        %2818 = vadd.xlane.f32.xlu0 %v2817
        %v2819 = vpop.xlane.xlu0 %2818
        %v2820 = vsel %vm2699, %v2781, 0.0
        %2821 = vadd.xlane.f32.xlu0 %v2820
        %v2822 = vpop.xlane.xlu0 %2821
        %v2823 = vsel %vm2699, %v2783, 0.0
        %2824 = vadd.xlane.f32.xlu0 %v2823
        %v2825 = vpop.xlane.xlu0 %2824
        %v2826 = vsel %vm2699, %v2785, 0.0
        %2827 = vadd.xlane.f32.xlu0 %v2826
        %v2828 = vpop.xlane.xlu0 %2827
        %v2829 = vsel %vm2699, %v2787, 0.0
        %2830 = vadd.xlane.f32.xlu0 %v2829
        %v2831 = vpop.xlane.xlu0 %2830
        %v2832 = vsel %vm2699, %v2789, 0.0
        %2833 = vadd.xlane.f32.xlu0 %v2832
        %v2834 = vpop.xlane.xlu0 %2833
        %v2835 = vsel %vm2699, %v2791, 0.0
        %2836 = vadd.xlane.f32.xlu0 %v2835
        %v2837 = vpop.xlane.xlu0 %2836
        %v2838 = vsel %vm2699, %v2793, 0.0
        %2839 = vadd.xlane.f32.xlu0 %v2838
        %v2840 = vpop.xlane.xlu0 %2839
        %v2841 = vsel %vm2699, %v2795, 0.0
        %2842 = vadd.xlane.f32.xlu0 %v2841
        %v2843 = vpop.xlane.xlu0 %2842
        %v2844 = vrcp.pop %v2798
        %v2845 = vrcp.pop %v2801
        %v2846 = vrcp.pop %v2804
        %v2847 = vrcp.pop %v2807
        %v2848 = vrcp.pop %v2810
        %v2849 = vrcp.pop %v2813
        %v2850 = vrcp.pop %v2816
        %v2851 = vrcp.pop %v2819
        %v2852 = vrcp.pop %v2822
        %v2853 = vrcp.pop %v2825
        %v2854 = vrcp.pop %v2828
        %v2855 = vrcp.pop %v2831
        %v2856 = vrcp.pop %v2834
        %v2857 = vrcp.pop %v2837
        %v2858 = vrcp.pop %v2840
        %v2859 = vrcp.pop %v2843
        %v2860 = vmul.f32 %v2765, %v2844
        %v2861 = vmul.f32 %v2767, %v2845
        %v2862 = vmul.f32 %v2769, %v2846
        %v2863 = vmul.f32 %v2771, %v2847
        %v2864 = vmul.f32 %v2773, %v2848
        %v2865 = vmul.f32 %v2775, %v2849
        %v2866 = vmul.f32 %v2777, %v2850
        %v2867 = vmul.f32 %v2779, %v2851
        %v2868 = vmul.f32 %v2781, %v2852
        %v2869 = vmul.f32 %v2783, %v2853
        %v2870 = vmul.f32 %v2785, %v2854
        %v2871 = vmul.f32 %v2787, %v2855
        %v2872 = vmul.f32 %v2789, %v2856
        %v2873 = vmul.f32 %v2791, %v2857
        %v2874 = vmul.f32 %v2793, %v2858
        %v2875 = vmul.f32 %v2795, %v2859
        %v2876 = vpack.c.bf16 %v2861, %v2860
        %v2877 = vpack.c.bf16 %v2863, %v2862
        %v2878 = vpack.c.bf16 %v2865, %v2864
        %v2879 = vpack.c.bf16 %v2867, %v2866
        %v2880 = vpack.c.bf16 %v2869, %v2868
        %v2881 = vpack.c.bf16 %v2871, %v2870
        %v2882 = vpack.c.bf16 %v2873, %v2872
        %v2883 = vpack.c.bf16 %v2875, %v2874
        %v2886 = vunpack.c.l.b16 %v2226
        %v2887 = vunpack.c.l.b16 %v2227
        %v2888 = vpack.c.b16 %v2887, %v2886
        %v2891 = vsel %vm2699, %v2876, 0
        %2893 = vmatprep.subr.bf16.mxu0 0
        %2894 = vmatpush1.bf16.msra.mxu0 0
        %2895 = vmatprep.subr.bf16.mxu0 0
        %2896 = vmatpush1.bf16.msra.mxu0 0
        %2897 = vmatprep.subr.bf16.mxu0 0
        %2898 = vmatpush1.bf16.msra.mxu0 0
        %2899 = vmatprep.subr.bf16.mxu0 0
        %2900 = vmatpush1.bf16.msra.mxu0 0
        %2901 = vmatprep.subr.bf16.mxu0 0
        %2902 = vmatpush1.bf16.msra.mxu0 0
        %2903 = vmatprep.subr.bf16.mxu0 0
        %2904 = vmatpush1.bf16.msra.mxu0 0
        %2905 = vmatprep.subr.bf16.mxu0 0
        %2906 = vmatpush1.bf16.msra.mxu0 0
        %2907 = vmatprep.subr.bf16.mxu0 0
        %2908 = vmatpush1.bf16.msra.mxu0 %v2888
        %2909 = vmatprep.subr.bf16.mxu0 0
        %2910 = vmatpush2.bf16.msra.mxu0 0
        %2911 = vmatprep.subr.bf16.mxu0 0
        %2912 = vmatpush2.bf16.msra.mxu0 0
        %2913 = vmatprep.subr.bf16.mxu0 0
        %2914 = vmatpush2.bf16.msra.mxu0 0
        %2915 = vmatprep.subr.bf16.mxu0 0
        %2916 = vmatpush2.bf16.msra.mxu0 0
        %2917 = vmatprep.subr.bf16.mxu0 0
        %2918 = vmatpush2.bf16.msra.mxu0 0
        %2919 = vmatprep.subr.bf16.mxu0 0
        %2920 = vmatpush2.bf16.msra.mxu0 0
        %2921 = vmatprep.subr.bf16.mxu0 0
        %2922 = vmatpush2.bf16.msra.mxu0 0
        %2923 = vmatprep.subr.bf16.mxu0 0
        %2924 = vmatpush2.bf16.msra.mxu0 0
        %2925 = vmatprep.mubr.bf16.mxu0 0
        %2926 = vmatmul.mubr.bf16.gmra.mxu0 %v2891
        %v2927 = vpop.f32.mrf.mxu0
        %v2928 = vadd.f32 0.0, %v2927
        %v2929 = vpop.f32.mrf.mxu0
        %v2930 = vpop.f32.mrf.mxu0
        %v2931 = vadd.f32 0.0, %v2930
        %v2932 = vpop.f32.mrf.mxu0
        %2933 = vdwg.mxu0
        %v2936 = vunpack.c.l.b16 %v2228
        %v2937 = vunpack.c.l.b16 %v2229
        %v2938 = vpack.c.b16 %v2937, %v2936
        %v2941 = vsel %vm2699, %v2877, 0
        %2943 = vmatprep.subr.bf16.mxu0 0
        %2944 = vmatpush1.bf16.msra.mxu0 0
        %2945 = vmatprep.subr.bf16.mxu0 0
        %2946 = vmatpush1.bf16.msra.mxu0 0
        %2947 = vmatprep.subr.bf16.mxu0 0
        %2948 = vmatpush1.bf16.msra.mxu0 0
        %2949 = vmatprep.subr.bf16.mxu0 0
        %2950 = vmatpush1.bf16.msra.mxu0 0
        %2951 = vmatprep.subr.bf16.mxu0 0
        %2952 = vmatpush1.bf16.msra.mxu0 0
        %2953 = vmatprep.subr.bf16.mxu0 0
        %2954 = vmatpush1.bf16.msra.mxu0 0
        %2955 = vmatprep.subr.bf16.mxu0 0
        %2956 = vmatpush1.bf16.msra.mxu0 0
        %2957 = vmatprep.subr.bf16.mxu0 0
        %2958 = vmatpush1.bf16.msra.mxu0 %v2938
        %2959 = vmatprep.subr.bf16.mxu0 0
        %2960 = vmatpush2.bf16.msra.mxu0 0
        %2961 = vmatprep.subr.bf16.mxu0 0
        %2962 = vmatpush2.bf16.msra.mxu0 0
        %2963 = vmatprep.subr.bf16.mxu0 0
        %2964 = vmatpush2.bf16.msra.mxu0 0
        %2965 = vmatprep.subr.bf16.mxu0 0
        %2966 = vmatpush2.bf16.msra.mxu0 0
        %2967 = vmatprep.subr.bf16.mxu0 0
        %2968 = vmatpush2.bf16.msra.mxu0 0
        %2969 = vmatprep.subr.bf16.mxu0 0
        %2970 = vmatpush2.bf16.msra.mxu0 0
        %2971 = vmatprep.subr.bf16.mxu0 0
        %2972 = vmatpush2.bf16.msra.mxu0 0
        %2973 = vmatprep.subr.bf16.mxu0 0
        %2974 = vmatpush2.bf16.msra.mxu0 0
        %2975 = vmatprep.mubr.bf16.mxu0 0
        %2976 = vmatmul.mubr.bf16.gmra.mxu0 %v2941
        %v2977 = vpop.f32.mrf.mxu0
        %v2978 = vadd.f32 0.0, %v2977
        %v2979 = vpop.f32.mrf.mxu0
        %v2980 = vpop.f32.mrf.mxu0
        %v2981 = vadd.f32 0.0, %v2980
        %v2982 = vpop.f32.mrf.mxu0
        %2983 = vdwg.mxu0
        %v2986 = vunpack.c.l.b16 %v2230
        %v2987 = vunpack.c.l.b16 %v2231
        %v2988 = vpack.c.b16 %v2987, %v2986
        %v2991 = vsel %vm2699, %v2878, 0
        %2993 = vmatprep.subr.bf16.mxu0 0
        %2994 = vmatpush1.bf16.msra.mxu0 0
        %2995 = vmatprep.subr.bf16.mxu0 0
        %2996 = vmatpush1.bf16.msra.mxu0 0
        %2997 = vmatprep.subr.bf16.mxu0 0
        %2998 = vmatpush1.bf16.msra.mxu0 0
        %2999 = vmatprep.subr.bf16.mxu0 0
        %3000 = vmatpush1.bf16.msra.mxu0 0
        %3001 = vmatprep.subr.bf16.mxu0 0
        %3002 = vmatpush1.bf16.msra.mxu0 0
        %3003 = vmatprep.subr.bf16.mxu0 0
        %3004 = vmatpush1.bf16.msra.mxu0 0
        %3005 = vmatprep.subr.bf16.mxu0 0
        %3006 = vmatpush1.bf16.msra.mxu0 0
        %3007 = vmatprep.subr.bf16.mxu0 0
        %3008 = vmatpush1.bf16.msra.mxu0 %v2988
        %3009 = vmatprep.subr.bf16.mxu0 0
        %3010 = vmatpush2.bf16.msra.mxu0 0
        %3011 = vmatprep.subr.bf16.mxu0 0
        %3012 = vmatpush2.bf16.msra.mxu0 0
        %3013 = vmatprep.subr.bf16.mxu0 0
        %3014 = vmatpush2.bf16.msra.mxu0 0
        %3015 = vmatprep.subr.bf16.mxu0 0
        %3016 = vmatpush2.bf16.msra.mxu0 0
        %3017 = vmatprep.subr.bf16.mxu0 0
        %3018 = vmatpush2.bf16.msra.mxu0 0
        %3019 = vmatprep.subr.bf16.mxu0 0
        %3020 = vmatpush2.bf16.msra.mxu0 0
        %3021 = vmatprep.subr.bf16.mxu0 0
        %3022 = vmatpush2.bf16.msra.mxu0 0
        %3023 = vmatprep.subr.bf16.mxu0 0
        %3024 = vmatpush2.bf16.msra.mxu0 0
        %3025 = vmatprep.mubr.bf16.mxu0 0
        %3026 = vmatmul.mubr.bf16.gmra.mxu0 %v2991
        %v3027 = vpop.f32.mrf.mxu0
        %v3028 = vadd.f32 0.0, %v3027
        %v3029 = vpop.f32.mrf.mxu0
        %v3030 = vpop.f32.mrf.mxu0
        %v3031 = vadd.f32 0.0, %v3030
        %v3032 = vpop.f32.mrf.mxu0
        %3033 = vdwg.mxu0
        %v3036 = vunpack.c.l.b16 %v2232
        %v3037 = vunpack.c.l.b16 %v2233
        %v3038 = vpack.c.b16 %v3037, %v3036
        %v3041 = vsel %vm2699, %v2879, 0
        %3043 = vmatprep.subr.bf16.mxu0 0
        %3044 = vmatpush1.bf16.msra.mxu0 0
        %3045 = vmatprep.subr.bf16.mxu0 0
        %3046 = vmatpush1.bf16.msra.mxu0 0
        %3047 = vmatprep.subr.bf16.mxu0 0
        %3048 = vmatpush1.bf16.msra.mxu0 0
        %3049 = vmatprep.subr.bf16.mxu0 0
        %3050 = vmatpush1.bf16.msra.mxu0 0
        %3051 = vmatprep.subr.bf16.mxu0 0
        %3052 = vmatpush1.bf16.msra.mxu0 0
        %3053 = vmatprep.subr.bf16.mxu0 0
        %3054 = vmatpush1.bf16.msra.mxu0 0
        %3055 = vmatprep.subr.bf16.mxu0 0
        %3056 = vmatpush1.bf16.msra.mxu0 0
        %3057 = vmatprep.subr.bf16.mxu0 0
        %3058 = vmatpush1.bf16.msra.mxu0 %v3038
        %3059 = vmatprep.subr.bf16.mxu0 0
        %3060 = vmatpush2.bf16.msra.mxu0 0
        %3061 = vmatprep.subr.bf16.mxu0 0
        %3062 = vmatpush2.bf16.msra.mxu0 0
        %3063 = vmatprep.subr.bf16.mxu0 0
        %3064 = vmatpush2.bf16.msra.mxu0 0
        %3065 = vmatprep.subr.bf16.mxu0 0
        %3066 = vmatpush2.bf16.msra.mxu0 0
        %3067 = vmatprep.subr.bf16.mxu0 0
        %3068 = vmatpush2.bf16.msra.mxu0 0
        %3069 = vmatprep.subr.bf16.mxu0 0
        %3070 = vmatpush2.bf16.msra.mxu0 0
        %3071 = vmatprep.subr.bf16.mxu0 0
        %3072 = vmatpush2.bf16.msra.mxu0 0
        %3073 = vmatprep.subr.bf16.mxu0 0
        %3074 = vmatpush2.bf16.msra.mxu0 0
        %3075 = vmatprep.mubr.bf16.mxu0 0
        %3076 = vmatmul.mubr.bf16.gmra.mxu0 %v3041
        %v3077 = vpop.f32.mrf.mxu0
        %v3078 = vadd.f32 0.0, %v3077
        %v3079 = vpop.f32.mrf.mxu0
        %v3080 = vpop.f32.mrf.mxu0
        %v3081 = vadd.f32 0.0, %v3080
        %v3082 = vpop.f32.mrf.mxu0
        %3083 = vdwg.mxu0
        %v3086 = vunpack.c.l.b16 %v2234
        %v3087 = vunpack.c.l.b16 %v2235
        %v3088 = vpack.c.b16 %v3087, %v3086
        %v3091 = vsel %vm2699, %v2880, 0
        %3093 = vmatprep.subr.bf16.mxu0 0
        %3094 = vmatpush1.bf16.msra.mxu0 0
        %3095 = vmatprep.subr.bf16.mxu0 0
        %3096 = vmatpush1.bf16.msra.mxu0 0
        %3097 = vmatprep.subr.bf16.mxu0 0
        %3098 = vmatpush1.bf16.msra.mxu0 0
        %3099 = vmatprep.subr.bf16.mxu0 0
        %3100 = vmatpush1.bf16.msra.mxu0 0
        %3101 = vmatprep.subr.bf16.mxu0 0
        %3102 = vmatpush1.bf16.msra.mxu0 0
        %3103 = vmatprep.subr.bf16.mxu0 0
        %3104 = vmatpush1.bf16.msra.mxu0 0
        %3105 = vmatprep.subr.bf16.mxu0 0
        %3106 = vmatpush1.bf16.msra.mxu0 0
        %3107 = vmatprep.subr.bf16.mxu0 0
        %3108 = vmatpush1.bf16.msra.mxu0 %v3088
        %3109 = vmatprep.subr.bf16.mxu0 0
        %3110 = vmatpush2.bf16.msra.mxu0 0
        %3111 = vmatprep.subr.bf16.mxu0 0
        %3112 = vmatpush2.bf16.msra.mxu0 0
        %3113 = vmatprep.subr.bf16.mxu0 0
        %3114 = vmatpush2.bf16.msra.mxu0 0
        %3115 = vmatprep.subr.bf16.mxu0 0
        %3116 = vmatpush2.bf16.msra.mxu0 0
        %3117 = vmatprep.subr.bf16.mxu0 0
        %3118 = vmatpush2.bf16.msra.mxu0 0
        %3119 = vmatprep.subr.bf16.mxu0 0
        %3120 = vmatpush2.bf16.msra.mxu0 0
        %3121 = vmatprep.subr.bf16.mxu0 0
        %3122 = vmatpush2.bf16.msra.mxu0 0
        %3123 = vmatprep.subr.bf16.mxu0 0
        %3124 = vmatpush2.bf16.msra.mxu0 0
        %3125 = vmatprep.mubr.bf16.mxu0 0
        %3126 = vmatmul.mubr.bf16.gmra.mxu0 %v3091
        %v3127 = vpop.f32.mrf.mxu0
        %v3128 = vadd.f32 0.0, %v3127
        %v3129 = vpop.f32.mrf.mxu0
        %v3130 = vpop.f32.mrf.mxu0
        %v3131 = vadd.f32 0.0, %v3130
        %v3132 = vpop.f32.mrf.mxu0
        %3133 = vdwg.mxu0
        %v3136 = vunpack.c.l.b16 %v2236
        %v3137 = vunpack.c.l.b16 %v2237
        %v3138 = vpack.c.b16 %v3137, %v3136
        %v3141 = vsel %vm2699, %v2881, 0
        %3143 = vmatprep.subr.bf16.mxu0 0
        %3144 = vmatpush1.bf16.msra.mxu0 0
        %3145 = vmatprep.subr.bf16.mxu0 0
        %3146 = vmatpush1.bf16.msra.mxu0 0
        %3147 = vmatprep.subr.bf16.mxu0 0
        %3148 = vmatpush1.bf16.msra.mxu0 0
        %3149 = vmatprep.subr.bf16.mxu0 0
        %3150 = vmatpush1.bf16.msra.mxu0 0
        %3151 = vmatprep.subr.bf16.mxu0 0
        %3152 = vmatpush1.bf16.msra.mxu0 0
        %3153 = vmatprep.subr.bf16.mxu0 0
        %3154 = vmatpush1.bf16.msra.mxu0 0
        %3155 = vmatprep.subr.bf16.mxu0 0
        %3156 = vmatpush1.bf16.msra.mxu0 0
        %3157 = vmatprep.subr.bf16.mxu0 0
        %3158 = vmatpush1.bf16.msra.mxu0 %v3138
        %3159 = vmatprep.subr.bf16.mxu0 0
        %3160 = vmatpush2.bf16.msra.mxu0 0
        %3161 = vmatprep.subr.bf16.mxu0 0
        %3162 = vmatpush2.bf16.msra.mxu0 0
        %3163 = vmatprep.subr.bf16.mxu0 0
        %3164 = vmatpush2.bf16.msra.mxu0 0
        %3165 = vmatprep.subr.bf16.mxu0 0
        %3166 = vmatpush2.bf16.msra.mxu0 0
        %3167 = vmatprep.subr.bf16.mxu0 0
        %3168 = vmatpush2.bf16.msra.mxu0 0
        %3169 = vmatprep.subr.bf16.mxu0 0
        %3170 = vmatpush2.bf16.msra.mxu0 0
        %3171 = vmatprep.subr.bf16.mxu0 0
        %3172 = vmatpush2.bf16.msra.mxu0 0
        %3173 = vmatprep.subr.bf16.mxu0 0
        %3174 = vmatpush2.bf16.msra.mxu0 0
        %3175 = vmatprep.mubr.bf16.mxu0 0
        %3176 = vmatmul.mubr.bf16.gmra.mxu0 %v3141
        %v3177 = vpop.f32.mrf.mxu0
        %v3178 = vadd.f32 0.0, %v3177
        %v3179 = vpop.f32.mrf.mxu0
        %v3180 = vpop.f32.mrf.mxu0
        %v3181 = vadd.f32 0.0, %v3180
        %v3182 = vpop.f32.mrf.mxu0
        %3183 = vdwg.mxu0
        %v3186 = vunpack.c.l.b16 %v2238
        %v3187 = vunpack.c.l.b16 %v2239
        %v3188 = vpack.c.b16 %v3187, %v3186
        %v3191 = vsel %vm2699, %v2882, 0
        %3193 = vmatprep.subr.bf16.mxu0 0
        %3194 = vmatpush1.bf16.msra.mxu0 0
        %3195 = vmatprep.subr.bf16.mxu0 0
        %3196 = vmatpush1.bf16.msra.mxu0 0
        %3197 = vmatprep.subr.bf16.mxu0 0
        %3198 = vmatpush1.bf16.msra.mxu0 0
        %3199 = vmatprep.subr.bf16.mxu0 0
        %3200 = vmatpush1.bf16.msra.mxu0 0
        %3201 = vmatprep.subr.bf16.mxu0 0
        %3202 = vmatpush1.bf16.msra.mxu0 0
        %3203 = vmatprep.subr.bf16.mxu0 0
        %3204 = vmatpush1.bf16.msra.mxu0 0
        %3205 = vmatprep.subr.bf16.mxu0 0
        %3206 = vmatpush1.bf16.msra.mxu0 0
        %3207 = vmatprep.subr.bf16.mxu0 0
        %3208 = vmatpush1.bf16.msra.mxu0 %v3188
        %3209 = vmatprep.subr.bf16.mxu0 0
        %3210 = vmatpush2.bf16.msra.mxu0 0
        %3211 = vmatprep.subr.bf16.mxu0 0
        %3212 = vmatpush2.bf16.msra.mxu0 0
        %3213 = vmatprep.subr.bf16.mxu0 0
        %3214 = vmatpush2.bf16.msra.mxu0 0
        %3215 = vmatprep.subr.bf16.mxu0 0
        %3216 = vmatpush2.bf16.msra.mxu0 0
        %3217 = vmatprep.subr.bf16.mxu0 0
        %3218 = vmatpush2.bf16.msra.mxu0 0
        %3219 = vmatprep.subr.bf16.mxu0 0
        %3220 = vmatpush2.bf16.msra.mxu0 0
        %3221 = vmatprep.subr.bf16.mxu0 0
        %3222 = vmatpush2.bf16.msra.mxu0 0
        %3223 = vmatprep.subr.bf16.mxu0 0
        %3224 = vmatpush2.bf16.msra.mxu0 0
        %3225 = vmatprep.mubr.bf16.mxu0 0
        %3226 = vmatmul.mubr.bf16.gmra.mxu0 %v3191
        %v3227 = vpop.f32.mrf.mxu0
        %v3228 = vadd.f32 0.0, %v3227
        %v3229 = vpop.f32.mrf.mxu0
        %v3230 = vpop.f32.mrf.mxu0
        %v3231 = vadd.f32 0.0, %v3230
        %v3232 = vpop.f32.mrf.mxu0
        %3233 = vdwg.mxu0
        %v3236 = vunpack.c.l.b16 %v2240
        %v3237 = vunpack.c.l.b16 %v2241
        %v3238 = vpack.c.b16 %v3237, %v3236
        %v3241 = vsel %vm2699, %v2883, 0
        %3243 = vmatprep.subr.bf16.mxu0 0
        %3244 = vmatpush1.bf16.msra.mxu0 0
        %3245 = vmatprep.subr.bf16.mxu0 0
        %3246 = vmatpush1.bf16.msra.mxu0 0
        %3247 = vmatprep.subr.bf16.mxu0 0
        %3248 = vmatpush1.bf16.msra.mxu0 0
        %3249 = vmatprep.subr.bf16.mxu0 0
        %3250 = vmatpush1.bf16.msra.mxu0 0
        %3251 = vmatprep.subr.bf16.mxu0 0
        %3252 = vmatpush1.bf16.msra.mxu0 0
        %3253 = vmatprep.subr.bf16.mxu0 0
        %3254 = vmatpush1.bf16.msra.mxu0 0
        %3255 = vmatprep.subr.bf16.mxu0 0
        %3256 = vmatpush1.bf16.msra.mxu0 0
        %3257 = vmatprep.subr.bf16.mxu0 0
        %3258 = vmatpush1.bf16.msra.mxu0 %v3238
        %3259 = vmatprep.subr.bf16.mxu0 0
        %3260 = vmatpush2.bf16.msra.mxu0 0
        %3261 = vmatprep.subr.bf16.mxu0 0
        %3262 = vmatpush2.bf16.msra.mxu0 0
        %3263 = vmatprep.subr.bf16.mxu0 0
        %3264 = vmatpush2.bf16.msra.mxu0 0
        %3265 = vmatprep.subr.bf16.mxu0 0
        %3266 = vmatpush2.bf16.msra.mxu0 0
        %3267 = vmatprep.subr.bf16.mxu0 0
        %3268 = vmatpush2.bf16.msra.mxu0 0
        %3269 = vmatprep.subr.bf16.mxu0 0
        %3270 = vmatpush2.bf16.msra.mxu0 0
        %3271 = vmatprep.subr.bf16.mxu0 0
        %3272 = vmatpush2.bf16.msra.mxu0 0
        %3273 = vmatprep.subr.bf16.mxu0 0
        %3274 = vmatpush2.bf16.msra.mxu0 0
        %3275 = vmatprep.mubr.bf16.mxu0 0
        %3276 = vmatmul.mubr.bf16.gmra.mxu0 %v3241
        %v3277 = vpop.f32.mrf.mxu0
        %v3278 = vadd.f32 0.0, %v3277
        %v3279 = vpop.f32.mrf.mxu0
        %v3280 = vpop.f32.mrf.mxu0
        %v3281 = vadd.f32 0.0, %v3280
        %v3282 = vpop.f32.mrf.mxu0
        %3283 = vdwg.mxu0
        %v3284 = vpack.c.bf16 %v2931, %v2928
        %v3285 = vpack.c.bf16 %v2981, %v2978
        %v3286 = vpack.c.bf16 %v3031, %v3028
        %v3287 = vpack.c.bf16 %v3081, %v3078
        %v3288 = vpack.c.bf16 %v3131, %v3128
        %v3289 = vpack.c.bf16 %v3181, %v3178
        %v3290 = vpack.c.bf16 %v3231, %v3228
        %v3291 = vpack.c.bf16 %v3281, %v3278
        %3293 = vrot.lane.b32.xlu0 %v3285, 4
        %v3294 = vpop.permute.xlu0 %3293
        %3296 = vrot.lane.b32.xlu0 %v3286, 8
        %v3297 = vpop.permute.xlu0 %3296
        %3299 = vrot.lane.b32.xlu0 %v3287, 12
        %v3300 = vpop.permute.xlu0 %3299
        %3302 = vrot.lane.b32.xlu0 %v3288, 16
        %v3303 = vpop.permute.xlu0 %3302
        %3305 = vrot.lane.b32.xlu0 %v3289, 20
        %v3306 = vpop.permute.xlu0 %3305
        %3308 = vrot.lane.b32.xlu0 %v3290, 24
        %v3309 = vpop.permute.xlu0 %3308
        %3311 = vrot.lane.b32.xlu0 %v3291, 28
        %v3312 = vpop.permute.xlu0 %3311
        %v3315 = vsel %vm2252, %v3284, %v3294
        %vm3316 = vcmask 64512
        %v3318 = vsel %vm3316, %v3315, %v3297
        %vm3319 = vcmask 97280
        %v3321 = vsel %vm3319, %v3318, %v3300
        %v3323 = vsel %vm2699, %v3321, %v3303
        %vm3324 = vcmask 162816
        %v3326 = vsel %vm3324, %v3323, %v3306
        %vm3327 = vcmask 195584
        %v3329 = vsel %vm3327, %v3326, %v3309
        %vm3330 = vcmask 228352
        %v3332 = vsel %vm3330, %v3329, %v3312
        %v3333 = vld [vmem:[%s6] sm:$0xf]
        %v3334 = vld [vmem:[%s6 + $0x4] sm:$0xf]
        %v3335 = vld [vmem:[%s6 + $0x8] sm:$0xf]
        %v3336 = vld [vmem:[%s6 + $0xc] sm:$0xf]
        %v3337 = vld [vmem:[%s7] sm:$0x1]
        %v3339 = vlaneseq
        %v3340 = vshrl.u32 %v3339, 7
        %v3341 = vsub.s32 0, %v3340
        %v3342 = vrot.slane %v3337, %v3341
        %v3348 = vunpack.c.l.b16 %v3333
        %v3349 = vunpack.c.l.b16 %v3334
        %v3350 = vunpack.c.l.b16 %v3335
        %v3351 = vunpack.c.l.b16 %v3336
        %v3352 = vpack.c.b16 %v3349, %v3348
        %v3353 = vpack.c.b16 %v3351, %v3350
        %vm3356 = vcmask 261120
        %v3357 = vsel %vm3356, %v3332, 0
        %3359 = vmatprep.subr.bf16.mxu0 0
        %3360 = vmatpush1.bf16.msra.mxu0 0
        %3361 = vmatprep.subr.bf16.mxu0 0
        %3362 = vmatpush1.bf16.msra.mxu0 0
        %3363 = vmatprep.subr.bf16.mxu0 0
        %3364 = vmatpush1.bf16.msra.mxu0 0
        %3365 = vmatprep.subr.bf16.mxu0 0
        %3366 = vmatpush1.bf16.msra.mxu0 0
        %3367 = vmatprep.subr.bf16.mxu0 0
        %3368 = vmatpush1.bf16.msra.mxu0 0
        %3369 = vmatprep.subr.bf16.mxu0 0
        %3370 = vmatpush1.bf16.msra.mxu0 0
        %3371 = vmatprep.subr.bf16.mxu0 0
        %3372 = vmatpush1.bf16.msra.mxu0 %v3353
        %3373 = vmatprep.subr.bf16.mxu0 0
        %3374 = vmatpush1.bf16.msra.mxu0 %v3352
        %3375 = vmatprep.subr.bf16.mxu0 0
        %3376 = vmatpush2.bf16.msra.mxu0 0
        %3377 = vmatprep.subr.bf16.mxu0 0
        %3378 = vmatpush2.bf16.msra.mxu0 0
        %3379 = vmatprep.subr.bf16.mxu0 0
        %3380 = vmatpush2.bf16.msra.mxu0 0
        %3381 = vmatprep.subr.bf16.mxu0 0
        %3382 = vmatpush2.bf16.msra.mxu0 0
        %3383 = vmatprep.subr.bf16.mxu0 0
        %3384 = vmatpush2.bf16.msra.mxu0 0
        %3385 = vmatprep.subr.bf16.mxu0 0
        %3386 = vmatpush2.bf16.msra.mxu0 0
        %3387 = vmatprep.subr.bf16.mxu0 0
        %3388 = vmatpush2.bf16.msra.mxu0 0
        %3389 = vmatprep.subr.bf16.mxu0 0
        %3390 = vmatpush2.bf16.msra.mxu0 0
        %3391 = vmatprep.mubr.bf16.mxu0 0
        %3392 = vmatmul.mubr.bf16.gmra.mxu0 %v3357
        %v3393 = vpop.f32.mrf.mxu0
        %v3394 = vadd.f32 %v3342, %v3393
        %v3395 = vpop.f32.mrf.mxu0
        %v3396 = vpop.f32.mrf.mxu0
        %v3397 = vadd.f32 %v3342, %v3396
        %v3398 = vpop.f32.mrf.mxu0
        %3399 = vdwg.mxu0
        %s3400 = scalar_lea.vmem %s479, %s482
        %v3401 = vld [vmem:[%s3400] sm:$0xff]
        %v3402 = vld [vmem:[%s3400 + $0x8] sm:$0xff]
        %v3403 = vadd.f32 %v3401, %v3394
        %v3404 = vadd.f32 %v3402, %v3397
        %v3405 = vld [vmem:[%s8] sm:$0x1]
        %v3406 = vld [vmem:[%s9] sm:$0x1]
        %v3407 = vsel %vm3356, %v3403, 0.0
        %3408 = vadd.xlane.f32.xlu0 %v3407
        %v3409 = vpop.xlane.xlu0 %3408
        %v3410 = vsel %vm3356, %v3404, 0.0
        %3411 = vadd.xlane.f32.xlu0 %v3410
        %v3412 = vpop.xlane.xlu0 %3411
        %v3413 = vrcp.pop 32.0
        %v3414 = vmul.f32 %v3409, %v3413
        %v3415 = vmul.f32 %v3412, %v3413
        %v3416 = vsub.f32 %v3403, %v3414
        %v3417 = vsub.f32 %v3404, %v3415
        %v3418 = vmul.f32 %v3416, %v3416
        %v3419 = vmul.f32 %v3417, %v3417
        %v3420 = vsel %vm3356, %v3418, 0.0
        %3421 = vadd.xlane.f32.xlu0 %v3420
        %v3422 = vpop.xlane.xlu0 %3421
        %v3423 = vsel %vm3356, %v3419, 0.0
        %3424 = vadd.xlane.f32.xlu0 %v3423
        %v3425 = vpop.xlane.xlu0 %3424
        %v3426 = vmul.f32 %v3422, %v3413
        %v3427 = vmul.f32 %v3425, %v3413
        %v3428 = vadd.f32 %v3426, 1e-05
        %v3429 = vadd.f32 %v3427, 1e-05
        %v3430 = vrsqrt.pop %v3428
        %v3431 = vrsqrt.pop %v3429
        %v3432 = vmul.f32 %v3416, %v3430
        %v3433 = vmul.f32 %v3417, %v3431
        %v3435 = vlaneseq
        %v3436 = vshrl.u32 %v3435, 7
        %v3437 = vsub.s32 0, %v3436
        %v3438 = vrot.slane %v3405, %v3437
        %v3440 = vmul.f32 %v3432, %v3438
        %v3441 = vmul.f32 %v3433, %v3438
        %v3443 = vlaneseq
        %v3444 = vshrl.u32 %v3443, 7
        %v3445 = vsub.s32 0, %v3444
        %v3446 = vrot.slane %v3406, %v3445
        %v3448 = vadd.f32 %v3440, %v3446
        %v3449 = vadd.f32 %v3441, %v3446
        %v3450 = vpack.c.bf16 %v3449, %v3448
        %v3451 = vld [vmem:[%s10] sm:$0xf]
        %v3452 = vld [vmem:[%s10 + $0x4] sm:$0xf]
        %v3453 = vld [vmem:[%s10 + $0x8] sm:$0xf]
        %v3454 = vld [vmem:[%s10 + $0xc] sm:$0xf]
        %v3455 = vld [vmem:[%s11] sm:$0x1]
        %v3457 = vlaneseq
        %v3458 = vshrl.u32 %v3457, 7
        %v3459 = vsub.s32 0, %v3458
        %v3460 = vrot.slane %v3455, %v3459
        %v3466 = vunpack.c.l.b16 %v3451
        %v3467 = vunpack.c.l.b16 %v3452
        %v3468 = vunpack.c.l.b16 %v3453
        %v3469 = vunpack.c.l.b16 %v3454
        %v3470 = vpack.c.b16 %v3467, %v3466
        %v3471 = vpack.c.b16 %v3469, %v3468
        %v3475 = vsel %vm3356, %v3450, 0
        %3477 = vmatprep.subr.bf16.mxu0 0
        %3478 = vmatpush1.bf16.msra.mxu0 0
        %3479 = vmatprep.subr.bf16.mxu0 0
        %3480 = vmatpush1.bf16.msra.mxu0 0
        %3481 = vmatprep.subr.bf16.mxu0 0
        %3482 = vmatpush1.bf16.msra.mxu0 0
        %3483 = vmatprep.subr.bf16.mxu0 0
        %3484 = vmatpush1.bf16.msra.mxu0 0
        %3485 = vmatprep.subr.bf16.mxu0 0
        %3486 = vmatpush1.bf16.msra.mxu0 0
        %3487 = vmatprep.subr.bf16.mxu0 0
        %3488 = vmatpush1.bf16.msra.mxu0 0
        %3489 = vmatprep.subr.bf16.mxu0 0
        %3490 = vmatpush1.bf16.msra.mxu0 %v3471
        %3491 = vmatprep.subr.bf16.mxu0 0
        %3492 = vmatpush1.bf16.msra.mxu0 %v3470
        %3493 = vmatprep.subr.bf16.mxu0 0
        %3494 = vmatpush2.bf16.msra.mxu0 0
        %3495 = vmatprep.subr.bf16.mxu0 0
        %3496 = vmatpush2.bf16.msra.mxu0 0
        %3497 = vmatprep.subr.bf16.mxu0 0
        %3498 = vmatpush2.bf16.msra.mxu0 0
        %3499 = vmatprep.subr.bf16.mxu0 0
        %3500 = vmatpush2.bf16.msra.mxu0 0
        %3501 = vmatprep.subr.bf16.mxu0 0
        %3502 = vmatpush2.bf16.msra.mxu0 0
        %3503 = vmatprep.subr.bf16.mxu0 0
        %3504 = vmatpush2.bf16.msra.mxu0 0
        %3505 = vmatprep.subr.bf16.mxu0 0
        %3506 = vmatpush2.bf16.msra.mxu0 0
        %3507 = vmatprep.subr.bf16.mxu0 0
        %3508 = vmatpush2.bf16.msra.mxu0 0
        %3509 = vmatprep.mubr.bf16.mxu0 0
        %3510 = vmatmul.mubr.bf16.gmra.mxu0 %v3475
        %v3511 = vpop.f32.mrf.mxu0
        %v3512 = vadd.f32 %v3460, %v3511
        %v3513 = vpop.f32.mrf.mxu0
        %v3514 = vpop.f32.mrf.mxu0
        %v3515 = vadd.f32 %v3460, %v3514
        %v3516 = vpop.f32.mrf.mxu0
        %3517 = vdwg.mxu0
        %v3518 = vmul.f32 %v3512, %v3512
        %v3519 = vmul.f32 %v3515, %v3515
        %v3520 = vmul.f32 %v3512, %v3518
        %v3521 = vmul.f32 %v3515, %v3519
        %v3522 = vmul.f32 %v3520, 0.044715
        %v3523 = vmul.f32 %v3521, 0.044715
        %v3524 = vadd.f32 %v3512, %v3522
        %v3525 = vadd.f32 %v3515, %v3523
        %v3526 = vmul.f32 %v3524, 0.7978846
        %v3527 = vmul.f32 %v3525, 0.7978846
        %v3528 = vtanh.pop %v3526
        %v3529 = vtanh.pop %v3527
        %v3530 = vadd.f32 %v3528, 1.0
        %v3531 = vadd.f32 %v3529, 1.0
        %v3532 = vmul.f32 %v3530, 0.5
        %v3533 = vmul.f32 %v3531, 0.5
        %v3534 = vmul.f32 %v3512, %v3532
        %v3535 = vmul.f32 %v3515, %v3533
        %v3536 = vpack.c.bf16 %v3535, %v3534
        %v3537 = vld [vmem:[%s12] sm:$0xf]
        %v3538 = vld [vmem:[%s12 + $0x4] sm:$0xf]
        %v3539 = vld [vmem:[%s12 + $0x8] sm:$0xf]
        %v3540 = vld [vmem:[%s12 + $0xc] sm:$0xf]
        %v3541 = vld [vmem:[%s12 + $0x10] sm:$0xf]
        %v3542 = vld [vmem:[%s12 + $0x14] sm:$0xf]
        %v3543 = vld [vmem:[%s12 + $0x18] sm:$0xf]
        %v3544 = vld [vmem:[%s12 + $0x1c] sm:$0xf]
        %v3545 = vld [vmem:[%s12 + $0x20] sm:$0xf]
        %v3546 = vld [vmem:[%s12 + $0x24] sm:$0xf]
        %v3547 = vld [vmem:[%s12 + $0x28] sm:$0xf]
        %v3548 = vld [vmem:[%s12 + $0x2c] sm:$0xf]
        %v3549 = vld [vmem:[%s12 + $0x30] sm:$0xf]
        %v3550 = vld [vmem:[%s12 + $0x34] sm:$0xf]
        %v3551 = vld [vmem:[%s12 + $0x38] sm:$0xf]
        %v3552 = vld [vmem:[%s12 + $0x3c] sm:$0xf]
        %v3553 = vld [vmem:[%s13] sm:$0x1]
        %v3555 = vlaneseq
        %v3556 = vshrl.u32 %v3555, 7
        %v3557 = vsub.s32 0, %v3556
        %v3558 = vrot.slane %v3553, %v3557
        %v3576 = vunpack.c.l.b16 %v3537
        %v3577 = vunpack.c.l.b16 %v3538
        %v3578 = vunpack.c.l.b16 %v3539
        %v3579 = vunpack.c.l.b16 %v3540
        %v3580 = vunpack.c.l.b16 %v3541
        %v3581 = vunpack.c.l.b16 %v3542
        %v3582 = vunpack.c.l.b16 %v3543
        %v3583 = vunpack.c.l.b16 %v3544
        %v3584 = vunpack.c.l.b16 %v3545
        %v3585 = vunpack.c.l.b16 %v3546
        %v3586 = vunpack.c.l.b16 %v3547
        %v3587 = vunpack.c.l.b16 %v3548
        %v3588 = vunpack.c.l.b16 %v3549
        %v3589 = vunpack.c.l.b16 %v3550
        %v3590 = vunpack.c.l.b16 %v3551
        %v3591 = vunpack.c.l.b16 %v3552
        %v3592 = vpack.c.b16 %v3577, %v3576
        %v3593 = vpack.c.b16 %v3579, %v3578
        %v3594 = vpack.c.b16 %v3581, %v3580
        %v3595 = vpack.c.b16 %v3583, %v3582
        %v3596 = vpack.c.b16 %v3585, %v3584
        %v3597 = vpack.c.b16 %v3587, %v3586
        %v3598 = vpack.c.b16 %v3589, %v3588
        %v3599 = vpack.c.b16 %v3591, %v3590
        %3608 = vmatprep.subr.bf16.mxu0 0
        %3609 = vmatpush1.bf16.msra.mxu0 %v3599
        %3610 = vmatprep.subr.bf16.mxu0 0
        %3611 = vmatpush1.bf16.msra.mxu0 %v3598
        %3612 = vmatprep.subr.bf16.mxu0 0
        %3613 = vmatpush1.bf16.msra.mxu0 %v3597
        %3614 = vmatprep.subr.bf16.mxu0 0
        %3615 = vmatpush1.bf16.msra.mxu0 %v3596
        %3616 = vmatprep.subr.bf16.mxu0 0
        %3617 = vmatpush1.bf16.msra.mxu0 %v3595
        %3618 = vmatprep.subr.bf16.mxu0 0
        %3619 = vmatpush1.bf16.msra.mxu0 %v3594
        %3620 = vmatprep.subr.bf16.mxu0 0
        %3621 = vmatpush1.bf16.msra.mxu0 %v3593
        %3622 = vmatprep.subr.bf16.mxu0 0
        %3623 = vmatpush1.bf16.msra.mxu0 %v3592
        %3624 = vmatprep.subr.bf16.mxu0 0
        %3625 = vmatpush2.bf16.msra.mxu0 0
        %3626 = vmatprep.subr.bf16.mxu0 0
        %3627 = vmatpush2.bf16.msra.mxu0 0
        %3628 = vmatprep.subr.bf16.mxu0 0
        %3629 = vmatpush2.bf16.msra.mxu0 0
        %3630 = vmatprep.subr.bf16.mxu0 0
        %3631 = vmatpush2.bf16.msra.mxu0 0
        %3632 = vmatprep.subr.bf16.mxu0 0
        %3633 = vmatpush2.bf16.msra.mxu0 0
        %3634 = vmatprep.subr.bf16.mxu0 0
        %3635 = vmatpush2.bf16.msra.mxu0 0
        %3636 = vmatprep.subr.bf16.mxu0 0
        %3637 = vmatpush2.bf16.msra.mxu0 0
        %3638 = vmatprep.subr.bf16.mxu0 0
        %3639 = vmatpush2.bf16.msra.mxu0 0
        %3640 = vmatprep.mubr.bf16.mxu0 0
        %3641 = vmatmul.mubr.bf16.gmra.mxu0 %v3536
        %v3642 = vpop.f32.mrf.mxu0
        %v3643 = vadd.f32 %v3558, %v3642
        %v3644 = vpop.f32.mrf.mxu0
        %v3645 = vpop.f32.mrf.mxu0
        %v3646 = vadd.f32 %v3558, %v3645
        %v3647 = vpop.f32.mrf.mxu0
        %3648 = vdwg.mxu0
        %v3649 = vadd.f32 %v3403, %v3643
        %v3650 = vadd.f32 %v3404, %v3646
        %3651 = vst.msk [vmem:[%s474] sm:$0xff] %vm3356, %v3649
        %3652 = vst.msk [vmem:[%s474 + $0x8] sm:$0xff] %vm3356, %v3650
        %s3653 = sand.u32 %s349, 1
        %s3654 = scalar_lea.sflag [#allocation6], %s3653
        %s3655 = sand.u32 %s349, 1
        %s3656 = smul.addr %s3655, 16
        %s3657 = scalar_lea.vmem [#allocation5], %s3656
        // Predicated region
        $region81: #{tpu_custom_call.1} parent=75 // pred_check
          %p3658 = pneg %p359
        $region82: #{tpu_custom_call.1} parent=75 // pred_check_branch
          %3660 = sbr.rel (%p3658) target = $region84
        $region83: #{tpu_custom_call.1} parent=75 // pred_region
          %s3661 = smul.u32 2, %s33
          %s3663 = ssub.s32 256, 256
          %3664 = vsyncadd %s3654, %s3663
          %s3665 = smul.addr %s32, 2
          %s3666 = sadd.s32 %s3661, %s3665
          %s3667 = smul.addr %s3666, 128
          %s3668 = scalar_lea.hbm %s14, %s3667
          %s3669 = sshll.u32 %s3657, 4
          %s3670 = int_to_ptr.vmem [resolvable:$true] %s3669
          %3675 = dma.vmem_to_hbm [thread:$0]  %s3670, 256, %s3668, %s3654, 128, 128, 8
        $region84: #{tpu_custom_call.1} parent=75 // pred_fallthru
          _
      $region76: #{tpu_custom_call.1} parent=5 // pred_fallthru
        _
      %p3676 = scmp.le.s32.totalorder 2, %s23
      // Predicated region
      $region85: #{tpu_custom_call.1} parent=5 // pred_check
        %p3677 = pneg %p3676
      $region86: #{tpu_custom_call.1} parent=5 // pred_check_branch
        %3679 = sbr.rel (%p3677) target = $region88
      $region87: #{tpu_custom_call.1} parent=5 // pred_region
        %s3680 = ssub.s32 %s23, 2
        // Predicated region
        $region89: #{tpu_custom_call.1} parent=87 // pred_check
          %p3681 = pneg %p365
        $region90: #{tpu_custom_call.1} parent=87 // pred_check_branch
          %3683 = sbr.rel (%p3681) target = $region92
        $region91: #{tpu_custom_call.1} parent=87 // pred_region
          %s3684 = sand.u32 %s350, 1
          %s3685 = scalar_lea.sflag [#allocation6], %s3684
          %s3686 = sand.u32 %s350, 1
          %s3687 = smul.addr %s3686, 16
          %s3688 = scalar_lea.vmem [#allocation5], %s3687
          %3689 = dma.done %s3685, 256
        $region92: #{tpu_custom_call.1} parent=87 // pred_fallthru
          _
      $region88: #{tpu_custom_call.1} parent=5 // pred_fallthru
        _
    $region6: #{tpu_custom_call.1} parent=1 // loop_footer
      %s27 = sadd.s32 1, %s23
    $region7: #{tpu_custom_call.1} parent=1 // loop_footer_branch
      %22 = sbr.rel target = $region3
    $region8: #{tpu_custom_call.1} parent=1 // loop_exit
      _
    %3690 = vsyncpa [#allocation6], 1
    %s3691 = scalar_lea.sflag [#allocation6], 1
    %3692 = vsyncpa %s3691, 1

// kernel: tpu_custom_call.1
$region0: #{tpu_custom_call.1}
  #allocation0 [shape = 'u32[]', space=smem, size = 0x4, offset = 0x4, fixed_abs, tag = 'smem constant byte address 0x4 - core index']
  #allocation1 [shape = 'u32[144,128]{1,0:T(1,128)}', space=vmem, size = 0x12000, scoped, tag = 'internal scratch']
  #allocation2 [shape = 'bf16[8,16,4]{2,1,0:T(8,128)(2,1)}', space=vmem, size = 0x8000, scoped, tag = 'scratch operand']
  #allocation3 [shape = 'bf16[8,16,4]{2,1,0:T(8,128)(2,1)}', space=vmem, size = 0x8000, scoped, tag = 'scratch operand']
  #allocation4 [shape = 'bf16[8,16,4]{2,1,0:T(8,128)(2,1)}', space=vmem, size = 0x8000, scoped, tag = 'scratch operand']
  %s0 = inlined_call_operand.vmem [shape: f32[2,16,32], index: 0, kind: input, shape index: {}]
  %s1 = inlined_call_operand.vmem [shape: f32[1,32], index: 1, kind: input, shape index: {}]
  %s2 = inlined_call_operand.vmem [shape: f32[1,32], index: 2, kind: input, shape index: {}]
  %s3 = inlined_call_operand.vmem [shape: bf16[8,32,4], index: 3, kind: input, shape index: {}]
  %s4 = inlined_call_operand.vmem [shape: bf16[8,32,4], index: 4, kind: input, shape index: {}]
  %s5 = inlined_call_operand.vmem [shape: bf16[8,32,4], index: 5, kind: input, shape index: {}]
  %s6 = inlined_call_operand.vmem [shape: bf16[32,32], index: 6, kind: input, shape index: {}]
  %s7 = inlined_call_operand.vmem [shape: f32[1,32], index: 7, kind: input, shape index: {}]
  %s8 = inlined_call_operand.vmem [shape: f32[1,32], index: 8, kind: input, shape index: {}]
  %s9 = inlined_call_operand.vmem [shape: f32[1,32], index: 9, kind: input, shape index: {}]
  %s10 = inlined_call_operand.vmem [shape: bf16[32,128], index: 10, kind: input, shape index: {}]
  %s11 = inlined_call_operand.vmem [shape: f32[1,128], index: 11, kind: input, shape index: {}]
  %s12 = inlined_call_operand.vmem [shape: bf16[128,32], index: 12, kind: input, shape index: {}]
  %s13 = inlined_call_operand.vmem [shape: f32[1,32], index: 13, kind: input, shape index: {}]
  %s14 = inlined_call_operand.hbm [shape: f32[2,16,32], index: 14, kind: output, shape index: {}]
  %s15 = sld [smem:[#allocation0]]
  $region93: #{tpu_custom_call.1} parent=0
    _
  %s17 = ssub.s32 1, %s15
  %s18 = scalar_select 0, %s17, %s15
  $region1: #{tpu_custom_call.1} parent=0
    #allocation5 [shape = 'u8[16384]{0}', space=vmem, size = 0x4000, scoped, tag = 'output window, operand 0']
    #allocation6 [shape = 's32[2]{0}', space=sflag, size = 0x8, scoped, tag = 'scoped memory for tpu_custom_call.1']
    %19 = vsyncpa [#allocation6], 0
    %s20 = scalar_lea.sflag [#allocation6], 1
    %21 = vsyncpa %s20, 0
    loop: start=0, step=1, limit=4
    $region2: #{tpu_custom_call.1} parent=1 // loop_pre_header
      _
    $region3: #{tpu_custom_call.1} parent=1 // loop_header
      %s23 = sphi 0, %s27
      %p24 = scmp.ge.s32.totalorder %s23, 4
      %s30 = sphi 0, %s42
      %s31 = sphi 0, %s38
      %s32 = sphi 0, %s30
      %s33 = sphi 0, %s31
      %s34 = sphi 0, %s32
      %s35 = sphi 0, %s33
      %s45 = sphi 0, %s47
      %s48 = sphi 0, %s45
      %s49 = sphi 0, %s48
      %s65 = sphi 0, %s49
      %s69 = sphi 0, %s69
      %s71 = sphi 0, %s69
      %s72 = sphi 0, %s71
      %s86 = sphi 0, %s72
      %s90 = sphi 0, %s90
      %s92 = sphi 0, %s90
      %s93 = sphi 0, %s92
      %s107 = sphi 0, %s93
      %s111 = sphi 0, %s111
      %s113 = sphi 0, %s111
      %s114 = sphi 0, %s113
      %s128 = sphi 0, %s114
      %s132 = sphi 0, %s132
      %s134 = sphi 0, %s132
      %s135 = sphi 0, %s134
      %s149 = sphi 0, %s135
      %s153 = sphi 0, %s153
      %s155 = sphi 0, %s153
      %s156 = sphi 0, %s155
      %s170 = sphi 0, %s156
      %s174 = sphi 0, %s174
      %s176 = sphi 0, %s174
      %s177 = sphi 0, %s176
      %s191 = sphi 0, %s177
      %s195 = sphi 0, %s195
      %s197 = sphi 0, %s195
      %s198 = sphi 0, %s197
      %s212 = sphi 0, %s198
      %s216 = sphi 0, %s216
      %s218 = sphi 0, %s216
      %s219 = sphi 0, %s218
      %s233 = sphi 0, %s219
      %s237 = sphi 0, %s237
      %s239 = sphi 0, %s237
      %s240 = sphi 0, %s239
      %s254 = sphi 0, %s240
      %s258 = sphi 0, %s258
      %s260 = sphi 0, %s258
      %s261 = sphi 0, %s260
      %s275 = sphi 0, %s261
      %s279 = sphi 0, %s279
      %s281 = sphi 0, %s279
      %s282 = sphi 0, %s281
      %s296 = sphi 0, %s282
      %s300 = sphi 0, %s300
      %s302 = sphi 0, %s300
      %s303 = sphi 0, %s302
      %s317 = sphi 0, %s303
      %s321 = sphi 0, %s321
      %s323 = sphi 0, %s321
      %s324 = sphi 0, %s323
      %s338 = sphi 0, %s324
      %s346 = sphi 0, %s348
      %s349 = sphi 0, %s346
      %s350 = sphi 0, %s349
      %s366 = sphi 0, %s350
    $region4: #{tpu_custom_call.1} parent=1 // loop_header_branch
      %26 = sbr.rel (%p24) target = $region8
    $region5: #{tpu_custom_call.1} parent=1 // loop_body
      %s28 = ssub.s32 %s23, 1
      %s29 = ssub.s32 %s23, 2
      %s36 = sadd.s32 1, %s31
      %p37 = scmp.ge.s32.totalorder %s36, 1
      %s38 = scalar_select %p37, 0, %s36
      %s39 = sadd.s32 1, %s30
      %s40 = scalar_select %p37, %s39, %s30
      %p41 = scmp.ge.s32.totalorder %s40, 2
      %s42 = scalar_select %p41, 0, %s40
      %s43 = ssub.s32 %s30, %s42
      %p44 = scmp.eq.s32.totalorder %s43, 0
      %s46 = sadd.s32 %s45, 1
      %s47 = scalar_select %p44, %s45, %s46
      %p50 = pneg %p44
      %p51 = scmp.eq.s32.totalorder %s23, 1
      %p52 = por %p50, %p51
      %p53 = scmp.ne.s32.totalorder %s45, %s48
      %p54 = scmp.eq.s32.totalorder %s23, 0
      %p55 = por %p53, %p54
      %p56 = scmp.ne.s32.totalorder %s45, %s48
      %p57 = scmp.eq.s32.totalorder %s28, 1
      %p58 = por %p56, %p57
      %p59 = scmp.ne.s32.totalorder %s48, %s49
      %p60 = scmp.eq.s32.totalorder %s28, 0
      %p61 = por %p59, %p60
      %p62 = scmp.ne.s32.totalorder %s48, %s49
      %p63 = scmp.eq.s32.totalorder %s29, 1
      %p64 = por %p62, %p63
      %p66 = scmp.ne.s32.totalorder %s49, %s65
      %p67 = scmp.eq.s32.totalorder %s29, 0
      %p68 = por %p66, %p67
      %s70 = sadd.s32 %s69, 1
      %p73 = scmp.eq.s32.totalorder %s23, 1
      %p74 = scmp.ne.s32.totalorder %s69, %s71
      %p75 = scmp.eq.s32.totalorder %s23, 0
      %p76 = por %p74, %p75
      %p77 = scmp.ne.s32.totalorder %s69, %s71
      %p78 = scmp.eq.s32.totalorder %s28, 1
      %p79 = por %p77, %p78
      %p80 = scmp.ne.s32.totalorder %s71, %s72
      %p81 = scmp.eq.s32.totalorder %s28, 0
      %p82 = por %p80, %p81
      %p83 = scmp.ne.s32.totalorder %s71, %s72
      %p84 = scmp.eq.s32.totalorder %s29, 1
      %p85 = por %p83, %p84
      %p87 = scmp.ne.s32.totalorder %s72, %s86
      %p88 = scmp.eq.s32.totalorder %s29, 0
      %p89 = por %p87, %p88
      %s91 = sadd.s32 %s90, 1
      %p94 = scmp.eq.s32.totalorder %s23, 1
      %p95 = scmp.ne.s32.totalorder %s90, %s92
      %p96 = scmp.eq.s32.totalorder %s23, 0
      %p97 = por %p95, %p96
      %p98 = scmp.ne.s32.totalorder %s90, %s92
      %p99 = scmp.eq.s32.totalorder %s28, 1
      %p100 = por %p98, %p99
      %p101 = scmp.ne.s32.totalorder %s92, %s93
      %p102 = scmp.eq.s32.totalorder %s28, 0
      %p103 = por %p101, %p102
      %p104 = scmp.ne.s32.totalorder %s92, %s93
      %p105 = scmp.eq.s32.totalorder %s29, 1
      %p106 = por %p104, %p105
      %p108 = scmp.ne.s32.totalorder %s93, %s107
      %p109 = scmp.eq.s32.totalorder %s29, 0
      %p110 = por %p108, %p109
      %s112 = sadd.s32 %s111, 1
      %p115 = scmp.eq.s32.totalorder %s23, 1
      %p116 = scmp.ne.s32.totalorder %s111, %s113
      %p117 = scmp.eq.s32.totalorder %s23, 0
      %p118 = por %p116, %p117
      %p119 = scmp.ne.s32.totalorder %s111, %s113
      %p120 = scmp.eq.s32.totalorder %s28, 1
      %p121 = por %p119, %p120
      %p122 = scmp.ne.s32.totalorder %s113, %s114
      %p123 = scmp.eq.s32.totalorder %s28, 0
      %p124 = por %p122, %p123
      %p125 = scmp.ne.s32.totalorder %s113, %s114
      %p126 = scmp.eq.s32.totalorder %s29, 1
      %p127 = por %p125, %p126
      %p129 = scmp.ne.s32.totalorder %s114, %s128
      %p130 = scmp.eq.s32.totalorder %s29, 0
      %p131 = por %p129, %p130
      %s133 = sadd.s32 %s132, 1
      %p136 = scmp.eq.s32.totalorder %s23, 1
      %p137 = scmp.ne.s32.totalorder %s132, %s134
      %p138 = scmp.eq.s32.totalorder %s23, 0
      %p139 = por %p137, %p138
      %p140 = scmp.ne.s32.totalorder %s132, %s134
      %p141 = scmp.eq.s32.totalorder %s28, 1
      %p142 = por %p140, %p141
      %p143 = scmp.ne.s32.totalorder %s134, %s135
      %p144 = scmp.eq.s32.totalorder %s28, 0
      %p145 = por %p143, %p144
      %p146 = scmp.ne.s32.totalorder %s134, %s135
      %p147 = scmp.eq.s32.totalorder %s29, 1
      %p148 = por %p146, %p147
      %p150 = scmp.ne.s32.totalorder %s135, %s149
      %p151 = scmp.eq.s32.totalorder %s29, 0
      %p152 = por %p150, %p151
      %s154 = sadd.s32 %s153, 1
      %p157 = scmp.eq.s32.totalorder %s23, 1
      %p158 = scmp.ne.s32.totalorder %s153, %s155
      %p159 = scmp.eq.s32.totalorder %s23, 0
      %p160 = por %p158, %p159
      %p161 = scmp.ne.s32.totalorder %s153, %s155
      %p162 = scmp.eq.s32.totalorder %s28, 1
      %p163 = por %p161, %p162
      %p164 = scmp.ne.s32.totalorder %s155, %s156
      %p165 = scmp.eq.s32.totalorder %s28, 0
      %p166 = por %p164, %p165
      %p167 = scmp.ne.s32.totalorder %s155, %s156
      %p168 = scmp.eq.s32.totalorder %s29, 1
      %p169 = por %p167, %p168
      %p171 = scmp.ne.s32.totalorder %s156, %s170
      %p172 = scmp.eq.s32.totalorder %s29, 0
      %p173 = por %p171, %p172
      %s175 = sadd.s32 %s174, 1
      %p178 = scmp.eq.s32.totalorder %s23, 1
      %p179 = scmp.ne.s32.totalorder %s174, %s176
      %p180 = scmp.eq.s32.totalorder %s23, 0
      %p181 = por %p179, %p180
      %p182 = scmp.ne.s32.totalorder %s174, %s176
      %p183 = scmp.eq.s32.totalorder %s28, 1
      %p184 = por %p182, %p183
      %p185 = scmp.ne.s32.totalorder %s176, %s177
      %p186 = scmp.eq.s32.totalorder %s28, 0
      %p187 = por %p185, %p186
      %p188 = scmp.ne.s32.totalorder %s176, %s177
      %p189 = scmp.eq.s32.totalorder %s29, 1
      %p190 = por %p188, %p189
      %p192 = scmp.ne.s32.totalorder %s177, %s191
      %p193 = scmp.eq.s32.totalorder %s29, 0
      %p194 = por %p192, %p193
      %s196 = sadd.s32 %s195, 1
      %p199 = scmp.eq.s32.totalorder %s23, 1
      %p200 = scmp.ne.s32.totalorder %s195, %s197
      %p201 = scmp.eq.s32.totalorder %s23, 0
      %p202 = por %p200, %p201
      %p203 = scmp.ne.s32.totalorder %s195, %s197
      %p204 = scmp.eq.s32.totalorder %s28, 1
      %p205 = por %p203, %p204
      %p206 = scmp.ne.s32.totalorder %s197, %s198
      %p207 = scmp.eq.s32.totalorder %s28, 0
      %p208 = por %p206, %p207
      %p209 = scmp.ne.s32.totalorder %s197, %s198
      %p210 = scmp.eq.s32.totalorder %s29, 1
      %p211 = por %p209, %p210
      %p213 = scmp.ne.s32.totalorder %s198, %s212
      %p214 = scmp.eq.s32.totalorder %s29, 0
      %p215 = por %p213, %p214
      %s217 = sadd.s32 %s216, 1
      %p220 = scmp.eq.s32.totalorder %s23, 1
      %p221 = scmp.ne.s32.totalorder %s216, %s218
      %p222 = scmp.eq.s32.totalorder %s23, 0
      %p223 = por %p221, %p222
      %p224 = scmp.ne.s32.totalorder %s216, %s218
      %p225 = scmp.eq.s32.totalorder %s28, 1
      %p226 = por %p224, %p225
      %p227 = scmp.ne.s32.totalorder %s218, %s219
      %p228 = scmp.eq.s32.totalorder %s28, 0
      %p229 = por %p227, %p228
      %p230 = scmp.ne.s32.totalorder %s218, %s219
      %p231 = scmp.eq.s32.totalorder %s29, 1
      %p232 = por %p230, %p231
      %p234 = scmp.ne.s32.totalorder %s219, %s233
      %p235 = scmp.eq.s32.totalorder %s29, 0
      %p236 = por %p234, %p235
      %s238 = sadd.s32 %s237, 1
      %p241 = scmp.eq.s32.totalorder %s23, 1
      %p242 = scmp.ne.s32.totalorder %s237, %s239
      %p243 = scmp.eq.s32.totalorder %s23, 0
      %p244 = por %p242, %p243
      %p245 = scmp.ne.s32.totalorder %s237, %s239
      %p246 = scmp.eq.s32.totalorder %s28, 1
      %p247 = por %p245, %p246
      %p248 = scmp.ne.s32.totalorder %s239, %s240
      %p249 = scmp.eq.s32.totalorder %s28, 0
      %p250 = por %p248, %p249
      %p251 = scmp.ne.s32.totalorder %s239, %s240
      %p252 = scmp.eq.s32.totalorder %s29, 1
      %p253 = por %p251, %p252
      %p255 = scmp.ne.s32.totalorder %s240, %s254
      %p256 = scmp.eq.s32.totalorder %s29, 0
      %p257 = por %p255, %p256
      %s259 = sadd.s32 %s258, 1
      %p262 = scmp.eq.s32.totalorder %s23, 1
      %p263 = scmp.ne.s32.totalorder %s258, %s260
      %p264 = scmp.eq.s32.totalorder %s23, 0
      %p265 = por %p263, %p264
      %p266 = scmp.ne.s32.totalorder %s258, %s260
      %p267 = scmp.eq.s32.totalorder %s28, 1
      %p268 = por %p266, %p267
      %p269 = scmp.ne.s32.totalorder %s260, %s261
      %p270 = scmp.eq.s32.totalorder %s28, 0
      %p271 = por %p269, %p270
      %p272 = scmp.ne.s32.totalorder %s260, %s261
      %p273 = scmp.eq.s32.totalorder %s29, 1
      %p274 = por %p272, %p273
      %p276 = scmp.ne.s32.totalorder %s261, %s275
      %p277 = scmp.eq.s32.totalorder %s29, 0
      %p278 = por %p276, %p277
      %s280 = sadd.s32 %s279, 1
      %p283 = scmp.eq.s32.totalorder %s23, 1
      %p284 = scmp.ne.s32.totalorder %s279, %s281
      %p285 = scmp.eq.s32.totalorder %s23, 0
      %p286 = por %p284, %p285
      %p287 = scmp.ne.s32.totalorder %s279, %s281
      %p288 = scmp.eq.s32.totalorder %s28, 1
      %p289 = por %p287, %p288
      %p290 = scmp.ne.s32.totalorder %s281, %s282
      %p291 = scmp.eq.s32.totalorder %s28, 0
      %p292 = por %p290, %p291
      %p293 = scmp.ne.s32.totalorder %s281, %s282
      %p294 = scmp.eq.s32.totalorder %s29, 1
      %p295 = por %p293, %p294
      %p297 = scmp.ne.s32.totalorder %s282, %s296
      %p298 = scmp.eq.s32.totalorder %s29, 0
      %p299 = por %p297, %p298
      %s301 = sadd.s32 %s300, 1
      %p304 = scmp.eq.s32.totalorder %s23, 1
      %p305 = scmp.ne.s32.totalorder %s300, %s302
      %p306 = scmp.eq.s32.totalorder %s23, 0
      %p307 = por %p305, %p306
      %p308 = scmp.ne.s32.totalorder %s300, %s302
      %p309 = scmp.eq.s32.totalorder %s28, 1
      %p310 = por %p308, %p309
      %p311 = scmp.ne.s32.totalorder %s302, %s303
      %p312 = scmp.eq.s32.totalorder %s28, 0
      %p313 = por %p311, %p312
      %p314 = scmp.ne.s32.totalorder %s302, %s303
      %p315 = scmp.eq.s32.totalorder %s29, 1
      %p316 = por %p314, %p315
      %p318 = scmp.ne.s32.totalorder %s303, %s317
      %p319 = scmp.eq.s32.totalorder %s29, 0
      %p320 = por %p318, %p319
      %s322 = sadd.s32 %s321, 1
      %p325 = scmp.eq.s32.totalorder %s23, 1
      %p326 = scmp.ne.s32.totalorder %s321, %s323
      %p327 = scmp.eq.s32.totalorder %s23, 0
      %p328 = por %p326, %p327
      %p329 = scmp.ne.s32.totalorder %s321, %s323
      %p330 = scmp.eq.s32.totalorder %s28, 1
      %p331 = por %p329, %p330
      %p332 = scmp.ne.s32.totalorder %s323, %s324
      %p333 = scmp.eq.s32.totalorder %s28, 0
      %p334 = por %p332, %p333
      %p335 = scmp.ne.s32.totalorder %s323, %s324
      %p336 = scmp.eq.s32.totalorder %s29, 1
      %p337 = por %p335, %p336
      %p339 = scmp.ne.s32.totalorder %s324, %s338
      %p340 = scmp.eq.s32.totalorder %s29, 0
      %p341 = por %p339, %p340
      %s342 = ssub.s32 %s30, %s42
      %s343 = ssub.s32 %s31, %s38
      %s344 = sor.u32 %s342, %s343
      %p345 = scmp.eq.s32.totalorder %s344, 0
      %s347 = sadd.s32 %s346, 1
      %s348 = scalar_select %p345, %s346, %s347
      %p351 = pneg %p345
      %p352 = scmp.eq.s32.totalorder %s23, 1
      %p353 = por %p351, %p352
      %p354 = scmp.ne.s32.totalorder %s346, %s349
      %p355 = scmp.eq.s32.totalorder %s23, 0
      %p356 = por %p354, %p355
      %p357 = scmp.ne.s32.totalorder %s346, %s349
      %p358 = scmp.eq.s32.totalorder %s28, 1
      %p359 = por %p357, %p358
      %p360 = scmp.ne.s32.totalorder %s349, %s350
      %p361 = scmp.eq.s32.totalorder %s28, 0
      %p362 = por %p360, %p361
      %p363 = scmp.ne.s32.totalorder %s349, %s350
      %p364 = scmp.eq.s32.totalorder %s29, 1
      %p365 = por %p363, %p364
      %p367 = scmp.ne.s32.totalorder %s350, %s366
      %p368 = scmp.eq.s32.totalorder %s29, 0
      %p369 = por %p367, %p368
      %p370 = scmp.le.s32.totalorder 1, %s23
      %p371 = scmp.lt.s32.totalorder %s23, 3
      %p372 = pnand %p370, %p371
      %p373 = pneg %p372
      // Predicated region
      $region9: #{tpu_custom_call.1} parent=5 // pred_check
        _
      $region10: #{tpu_custom_call.1} parent=5 // pred_check_branch
        %375 = sbr.rel (%p372) target = $region12
      $region11: #{tpu_custom_call.1} parent=5 // pred_region
        %s376 = ssub.s32 %s23, 1
        // Predicated region
        $region13: #{tpu_custom_call.1} parent=11 // pred_check
          %p377 = pneg %p82
        $region14: #{tpu_custom_call.1} parent=11 // pred_check_branch
          %379 = sbr.rel (%p377) target = $region16
        $region15: #{tpu_custom_call.1} parent=11 // pred_region
          _
        $region16: #{tpu_custom_call.1} parent=11 // pred_fallthru
          _
        // Predicated region
        $region17: #{tpu_custom_call.1} parent=11 // pred_check
          %p380 = pneg %p103
        $region18: #{tpu_custom_call.1} parent=11 // pred_check_branch
          %382 = sbr.rel (%p380) target = $region20
        $region19: #{tpu_custom_call.1} parent=11 // pred_region
          _
        $region20: #{tpu_custom_call.1} parent=11 // pred_fallthru
          _
        // Predicated region
        $region21: #{tpu_custom_call.1} parent=11 // pred_check
          %p383 = pneg %p124
        $region22: #{tpu_custom_call.1} parent=11 // pred_check_branch
          %385 = sbr.rel (%p383) target = $region24
        $region23: #{tpu_custom_call.1} parent=11 // pred_region
          _
        $region24: #{tpu_custom_call.1} parent=11 // pred_fallthru
          _
        // Predicated region
        $region25: #{tpu_custom_call.1} parent=11 // pred_check
          %p386 = pneg %p145
        $region26: #{tpu_custom_call.1} parent=11 // pred_check_branch
          %388 = sbr.rel (%p386) target = $region28
        $region27: #{tpu_custom_call.1} parent=11 // pred_region
          _
        $region28: #{tpu_custom_call.1} parent=11 // pred_fallthru
          _
        // Predicated region
        $region29: #{tpu_custom_call.1} parent=11 // pred_check
          %p389 = pneg %p166
        $region30: #{tpu_custom_call.1} parent=11 // pred_check_branch
          %391 = sbr.rel (%p389) target = $region32
        $region31: #{tpu_custom_call.1} parent=11 // pred_region
          _
        $region32: #{tpu_custom_call.1} parent=11 // pred_fallthru
          _
        // Predicated region
        $region33: #{tpu_custom_call.1} parent=11 // pred_check
          %p392 = pneg %p187
        $region34: #{tpu_custom_call.1} parent=11 // pred_check_branch
          %394 = sbr.rel (%p392) target = $region36
        $region35: #{tpu_custom_call.1} parent=11 // pred_region
          _
        $region36: #{tpu_custom_call.1} parent=11 // pred_fallthru
          _
        // Predicated region
        $region37: #{tpu_custom_call.1} parent=11 // pred_check
          %p395 = pneg %p208
        $region38: #{tpu_custom_call.1} parent=11 // pred_check_branch
          %397 = sbr.rel (%p395) target = $region40
        $region39: #{tpu_custom_call.1} parent=11 // pred_region
          _
        $region40: #{tpu_custom_call.1} parent=11 // pred_fallthru
          _
        // Predicated region
        $region41: #{tpu_custom_call.1} parent=11 // pred_check
          %p398 = pneg %p229
        $region42: #{tpu_custom_call.1} parent=11 // pred_check_branch
          %400 = sbr.rel (%p398) target = $region44
        $region43: #{tpu_custom_call.1} parent=11 // pred_region
          _
        $region44: #{tpu_custom_call.1} parent=11 // pred_fallthru
          _
        // Predicated region
        $region45: #{tpu_custom_call.1} parent=11 // pred_check
          %p401 = pneg %p250
        $region46: #{tpu_custom_call.1} parent=11 // pred_check_branch
          %403 = sbr.rel (%p401) target = $region48
        $region47: #{tpu_custom_call.1} parent=11 // pred_region
          _
        $region48: #{tpu_custom_call.1} parent=11 // pred_fallthru
          _
        // Predicated region
        $region49: #{tpu_custom_call.1} parent=11 // pred_check
          %p404 = pneg %p271
        $region50: #{tpu_custom_call.1} parent=11 // pred_check_branch
          %406 = sbr.rel (%p404) target = $region52
        $region51: #{tpu_custom_call.1} parent=11 // pred_region
          _
        $region52: #{tpu_custom_call.1} parent=11 // pred_fallthru
          _
        // Predicated region
        $region53: #{tpu_custom_call.1} parent=11 // pred_check
          %p407 = pneg %p292
        $region54: #{tpu_custom_call.1} parent=11 // pred_check_branch
          %409 = sbr.rel (%p407) target = $region56
        $region55: #{tpu_custom_call.1} parent=11 // pred_region
          _
        $region56: #{tpu_custom_call.1} parent=11 // pred_fallthru
          _
        // Predicated region
        $region57: #{tpu_custom_call.1} parent=11 // pred_check
          %p410 = pneg %p313
        $region58: #{tpu_custom_call.1} parent=11 // pred_check_branch
          %412 = sbr.rel (%p410) target = $region60
        $region59: #{tpu_custom_call.1} parent=11 // pred_region
          _
        $region60: #{tpu_custom_call.1} parent=11 // pred_fallthru
          _
        // Predicated region
        $region61: #{tpu_custom_call.1} parent=11 // pred_check
          %p413 = pneg %p334
        $region62: #{tpu_custom_call.1} parent=11 // pred_check_branch
          %415 = sbr.rel (%p413) target = $region64
        $region63: #{tpu_custom_call.1} parent=11 // pred_region
          _
        $region64: #{tpu_custom_call.1} parent=11 // pred_fallthru
          _
      $region12: #{tpu_custom_call.1} parent=5 // pred_fallthru
        _
      %p416 = scmp.lt.s32.totalorder %s23, 2
      // Predicated region
      $region65: #{tpu_custom_call.1} parent=5 // pred_check
        %p417 = pneg %p416
      $region66: #{tpu_custom_call.1} parent=5 // pred_check_branch
        %419 = sbr.rel (%p417) target = $region68
      $region67: #{tpu_custom_call.1} parent=5 // pred_region
        // Predicated region
        $region69: #{tpu_custom_call.1} parent=67 // pred_check
          %p420 = pneg %p55
        $region70: #{tpu_custom_call.1} parent=67 // pred_check_branch
          %422 = sbr.rel (%p420) target = $region72
        $region71: #{tpu_custom_call.1} parent=67 // pred_region
          %p423 = scmp.lt.s32.totalorder %s30, 1
          %s424 = scalar_select %p423, %s30, 1
          %s425 = smul.addr %s424, 2
          %s426 = smul.addr %s425, 8
          %s427 = scalar_lea.vmem %s0, %s426
        $region72: #{tpu_custom_call.1} parent=67 // pred_fallthru
          _
      $region68: #{tpu_custom_call.1} parent=5 // pred_fallthru
        _
      %p428 = scmp.le.s32.totalorder 1, %s23
      %p429 = scmp.lt.s32.totalorder %s23, 3
      %p430 = pnand %p428, %p429
      %p431 = pneg %p430
      // Predicated region
      $region73: #{tpu_custom_call.1} parent=5 // pred_check
        _
      $region74: #{tpu_custom_call.1} parent=5 // pred_check_branch
        %433 = sbr.rel (%p430) target = $region76
      $region75: #{tpu_custom_call.1} parent=5 // pred_region
        %s434 = ssub.s32 %s23, 1
        %p435 = scmp.lt.s32.totalorder %s32, 1
        %s436 = scalar_select %p435, %s32, 1
        %s437 = smul.addr %s436, 2
        %s438 = smul.addr %s437, 8
        %s439 = scalar_lea.vmem %s0, %s438
        %p440 = pneg %p61
        %p441 = pneg %p58
        %p442 = pneg %p82
        %p443 = pneg %p79
        %p444 = pneg %p103
        %p445 = pneg %p100
        %p446 = pneg %p124
        %p447 = pneg %p121
        %p448 = pneg %p145
        %p449 = pneg %p142
        %p450 = pneg %p166
        %p451 = pneg %p163
        %p452 = pneg %p187
        %p453 = pneg %p184
        %p454 = pneg %p208
        %p455 = pneg %p205
        %p456 = pneg %p229
        %p457 = pneg %p226
        %p458 = pneg %p250
        %p459 = pneg %p247
        %p460 = pneg %p271
        %p461 = pneg %p268
        %p462 = pneg %p292
        %p463 = pneg %p289
        %p464 = pneg %p313
        %p465 = pneg %p310
        %p466 = pneg %p334
        %p467 = pneg %p331
        %p468 = pneg %p362
        %p469 = pneg %p359
        %s470 = sand.u32 %s349, 1
        %s471 = scalar_lea.sflag [#allocation6], %s470
        %s472 = sand.u32 %s349, 1
        %s473 = smul.addr %s472, 16
        %s474 = scalar_lea.vmem [#allocation5], %s473
        %p475 = scmp.lt.s32.totalorder %s32, 1
        %s476 = scalar_select %p475, %s32, 1
        %s477 = smul.addr %s476, 2
        %s478 = smul.addr %s477, 8
        %s479 = scalar_lea.vmem %s0, %s478
        %s480 = smul.u32 2, %s33
        %s482 = smul.u32 %s33, 16
        %p483 = scmp.eq.s32.totalorder %s33, 0
        // Predicated region
        $region77: #{tpu_custom_call.1} parent=75 // pred_check
          %p484 = pneg %p483
        $region78: #{tpu_custom_call.1} parent=75 // pred_check_branch
          %486 = sbr.rel (%p484) target = $region80
        $region79: #{tpu_custom_call.1} parent=75 // pred_region
          %v487 = vld [vmem:[%s479] sm:$0xff]
          %v488 = vld [vmem:[%s479 + $0x8] sm:$0xff]
          %v489 = vld [vmem:[%s1] sm:$0x1]
          %v490 = vld [vmem:[%s2] sm:$0x1]
          %vm491 = vcmask 261120
          %v492 = vsel %vm491, %v487, 0.0
          %493 = vadd.xlane.f32.xlu0 %v492
          %v494 = vpop.xlane.xlu0 %493
          %v495 = vsel %vm491, %v488, 0.0
          %496 = vadd.xlane.f32.xlu0 %v495
          %v497 = vpop.xlane.xlu0 %496
          %v498 = vrcp.pop 32.0
          %v499 = vmul.f32 %v494, %v498
          %v500 = vmul.f32 %v497, %v498
          %v501 = vsub.f32 %v487, %v499
          %v502 = vsub.f32 %v488, %v500
          %v503 = vmul.f32 %v501, %v501
          %v504 = vmul.f32 %v502, %v502
          %v505 = vsel %vm491, %v503, 0.0
          %506 = vadd.xlane.f32.xlu0 %v505
          %v507 = vpop.xlane.xlu0 %506
          %v508 = vsel %vm491, %v504, 0.0
          %509 = vadd.xlane.f32.xlu0 %v508
          %v510 = vpop.xlane.xlu0 %509
          %v511 = vmul.f32 %v507, %v498
          %v512 = vmul.f32 %v510, %v498
          %v513 = vadd.f32 %v511, 1e-05
          %v514 = vadd.f32 %v512, 1e-05
          %v515 = vrsqrt.pop %v513
          %v516 = vrsqrt.pop %v514
          %v517 = vmul.f32 %v501, %v515
          %v518 = vmul.f32 %v502, %v516
          %v520 = vlaneseq
          %v521 = vshrl.u32 %v520, 7
          %v522 = vsub.s32 0, %v521
          %v523 = vrot.slane %v489, %v522
          %v525 = vmul.f32 %v517, %v523
          %v526 = vmul.f32 %v518, %v523
          %v528 = vlaneseq
          %v529 = vshrl.u32 %v528, 7
          %v530 = vsub.s32 0, %v529
          %v531 = vrot.slane %v490, %v530
          %v533 = vadd.f32 %v525, %v531
          %v534 = vadd.f32 %v526, %v531
          %v535 = vpack.c.bf16 %v534, %v533
          %v536 = vld [vmem:[%s3] sm:$0xf]
          %v537 = vld [vmem:[%s3 + $0x4] sm:$0xf]
          %v538 = vld [vmem:[%s3 + $0x8] sm:$0xf]
          %v539 = vld [vmem:[%s3 + $0xc] sm:$0xf]
          %v544 = vunpack.c.l.b16 %v536
          %v545 = vunpack.c.l.b16 %v537
          %v546 = vunpack.c.l.b16 %v538
          %v547 = vunpack.c.l.b16 %v539
          %v548 = vpack.c.b16 %v545, %v544
          %v549 = vpack.c.b16 %v547, %v546
          %v553 = vsel %vm491, %v535, 0
          %555 = vmatprep.subr.bf16.mxu0 0
          %556 = vmatpush1.bf16.msra.mxu0 0
          %557 = vmatprep.subr.bf16.mxu0 0
          %558 = vmatpush1.bf16.msra.mxu0 0
          %559 = vmatprep.subr.bf16.mxu0 0
          %560 = vmatpush1.bf16.msra.mxu0 0
          %561 = vmatprep.subr.bf16.mxu0 0
          %562 = vmatpush1.bf16.msra.mxu0 0
          %563 = vmatprep.subr.bf16.mxu0 0
          %564 = vmatpush1.bf16.msra.mxu0 0
          %565 = vmatprep.subr.bf16.mxu0 0
          %566 = vmatpush1.bf16.msra.mxu0 0
          %567 = vmatprep.subr.bf16.mxu0 0
          %568 = vmatpush1.bf16.msra.mxu0 %v549
          %569 = vmatprep.subr.bf16.mxu0 0
          %570 = vmatpush1.bf16.msra.mxu0 %v548
          %571 = vmatprep.subr.bf16.mxu0 0
          %572 = vmatpush2.bf16.msra.mxu0 0
          %573 = vmatprep.subr.bf16.mxu0 0
          %574 = vmatpush2.bf16.msra.mxu0 0
          %575 = vmatprep.subr.bf16.mxu0 0
          %576 = vmatpush2.bf16.msra.mxu0 0
          %577 = vmatprep.subr.bf16.mxu0 0
          %578 = vmatpush2.bf16.msra.mxu0 0
          %579 = vmatprep.subr.bf16.mxu0 0
          %580 = vmatpush2.bf16.msra.mxu0 0
          %581 = vmatprep.subr.bf16.mxu0 0
          %582 = vmatpush2.bf16.msra.mxu0 0
          %583 = vmatprep.subr.bf16.mxu0 0
          %584 = vmatpush2.bf16.msra.mxu0 0
          %585 = vmatprep.subr.bf16.mxu0 0
          %586 = vmatpush2.bf16.msra.mxu0 0
          %587 = vmatprep.mubr.bf16.mxu0 0
          %588 = vmatmul.mubr.bf16.gmra.mxu0 %v553
          %v589 = vpop.f32.mrf.mxu0
          %v590 = vadd.f32 0.0, %v589
          %v591 = vpop.f32.mrf.mxu0
          %v592 = vpop.f32.mrf.mxu0
          %v593 = vadd.f32 0.0, %v592
          %v594 = vpop.f32.mrf.mxu0
          %595 = vdwg.mxu0
          %v596 = vpack.c.bf16 %v593, %v590
          %v598 = vunpack.c.l.b16 %v596
          %v599 = vunpack.c.h.b16 %v596
          %v600 = vpack.c.b16 %v598, %v598
          %v601 = vpack.c.b16 %v599, %v599
          %vm604 = vcmask 27648
          %605 = vst.msk [vmem:[#allocation2] sm:$0xf] %vm604, %v600
          %606 = vst.msk [vmem:[#allocation2 + $0x4] sm:$0xf] %vm604, %v601
          %v607 = vld [vmem:[%s4] sm:$0xf]
          %v608 = vld [vmem:[%s4 + $0x4] sm:$0xf]
          %v609 = vld [vmem:[%s4 + $0x8] sm:$0xf]
          %v610 = vld [vmem:[%s4 + $0xc] sm:$0xf]
          %v615 = vunpack.c.l.b16 %v607
          %v616 = vunpack.c.l.b16 %v608
          %v617 = vunpack.c.l.b16 %v609
          %v618 = vunpack.c.l.b16 %v610
          %v619 = vpack.c.b16 %v616, %v615
          %v620 = vpack.c.b16 %v618, %v617
          %623 = vmatprep.subr.bf16.mxu0 0
          %624 = vmatpush1.bf16.msra.mxu0 0
          %625 = vmatprep.subr.bf16.mxu0 0
          %626 = vmatpush1.bf16.msra.mxu0 0
          %627 = vmatprep.subr.bf16.mxu0 0
          %628 = vmatpush1.bf16.msra.mxu0 0
          %629 = vmatprep.subr.bf16.mxu0 0
          %630 = vmatpush1.bf16.msra.mxu0 0
          %631 = vmatprep.subr.bf16.mxu0 0
          %632 = vmatpush1.bf16.msra.mxu0 0
          %633 = vmatprep.subr.bf16.mxu0 0
          %634 = vmatpush1.bf16.msra.mxu0 0
          %635 = vmatprep.subr.bf16.mxu0 0
          %636 = vmatpush1.bf16.msra.mxu0 %v620
          %637 = vmatprep.subr.bf16.mxu0 0
          %638 = vmatpush1.bf16.msra.mxu0 %v619
          %639 = vmatprep.subr.bf16.mxu0 0
          %640 = vmatpush2.bf16.msra.mxu0 0
          %641 = vmatprep.subr.bf16.mxu0 0
          %642 = vmatpush2.bf16.msra.mxu0 0
          %643 = vmatprep.subr.bf16.mxu0 0
          %644 = vmatpush2.bf16.msra.mxu0 0
          %645 = vmatprep.subr.bf16.mxu0 0
          %646 = vmatpush2.bf16.msra.mxu0 0
          %647 = vmatprep.subr.bf16.mxu0 0
          %648 = vmatpush2.bf16.msra.mxu0 0
          %649 = vmatprep.subr.bf16.mxu0 0
          %650 = vmatpush2.bf16.msra.mxu0 0
          %651 = vmatprep.subr.bf16.mxu0 0
          %652 = vmatpush2.bf16.msra.mxu0 0
          %653 = vmatprep.subr.bf16.mxu0 0
          %654 = vmatpush2.bf16.msra.mxu0 0
          %655 = vmatprep.mubr.bf16.mxu0 0
          %656 = vmatmul.mubr.bf16.gmra.mxu0 %v553
          %v657 = vpop.f32.mrf.mxu0
          %v658 = vadd.f32 0.0, %v657
          %v659 = vpop.f32.mrf.mxu0
          %v660 = vpop.f32.mrf.mxu0
          %v661 = vadd.f32 0.0, %v660
          %v662 = vpop.f32.mrf.mxu0
          %663 = vdwg.mxu0
          %v664 = vpack.c.bf16 %v661, %v658
          %v666 = vunpack.c.l.b16 %v664
          %v667 = vunpack.c.h.b16 %v664
          %v668 = vpack.c.b16 %v666, %v666
          %v669 = vpack.c.b16 %v667, %v667
          %672 = vst.msk [vmem:[#allocation3] sm:$0xf] %vm604, %v668
          %673 = vst.msk [vmem:[#allocation3 + $0x4] sm:$0xf] %vm604, %v669
          %v674 = vld [vmem:[%s5] sm:$0xf]
          %v675 = vld [vmem:[%s5 + $0x4] sm:$0xf]
          %v676 = vld [vmem:[%s5 + $0x8] sm:$0xf]
          %v677 = vld [vmem:[%s5 + $0xc] sm:$0xf]
          %v682 = vunpack.c.l.b16 %v674
          %v683 = vunpack.c.l.b16 %v675
          %v684 = vunpack.c.l.b16 %v676
          %v685 = vunpack.c.l.b16 %v677
          %v686 = vpack.c.b16 %v683, %v682
          %v687 = vpack.c.b16 %v685, %v684
          %690 = vmatprep.subr.bf16.mxu0 0
          %691 = vmatpush1.bf16.msra.mxu0 0
          %692 = vmatprep.subr.bf16.mxu0 0
          %693 = vmatpush1.bf16.msra.mxu0 0
          %694 = vmatprep.subr.bf16.mxu0 0
          %695 = vmatpush1.bf16.msra.mxu0 0
          %696 = vmatprep.subr.bf16.mxu0 0
          %697 = vmatpush1.bf16.msra.mxu0 0
          %698 = vmatprep.subr.bf16.mxu0 0
          %699 = vmatpush1.bf16.msra.mxu0 0
          %700 = vmatprep.subr.bf16.mxu0 0
          %701 = vmatpush1.bf16.msra.mxu0 0
          %702 = vmatprep.subr.bf16.mxu0 0
          %703 = vmatpush1.bf16.msra.mxu0 %v687
          %704 = vmatprep.subr.bf16.mxu0 0
          %705 = vmatpush1.bf16.msra.mxu0 %v686
          %706 = vmatprep.subr.bf16.mxu0 0
          %707 = vmatpush2.bf16.msra.mxu0 0
          %708 = vmatprep.subr.bf16.mxu0 0
          %709 = vmatpush2.bf16.msra.mxu0 0
          %710 = vmatprep.subr.bf16.mxu0 0
          %711 = vmatpush2.bf16.msra.mxu0 0
          %712 = vmatprep.subr.bf16.mxu0 0
          %713 = vmatpush2.bf16.msra.mxu0 0
          %714 = vmatprep.subr.bf16.mxu0 0
          %715 = vmatpush2.bf16.msra.mxu0 0
          %716 = vmatprep.subr.bf16.mxu0 0
          %717 = vmatpush2.bf16.msra.mxu0 0
          %718 = vmatprep.subr.bf16.mxu0 0
          %719 = vmatpush2.bf16.msra.mxu0 0
          %720 = vmatprep.subr.bf16.mxu0 0
          %721 = vmatpush2.bf16.msra.mxu0 0
          %722 = vmatprep.mubr.bf16.mxu0 0
          %723 = vmatmul.mubr.bf16.gmra.mxu0 %v553
          %v724 = vpop.f32.mrf.mxu0
          %v725 = vadd.f32 0.0, %v724
          %v726 = vpop.f32.mrf.mxu0
          %v727 = vpop.f32.mrf.mxu0
          %v728 = vadd.f32 0.0, %v727
          %v729 = vpop.f32.mrf.mxu0
          %730 = vdwg.mxu0
          %v731 = vpack.c.bf16 %v728, %v725
          %v733 = vunpack.c.l.b16 %v731
          %v734 = vunpack.c.h.b16 %v731
          %v735 = vpack.c.b16 %v733, %v733
          %v736 = vpack.c.b16 %v734, %v734
          %739 = vst.msk [vmem:[#allocation4] sm:$0xf] %vm604, %v735
          %740 = vst.msk [vmem:[#allocation4 + $0x4] sm:$0xf] %vm604, %v736
          %s741 = scalar_lea.vmem %s3, 16
          %v742 = vld [vmem:[%s741] sm:$0xf]
          %v743 = vld [vmem:[%s741 + $0x4] sm:$0xf]
          %v744 = vld [vmem:[%s741 + $0x8] sm:$0xf]
          %v745 = vld [vmem:[%s741 + $0xc] sm:$0xf]
          %v750 = vunpack.c.l.b16 %v742
          %v751 = vunpack.c.l.b16 %v743
          %v752 = vunpack.c.l.b16 %v744
          %v753 = vunpack.c.l.b16 %v745
          %v754 = vpack.c.b16 %v751, %v750
          %v755 = vpack.c.b16 %v753, %v752
          %758 = vmatprep.subr.bf16.mxu0 0
          %759 = vmatpush1.bf16.msra.mxu0 0
          %760 = vmatprep.subr.bf16.mxu0 0
          %761 = vmatpush1.bf16.msra.mxu0 0
          %762 = vmatprep.subr.bf16.mxu0 0
          %763 = vmatpush1.bf16.msra.mxu0 0
          %764 = vmatprep.subr.bf16.mxu0 0
          %765 = vmatpush1.bf16.msra.mxu0 0
          %766 = vmatprep.subr.bf16.mxu0 0
          %767 = vmatpush1.bf16.msra.mxu0 0
          %768 = vmatprep.subr.bf16.mxu0 0
          %769 = vmatpush1.bf16.msra.mxu0 0
          %770 = vmatprep.subr.bf16.mxu0 0
          %771 = vmatpush1.bf16.msra.mxu0 %v755
          %772 = vmatprep.subr.bf16.mxu0 0
          %773 = vmatpush1.bf16.msra.mxu0 %v754
          %774 = vmatprep.subr.bf16.mxu0 0
          %775 = vmatpush2.bf16.msra.mxu0 0
          %776 = vmatprep.subr.bf16.mxu0 0
          %777 = vmatpush2.bf16.msra.mxu0 0
          %778 = vmatprep.subr.bf16.mxu0 0
          %779 = vmatpush2.bf16.msra.mxu0 0
          %780 = vmatprep.subr.bf16.mxu0 0
          %781 = vmatpush2.bf16.msra.mxu0 0
          %782 = vmatprep.subr.bf16.mxu0 0
          %783 = vmatpush2.bf16.msra.mxu0 0
          %784 = vmatprep.subr.bf16.mxu0 0
          %785 = vmatpush2.bf16.msra.mxu0 0
          %786 = vmatprep.subr.bf16.mxu0 0
          %787 = vmatpush2.bf16.msra.mxu0 0
          %788 = vmatprep.subr.bf16.mxu0 0
          %789 = vmatpush2.bf16.msra.mxu0 0
          %790 = vmatprep.mubr.bf16.mxu0 0
          %791 = vmatmul.mubr.bf16.gmra.mxu0 %v553
          %v792 = vpop.f32.mrf.mxu0
          %v793 = vadd.f32 0.0, %v792
          %v794 = vpop.f32.mrf.mxu0
          %v795 = vpop.f32.mrf.mxu0
          %v796 = vadd.f32 0.0, %v795
          %v797 = vpop.f32.mrf.mxu0
          %798 = vdwg.mxu0
          %v799 = vpack.c.bf16 %v796, %v793
          %v801 = vunpack.c.l.b16 %v799
          %v802 = vunpack.c.h.b16 %v799
          %v803 = vpack.c.b16 %v801, %v801
          %v804 = vpack.c.b16 %v802, %v802
          %s807 = scalar_lea.vmem [#allocation2], 8
          %808 = vst.msk [vmem:[%s807] sm:$0xf] %vm604, %v803
          %809 = vst.msk [vmem:[%s807 + $0x4] sm:$0xf] %vm604, %v804
          %s810 = scalar_lea.vmem %s4, 16
          %v811 = vld [vmem:[%s810] sm:$0xf]
          %v812 = vld [vmem:[%s810 + $0x4] sm:$0xf]
          %v813 = vld [vmem:[%s810 + $0x8] sm:$0xf]
          %v814 = vld [vmem:[%s810 + $0xc] sm:$0xf]
          %v819 = vunpack.c.l.b16 %v811
          %v820 = vunpack.c.l.b16 %v812
          %v821 = vunpack.c.l.b16 %v813
          %v822 = vunpack.c.l.b16 %v814
          %v823 = vpack.c.b16 %v820, %v819
          %v824 = vpack.c.b16 %v822, %v821
          %827 = vmatprep.subr.bf16.mxu0 0
          %828 = vmatpush1.bf16.msra.mxu0 0
          %829 = vmatprep.subr.bf16.mxu0 0
          %830 = vmatpush1.bf16.msra.mxu0 0
          %831 = vmatprep.subr.bf16.mxu0 0
          %832 = vmatpush1.bf16.msra.mxu0 0
          %833 = vmatprep.subr.bf16.mxu0 0
          %834 = vmatpush1.bf16.msra.mxu0 0
          %835 = vmatprep.subr.bf16.mxu0 0
          %836 = vmatpush1.bf16.msra.mxu0 0
          %837 = vmatprep.subr.bf16.mxu0 0
          %838 = vmatpush1.bf16.msra.mxu0 0
          %839 = vmatprep.subr.bf16.mxu0 0
          %840 = vmatpush1.bf16.msra.mxu0 %v824
          %841 = vmatprep.subr.bf16.mxu0 0
          %842 = vmatpush1.bf16.msra.mxu0 %v823
          %843 = vmatprep.subr.bf16.mxu0 0
          %844 = vmatpush2.bf16.msra.mxu0 0
          %845 = vmatprep.subr.bf16.mxu0 0
          %846 = vmatpush2.bf16.msra.mxu0 0
          %847 = vmatprep.subr.bf16.mxu0 0
          %848 = vmatpush2.bf16.msra.mxu0 0
          %849 = vmatprep.subr.bf16.mxu0 0
          %850 = vmatpush2.bf16.msra.mxu0 0
          %851 = vmatprep.subr.bf16.mxu0 0
          %852 = vmatpush2.bf16.msra.mxu0 0
          %853 = vmatprep.subr.bf16.mxu0 0
          %854 = vmatpush2.bf16.msra.mxu0 0
          %855 = vmatprep.subr.bf16.mxu0 0
          %856 = vmatpush2.bf16.msra.mxu0 0
          %857 = vmatprep.subr.bf16.mxu0 0
          %858 = vmatpush2.bf16.msra.mxu0 0
          %859 = vmatprep.mubr.bf16.mxu0 0
          %860 = vmatmul.mubr.bf16.gmra.mxu0 %v553
          %v861 = vpop.f32.mrf.mxu0
          %v862 = vadd.f32 0.0, %v861
          %v863 = vpop.f32.mrf.mxu0
          %v864 = vpop.f32.mrf.mxu0
          %v865 = vadd.f32 0.0, %v864
          %v866 = vpop.f32.mrf.mxu0
          %867 = vdwg.mxu0
          %v868 = vpack.c.bf16 %v865, %v862
          %v870 = vunpack.c.l.b16 %v868
          %v871 = vunpack.c.h.b16 %v868
          %v872 = vpack.c.b16 %v870, %v870
          %v873 = vpack.c.b16 %v871, %v871
          %s876 = scalar_lea.vmem [#allocation3], 8
          %877 = vst.msk [vmem:[%s876] sm:$0xf] %vm604, %v872
          %878 = vst.msk [vmem:[%s876 + $0x4] sm:$0xf] %vm604, %v873
          %s879 = scalar_lea.vmem %s5, 16
          %v880 = vld [vmem:[%s879] sm:$0xf]
          %v881 = vld [vmem:[%s879 + $0x4] sm:$0xf]
          %v882 = vld [vmem:[%s879 + $0x8] sm:$0xf]
          %v883 = vld [vmem:[%s879 + $0xc] sm:$0xf]
          %v888 = vunpack.c.l.b16 %v880
          %v889 = vunpack.c.l.b16 %v881
          %v890 = vunpack.c.l.b16 %v882
          %v891 = vunpack.c.l.b16 %v883
          %v892 = vpack.c.b16 %v889, %v888
          %v893 = vpack.c.b16 %v891, %v890
          %896 = vmatprep.subr.bf16.mxu0 0
          %897 = vmatpush1.bf16.msra.mxu0 0
          %898 = vmatprep.subr.bf16.mxu0 0
          %899 = vmatpush1.bf16.msra.mxu0 0
          %900 = vmatprep.subr.bf16.mxu0 0
          %901 = vmatpush1.bf16.msra.mxu0 0
          %902 = vmatprep.subr.bf16.mxu0 0
          %903 = vmatpush1.bf16.msra.mxu0 0
          %904 = vmatprep.subr.bf16.mxu0 0
          %905 = vmatpush1.bf16.msra.mxu0 0
          %906 = vmatprep.subr.bf16.mxu0 0
          %907 = vmatpush1.bf16.msra.mxu0 0
          %908 = vmatprep.subr.bf16.mxu0 0
          %909 = vmatpush1.bf16.msra.mxu0 %v893
          %910 = vmatprep.subr.bf16.mxu0 0
          %911 = vmatpush1.bf16.msra.mxu0 %v892
          %912 = vmatprep.subr.bf16.mxu0 0
          %913 = vmatpush2.bf16.msra.mxu0 0
          %914 = vmatprep.subr.bf16.mxu0 0
          %915 = vmatpush2.bf16.msra.mxu0 0
          %916 = vmatprep.subr.bf16.mxu0 0
          %917 = vmatpush2.bf16.msra.mxu0 0
          %918 = vmatprep.subr.bf16.mxu0 0
          %919 = vmatpush2.bf16.msra.mxu0 0
          %920 = vmatprep.subr.bf16.mxu0 0
          %921 = vmatpush2.bf16.msra.mxu0 0
          %922 = vmatprep.subr.bf16.mxu0 0
          %923 = vmatpush2.bf16.msra.mxu0 0
          %924 = vmatprep.subr.bf16.mxu0 0
          %925 = vmatpush2.bf16.msra.mxu0 0
          %926 = vmatprep.subr.bf16.mxu0 0
          %927 = vmatpush2.bf16.msra.mxu0 0
          %928 = vmatprep.mubr.bf16.mxu0 0
          %929 = vmatmul.mubr.bf16.gmra.mxu0 %v553
          %v930 = vpop.f32.mrf.mxu0
          %v931 = vadd.f32 0.0, %v930
          %v932 = vpop.f32.mrf.mxu0
          %v933 = vpop.f32.mrf.mxu0
          %v934 = vadd.f32 0.0, %v933
          %v935 = vpop.f32.mrf.mxu0
          %936 = vdwg.mxu0
          %v937 = vpack.c.bf16 %v934, %v931
          %v939 = vunpack.c.l.b16 %v937
          %v940 = vunpack.c.h.b16 %v937
          %v941 = vpack.c.b16 %v939, %v939
          %v942 = vpack.c.b16 %v940, %v940
          %s945 = scalar_lea.vmem [#allocation4], 8
          %946 = vst.msk [vmem:[%s945] sm:$0xf] %vm604, %v941
          %947 = vst.msk [vmem:[%s945 + $0x4] sm:$0xf] %vm604, %v942
          %s948 = scalar_lea.vmem %s3, 32
          %v949 = vld [vmem:[%s948] sm:$0xf]
          %v950 = vld [vmem:[%s948 + $0x4] sm:$0xf]
          %v951 = vld [vmem:[%s948 + $0x8] sm:$0xf]
          %v952 = vld [vmem:[%s948 + $0xc] sm:$0xf]
          %v957 = vunpack.c.l.b16 %v949
          %v958 = vunpack.c.l.b16 %v950
          %v959 = vunpack.c.l.b16 %v951
          %v960 = vunpack.c.l.b16 %v952
          %v961 = vpack.c.b16 %v958, %v957
          %v962 = vpack.c.b16 %v960, %v959
          %965 = vmatprep.subr.bf16.mxu0 0
          %966 = vmatpush1.bf16.msra.mxu0 0
          %967 = vmatprep.subr.bf16.mxu0 0
          %968 = vmatpush1.bf16.msra.mxu0 0
          %969 = vmatprep.subr.bf16.mxu0 0
          %970 = vmatpush1.bf16.msra.mxu0 0
          %971 = vmatprep.subr.bf16.mxu0 0
          %972 = vmatpush1.bf16.msra.mxu0 0
          %973 = vmatprep.subr.bf16.mxu0 0
          %974 = vmatpush1.bf16.msra.mxu0 0
          %975 = vmatprep.subr.bf16.mxu0 0
          %976 = vmatpush1.bf16.msra.mxu0 0
          %977 = vmatprep.subr.bf16.mxu0 0
          %978 = vmatpush1.bf16.msra.mxu0 %v962
          %979 = vmatprep.subr.bf16.mxu0 0
          %980 = vmatpush1.bf16.msra.mxu0 %v961
          %981 = vmatprep.subr.bf16.mxu0 0
          %982 = vmatpush2.bf16.msra.mxu0 0
          %983 = vmatprep.subr.bf16.mxu0 0
          %984 = vmatpush2.bf16.msra.mxu0 0
          %985 = vmatprep.subr.bf16.mxu0 0
          %986 = vmatpush2.bf16.msra.mxu0 0
          %987 = vmatprep.subr.bf16.mxu0 0
          %988 = vmatpush2.bf16.msra.mxu0 0
          %989 = vmatprep.subr.bf16.mxu0 0
          %990 = vmatpush2.bf16.msra.mxu0 0
          %991 = vmatprep.subr.bf16.mxu0 0
          %992 = vmatpush2.bf16.msra.mxu0 0
          %993 = vmatprep.subr.bf16.mxu0 0
          %994 = vmatpush2.bf16.msra.mxu0 0
          %995 = vmatprep.subr.bf16.mxu0 0
          %996 = vmatpush2.bf16.msra.mxu0 0
          %997 = vmatprep.mubr.bf16.mxu0 0
          %998 = vmatmul.mubr.bf16.gmra.mxu0 %v553
          %v999 = vpop.f32.mrf.mxu0
          %v1000 = vadd.f32 0.0, %v999
          %v1001 = vpop.f32.mrf.mxu0
          %v1002 = vpop.f32.mrf.mxu0
          %v1003 = vadd.f32 0.0, %v1002
          %v1004 = vpop.f32.mrf.mxu0
          %1005 = vdwg.mxu0
          %v1006 = vpack.c.bf16 %v1003, %v1000
          %v1008 = vunpack.c.l.b16 %v1006
          %v1009 = vunpack.c.h.b16 %v1006
          %v1010 = vpack.c.b16 %v1008, %v1008
          %v1011 = vpack.c.b16 %v1009, %v1009
          %s1014 = scalar_lea.vmem [#allocation2], 16
          %1015 = vst.msk [vmem:[%s1014] sm:$0xf] %vm604, %v1010
          %1016 = vst.msk [vmem:[%s1014 + $0x4] sm:$0xf] %vm604, %v1011
          %s1017 = scalar_lea.vmem %s4, 32
          %v1018 = vld [vmem:[%s1017] sm:$0xf]
          %v1019 = vld [vmem:[%s1017 + $0x4] sm:$0xf]
          %v1020 = vld [vmem:[%s1017 + $0x8] sm:$0xf]
          %v1021 = vld [vmem:[%s1017 + $0xc] sm:$0xf]
          %v1026 = vunpack.c.l.b16 %v1018
          %v1027 = vunpack.c.l.b16 %v1019
          %v1028 = vunpack.c.l.b16 %v1020
          %v1029 = vunpack.c.l.b16 %v1021
          %v1030 = vpack.c.b16 %v1027, %v1026
          %v1031 = vpack.c.b16 %v1029, %v1028
          %1034 = vmatprep.subr.bf16.mxu0 0
          %1035 = vmatpush1.bf16.msra.mxu0 0
          %1036 = vmatprep.subr.bf16.mxu0 0
          %1037 = vmatpush1.bf16.msra.mxu0 0
          %1038 = vmatprep.subr.bf16.mxu0 0
          %1039 = vmatpush1.bf16.msra.mxu0 0
          %1040 = vmatprep.subr.bf16.mxu0 0
          %1041 = vmatpush1.bf16.msra.mxu0 0
          %1042 = vmatprep.subr.bf16.mxu0 0
          %1043 = vmatpush1.bf16.msra.mxu0 0
          %1044 = vmatprep.subr.bf16.mxu0 0
          %1045 = vmatpush1.bf16.msra.mxu0 0
          %1046 = vmatprep.subr.bf16.mxu0 0
          %1047 = vmatpush1.bf16.msra.mxu0 %v1031
          %1048 = vmatprep.subr.bf16.mxu0 0
          %1049 = vmatpush1.bf16.msra.mxu0 %v1030
          %1050 = vmatprep.subr.bf16.mxu0 0
          %1051 = vmatpush2.bf16.msra.mxu0 0
          %1052 = vmatprep.subr.bf16.mxu0 0
          %1053 = vmatpush2.bf16.msra.mxu0 0
          %1054 = vmatprep.subr.bf16.mxu0 0
          %1055 = vmatpush2.bf16.msra.mxu0 0
          %1056 = vmatprep.subr.bf16.mxu0 0
          %1057 = vmatpush2.bf16.msra.mxu0 0
          %1058 = vmatprep.subr.bf16.mxu0 0
          %1059 = vmatpush2.bf16.msra.mxu0 0
          %1060 = vmatprep.subr.bf16.mxu0 0
          %1061 = vmatpush2.bf16.msra.mxu0 0
          %1062 = vmatprep.subr.bf16.mxu0 0
          %1063 = vmatpush2.bf16.msra.mxu0 0
          %1064 = vmatprep.subr.bf16.mxu0 0
          %1065 = vmatpush2.bf16.msra.mxu0 0
          %1066 = vmatprep.mubr.bf16.mxu0 0
          %1067 = vmatmul.mubr.bf16.gmra.mxu0 %v553
          %v1068 = vpop.f32.mrf.mxu0
          %v1069 = vadd.f32 0.0, %v1068
          %v1070 = vpop.f32.mrf.mxu0
          %v1071 = vpop.f32.mrf.mxu0
          %v1072 = vadd.f32 0.0, %v1071
          %v1073 = vpop.f32.mrf.mxu0
          %1074 = vdwg.mxu0
          %v1075 = vpack.c.bf16 %v1072, %v1069
          %v1077 = vunpack.c.l.b16 %v1075
          %v1078 = vunpack.c.h.b16 %v1075
          %v1079 = vpack.c.b16 %v1077, %v1077
          %v1080 = vpack.c.b16 %v1078, %v1078
          %s1083 = scalar_lea.vmem [#allocation3], 16
          %1084 = vst.msk [vmem:[%s1083] sm:$0xf] %vm604, %v1079
          %1085 = vst.msk [vmem:[%s1083 + $0x4] sm:$0xf] %vm604, %v1080
          %s1086 = scalar_lea.vmem %s5, 32
          %v1087 = vld [vmem:[%s1086] sm:$0xf]
          %v1088 = vld [vmem:[%s1086 + $0x4] sm:$0xf]
          %v1089 = vld [vmem:[%s1086 + $0x8] sm:$0xf]
          %v1090 = vld [vmem:[%s1086 + $0xc] sm:$0xf]
          %v1095 = vunpack.c.l.b16 %v1087
          %v1096 = vunpack.c.l.b16 %v1088
          %v1097 = vunpack.c.l.b16 %v1089
          %v1098 = vunpack.c.l.b16 %v1090
          %v1099 = vpack.c.b16 %v1096, %v1095
          %v1100 = vpack.c.b16 %v1098, %v1097
          %1103 = vmatprep.subr.bf16.mxu0 0
          %1104 = vmatpush1.bf16.msra.mxu0 0
          %1105 = vmatprep.subr.bf16.mxu0 0
          %1106 = vmatpush1.bf16.msra.mxu0 0
          %1107 = vmatprep.subr.bf16.mxu0 0
          %1108 = vmatpush1.bf16.msra.mxu0 0
          %1109 = vmatprep.subr.bf16.mxu0 0
          %1110 = vmatpush1.bf16.msra.mxu0 0
          %1111 = vmatprep.subr.bf16.mxu0 0
          %1112 = vmatpush1.bf16.msra.mxu0 0
          %1113 = vmatprep.subr.bf16.mxu0 0
          %1114 = vmatpush1.bf16.msra.mxu0 0
          %1115 = vmatprep.subr.bf16.mxu0 0
          %1116 = vmatpush1.bf16.msra.mxu0 %v1100
          %1117 = vmatprep.subr.bf16.mxu0 0
          %1118 = vmatpush1.bf16.msra.mxu0 %v1099
          %1119 = vmatprep.subr.bf16.mxu0 0
          %1120 = vmatpush2.bf16.msra.mxu0 0
          %1121 = vmatprep.subr.bf16.mxu0 0
          %1122 = vmatpush2.bf16.msra.mxu0 0
          %1123 = vmatprep.subr.bf16.mxu0 0
          %1124 = vmatpush2.bf16.msra.mxu0 0
          %1125 = vmatprep.subr.bf16.mxu0 0
          %1126 = vmatpush2.bf16.msra.mxu0 0
          %1127 = vmatprep.subr.bf16.mxu0 0
          %1128 = vmatpush2.bf16.msra.mxu0 0
          %1129 = vmatprep.subr.bf16.mxu0 0
          %1130 = vmatpush2.bf16.msra.mxu0 0
          %1131 = vmatprep.subr.bf16.mxu0 0
          %1132 = vmatpush2.bf16.msra.mxu0 0
          %1133 = vmatprep.subr.bf16.mxu0 0
          %1134 = vmatpush2.bf16.msra.mxu0 0
          %1135 = vmatprep.mubr.bf16.mxu0 0
          %1136 = vmatmul.mubr.bf16.gmra.mxu0 %v553
          %v1137 = vpop.f32.mrf.mxu0
          %v1138 = vadd.f32 0.0, %v1137
          %v1139 = vpop.f32.mrf.mxu0
          %v1140 = vpop.f32.mrf.mxu0
          %v1141 = vadd.f32 0.0, %v1140
          %v1142 = vpop.f32.mrf.mxu0
          %1143 = vdwg.mxu0
          %v1144 = vpack.c.bf16 %v1141, %v1138
          %v1146 = vunpack.c.l.b16 %v1144
          %v1147 = vunpack.c.h.b16 %v1144
          %v1148 = vpack.c.b16 %v1146, %v1146
          %v1149 = vpack.c.b16 %v1147, %v1147
          %s1152 = scalar_lea.vmem [#allocation4], 16
          %1153 = vst.msk [vmem:[%s1152] sm:$0xf] %vm604, %v1148
          %1154 = vst.msk [vmem:[%s1152 + $0x4] sm:$0xf] %vm604, %v1149
          %s1155 = scalar_lea.vmem %s3, 48
          %v1156 = vld [vmem:[%s1155] sm:$0xf]
          %v1157 = vld [vmem:[%s1155 + $0x4] sm:$0xf]
          %v1158 = vld [vmem:[%s1155 + $0x8] sm:$0xf]
          %v1159 = vld [vmem:[%s1155 + $0xc] sm:$0xf]
          %v1164 = vunpack.c.l.b16 %v1156
          %v1165 = vunpack.c.l.b16 %v1157
          %v1166 = vunpack.c.l.b16 %v1158
          %v1167 = vunpack.c.l.b16 %v1159
          %v1168 = vpack.c.b16 %v1165, %v1164
          %v1169 = vpack.c.b16 %v1167, %v1166
          %1172 = vmatprep.subr.bf16.mxu0 0
          %1173 = vmatpush1.bf16.msra.mxu0 0
          %1174 = vmatprep.subr.bf16.mxu0 0
          %1175 = vmatpush1.bf16.msra.mxu0 0
          %1176 = vmatprep.subr.bf16.mxu0 0
          %1177 = vmatpush1.bf16.msra.mxu0 0
          %1178 = vmatprep.subr.bf16.mxu0 0
          %1179 = vmatpush1.bf16.msra.mxu0 0
          %1180 = vmatprep.subr.bf16.mxu0 0
          %1181 = vmatpush1.bf16.msra.mxu0 0
          %1182 = vmatprep.subr.bf16.mxu0 0
          %1183 = vmatpush1.bf16.msra.mxu0 0
          %1184 = vmatprep.subr.bf16.mxu0 0
          %1185 = vmatpush1.bf16.msra.mxu0 %v1169
          %1186 = vmatprep.subr.bf16.mxu0 0
          %1187 = vmatpush1.bf16.msra.mxu0 %v1168
          %1188 = vmatprep.subr.bf16.mxu0 0
          %1189 = vmatpush2.bf16.msra.mxu0 0
          %1190 = vmatprep.subr.bf16.mxu0 0
          %1191 = vmatpush2.bf16.msra.mxu0 0
          %1192 = vmatprep.subr.bf16.mxu0 0
          %1193 = vmatpush2.bf16.msra.mxu0 0
          %1194 = vmatprep.subr.bf16.mxu0 0
          %1195 = vmatpush2.bf16.msra.mxu0 0
          %1196 = vmatprep.subr.bf16.mxu0 0
          %1197 = vmatpush2.bf16.msra.mxu0 0
          %1198 = vmatprep.subr.bf16.mxu0 0
          %1199 = vmatpush2.bf16.msra.mxu0 0
          %1200 = vmatprep.subr.bf16.mxu0 0
          %1201 = vmatpush2.bf16.msra.mxu0 0
          %1202 = vmatprep.subr.bf16.mxu0 0
          %1203 = vmatpush2.bf16.msra.mxu0 0
          %1204 = vmatprep.mubr.bf16.mxu0 0
          %1205 = vmatmul.mubr.bf16.gmra.mxu0 %v553
          %v1206 = vpop.f32.mrf.mxu0
          %v1207 = vadd.f32 0.0, %v1206
          %v1208 = vpop.f32.mrf.mxu0
          %v1209 = vpop.f32.mrf.mxu0
          %v1210 = vadd.f32 0.0, %v1209
          %v1211 = vpop.f32.mrf.mxu0
          %1212 = vdwg.mxu0
          %v1213 = vpack.c.bf16 %v1210, %v1207
          %v1215 = vunpack.c.l.b16 %v1213
          %v1216 = vunpack.c.h.b16 %v1213
          %v1217 = vpack.c.b16 %v1215, %v1215
          %v1218 = vpack.c.b16 %v1216, %v1216
          %s1221 = scalar_lea.vmem [#allocation2], 24
          %1222 = vst.msk [vmem:[%s1221] sm:$0xf] %vm604, %v1217
          %1223 = vst.msk [vmem:[%s1221 + $0x4] sm:$0xf] %vm604, %v1218
          %s1224 = scalar_lea.vmem %s4, 48
          %v1225 = vld [vmem:[%s1224] sm:$0xf]
          %v1226 = vld [vmem:[%s1224 + $0x4] sm:$0xf]
          %v1227 = vld [vmem:[%s1224 + $0x8] sm:$0xf]
          %v1228 = vld [vmem:[%s1224 + $0xc] sm:$0xf]
          %v1233 = vunpack.c.l.b16 %v1225
          %v1234 = vunpack.c.l.b16 %v1226
          %v1235 = vunpack.c.l.b16 %v1227
          %v1236 = vunpack.c.l.b16 %v1228
          %v1237 = vpack.c.b16 %v1234, %v1233
          %v1238 = vpack.c.b16 %v1236, %v1235
          %1241 = vmatprep.subr.bf16.mxu0 0
          %1242 = vmatpush1.bf16.msra.mxu0 0
          %1243 = vmatprep.subr.bf16.mxu0 0
          %1244 = vmatpush1.bf16.msra.mxu0 0
          %1245 = vmatprep.subr.bf16.mxu0 0
          %1246 = vmatpush1.bf16.msra.mxu0 0
          %1247 = vmatprep.subr.bf16.mxu0 0
          %1248 = vmatpush1.bf16.msra.mxu0 0
          %1249 = vmatprep.subr.bf16.mxu0 0
          %1250 = vmatpush1.bf16.msra.mxu0 0
          %1251 = vmatprep.subr.bf16.mxu0 0
          %1252 = vmatpush1.bf16.msra.mxu0 0
          %1253 = vmatprep.subr.bf16.mxu0 0
          %1254 = vmatpush1.bf16.msra.mxu0 %v1238
          %1255 = vmatprep.subr.bf16.mxu0 0
          %1256 = vmatpush1.bf16.msra.mxu0 %v1237
          %1257 = vmatprep.subr.bf16.mxu0 0
          %1258 = vmatpush2.bf16.msra.mxu0 0
          %1259 = vmatprep.subr.bf16.mxu0 0
          %1260 = vmatpush2.bf16.msra.mxu0 0
          %1261 = vmatprep.subr.bf16.mxu0 0
          %1262 = vmatpush2.bf16.msra.mxu0 0
          %1263 = vmatprep.subr.bf16.mxu0 0
          %1264 = vmatpush2.bf16.msra.mxu0 0
          %1265 = vmatprep.subr.bf16.mxu0 0
          %1266 = vmatpush2.bf16.msra.mxu0 0
          %1267 = vmatprep.subr.bf16.mxu0 0
          %1268 = vmatpush2.bf16.msra.mxu0 0
          %1269 = vmatprep.subr.bf16.mxu0 0
          %1270 = vmatpush2.bf16.msra.mxu0 0
          %1271 = vmatprep.subr.bf16.mxu0 0
          %1272 = vmatpush2.bf16.msra.mxu0 0
          %1273 = vmatprep.mubr.bf16.mxu0 0
          %1274 = vmatmul.mubr.bf16.gmra.mxu0 %v553
          %v1275 = vpop.f32.mrf.mxu0
          %v1276 = vadd.f32 0.0, %v1275
          %v1277 = vpop.f32.mrf.mxu0
          %v1278 = vpop.f32.mrf.mxu0
          %v1279 = vadd.f32 0.0, %v1278
          %v1280 = vpop.f32.mrf.mxu0
          %1281 = vdwg.mxu0
          %v1282 = vpack.c.bf16 %v1279, %v1276
          %v1284 = vunpack.c.l.b16 %v1282
          %v1285 = vunpack.c.h.b16 %v1282
          %v1286 = vpack.c.b16 %v1284, %v1284
          %v1287 = vpack.c.b16 %v1285, %v1285
          %s1290 = scalar_lea.vmem [#allocation3], 24
          %1291 = vst.msk [vmem:[%s1290] sm:$0xf] %vm604, %v1286
          %1292 = vst.msk [vmem:[%s1290 + $0x4] sm:$0xf] %vm604, %v1287
          %s1293 = scalar_lea.vmem %s5, 48
          %v1294 = vld [vmem:[%s1293] sm:$0xf]
          %v1295 = vld [vmem:[%s1293 + $0x4] sm:$0xf]
          %v1296 = vld [vmem:[%s1293 + $0x8] sm:$0xf]
          %v1297 = vld [vmem:[%s1293 + $0xc] sm:$0xf]
          %v1302 = vunpack.c.l.b16 %v1294
          %v1303 = vunpack.c.l.b16 %v1295
          %v1304 = vunpack.c.l.b16 %v1296
          %v1305 = vunpack.c.l.b16 %v1297
          %v1306 = vpack.c.b16 %v1303, %v1302
          %v1307 = vpack.c.b16 %v1305, %v1304
          %1310 = vmatprep.subr.bf16.mxu0 0
          %1311 = vmatpush1.bf16.msra.mxu0 0
          %1312 = vmatprep.subr.bf16.mxu0 0
          %1313 = vmatpush1.bf16.msra.mxu0 0
          %1314 = vmatprep.subr.bf16.mxu0 0
          %1315 = vmatpush1.bf16.msra.mxu0 0
          %1316 = vmatprep.subr.bf16.mxu0 0
          %1317 = vmatpush1.bf16.msra.mxu0 0
          %1318 = vmatprep.subr.bf16.mxu0 0
          %1319 = vmatpush1.bf16.msra.mxu0 0
          %1320 = vmatprep.subr.bf16.mxu0 0
          %1321 = vmatpush1.bf16.msra.mxu0 0
          %1322 = vmatprep.subr.bf16.mxu0 0
          %1323 = vmatpush1.bf16.msra.mxu0 %v1307
          %1324 = vmatprep.subr.bf16.mxu0 0
          %1325 = vmatpush1.bf16.msra.mxu0 %v1306
          %1326 = vmatprep.subr.bf16.mxu0 0
          %1327 = vmatpush2.bf16.msra.mxu0 0
          %1328 = vmatprep.subr.bf16.mxu0 0
          %1329 = vmatpush2.bf16.msra.mxu0 0
          %1330 = vmatprep.subr.bf16.mxu0 0
          %1331 = vmatpush2.bf16.msra.mxu0 0
          %1332 = vmatprep.subr.bf16.mxu0 0
          %1333 = vmatpush2.bf16.msra.mxu0 0
          %1334 = vmatprep.subr.bf16.mxu0 0
          %1335 = vmatpush2.bf16.msra.mxu0 0
          %1336 = vmatprep.subr.bf16.mxu0 0
          %1337 = vmatpush2.bf16.msra.mxu0 0
          %1338 = vmatprep.subr.bf16.mxu0 0
          %1339 = vmatpush2.bf16.msra.mxu0 0
          %1340 = vmatprep.subr.bf16.mxu0 0
          %1341 = vmatpush2.bf16.msra.mxu0 0
          %1342 = vmatprep.mubr.bf16.mxu0 0
          %1343 = vmatmul.mubr.bf16.gmra.mxu0 %v553
          %v1344 = vpop.f32.mrf.mxu0
          %v1345 = vadd.f32 0.0, %v1344
          %v1346 = vpop.f32.mrf.mxu0
          %v1347 = vpop.f32.mrf.mxu0
          %v1348 = vadd.f32 0.0, %v1347
          %v1349 = vpop.f32.mrf.mxu0
          %1350 = vdwg.mxu0
          %v1351 = vpack.c.bf16 %v1348, %v1345
          %v1353 = vunpack.c.l.b16 %v1351
          %v1354 = vunpack.c.h.b16 %v1351
          %v1355 = vpack.c.b16 %v1353, %v1353
          %v1356 = vpack.c.b16 %v1354, %v1354
          %s1359 = scalar_lea.vmem [#allocation4], 24
          %1360 = vst.msk [vmem:[%s1359] sm:$0xf] %vm604, %v1355
          %1361 = vst.msk [vmem:[%s1359 + $0x4] sm:$0xf] %vm604, %v1356
          %s1362 = scalar_lea.vmem %s3, 64
          %v1363 = vld [vmem:[%s1362] sm:$0xf]
          %v1364 = vld [vmem:[%s1362 + $0x4] sm:$0xf]
          %v1365 = vld [vmem:[%s1362 + $0x8] sm:$0xf]
          %v1366 = vld [vmem:[%s1362 + $0xc] sm:$0xf]
          %v1371 = vunpack.c.l.b16 %v1363
          %v1372 = vunpack.c.l.b16 %v1364
          %v1373 = vunpack.c.l.b16 %v1365
          %v1374 = vunpack.c.l.b16 %v1366
          %v1375 = vpack.c.b16 %v1372, %v1371
          %v1376 = vpack.c.b16 %v1374, %v1373
          %1379 = vmatprep.subr.bf16.mxu0 0
          %1380 = vmatpush1.bf16.msra.mxu0 0
          %1381 = vmatprep.subr.bf16.mxu0 0
          %1382 = vmatpush1.bf16.msra.mxu0 0
          %1383 = vmatprep.subr.bf16.mxu0 0
          %1384 = vmatpush1.bf16.msra.mxu0 0
          %1385 = vmatprep.subr.bf16.mxu0 0
          %1386 = vmatpush1.bf16.msra.mxu0 0
          %1387 = vmatprep.subr.bf16.mxu0 0
          %1388 = vmatpush1.bf16.msra.mxu0 0
          %1389 = vmatprep.subr.bf16.mxu0 0
          %1390 = vmatpush1.bf16.msra.mxu0 0
          %1391 = vmatprep.subr.bf16.mxu0 0
          %1392 = vmatpush1.bf16.msra.mxu0 %v1376
          %1393 = vmatprep.subr.bf16.mxu0 0
          %1394 = vmatpush1.bf16.msra.mxu0 %v1375
          %1395 = vmatprep.subr.bf16.mxu0 0
          %1396 = vmatpush2.bf16.msra.mxu0 0
          %1397 = vmatprep.subr.bf16.mxu0 0
          %1398 = vmatpush2.bf16.msra.mxu0 0
          %1399 = vmatprep.subr.bf16.mxu0 0
          %1400 = vmatpush2.bf16.msra.mxu0 0
          %1401 = vmatprep.subr.bf16.mxu0 0
          %1402 = vmatpush2.bf16.msra.mxu0 0
          %1403 = vmatprep.subr.bf16.mxu0 0
          %1404 = vmatpush2.bf16.msra.mxu0 0
          %1405 = vmatprep.subr.bf16.mxu0 0
          %1406 = vmatpush2.bf16.msra.mxu0 0
          %1407 = vmatprep.subr.bf16.mxu0 0
          %1408 = vmatpush2.bf16.msra.mxu0 0
          %1409 = vmatprep.subr.bf16.mxu0 0
          %1410 = vmatpush2.bf16.msra.mxu0 0
          %1411 = vmatprep.mubr.bf16.mxu0 0
          %1412 = vmatmul.mubr.bf16.gmra.mxu0 %v553
          %v1413 = vpop.f32.mrf.mxu0
          %v1414 = vadd.f32 0.0, %v1413
          %v1415 = vpop.f32.mrf.mxu0
          %v1416 = vpop.f32.mrf.mxu0
          %v1417 = vadd.f32 0.0, %v1416
          %v1418 = vpop.f32.mrf.mxu0
          %1419 = vdwg.mxu0
          %v1420 = vpack.c.bf16 %v1417, %v1414
          %v1422 = vunpack.c.l.b16 %v1420
          %v1423 = vunpack.c.h.b16 %v1420
          %v1424 = vpack.c.b16 %v1422, %v1422
          %v1425 = vpack.c.b16 %v1423, %v1423
          %s1428 = scalar_lea.vmem [#allocation2], 32
          %1429 = vst.msk [vmem:[%s1428] sm:$0xf] %vm604, %v1424
          %1430 = vst.msk [vmem:[%s1428 + $0x4] sm:$0xf] %vm604, %v1425
          %s1431 = scalar_lea.vmem %s4, 64
          %v1432 = vld [vmem:[%s1431] sm:$0xf]
          %v1433 = vld [vmem:[%s1431 + $0x4] sm:$0xf]
          %v1434 = vld [vmem:[%s1431 + $0x8] sm:$0xf]
          %v1435 = vld [vmem:[%s1431 + $0xc] sm:$0xf]
          %v1440 = vunpack.c.l.b16 %v1432
          %v1441 = vunpack.c.l.b16 %v1433
          %v1442 = vunpack.c.l.b16 %v1434
          %v1443 = vunpack.c.l.b16 %v1435
          %v1444 = vpack.c.b16 %v1441, %v1440
          %v1445 = vpack.c.b16 %v1443, %v1442
          %1448 = vmatprep.subr.bf16.mxu0 0
          %1449 = vmatpush1.bf16.msra.mxu0 0
          %1450 = vmatprep.subr.bf16.mxu0 0
          %1451 = vmatpush1.bf16.msra.mxu0 0
          %1452 = vmatprep.subr.bf16.mxu0 0
          %1453 = vmatpush1.bf16.msra.mxu0 0
          %1454 = vmatprep.subr.bf16.mxu0 0
          %1455 = vmatpush1.bf16.msra.mxu0 0
          %1456 = vmatprep.subr.bf16.mxu0 0
          %1457 = vmatpush1.bf16.msra.mxu0 0
          %1458 = vmatprep.subr.bf16.mxu0 0
          %1459 = vmatpush1.bf16.msra.mxu0 0
          %1460 = vmatprep.subr.bf16.mxu0 0
          %1461 = vmatpush1.bf16.msra.mxu0 %v1445
          %1462 = vmatprep.subr.bf16.mxu0 0
          %1463 = vmatpush1.bf16.msra.mxu0 %v1444
          %1464 = vmatprep.subr.bf16.mxu0 0
          %1465 = vmatpush2.bf16.msra.mxu0 0
          %1466 = vmatprep.subr.bf16.mxu0 0
          %1467 = vmatpush2.bf16.msra.mxu0 0
          %1468 = vmatprep.subr.bf16.mxu0 0
          %1469 = vmatpush2.bf16.msra.mxu0 0
          %1470 = vmatprep.subr.bf16.mxu0 0
          %1471 = vmatpush2.bf16.msra.mxu0 0
          %1472 = vmatprep.subr.bf16.mxu0 0
          %1473 = vmatpush2.bf16.msra.mxu0 0
          %1474 = vmatprep.subr.bf16.mxu0 0
          %1475 = vmatpush2.bf16.msra.mxu0 0
          %1476 = vmatprep.subr.bf16.mxu0 0
          %1477 = vmatpush2.bf16.msra.mxu0 0
          %1478 = vmatprep.subr.bf16.mxu0 0
          %1479 = vmatpush2.bf16.msra.mxu0 0
          %1480 = vmatprep.mubr.bf16.mxu0 0
          %1481 = vmatmul.mubr.bf16.gmra.mxu0 %v553
          %v1482 = vpop.f32.mrf.mxu0
          %v1483 = vadd.f32 0.0, %v1482
          %v1484 = vpop.f32.mrf.mxu0
          %v1485 = vpop.f32.mrf.mxu0
          %v1486 = vadd.f32 0.0, %v1485
          %v1487 = vpop.f32.mrf.mxu0
          %1488 = vdwg.mxu0
          %v1489 = vpack.c.bf16 %v1486, %v1483
          %v1491 = vunpack.c.l.b16 %v1489
          %v1492 = vunpack.c.h.b16 %v1489
          %v1493 = vpack.c.b16 %v1491, %v1491
          %v1494 = vpack.c.b16 %v1492, %v1492
          %s1497 = scalar_lea.vmem [#allocation3], 32
          %1498 = vst.msk [vmem:[%s1497] sm:$0xf] %vm604, %v1493
          %1499 = vst.msk [vmem:[%s1497 + $0x4] sm:$0xf] %vm604, %v1494
          %s1500 = scalar_lea.vmem %s5, 64
          %v1501 = vld [vmem:[%s1500] sm:$0xf]
          %v1502 = vld [vmem:[%s1500 + $0x4] sm:$0xf]
          %v1503 = vld [vmem:[%s1500 + $0x8] sm:$0xf]
          %v1504 = vld [vmem:[%s1500 + $0xc] sm:$0xf]
          %v1509 = vunpack.c.l.b16 %v1501
          %v1510 = vunpack.c.l.b16 %v1502
          %v1511 = vunpack.c.l.b16 %v1503
          %v1512 = vunpack.c.l.b16 %v1504
          %v1513 = vpack.c.b16 %v1510, %v1509
          %v1514 = vpack.c.b16 %v1512, %v1511
          %1517 = vmatprep.subr.bf16.mxu0 0
          %1518 = vmatpush1.bf16.msra.mxu0 0
          %1519 = vmatprep.subr.bf16.mxu0 0
          %1520 = vmatpush1.bf16.msra.mxu0 0
          %1521 = vmatprep.subr.bf16.mxu0 0
          %1522 = vmatpush1.bf16.msra.mxu0 0
          %1523 = vmatprep.subr.bf16.mxu0 0
          %1524 = vmatpush1.bf16.msra.mxu0 0
          %1525 = vmatprep.subr.bf16.mxu0 0
          %1526 = vmatpush1.bf16.msra.mxu0 0
          %1527 = vmatprep.subr.bf16.mxu0 0
          %1528 = vmatpush1.bf16.msra.mxu0 0
          %1529 = vmatprep.subr.bf16.mxu0 0
          %1530 = vmatpush1.bf16.msra.mxu0 %v1514
          %1531 = vmatprep.subr.bf16.mxu0 0
          %1532 = vmatpush1.bf16.msra.mxu0 %v1513
          %1533 = vmatprep.subr.bf16.mxu0 0
          %1534 = vmatpush2.bf16.msra.mxu0 0
          %1535 = vmatprep.subr.bf16.mxu0 0
          %1536 = vmatpush2.bf16.msra.mxu0 0
          %1537 = vmatprep.subr.bf16.mxu0 0
          %1538 = vmatpush2.bf16.msra.mxu0 0
          %1539 = vmatprep.subr.bf16.mxu0 0
          %1540 = vmatpush2.bf16.msra.mxu0 0
          %1541 = vmatprep.subr.bf16.mxu0 0
          %1542 = vmatpush2.bf16.msra.mxu0 0
          %1543 = vmatprep.subr.bf16.mxu0 0
          %1544 = vmatpush2.bf16.msra.mxu0 0
          %1545 = vmatprep.subr.bf16.mxu0 0
          %1546 = vmatpush2.bf16.msra.mxu0 0
          %1547 = vmatprep.subr.bf16.mxu0 0
          %1548 = vmatpush2.bf16.msra.mxu0 0
          %1549 = vmatprep.mubr.bf16.mxu0 0
          %1550 = vmatmul.mubr.bf16.gmra.mxu0 %v553
          %v1551 = vpop.f32.mrf.mxu0
          %v1552 = vadd.f32 0.0, %v1551
          %v1553 = vpop.f32.mrf.mxu0
          %v1554 = vpop.f32.mrf.mxu0
          %v1555 = vadd.f32 0.0, %v1554
          %v1556 = vpop.f32.mrf.mxu0
          %1557 = vdwg.mxu0
          %v1558 = vpack.c.bf16 %v1555, %v1552
          %v1560 = vunpack.c.l.b16 %v1558
          %v1561 = vunpack.c.h.b16 %v1558
          %v1562 = vpack.c.b16 %v1560, %v1560
          %v1563 = vpack.c.b16 %v1561, %v1561
          %s1566 = scalar_lea.vmem [#allocation4], 32
          %1567 = vst.msk [vmem:[%s1566] sm:$0xf] %vm604, %v1562
          %1568 = vst.msk [vmem:[%s1566 + $0x4] sm:$0xf] %vm604, %v1563
          %s1569 = scalar_lea.vmem %s3, 80
          %v1570 = vld [vmem:[%s1569] sm:$0xf]
          %v1571 = vld [vmem:[%s1569 + $0x4] sm:$0xf]
          %v1572 = vld [vmem:[%s1569 + $0x8] sm:$0xf]
          %v1573 = vld [vmem:[%s1569 + $0xc] sm:$0xf]
          %v1578 = vunpack.c.l.b16 %v1570
          %v1579 = vunpack.c.l.b16 %v1571
          %v1580 = vunpack.c.l.b16 %v1572
          %v1581 = vunpack.c.l.b16 %v1573
          %v1582 = vpack.c.b16 %v1579, %v1578
          %v1583 = vpack.c.b16 %v1581, %v1580
          %1586 = vmatprep.subr.bf16.mxu0 0
          %1587 = vmatpush1.bf16.msra.mxu0 0
          %1588 = vmatprep.subr.bf16.mxu0 0
          %1589 = vmatpush1.bf16.msra.mxu0 0
          %1590 = vmatprep.subr.bf16.mxu0 0
          %1591 = vmatpush1.bf16.msra.mxu0 0
          %1592 = vmatprep.subr.bf16.mxu0 0
          %1593 = vmatpush1.bf16.msra.mxu0 0
          %1594 = vmatprep.subr.bf16.mxu0 0
          %1595 = vmatpush1.bf16.msra.mxu0 0
          %1596 = vmatprep.subr.bf16.mxu0 0
          %1597 = vmatpush1.bf16.msra.mxu0 0
          %1598 = vmatprep.subr.bf16.mxu0 0
          %1599 = vmatpush1.bf16.msra.mxu0 %v1583
          %1600 = vmatprep.subr.bf16.mxu0 0
          %1601 = vmatpush1.bf16.msra.mxu0 %v1582
          %1602 = vmatprep.subr.bf16.mxu0 0
          %1603 = vmatpush2.bf16.msra.mxu0 0
          %1604 = vmatprep.subr.bf16.mxu0 0
          %1605 = vmatpush2.bf16.msra.mxu0 0
          %1606 = vmatprep.subr.bf16.mxu0 0
          %1607 = vmatpush2.bf16.msra.mxu0 0
          %1608 = vmatprep.subr.bf16.mxu0 0
          %1609 = vmatpush2.bf16.msra.mxu0 0
          %1610 = vmatprep.subr.bf16.mxu0 0
          %1611 = vmatpush2.bf16.msra.mxu0 0
          %1612 = vmatprep.subr.bf16.mxu0 0
          %1613 = vmatpush2.bf16.msra.mxu0 0
          %1614 = vmatprep.subr.bf16.mxu0 0
          %1615 = vmatpush2.bf16.msra.mxu0 0
          %1616 = vmatprep.subr.bf16.mxu0 0
          %1617 = vmatpush2.bf16.msra.mxu0 0
          %1618 = vmatprep.mubr.bf16.mxu0 0
          %1619 = vmatmul.mubr.bf16.gmra.mxu0 %v553
          %v1620 = vpop.f32.mrf.mxu0
          %v1621 = vadd.f32 0.0, %v1620
          %v1622 = vpop.f32.mrf.mxu0
          %v1623 = vpop.f32.mrf.mxu0
          %v1624 = vadd.f32 0.0, %v1623
          %v1625 = vpop.f32.mrf.mxu0
          %1626 = vdwg.mxu0
          %v1627 = vpack.c.bf16 %v1624, %v1621
          %v1629 = vunpack.c.l.b16 %v1627
          %v1630 = vunpack.c.h.b16 %v1627
          %v1631 = vpack.c.b16 %v1629, %v1629
          %v1632 = vpack.c.b16 %v1630, %v1630
          %s1635 = scalar_lea.vmem [#allocation2], 40
          %1636 = vst.msk [vmem:[%s1635] sm:$0xf] %vm604, %v1631
          %1637 = vst.msk [vmem:[%s1635 + $0x4] sm:$0xf] %vm604, %v1632
          %s1638 = scalar_lea.vmem %s4, 80
          %v1639 = vld [vmem:[%s1638] sm:$0xf]
          %v1640 = vld [vmem:[%s1638 + $0x4] sm:$0xf]
          %v1641 = vld [vmem:[%s1638 + $0x8] sm:$0xf]
          %v1642 = vld [vmem:[%s1638 + $0xc] sm:$0xf]
          %v1647 = vunpack.c.l.b16 %v1639
          %v1648 = vunpack.c.l.b16 %v1640
          %v1649 = vunpack.c.l.b16 %v1641
          %v1650 = vunpack.c.l.b16 %v1642
          %v1651 = vpack.c.b16 %v1648, %v1647
          %v1652 = vpack.c.b16 %v1650, %v1649
          %1655 = vmatprep.subr.bf16.mxu0 0
          %1656 = vmatpush1.bf16.msra.mxu0 0
          %1657 = vmatprep.subr.bf16.mxu0 0
          %1658 = vmatpush1.bf16.msra.mxu0 0
          %1659 = vmatprep.subr.bf16.mxu0 0
          %1660 = vmatpush1.bf16.msra.mxu0 0
          %1661 = vmatprep.subr.bf16.mxu0 0
          %1662 = vmatpush1.bf16.msra.mxu0 0
          %1663 = vmatprep.subr.bf16.mxu0 0
          %1664 = vmatpush1.bf16.msra.mxu0 0
          %1665 = vmatprep.subr.bf16.mxu0 0
          %1666 = vmatpush1.bf16.msra.mxu0 0
          %1667 = vmatprep.subr.bf16.mxu0 0
          %1668 = vmatpush1.bf16.msra.mxu0 %v1652
          %1669 = vmatprep.subr.bf16.mxu0 0
          %1670 = vmatpush1.bf16.msra.mxu0 %v1651
          %1671 = vmatprep.subr.bf16.mxu0 0
          %1672 = vmatpush2.bf16.msra.mxu0 0
          %1673 = vmatprep.subr.bf16.mxu0 0
          %1674 = vmatpush2.bf16.msra.mxu0 0
          %1675 = vmatprep.subr.bf16.mxu0 0
          %1676 = vmatpush2.bf16.msra.mxu0 0
          %1677 = vmatprep.subr.bf16.mxu0 0
          %1678 = vmatpush2.bf16.msra.mxu0 0
          %1679 = vmatprep.subr.bf16.mxu0 0
          %1680 = vmatpush2.bf16.msra.mxu0 0
          %1681 = vmatprep.subr.bf16.mxu0 0
          %1682 = vmatpush2.bf16.msra.mxu0 0
          %1683 = vmatprep.subr.bf16.mxu0 0
          %1684 = vmatpush2.bf16.msra.mxu0 0
          %1685 = vmatprep.subr.bf16.mxu0 0
          %1686 = vmatpush2.bf16.msra.mxu0 0
          %1687 = vmatprep.mubr.bf16.mxu0 0
          %1688 = vmatmul.mubr.bf16.gmra.mxu0 %v553
          %v1689 = vpop.f32.mrf.mxu0
          %v1690 = vadd.f32 0.0, %v1689
          %v1691 = vpop.f32.mrf.mxu0
          %v1692 = vpop.f32.mrf.mxu0
          %v1693 = vadd.f32 0.0, %v1692
          %v1694 = vpop.f32.mrf.mxu0
          %1695 = vdwg.mxu0
          %v1696 = vpack.c.bf16 %v1693, %v1690
          %v1698 = vunpack.c.l.b16 %v1696
          %v1699 = vunpack.c.h.b16 %v1696
          %v1700 = vpack.c.b16 %v1698, %v1698
          %v1701 = vpack.c.b16 %v1699, %v1699
          %s1704 = scalar_lea.vmem [#allocation3], 40
          %1705 = vst.msk [vmem:[%s1704] sm:$0xf] %vm604, %v1700
          %1706 = vst.msk [vmem:[%s1704 + $0x4] sm:$0xf] %vm604, %v1701
          %s1707 = scalar_lea.vmem %s5, 80
          %v1708 = vld [vmem:[%s1707] sm:$0xf]
          %v1709 = vld [vmem:[%s1707 + $0x4] sm:$0xf]
          %v1710 = vld [vmem:[%s1707 + $0x8] sm:$0xf]
          %v1711 = vld [vmem:[%s1707 + $0xc] sm:$0xf]
          %v1716 = vunpack.c.l.b16 %v1708
          %v1717 = vunpack.c.l.b16 %v1709
          %v1718 = vunpack.c.l.b16 %v1710
          %v1719 = vunpack.c.l.b16 %v1711
          %v1720 = vpack.c.b16 %v1717, %v1716
          %v1721 = vpack.c.b16 %v1719, %v1718
          %1724 = vmatprep.subr.bf16.mxu0 0
          %1725 = vmatpush1.bf16.msra.mxu0 0
          %1726 = vmatprep.subr.bf16.mxu0 0
          %1727 = vmatpush1.bf16.msra.mxu0 0
          %1728 = vmatprep.subr.bf16.mxu0 0
          %1729 = vmatpush1.bf16.msra.mxu0 0
          %1730 = vmatprep.subr.bf16.mxu0 0
          %1731 = vmatpush1.bf16.msra.mxu0 0
          %1732 = vmatprep.subr.bf16.mxu0 0
          %1733 = vmatpush1.bf16.msra.mxu0 0
          %1734 = vmatprep.subr.bf16.mxu0 0
          %1735 = vmatpush1.bf16.msra.mxu0 0
          %1736 = vmatprep.subr.bf16.mxu0 0
          %1737 = vmatpush1.bf16.msra.mxu0 %v1721
          %1738 = vmatprep.subr.bf16.mxu0 0
          %1739 = vmatpush1.bf16.msra.mxu0 %v1720
          %1740 = vmatprep.subr.bf16.mxu0 0
          %1741 = vmatpush2.bf16.msra.mxu0 0
          %1742 = vmatprep.subr.bf16.mxu0 0
          %1743 = vmatpush2.bf16.msra.mxu0 0
          %1744 = vmatprep.subr.bf16.mxu0 0
          %1745 = vmatpush2.bf16.msra.mxu0 0
          %1746 = vmatprep.subr.bf16.mxu0 0
          %1747 = vmatpush2.bf16.msra.mxu0 0
          %1748 = vmatprep.subr.bf16.mxu0 0
          %1749 = vmatpush2.bf16.msra.mxu0 0
          %1750 = vmatprep.subr.bf16.mxu0 0
          %1751 = vmatpush2.bf16.msra.mxu0 0
          %1752 = vmatprep.subr.bf16.mxu0 0
          %1753 = vmatpush2.bf16.msra.mxu0 0
          %1754 = vmatprep.subr.bf16.mxu0 0
          %1755 = vmatpush2.bf16.msra.mxu0 0
          %1756 = vmatprep.mubr.bf16.mxu0 0
          %1757 = vmatmul.mubr.bf16.gmra.mxu0 %v553
          %v1758 = vpop.f32.mrf.mxu0
          %v1759 = vadd.f32 0.0, %v1758
          %v1760 = vpop.f32.mrf.mxu0
          %v1761 = vpop.f32.mrf.mxu0
          %v1762 = vadd.f32 0.0, %v1761
          %v1763 = vpop.f32.mrf.mxu0
          %1764 = vdwg.mxu0
          %v1765 = vpack.c.bf16 %v1762, %v1759
          %v1767 = vunpack.c.l.b16 %v1765
          %v1768 = vunpack.c.h.b16 %v1765
          %v1769 = vpack.c.b16 %v1767, %v1767
          %v1770 = vpack.c.b16 %v1768, %v1768
          %s1773 = scalar_lea.vmem [#allocation4], 40
          %1774 = vst.msk [vmem:[%s1773] sm:$0xf] %vm604, %v1769
          %1775 = vst.msk [vmem:[%s1773 + $0x4] sm:$0xf] %vm604, %v1770
          %s1776 = scalar_lea.vmem %s3, 96
          %v1777 = vld [vmem:[%s1776] sm:$0xf]
          %v1778 = vld [vmem:[%s1776 + $0x4] sm:$0xf]
          %v1779 = vld [vmem:[%s1776 + $0x8] sm:$0xf]
          %v1780 = vld [vmem:[%s1776 + $0xc] sm:$0xf]
          %v1785 = vunpack.c.l.b16 %v1777
          %v1786 = vunpack.c.l.b16 %v1778
          %v1787 = vunpack.c.l.b16 %v1779
          %v1788 = vunpack.c.l.b16 %v1780
          %v1789 = vpack.c.b16 %v1786, %v1785
          %v1790 = vpack.c.b16 %v1788, %v1787
          %1793 = vmatprep.subr.bf16.mxu0 0
          %1794 = vmatpush1.bf16.msra.mxu0 0
          %1795 = vmatprep.subr.bf16.mxu0 0
          %1796 = vmatpush1.bf16.msra.mxu0 0
          %1797 = vmatprep.subr.bf16.mxu0 0
          %1798 = vmatpush1.bf16.msra.mxu0 0
          %1799 = vmatprep.subr.bf16.mxu0 0
          %1800 = vmatpush1.bf16.msra.mxu0 0
          %1801 = vmatprep.subr.bf16.mxu0 0
          %1802 = vmatpush1.bf16.msra.mxu0 0
          %1803 = vmatprep.subr.bf16.mxu0 0
          %1804 = vmatpush1.bf16.msra.mxu0 0
          %1805 = vmatprep.subr.bf16.mxu0 0
          %1806 = vmatpush1.bf16.msra.mxu0 %v1790
          %1807 = vmatprep.subr.bf16.mxu0 0
          %1808 = vmatpush1.bf16.msra.mxu0 %v1789
          %1809 = vmatprep.subr.bf16.mxu0 0
          %1810 = vmatpush2.bf16.msra.mxu0 0
          %1811 = vmatprep.subr.bf16.mxu0 0
          %1812 = vmatpush2.bf16.msra.mxu0 0
          %1813 = vmatprep.subr.bf16.mxu0 0
          %1814 = vmatpush2.bf16.msra.mxu0 0
          %1815 = vmatprep.subr.bf16.mxu0 0
          %1816 = vmatpush2.bf16.msra.mxu0 0
          %1817 = vmatprep.subr.bf16.mxu0 0
          %1818 = vmatpush2.bf16.msra.mxu0 0
          %1819 = vmatprep.subr.bf16.mxu0 0
          %1820 = vmatpush2.bf16.msra.mxu0 0
          %1821 = vmatprep.subr.bf16.mxu0 0
          %1822 = vmatpush2.bf16.msra.mxu0 0
          %1823 = vmatprep.subr.bf16.mxu0 0
          %1824 = vmatpush2.bf16.msra.mxu0 0
          %1825 = vmatprep.mubr.bf16.mxu0 0
          %1826 = vmatmul.mubr.bf16.gmra.mxu0 %v553
          %v1827 = vpop.f32.mrf.mxu0
          %v1828 = vadd.f32 0.0, %v1827
          %v1829 = vpop.f32.mrf.mxu0
          %v1830 = vpop.f32.mrf.mxu0
          %v1831 = vadd.f32 0.0, %v1830
          %v1832 = vpop.f32.mrf.mxu0
          %1833 = vdwg.mxu0
          %v1834 = vpack.c.bf16 %v1831, %v1828
          %v1836 = vunpack.c.l.b16 %v1834
          %v1837 = vunpack.c.h.b16 %v1834
          %v1838 = vpack.c.b16 %v1836, %v1836
          %v1839 = vpack.c.b16 %v1837, %v1837
          %s1842 = scalar_lea.vmem [#allocation2], 48
          %1843 = vst.msk [vmem:[%s1842] sm:$0xf] %vm604, %v1838
          %1844 = vst.msk [vmem:[%s1842 + $0x4] sm:$0xf] %vm604, %v1839
          %s1845 = scalar_lea.vmem %s4, 96
          %v1846 = vld [vmem:[%s1845] sm:$0xf]
          %v1847 = vld [vmem:[%s1845 + $0x4] sm:$0xf]
          %v1848 = vld [vmem:[%s1845 + $0x8] sm:$0xf]
          %v1849 = vld [vmem:[%s1845 + $0xc] sm:$0xf]
          %v1854 = vunpack.c.l.b16 %v1846
          %v1855 = vunpack.c.l.b16 %v1847
          %v1856 = vunpack.c.l.b16 %v1848
          %v1857 = vunpack.c.l.b16 %v1849
          %v1858 = vpack.c.b16 %v1855, %v1854
          %v1859 = vpack.c.b16 %v1857, %v1856
          %1862 = vmatprep.subr.bf16.mxu0 0
          %1863 = vmatpush1.bf16.msra.mxu0 0
          %1864 = vmatprep.subr.bf16.mxu0 0
          %1865 = vmatpush1.bf16.msra.mxu0 0
          %1866 = vmatprep.subr.bf16.mxu0 0
          %1867 = vmatpush1.bf16.msra.mxu0 0
          %1868 = vmatprep.subr.bf16.mxu0 0
          %1869 = vmatpush1.bf16.msra.mxu0 0
          %1870 = vmatprep.subr.bf16.mxu0 0
          %1871 = vmatpush1.bf16.msra.mxu0 0
          %1872 = vmatprep.subr.bf16.mxu0 0
          %1873 = vmatpush1.bf16.msra.mxu0 0
          %1874 = vmatprep.subr.bf16.mxu0 0
          %1875 = vmatpush1.bf16.msra.mxu0 %v1859
          %1876 = vmatprep.subr.bf16.mxu0 0
          %1877 = vmatpush1.bf16.msra.mxu0 %v1858
          %1878 = vmatprep.subr.bf16.mxu0 0
          %1879 = vmatpush2.bf16.msra.mxu0 0
          %1880 = vmatprep.subr.bf16.mxu0 0
          %1881 = vmatpush2.bf16.msra.mxu0 0
          %1882 = vmatprep.subr.bf16.mxu0 0
          %1883 = vmatpush2.bf16.msra.mxu0 0
          %1884 = vmatprep.subr.bf16.mxu0 0
          %1885 = vmatpush2.bf16.msra.mxu0 0
          %1886 = vmatprep.subr.bf16.mxu0 0
          %1887 = vmatpush2.bf16.msra.mxu0 0
          %1888 = vmatprep.subr.bf16.mxu0 0
          %1889 = vmatpush2.bf16.msra.mxu0 0
          %1890 = vmatprep.subr.bf16.mxu0 0
          %1891 = vmatpush2.bf16.msra.mxu0 0
          %1892 = vmatprep.subr.bf16.mxu0 0
          %1893 = vmatpush2.bf16.msra.mxu0 0
          %1894 = vmatprep.mubr.bf16.mxu0 0
          %1895 = vmatmul.mubr.bf16.gmra.mxu0 %v553
          %v1896 = vpop.f32.mrf.mxu0
          %v1897 = vadd.f32 0.0, %v1896
          %v1898 = vpop.f32.mrf.mxu0
          %v1899 = vpop.f32.mrf.mxu0
          %v1900 = vadd.f32 0.0, %v1899
          %v1901 = vpop.f32.mrf.mxu0
          %1902 = vdwg.mxu0
          %v1903 = vpack.c.bf16 %v1900, %v1897
          %v1905 = vunpack.c.l.b16 %v1903
          %v1906 = vunpack.c.h.b16 %v1903
          %v1907 = vpack.c.b16 %v1905, %v1905
          %v1908 = vpack.c.b16 %v1906, %v1906
          %s1911 = scalar_lea.vmem [#allocation3], 48
          %1912 = vst.msk [vmem:[%s1911] sm:$0xf] %vm604, %v1907
          %1913 = vst.msk [vmem:[%s1911 + $0x4] sm:$0xf] %vm604, %v1908
          %s1914 = scalar_lea.vmem %s5, 96
          %v1915 = vld [vmem:[%s1914] sm:$0xf]
          %v1916 = vld [vmem:[%s1914 + $0x4] sm:$0xf]
          %v1917 = vld [vmem:[%s1914 + $0x8] sm:$0xf]
          %v1918 = vld [vmem:[%s1914 + $0xc] sm:$0xf]
          %v1923 = vunpack.c.l.b16 %v1915
          %v1924 = vunpack.c.l.b16 %v1916
          %v1925 = vunpack.c.l.b16 %v1917
          %v1926 = vunpack.c.l.b16 %v1918
          %v1927 = vpack.c.b16 %v1924, %v1923
          %v1928 = vpack.c.b16 %v1926, %v1925
          %1931 = vmatprep.subr.bf16.mxu0 0
          %1932 = vmatpush1.bf16.msra.mxu0 0
          %1933 = vmatprep.subr.bf16.mxu0 0
          %1934 = vmatpush1.bf16.msra.mxu0 0
          %1935 = vmatprep.subr.bf16.mxu0 0
          %1936 = vmatpush1.bf16.msra.mxu0 0
          %1937 = vmatprep.subr.bf16.mxu0 0
          %1938 = vmatpush1.bf16.msra.mxu0 0
          %1939 = vmatprep.subr.bf16.mxu0 0
          %1940 = vmatpush1.bf16.msra.mxu0 0
          %1941 = vmatprep.subr.bf16.mxu0 0
          %1942 = vmatpush1.bf16.msra.mxu0 0
          %1943 = vmatprep.subr.bf16.mxu0 0
          %1944 = vmatpush1.bf16.msra.mxu0 %v1928
          %1945 = vmatprep.subr.bf16.mxu0 0
          %1946 = vmatpush1.bf16.msra.mxu0 %v1927
          %1947 = vmatprep.subr.bf16.mxu0 0
          %1948 = vmatpush2.bf16.msra.mxu0 0
          %1949 = vmatprep.subr.bf16.mxu0 0
          %1950 = vmatpush2.bf16.msra.mxu0 0
          %1951 = vmatprep.subr.bf16.mxu0 0
          %1952 = vmatpush2.bf16.msra.mxu0 0
          %1953 = vmatprep.subr.bf16.mxu0 0
          %1954 = vmatpush2.bf16.msra.mxu0 0
          %1955 = vmatprep.subr.bf16.mxu0 0
          %1956 = vmatpush2.bf16.msra.mxu0 0
          %1957 = vmatprep.subr.bf16.mxu0 0
          %1958 = vmatpush2.bf16.msra.mxu0 0
          %1959 = vmatprep.subr.bf16.mxu0 0
          %1960 = vmatpush2.bf16.msra.mxu0 0
          %1961 = vmatprep.subr.bf16.mxu0 0
          %1962 = vmatpush2.bf16.msra.mxu0 0
          %1963 = vmatprep.mubr.bf16.mxu0 0
          %1964 = vmatmul.mubr.bf16.gmra.mxu0 %v553
          %v1965 = vpop.f32.mrf.mxu0
          %v1966 = vadd.f32 0.0, %v1965
          %v1967 = vpop.f32.mrf.mxu0
          %v1968 = vpop.f32.mrf.mxu0
          %v1969 = vadd.f32 0.0, %v1968
          %v1970 = vpop.f32.mrf.mxu0
          %1971 = vdwg.mxu0
          %v1972 = vpack.c.bf16 %v1969, %v1966
          %v1974 = vunpack.c.l.b16 %v1972
          %v1975 = vunpack.c.h.b16 %v1972
          %v1976 = vpack.c.b16 %v1974, %v1974
          %v1977 = vpack.c.b16 %v1975, %v1975
          %s1980 = scalar_lea.vmem [#allocation4], 48
          %1981 = vst.msk [vmem:[%s1980] sm:$0xf] %vm604, %v1976
          %1982 = vst.msk [vmem:[%s1980 + $0x4] sm:$0xf] %vm604, %v1977
          %s1983 = scalar_lea.vmem %s3, 112
          %v1984 = vld [vmem:[%s1983] sm:$0xf]
          %v1985 = vld [vmem:[%s1983 + $0x4] sm:$0xf]
          %v1986 = vld [vmem:[%s1983 + $0x8] sm:$0xf]
          %v1987 = vld [vmem:[%s1983 + $0xc] sm:$0xf]
          %v1992 = vunpack.c.l.b16 %v1984
          %v1993 = vunpack.c.l.b16 %v1985
          %v1994 = vunpack.c.l.b16 %v1986
          %v1995 = vunpack.c.l.b16 %v1987
          %v1996 = vpack.c.b16 %v1993, %v1992
          %v1997 = vpack.c.b16 %v1995, %v1994
          %2000 = vmatprep.subr.bf16.mxu0 0
          %2001 = vmatpush1.bf16.msra.mxu0 0
          %2002 = vmatprep.subr.bf16.mxu0 0
          %2003 = vmatpush1.bf16.msra.mxu0 0
          %2004 = vmatprep.subr.bf16.mxu0 0
          %2005 = vmatpush1.bf16.msra.mxu0 0
          %2006 = vmatprep.subr.bf16.mxu0 0
          %2007 = vmatpush1.bf16.msra.mxu0 0
          %2008 = vmatprep.subr.bf16.mxu0 0
          %2009 = vmatpush1.bf16.msra.mxu0 0
          %2010 = vmatprep.subr.bf16.mxu0 0
          %2011 = vmatpush1.bf16.msra.mxu0 0
          %2012 = vmatprep.subr.bf16.mxu0 0
          %2013 = vmatpush1.bf16.msra.mxu0 %v1997
          %2014 = vmatprep.subr.bf16.mxu0 0
          %2015 = vmatpush1.bf16.msra.mxu0 %v1996
          %2016 = vmatprep.subr.bf16.mxu0 0
          %2017 = vmatpush2.bf16.msra.mxu0 0
          %2018 = vmatprep.subr.bf16.mxu0 0
          %2019 = vmatpush2.bf16.msra.mxu0 0
          %2020 = vmatprep.subr.bf16.mxu0 0
          %2021 = vmatpush2.bf16.msra.mxu0 0
          %2022 = vmatprep.subr.bf16.mxu0 0
          %2023 = vmatpush2.bf16.msra.mxu0 0
          %2024 = vmatprep.subr.bf16.mxu0 0
          %2025 = vmatpush2.bf16.msra.mxu0 0
          %2026 = vmatprep.subr.bf16.mxu0 0
          %2027 = vmatpush2.bf16.msra.mxu0 0
          %2028 = vmatprep.subr.bf16.mxu0 0
          %2029 = vmatpush2.bf16.msra.mxu0 0
          %2030 = vmatprep.subr.bf16.mxu0 0
          %2031 = vmatpush2.bf16.msra.mxu0 0
          %2032 = vmatprep.mubr.bf16.mxu0 0
          %2033 = vmatmul.mubr.bf16.gmra.mxu0 %v553
          %v2034 = vpop.f32.mrf.mxu0
          %v2035 = vadd.f32 0.0, %v2034
          %v2036 = vpop.f32.mrf.mxu0
          %v2037 = vpop.f32.mrf.mxu0
          %v2038 = vadd.f32 0.0, %v2037
          %v2039 = vpop.f32.mrf.mxu0
          %2040 = vdwg.mxu0
          %v2041 = vpack.c.bf16 %v2038, %v2035
          %v2043 = vunpack.c.l.b16 %v2041
          %v2044 = vunpack.c.h.b16 %v2041
          %v2045 = vpack.c.b16 %v2043, %v2043
          %v2046 = vpack.c.b16 %v2044, %v2044
          %s2049 = scalar_lea.vmem [#allocation2], 56
          %2050 = vst.msk [vmem:[%s2049] sm:$0xf] %vm604, %v2045
          %2051 = vst.msk [vmem:[%s2049 + $0x4] sm:$0xf] %vm604, %v2046
          %s2052 = scalar_lea.vmem %s4, 112
          %v2053 = vld [vmem:[%s2052] sm:$0xf]
          %v2054 = vld [vmem:[%s2052 + $0x4] sm:$0xf]
          %v2055 = vld [vmem:[%s2052 + $0x8] sm:$0xf]
          %v2056 = vld [vmem:[%s2052 + $0xc] sm:$0xf]
          %v2061 = vunpack.c.l.b16 %v2053
          %v2062 = vunpack.c.l.b16 %v2054
          %v2063 = vunpack.c.l.b16 %v2055
          %v2064 = vunpack.c.l.b16 %v2056
          %v2065 = vpack.c.b16 %v2062, %v2061
          %v2066 = vpack.c.b16 %v2064, %v2063
          %2069 = vmatprep.subr.bf16.mxu0 0
          %2070 = vmatpush1.bf16.msra.mxu0 0
          %2071 = vmatprep.subr.bf16.mxu0 0
          %2072 = vmatpush1.bf16.msra.mxu0 0
          %2073 = vmatprep.subr.bf16.mxu0 0
          %2074 = vmatpush1.bf16.msra.mxu0 0
          %2075 = vmatprep.subr.bf16.mxu0 0
          %2076 = vmatpush1.bf16.msra.mxu0 0
          %2077 = vmatprep.subr.bf16.mxu0 0
          %2078 = vmatpush1.bf16.msra.mxu0 0
          %2079 = vmatprep.subr.bf16.mxu0 0
          %2080 = vmatpush1.bf16.msra.mxu0 0
          %2081 = vmatprep.subr.bf16.mxu0 0
          %2082 = vmatpush1.bf16.msra.mxu0 %v2066
          %2083 = vmatprep.subr.bf16.mxu0 0
          %2084 = vmatpush1.bf16.msra.mxu0 %v2065
          %2085 = vmatprep.subr.bf16.mxu0 0
          %2086 = vmatpush2.bf16.msra.mxu0 0
          %2087 = vmatprep.subr.bf16.mxu0 0
          %2088 = vmatpush2.bf16.msra.mxu0 0
          %2089 = vmatprep.subr.bf16.mxu0 0
          %2090 = vmatpush2.bf16.msra.mxu0 0
          %2091 = vmatprep.subr.bf16.mxu0 0
          %2092 = vmatpush2.bf16.msra.mxu0 0
          %2093 = vmatprep.subr.bf16.mxu0 0
          %2094 = vmatpush2.bf16.msra.mxu0 0
          %2095 = vmatprep.subr.bf16.mxu0 0
          %2096 = vmatpush2.bf16.msra.mxu0 0
          %2097 = vmatprep.subr.bf16.mxu0 0
          %2098 = vmatpush2.bf16.msra.mxu0 0
          %2099 = vmatprep.subr.bf16.mxu0 0
          %2100 = vmatpush2.bf16.msra.mxu0 0
          %2101 = vmatprep.mubr.bf16.mxu0 0
          %2102 = vmatmul.mubr.bf16.gmra.mxu0 %v553
          %v2103 = vpop.f32.mrf.mxu0
          %v2104 = vadd.f32 0.0, %v2103
          %v2105 = vpop.f32.mrf.mxu0
          %v2106 = vpop.f32.mrf.mxu0
          %v2107 = vadd.f32 0.0, %v2106
          %v2108 = vpop.f32.mrf.mxu0
          %2109 = vdwg.mxu0
          %v2110 = vpack.c.bf16 %v2107, %v2104
          %v2112 = vunpack.c.l.b16 %v2110
          %v2113 = vunpack.c.h.b16 %v2110
          %v2114 = vpack.c.b16 %v2112, %v2112
          %v2115 = vpack.c.b16 %v2113, %v2113
          %s2118 = scalar_lea.vmem [#allocation3], 56
          %2119 = vst.msk [vmem:[%s2118] sm:$0xf] %vm604, %v2114
          %2120 = vst.msk [vmem:[%s2118 + $0x4] sm:$0xf] %vm604, %v2115
          %s2121 = scalar_lea.vmem %s5, 112
          %v2122 = vld [vmem:[%s2121] sm:$0xf]
          %v2123 = vld [vmem:[%s2121 + $0x4] sm:$0xf]
          %v2124 = vld [vmem:[%s2121 + $0x8] sm:$0xf]
          %v2125 = vld [vmem:[%s2121 + $0xc] sm:$0xf]
          %v2130 = vunpack.c.l.b16 %v2122
          %v2131 = vunpack.c.l.b16 %v2123
          %v2132 = vunpack.c.l.b16 %v2124
          %v2133 = vunpack.c.l.b16 %v2125
          %v2134 = vpack.c.b16 %v2131, %v2130
          %v2135 = vpack.c.b16 %v2133, %v2132
          %2138 = vmatprep.subr.bf16.mxu0 0
          %2139 = vmatpush1.bf16.msra.mxu0 0
          %2140 = vmatprep.subr.bf16.mxu0 0
          %2141 = vmatpush1.bf16.msra.mxu0 0
          %2142 = vmatprep.subr.bf16.mxu0 0
          %2143 = vmatpush1.bf16.msra.mxu0 0
          %2144 = vmatprep.subr.bf16.mxu0 0
          %2145 = vmatpush1.bf16.msra.mxu0 0
          %2146 = vmatprep.subr.bf16.mxu0 0
          %2147 = vmatpush1.bf16.msra.mxu0 0
          %2148 = vmatprep.subr.bf16.mxu0 0
          %2149 = vmatpush1.bf16.msra.mxu0 0
          %2150 = vmatprep.subr.bf16.mxu0 0
          %2151 = vmatpush1.bf16.msra.mxu0 %v2135
          %2152 = vmatprep.subr.bf16.mxu0 0
          %2153 = vmatpush1.bf16.msra.mxu0 %v2134
          %2154 = vmatprep.subr.bf16.mxu0 0
          %2155 = vmatpush2.bf16.msra.mxu0 0
          %2156 = vmatprep.subr.bf16.mxu0 0
          %2157 = vmatpush2.bf16.msra.mxu0 0
          %2158 = vmatprep.subr.bf16.mxu0 0
          %2159 = vmatpush2.bf16.msra.mxu0 0
          %2160 = vmatprep.subr.bf16.mxu0 0
          %2161 = vmatpush2.bf16.msra.mxu0 0
          %2162 = vmatprep.subr.bf16.mxu0 0
          %2163 = vmatpush2.bf16.msra.mxu0 0
          %2164 = vmatprep.subr.bf16.mxu0 0
          %2165 = vmatpush2.bf16.msra.mxu0 0
          %2166 = vmatprep.subr.bf16.mxu0 0
          %2167 = vmatpush2.bf16.msra.mxu0 0
          %2168 = vmatprep.subr.bf16.mxu0 0
          %2169 = vmatpush2.bf16.msra.mxu0 0
          %2170 = vmatprep.mubr.bf16.mxu0 0
          %2171 = vmatmul.mubr.bf16.gmra.mxu0 %v553
          %v2172 = vpop.f32.mrf.mxu0
          %v2173 = vadd.f32 0.0, %v2172
          %v2174 = vpop.f32.mrf.mxu0
          %v2175 = vpop.f32.mrf.mxu0
          %v2176 = vadd.f32 0.0, %v2175
          %v2177 = vpop.f32.mrf.mxu0
          %2178 = vdwg.mxu0
          %v2179 = vpack.c.bf16 %v2176, %v2173
          %v2181 = vunpack.c.l.b16 %v2179
          %v2182 = vunpack.c.h.b16 %v2179
          %v2183 = vpack.c.b16 %v2181, %v2181
          %v2184 = vpack.c.b16 %v2182, %v2182
          %s2187 = scalar_lea.vmem [#allocation4], 56
          %2188 = vst.msk [vmem:[%s2187] sm:$0xf] %vm604, %v2183
          %2189 = vst.msk [vmem:[%s2187 + $0x4] sm:$0xf] %vm604, %v2184
        $region80: #{tpu_custom_call.1} parent=75 // pred_fallthru
          _
        %s2190 = sshra.s32 %s482, 3
        %s2191 = sand.u32 %s482, 7
        %s2192 = smul.addr %s2190, 4
        %s2193 = scalar_lea.vmem [#allocation2], %s2192
        %v2194 = vld [vmem:[%s2193] sm:$0xf]
        %v2195 = vld [vmem:[%s2193 + $0x4] sm:$0xf]
        %v2196 = vld [vmem:[%s2193 + $0x8] sm:$0xf]
        %v2197 = vld [vmem:[%s2193 + $0xc] sm:$0xf]
        %v2198 = vld [vmem:[%s2193 + $0x10] sm:$0xf]
        %v2199 = vld [vmem:[%s2193 + $0x14] sm:$0xf]
        %v2200 = vld [vmem:[%s2193 + $0x18] sm:$0xf]
        %v2201 = vld [vmem:[%s2193 + $0x1c] sm:$0xf]
        %v2202 = vld [vmem:[%s2193 + $0x20] sm:$0xf]
        %v2203 = vld [vmem:[%s2193 + $0x24] sm:$0xf]
        %v2204 = vld [vmem:[%s2193 + $0x28] sm:$0xf]
        %v2205 = vld [vmem:[%s2193 + $0x2c] sm:$0xf]
        %v2206 = vld [vmem:[%s2193 + $0x30] sm:$0xf]
        %v2207 = vld [vmem:[%s2193 + $0x34] sm:$0xf]
        %v2208 = vld [vmem:[%s2193 + $0x38] sm:$0xf]
        %v2209 = vld [vmem:[%s2193 + $0x3c] sm:$0xf]
        %v2210 = vld [vmem:[#allocation3] sm:$0xf]
        %v2211 = vld [vmem:[#allocation3 + $0x4] sm:$0xf]
        %v2212 = vld [vmem:[#allocation3 + $0x8] sm:$0xf]
        %v2213 = vld [vmem:[#allocation3 + $0xc] sm:$0xf]
        %v2214 = vld [vmem:[#allocation3 + $0x10] sm:$0xf]
        %v2215 = vld [vmem:[#allocation3 + $0x14] sm:$0xf]
        %v2216 = vld [vmem:[#allocation3 + $0x18] sm:$0xf]
        %v2217 = vld [vmem:[#allocation3 + $0x1c] sm:$0xf]
        %v2218 = vld [vmem:[#allocation3 + $0x20] sm:$0xf]
        %v2219 = vld [vmem:[#allocation3 + $0x24] sm:$0xf]
        %v2220 = vld [vmem:[#allocation3 + $0x28] sm:$0xf]
        %v2221 = vld [vmem:[#allocation3 + $0x2c] sm:$0xf]
        %v2222 = vld [vmem:[#allocation3 + $0x30] sm:$0xf]
        %v2223 = vld [vmem:[#allocation3 + $0x34] sm:$0xf]
        %v2224 = vld [vmem:[#allocation3 + $0x38] sm:$0xf]
        %v2225 = vld [vmem:[#allocation3 + $0x3c] sm:$0xf]
        %v2226 = vld [vmem:[#allocation4] sm:$0xf]
        %v2227 = vld [vmem:[#allocation4 + $0x4] sm:$0xf]
        %v2228 = vld [vmem:[#allocation4 + $0x8] sm:$0xf]
        %v2229 = vld [vmem:[#allocation4 + $0xc] sm:$0xf]
        %v2230 = vld [vmem:[#allocation4 + $0x10] sm:$0xf]
        %v2231 = vld [vmem:[#allocation4 + $0x14] sm:$0xf]
        %v2232 = vld [vmem:[#allocation4 + $0x18] sm:$0xf]
        %v2233 = vld [vmem:[#allocation4 + $0x1c] sm:$0xf]
        %v2234 = vld [vmem:[#allocation4 + $0x20] sm:$0xf]
        %v2235 = vld [vmem:[#allocation4 + $0x24] sm:$0xf]
        %v2236 = vld [vmem:[#allocation4 + $0x28] sm:$0xf]
        %v2237 = vld [vmem:[#allocation4 + $0x2c] sm:$0xf]
        %v2238 = vld [vmem:[#allocation4 + $0x30] sm:$0xf]
        %v2239 = vld [vmem:[#allocation4 + $0x34] sm:$0xf]
        %v2240 = vld [vmem:[#allocation4 + $0x38] sm:$0xf]
        %v2241 = vld [vmem:[#allocation4 + $0x3c] sm:$0xf]
        %v2244 = vunpack.c.l.b16 %v2194
        %v2245 = vunpack.c.l.b16 %v2195
        %v2246 = vpack.c.b16 %v2245, %v2244
        %v2249 = vunpack.c.l.b16 %v2210
        %v2250 = vunpack.c.l.b16 %v2211
        %v2251 = vpack.c.b16 %v2250, %v2249
        %vm2252 = vcmask 31744
        %v2254 = vsel %vm2252, %v2246, 0
        %v2257 = vsel %vm2252, %v2251, 0
        %2259 = vmatprep.subr.bf16.mxu0 0
        %2260 = vmatpush1.bf16.xpose.msra.mxu0 0
        %2261 = vmatprep.subr.bf16.mxu0 0
        %2262 = vmatpush1.bf16.xpose.msra.mxu0 0
        %2263 = vmatprep.subr.bf16.mxu0 0
        %2264 = vmatpush1.bf16.xpose.msra.mxu0 0
        %2265 = vmatprep.subr.bf16.mxu0 0
        %2266 = vmatpush1.bf16.xpose.msra.mxu0 0
        %2267 = vmatprep.subr.bf16.mxu0 0
        %2268 = vmatpush1.bf16.xpose.msra.mxu0 0
        %2269 = vmatprep.subr.bf16.mxu0 0
        %2270 = vmatpush1.bf16.xpose.msra.mxu0 0
        %2271 = vmatprep.subr.bf16.mxu0 0
        %2272 = vmatpush1.bf16.xpose.msra.mxu0 0
        %2273 = vmatprep.subr.bf16.mxu0 0
        %2274 = vmatpush1.bf16.xpose.msra.mxu0 %v2257
        %2275 = vmatprep.subr.bf16.mxu0 0
        %2276 = vmatpush2.bf16.xpose.msra.mxu0 0
        %2277 = vmatprep.subr.bf16.mxu0 0
        %2278 = vmatpush2.bf16.xpose.msra.mxu0 0
        %2279 = vmatprep.subr.bf16.mxu0 0
        %2280 = vmatpush2.bf16.xpose.msra.mxu0 0
        %2281 = vmatprep.subr.bf16.mxu0 0
        %2282 = vmatpush2.bf16.xpose.msra.mxu0 0
        %2283 = vmatprep.subr.bf16.mxu0 0
        %2284 = vmatpush2.bf16.xpose.msra.mxu0 0
        %2285 = vmatprep.subr.bf16.mxu0 0
        %2286 = vmatpush2.bf16.xpose.msra.mxu0 0
        %2287 = vmatprep.subr.bf16.mxu0 0
        %2288 = vmatpush2.bf16.xpose.msra.mxu0 0
        %2289 = vmatprep.subr.bf16.mxu0 0
        %2290 = vmatpush2.bf16.xpose.msra.mxu0 0
        %2291 = vmatprep.mubr.bf16.mxu0 0
        %2292 = vmatmul.mubr.bf16.gmra.mxu0 %v2254
        %v2293 = vpop.f32.mrf.mxu0
        %v2294 = vadd.f32 0.0, %v2293
        %v2295 = vpop.f32.mrf.mxu0
        %v2296 = vpop.f32.mrf.mxu0
        %v2297 = vadd.f32 0.0, %v2296
        %v2298 = vpop.f32.mrf.mxu0
        %2299 = vdwg.mxu0
        %v2302 = vunpack.c.l.b16 %v2196
        %v2303 = vunpack.c.l.b16 %v2197
        %v2304 = vpack.c.b16 %v2303, %v2302
        %v2307 = vunpack.c.l.b16 %v2212
        %v2308 = vunpack.c.l.b16 %v2213
        %v2309 = vpack.c.b16 %v2308, %v2307
        %v2311 = vsel %vm2252, %v2304, 0
        %v2314 = vsel %vm2252, %v2309, 0
        %2316 = vmatprep.subr.bf16.mxu0 0
        %2317 = vmatpush1.bf16.xpose.msra.mxu0 0
        %2318 = vmatprep.subr.bf16.mxu0 0
        %2319 = vmatpush1.bf16.xpose.msra.mxu0 0
        %2320 = vmatprep.subr.bf16.mxu0 0
        %2321 = vmatpush1.bf16.xpose.msra.mxu0 0
        %2322 = vmatprep.subr.bf16.mxu0 0
        %2323 = vmatpush1.bf16.xpose.msra.mxu0 0
        %2324 = vmatprep.subr.bf16.mxu0 0
        %2325 = vmatpush1.bf16.xpose.msra.mxu0 0
        %2326 = vmatprep.subr.bf16.mxu0 0
        %2327 = vmatpush1.bf16.xpose.msra.mxu0 0
        %2328 = vmatprep.subr.bf16.mxu0 0
        %2329 = vmatpush1.bf16.xpose.msra.mxu0 0
        %2330 = vmatprep.subr.bf16.mxu0 0
        %2331 = vmatpush1.bf16.xpose.msra.mxu0 %v2314
        %2332 = vmatprep.subr.bf16.mxu0 0
        %2333 = vmatpush2.bf16.xpose.msra.mxu0 0
        %2334 = vmatprep.subr.bf16.mxu0 0
        %2335 = vmatpush2.bf16.xpose.msra.mxu0 0
        %2336 = vmatprep.subr.bf16.mxu0 0
        %2337 = vmatpush2.bf16.xpose.msra.mxu0 0
        %2338 = vmatprep.subr.bf16.mxu0 0
        %2339 = vmatpush2.bf16.xpose.msra.mxu0 0
        %2340 = vmatprep.subr.bf16.mxu0 0
        %2341 = vmatpush2.bf16.xpose.msra.mxu0 0
        %2342 = vmatprep.subr.bf16.mxu0 0
        %2343 = vmatpush2.bf16.xpose.msra.mxu0 0
        %2344 = vmatprep.subr.bf16.mxu0 0
        %2345 = vmatpush2.bf16.xpose.msra.mxu0 0
        %2346 = vmatprep.subr.bf16.mxu0 0
        %2347 = vmatpush2.bf16.xpose.msra.mxu0 0
        %2348 = vmatprep.mubr.bf16.mxu0 0
        %2349 = vmatmul.mubr.bf16.gmra.mxu0 %v2311
        %v2350 = vpop.f32.mrf.mxu0
        %v2351 = vadd.f32 0.0, %v2350
        %v2352 = vpop.f32.mrf.mxu0
        %v2353 = vpop.f32.mrf.mxu0
        %v2354 = vadd.f32 0.0, %v2353
        %v2355 = vpop.f32.mrf.mxu0
        %2356 = vdwg.mxu0
        %v2359 = vunpack.c.l.b16 %v2198
        %v2360 = vunpack.c.l.b16 %v2199
        %v2361 = vpack.c.b16 %v2360, %v2359
        %v2364 = vunpack.c.l.b16 %v2214
        %v2365 = vunpack.c.l.b16 %v2215
        %v2366 = vpack.c.b16 %v2365, %v2364
        %v2368 = vsel %vm2252, %v2361, 0
        %v2371 = vsel %vm2252, %v2366, 0
        %2373 = vmatprep.subr.bf16.mxu0 0
        %2374 = vmatpush1.bf16.xpose.msra.mxu0 0
        %2375 = vmatprep.subr.bf16.mxu0 0
        %2376 = vmatpush1.bf16.xpose.msra.mxu0 0
        %2377 = vmatprep.subr.bf16.mxu0 0
        %2378 = vmatpush1.bf16.xpose.msra.mxu0 0
        %2379 = vmatprep.subr.bf16.mxu0 0
        %2380 = vmatpush1.bf16.xpose.msra.mxu0 0
        %2381 = vmatprep.subr.bf16.mxu0 0
        %2382 = vmatpush1.bf16.xpose.msra.mxu0 0
        %2383 = vmatprep.subr.bf16.mxu0 0
        %2384 = vmatpush1.bf16.xpose.msra.mxu0 0
        %2385 = vmatprep.subr.bf16.mxu0 0
        %2386 = vmatpush1.bf16.xpose.msra.mxu0 0
        %2387 = vmatprep.subr.bf16.mxu0 0
        %2388 = vmatpush1.bf16.xpose.msra.mxu0 %v2371
        %2389 = vmatprep.subr.bf16.mxu0 0
        %2390 = vmatpush2.bf16.xpose.msra.mxu0 0
        %2391 = vmatprep.subr.bf16.mxu0 0
        %2392 = vmatpush2.bf16.xpose.msra.mxu0 0
        %2393 = vmatprep.subr.bf16.mxu0 0
        %2394 = vmatpush2.bf16.xpose.msra.mxu0 0
        %2395 = vmatprep.subr.bf16.mxu0 0
        %2396 = vmatpush2.bf16.xpose.msra.mxu0 0
        %2397 = vmatprep.subr.bf16.mxu0 0
        %2398 = vmatpush2.bf16.xpose.msra.mxu0 0
        %2399 = vmatprep.subr.bf16.mxu0 0
        %2400 = vmatpush2.bf16.xpose.msra.mxu0 0
        %2401 = vmatprep.subr.bf16.mxu0 0
        %2402 = vmatpush2.bf16.xpose.msra.mxu0 0
        %2403 = vmatprep.subr.bf16.mxu0 0
        %2404 = vmatpush2.bf16.xpose.msra.mxu0 0
        %2405 = vmatprep.mubr.bf16.mxu0 0
        %2406 = vmatmul.mubr.bf16.gmra.mxu0 %v2368
        %v2407 = vpop.f32.mrf.mxu0
        %v2408 = vadd.f32 0.0, %v2407
        %v2409 = vpop.f32.mrf.mxu0
        %v2410 = vpop.f32.mrf.mxu0
        %v2411 = vadd.f32 0.0, %v2410
        %v2412 = vpop.f32.mrf.mxu0
        %2413 = vdwg.mxu0
        %v2416 = vunpack.c.l.b16 %v2200
        %v2417 = vunpack.c.l.b16 %v2201
        %v2418 = vpack.c.b16 %v2417, %v2416
        %v2421 = vunpack.c.l.b16 %v2216
        %v2422 = vunpack.c.l.b16 %v2217
        %v2423 = vpack.c.b16 %v2422, %v2421
        %v2425 = vsel %vm2252, %v2418, 0
        %v2428 = vsel %vm2252, %v2423, 0
        %2430 = vmatprep.subr.bf16.mxu0 0
        %2431 = vmatpush1.bf16.xpose.msra.mxu0 0
        %2432 = vmatprep.subr.bf16.mxu0 0
        %2433 = vmatpush1.bf16.xpose.msra.mxu0 0
        %2434 = vmatprep.subr.bf16.mxu0 0
        %2435 = vmatpush1.bf16.xpose.msra.mxu0 0
        %2436 = vmatprep.subr.bf16.mxu0 0
        %2437 = vmatpush1.bf16.xpose.msra.mxu0 0
        %2438 = vmatprep.subr.bf16.mxu0 0
        %2439 = vmatpush1.bf16.xpose.msra.mxu0 0
        %2440 = vmatprep.subr.bf16.mxu0 0
        %2441 = vmatpush1.bf16.xpose.msra.mxu0 0
        %2442 = vmatprep.subr.bf16.mxu0 0
        %2443 = vmatpush1.bf16.xpose.msra.mxu0 0
        %2444 = vmatprep.subr.bf16.mxu0 0
        %2445 = vmatpush1.bf16.xpose.msra.mxu0 %v2428
        %2446 = vmatprep.subr.bf16.mxu0 0
        %2447 = vmatpush2.bf16.xpose.msra.mxu0 0
        %2448 = vmatprep.subr.bf16.mxu0 0
        %2449 = vmatpush2.bf16.xpose.msra.mxu0 0
        %2450 = vmatprep.subr.bf16.mxu0 0
        %2451 = vmatpush2.bf16.xpose.msra.mxu0 0
        %2452 = vmatprep.subr.bf16.mxu0 0
        %2453 = vmatpush2.bf16.xpose.msra.mxu0 0
        %2454 = vmatprep.subr.bf16.mxu0 0
        %2455 = vmatpush2.bf16.xpose.msra.mxu0 0
        %2456 = vmatprep.subr.bf16.mxu0 0
        %2457 = vmatpush2.bf16.xpose.msra.mxu0 0
        %2458 = vmatprep.subr.bf16.mxu0 0
        %2459 = vmatpush2.bf16.xpose.msra.mxu0 0
        %2460 = vmatprep.subr.bf16.mxu0 0
        %2461 = vmatpush2.bf16.xpose.msra.mxu0 0
        %2462 = vmatprep.mubr.bf16.mxu0 0
        %2463 = vmatmul.mubr.bf16.gmra.mxu0 %v2425
        %v2464 = vpop.f32.mrf.mxu0
        %v2465 = vadd.f32 0.0, %v2464
        %v2466 = vpop.f32.mrf.mxu0
        %v2467 = vpop.f32.mrf.mxu0
        %v2468 = vadd.f32 0.0, %v2467
        %v2469 = vpop.f32.mrf.mxu0
        %2470 = vdwg.mxu0
        %v2473 = vunpack.c.l.b16 %v2202
        %v2474 = vunpack.c.l.b16 %v2203
        %v2475 = vpack.c.b16 %v2474, %v2473
        %v2478 = vunpack.c.l.b16 %v2218
        %v2479 = vunpack.c.l.b16 %v2219
        %v2480 = vpack.c.b16 %v2479, %v2478
        %v2482 = vsel %vm2252, %v2475, 0
        %v2485 = vsel %vm2252, %v2480, 0
        %2487 = vmatprep.subr.bf16.mxu0 0
        %2488 = vmatpush1.bf16.xpose.msra.mxu0 0
        %2489 = vmatprep.subr.bf16.mxu0 0
        %2490 = vmatpush1.bf16.xpose.msra.mxu0 0
        %2491 = vmatprep.subr.bf16.mxu0 0
        %2492 = vmatpush1.bf16.xpose.msra.mxu0 0
        %2493 = vmatprep.subr.bf16.mxu0 0
        %2494 = vmatpush1.bf16.xpose.msra.mxu0 0
        %2495 = vmatprep.subr.bf16.mxu0 0
        %2496 = vmatpush1.bf16.xpose.msra.mxu0 0
        %2497 = vmatprep.subr.bf16.mxu0 0
        %2498 = vmatpush1.bf16.xpose.msra.mxu0 0
        %2499 = vmatprep.subr.bf16.mxu0 0
        %2500 = vmatpush1.bf16.xpose.msra.mxu0 0
        %2501 = vmatprep.subr.bf16.mxu0 0
        %2502 = vmatpush1.bf16.xpose.msra.mxu0 %v2485
        %2503 = vmatprep.subr.bf16.mxu0 0
        %2504 = vmatpush2.bf16.xpose.msra.mxu0 0
        %2505 = vmatprep.subr.bf16.mxu0 0
        %2506 = vmatpush2.bf16.xpose.msra.mxu0 0
        %2507 = vmatprep.subr.bf16.mxu0 0
        %2508 = vmatpush2.bf16.xpose.msra.mxu0 0
        %2509 = vmatprep.subr.bf16.mxu0 0
        %2510 = vmatpush2.bf16.xpose.msra.mxu0 0
        %2511 = vmatprep.subr.bf16.mxu0 0
        %2512 = vmatpush2.bf16.xpose.msra.mxu0 0
        %2513 = vmatprep.subr.bf16.mxu0 0
        %2514 = vmatpush2.bf16.xpose.msra.mxu0 0
        %2515 = vmatprep.subr.bf16.mxu0 0
        %2516 = vmatpush2.bf16.xpose.msra.mxu0 0
        %2517 = vmatprep.subr.bf16.mxu0 0
        %2518 = vmatpush2.bf16.xpose.msra.mxu0 0
        %2519 = vmatprep.mubr.bf16.mxu0 0
        %2520 = vmatmul.mubr.bf16.gmra.mxu0 %v2482
        %v2521 = vpop.f32.mrf.mxu0
        %v2522 = vadd.f32 0.0, %v2521
        %v2523 = vpop.f32.mrf.mxu0
        %v2524 = vpop.f32.mrf.mxu0
        %v2525 = vadd.f32 0.0, %v2524
        %v2526 = vpop.f32.mrf.mxu0
        %2527 = vdwg.mxu0
        %v2530 = vunpack.c.l.b16 %v2204
        %v2531 = vunpack.c.l.b16 %v2205
        %v2532 = vpack.c.b16 %v2531, %v2530
        %v2535 = vunpack.c.l.b16 %v2220
        %v2536 = vunpack.c.l.b16 %v2221
        %v2537 = vpack.c.b16 %v2536, %v2535
        %v2539 = vsel %vm2252, %v2532, 0
        %v2542 = vsel %vm2252, %v2537, 0
        %2544 = vmatprep.subr.bf16.mxu0 0
        %2545 = vmatpush1.bf16.xpose.msra.mxu0 0
        %2546 = vmatprep.subr.bf16.mxu0 0
        %2547 = vmatpush1.bf16.xpose.msra.mxu0 0
        %2548 = vmatprep.subr.bf16.mxu0 0
        %2549 = vmatpush1.bf16.xpose.msra.mxu0 0
        %2550 = vmatprep.subr.bf16.mxu0 0
        %2551 = vmatpush1.bf16.xpose.msra.mxu0 0
        %2552 = vmatprep.subr.bf16.mxu0 0
        %2553 = vmatpush1.bf16.xpose.msra.mxu0 0
        %2554 = vmatprep.subr.bf16.mxu0 0
        %2555 = vmatpush1.bf16.xpose.msra.mxu0 0
        %2556 = vmatprep.subr.bf16.mxu0 0
        %2557 = vmatpush1.bf16.xpose.msra.mxu0 0
        %2558 = vmatprep.subr.bf16.mxu0 0
        %2559 = vmatpush1.bf16.xpose.msra.mxu0 %v2542
        %2560 = vmatprep.subr.bf16.mxu0 0
        %2561 = vmatpush2.bf16.xpose.msra.mxu0 0
        %2562 = vmatprep.subr.bf16.mxu0 0
        %2563 = vmatpush2.bf16.xpose.msra.mxu0 0
        %2564 = vmatprep.subr.bf16.mxu0 0
        %2565 = vmatpush2.bf16.xpose.msra.mxu0 0
        %2566 = vmatprep.subr.bf16.mxu0 0
        %2567 = vmatpush2.bf16.xpose.msra.mxu0 0
        %2568 = vmatprep.subr.bf16.mxu0 0
        %2569 = vmatpush2.bf16.xpose.msra.mxu0 0
        %2570 = vmatprep.subr.bf16.mxu0 0
        %2571 = vmatpush2.bf16.xpose.msra.mxu0 0
        %2572 = vmatprep.subr.bf16.mxu0 0
        %2573 = vmatpush2.bf16.xpose.msra.mxu0 0
        %2574 = vmatprep.subr.bf16.mxu0 0
        %2575 = vmatpush2.bf16.xpose.msra.mxu0 0
        %2576 = vmatprep.mubr.bf16.mxu0 0
        %2577 = vmatmul.mubr.bf16.gmra.mxu0 %v2539
        %v2578 = vpop.f32.mrf.mxu0
        %v2579 = vadd.f32 0.0, %v2578
        %v2580 = vpop.f32.mrf.mxu0
        %v2581 = vpop.f32.mrf.mxu0
        %v2582 = vadd.f32 0.0, %v2581
        %v2583 = vpop.f32.mrf.mxu0
        %2584 = vdwg.mxu0
        %v2587 = vunpack.c.l.b16 %v2206
        %v2588 = vunpack.c.l.b16 %v2207
        %v2589 = vpack.c.b16 %v2588, %v2587
        %v2592 = vunpack.c.l.b16 %v2222
        %v2593 = vunpack.c.l.b16 %v2223
        %v2594 = vpack.c.b16 %v2593, %v2592
        %v2596 = vsel %vm2252, %v2589, 0
        %v2599 = vsel %vm2252, %v2594, 0
        %2601 = vmatprep.subr.bf16.mxu0 0
        %2602 = vmatpush1.bf16.xpose.msra.mxu0 0
        %2603 = vmatprep.subr.bf16.mxu0 0
        %2604 = vmatpush1.bf16.xpose.msra.mxu0 0
        %2605 = vmatprep.subr.bf16.mxu0 0
        %2606 = vmatpush1.bf16.xpose.msra.mxu0 0
        %2607 = vmatprep.subr.bf16.mxu0 0
        %2608 = vmatpush1.bf16.xpose.msra.mxu0 0
        %2609 = vmatprep.subr.bf16.mxu0 0
        %2610 = vmatpush1.bf16.xpose.msra.mxu0 0
        %2611 = vmatprep.subr.bf16.mxu0 0
        %2612 = vmatpush1.bf16.xpose.msra.mxu0 0
        %2613 = vmatprep.subr.bf16.mxu0 0
        %2614 = vmatpush1.bf16.xpose.msra.mxu0 0
        %2615 = vmatprep.subr.bf16.mxu0 0
        %2616 = vmatpush1.bf16.xpose.msra.mxu0 %v2599
        %2617 = vmatprep.subr.bf16.mxu0 0
        %2618 = vmatpush2.bf16.xpose.msra.mxu0 0
        %2619 = vmatprep.subr.bf16.mxu0 0
        %2620 = vmatpush2.bf16.xpose.msra.mxu0 0
        %2621 = vmatprep.subr.bf16.mxu0 0
        %2622 = vmatpush2.bf16.xpose.msra.mxu0 0
        %2623 = vmatprep.subr.bf16.mxu0 0
        %2624 = vmatpush2.bf16.xpose.msra.mxu0 0
        %2625 = vmatprep.subr.bf16.mxu0 0
        %2626 = vmatpush2.bf16.xpose.msra.mxu0 0
        %2627 = vmatprep.subr.bf16.mxu0 0
        %2628 = vmatpush2.bf16.xpose.msra.mxu0 0
        %2629 = vmatprep.subr.bf16.mxu0 0
        %2630 = vmatpush2.bf16.xpose.msra.mxu0 0
        %2631 = vmatprep.subr.bf16.mxu0 0
        %2632 = vmatpush2.bf16.xpose.msra.mxu0 0
        %2633 = vmatprep.mubr.bf16.mxu0 0
        %2634 = vmatmul.mubr.bf16.gmra.mxu0 %v2596
        %v2635 = vpop.f32.mrf.mxu0
        %v2636 = vadd.f32 0.0, %v2635
        %v2637 = vpop.f32.mrf.mxu0
        %v2638 = vpop.f32.mrf.mxu0
        %v2639 = vadd.f32 0.0, %v2638
        %v2640 = vpop.f32.mrf.mxu0
        %2641 = vdwg.mxu0
        %v2644 = vunpack.c.l.b16 %v2208
        %v2645 = vunpack.c.l.b16 %v2209
        %v2646 = vpack.c.b16 %v2645, %v2644
        %v2649 = vunpack.c.l.b16 %v2224
        %v2650 = vunpack.c.l.b16 %v2225
        %v2651 = vpack.c.b16 %v2650, %v2649
        %v2653 = vsel %vm2252, %v2646, 0
        %v2656 = vsel %vm2252, %v2651, 0
        %2658 = vmatprep.subr.bf16.mxu0 0
        %2659 = vmatpush1.bf16.xpose.msra.mxu0 0
        %2660 = vmatprep.subr.bf16.mxu0 0
        %2661 = vmatpush1.bf16.xpose.msra.mxu0 0
        %2662 = vmatprep.subr.bf16.mxu0 0
        %2663 = vmatpush1.bf16.xpose.msra.mxu0 0
        %2664 = vmatprep.subr.bf16.mxu0 0
        %2665 = vmatpush1.bf16.xpose.msra.mxu0 0
        %2666 = vmatprep.subr.bf16.mxu0 0
        %2667 = vmatpush1.bf16.xpose.msra.mxu0 0
        %2668 = vmatprep.subr.bf16.mxu0 0
        %2669 = vmatpush1.bf16.xpose.msra.mxu0 0
        %2670 = vmatprep.subr.bf16.mxu0 0
        %2671 = vmatpush1.bf16.xpose.msra.mxu0 0
        %2672 = vmatprep.subr.bf16.mxu0 0
        %2673 = vmatpush1.bf16.xpose.msra.mxu0 %v2656
        %2674 = vmatprep.subr.bf16.mxu0 0
        %2675 = vmatpush2.bf16.xpose.msra.mxu0 0
        %2676 = vmatprep.subr.bf16.mxu0 0
        %2677 = vmatpush2.bf16.xpose.msra.mxu0 0
        %2678 = vmatprep.subr.bf16.mxu0 0
        %2679 = vmatpush2.bf16.xpose.msra.mxu0 0
        %2680 = vmatprep.subr.bf16.mxu0 0
        %2681 = vmatpush2.bf16.xpose.msra.mxu0 0
        %2682 = vmatprep.subr.bf16.mxu0 0
        %2683 = vmatpush2.bf16.xpose.msra.mxu0 0
        %2684 = vmatprep.subr.bf16.mxu0 0
        %2685 = vmatpush2.bf16.xpose.msra.mxu0 0
        %2686 = vmatprep.subr.bf16.mxu0 0
        %2687 = vmatpush2.bf16.xpose.msra.mxu0 0
        %2688 = vmatprep.subr.bf16.mxu0 0
        %2689 = vmatpush2.bf16.xpose.msra.mxu0 0
        %2690 = vmatprep.mubr.bf16.mxu0 0
        %2691 = vmatmul.mubr.bf16.gmra.mxu0 %v2653
        %v2692 = vpop.f32.mrf.mxu0
        %v2693 = vadd.f32 0.0, %v2692
        %v2694 = vpop.f32.mrf.mxu0
        %v2695 = vpop.f32.mrf.mxu0
        %v2696 = vadd.f32 0.0, %v2695
        %v2697 = vpop.f32.mrf.mxu0
        %2698 = vdwg.mxu0
        %vm2699 = vcmask 130048
        %v2700 = vsel %vm2699, %v2294, -inf
        %2701 = vmax.xlane.f32.xlu0 %v2700
        %v2702 = vpop.xlane.xlu0 %2701
        %v2703 = vsel %vm2699, %v2297, -inf
        %2704 = vmax.xlane.f32.xlu0 %v2703
        %v2705 = vpop.xlane.xlu0 %2704
        %v2706 = vsel %vm2699, %v2351, -inf
        %2707 = vmax.xlane.f32.xlu0 %v2706
        %v2708 = vpop.xlane.xlu0 %2707
        %v2709 = vsel %vm2699, %v2354, -inf
        %2710 = vmax.xlane.f32.xlu0 %v2709
        %v2711 = vpop.xlane.xlu0 %2710
        %v2712 = vsel %vm2699, %v2408, -inf
        %2713 = vmax.xlane.f32.xlu0 %v2712
        %v2714 = vpop.xlane.xlu0 %2713
        %v2715 = vsel %vm2699, %v2411, -inf
        %2716 = vmax.xlane.f32.xlu0 %v2715
        %v2717 = vpop.xlane.xlu0 %2716
        %v2718 = vsel %vm2699, %v2465, -inf
        %2719 = vmax.xlane.f32.xlu0 %v2718
        %v2720 = vpop.xlane.xlu0 %2719
        %v2721 = vsel %vm2699, %v2468, -inf
        %2722 = vmax.xlane.f32.xlu0 %v2721
        %v2723 = vpop.xlane.xlu0 %2722
        %v2724 = vsel %vm2699, %v2522, -inf
        %2725 = vmax.xlane.f32.xlu0 %v2724
        %v2726 = vpop.xlane.xlu0 %2725
        %v2727 = vsel %vm2699, %v2525, -inf
        %2728 = vmax.xlane.f32.xlu0 %v2727
        %v2729 = vpop.xlane.xlu0 %2728
        %v2730 = vsel %vm2699, %v2579, -inf
        %2731 = vmax.xlane.f32.xlu0 %v2730
        %v2732 = vpop.xlane.xlu0 %2731
        %v2733 = vsel %vm2699, %v2582, -inf
        %2734 = vmax.xlane.f32.xlu0 %v2733
        %v2735 = vpop.xlane.xlu0 %2734
        %v2736 = vsel %vm2699, %v2636, -inf
        %2737 = vmax.xlane.f32.xlu0 %v2736
        %v2738 = vpop.xlane.xlu0 %2737
        %v2739 = vsel %vm2699, %v2639, -inf
        %2740 = vmax.xlane.f32.xlu0 %v2739
        %v2741 = vpop.xlane.xlu0 %2740
        %v2742 = vsel %vm2699, %v2693, -inf
        %2743 = vmax.xlane.f32.xlu0 %v2742
        %v2744 = vpop.xlane.xlu0 %2743
        %v2745 = vsel %vm2699, %v2696, -inf
        %2746 = vmax.xlane.f32.xlu0 %v2745
        %v2747 = vpop.xlane.xlu0 %2746
        %v2748 = vsub.f32 %v2294, %v2702
        %v2749 = vsub.f32 %v2297, %v2705
        %v2750 = vsub.f32 %v2351, %v2708
        %v2751 = vsub.f32 %v2354, %v2711
        %v2752 = vsub.f32 %v2408, %v2714
        %v2753 = vsub.f32 %v2411, %v2717
        %v2754 = vsub.f32 %v2465, %v2720
        %v2755 = vsub.f32 %v2468, %v2723
        %v2756 = vsub.f32 %v2522, %v2726
        %v2757 = vsub.f32 %v2525, %v2729
        %v2758 = vsub.f32 %v2579, %v2732
        %v2759 = vsub.f32 %v2582, %v2735
        %v2760 = vsub.f32 %v2636, %v2738
        %v2761 = vsub.f32 %v2639, %v2741
        %v2762 = vsub.f32 %v2693, %v2744
        %v2763 = vsub.f32 %v2696, %v2747
        %v2764 = vmul.f32 %v2748, 1.442695
        %v2765 = vpow.pop %v2764
        %v2766 = vmul.f32 %v2749, 1.442695
        %v2767 = vpow.pop %v2766
        %v2768 = vmul.f32 %v2750, 1.442695
        %v2769 = vpow.pop %v2768
        %v2770 = vmul.f32 %v2751, 1.442695
        %v2771 = vpow.pop %v2770
        %v2772 = vmul.f32 %v2752, 1.442695
        %v2773 = vpow.pop %v2772
        %v2774 = vmul.f32 %v2753, 1.442695
        %v2775 = vpow.pop %v2774
        %v2776 = vmul.f32 %v2754, 1.442695
        %v2777 = vpow.pop %v2776
        %v2778 = vmul.f32 %v2755, 1.442695
        %v2779 = vpow.pop %v2778
        %v2780 = vmul.f32 %v2756, 1.442695
        %v2781 = vpow.pop %v2780
        %v2782 = vmul.f32 %v2757, 1.442695
        %v2783 = vpow.pop %v2782
        %v2784 = vmul.f32 %v2758, 1.442695
        %v2785 = vpow.pop %v2784
        %v2786 = vmul.f32 %v2759, 1.442695
        %v2787 = vpow.pop %v2786
        %v2788 = vmul.f32 %v2760, 1.442695
        %v2789 = vpow.pop %v2788
        %v2790 = vmul.f32 %v2761, 1.442695
        %v2791 = vpow.pop %v2790
        %v2792 = vmul.f32 %v2762, 1.442695
        %v2793 = vpow.pop %v2792
        %v2794 = vmul.f32 %v2763, 1.442695
        %v2795 = vpow.pop %v2794
        %v2796 = vsel %vm2699, %v2765, 0.0
        %2797 = vadd.xlane.f32.xlu0 %v2796
        %v2798 = vpop.xlane.xlu0 %2797
        %v2799 = vsel %vm2699, %v2767, 0.0
        %2800 = vadd.xlane.f32.xlu0 %v2799
        %v2801 = vpop.xlane.xlu0 %2800
        %v2802 = vsel %vm2699, %v2769, 0.0
        %2803 = vadd.xlane.f32.xlu0 %v2802
        %v2804 = vpop.xlane.xlu0 %2803
        %v2805 = vsel %vm2699, %v2771, 0.0
        %2806 = vadd.xlane.f32.xlu0 %v2805
        %v2807 = vpop.xlane.xlu0 %2806
        %v2808 = vsel %vm2699, %v2773, 0.0
        %2809 = vadd.xlane.f32.xlu0 %v2808
        %v2810 = vpop.xlane.xlu0 %2809
        %v2811 = vsel %vm2699, %v2775, 0.0
        %2812 = vadd.xlane.f32.xlu0 %v2811
        %v2813 = vpop.xlane.xlu0 %2812
        %v2814 = vsel %vm2699, %v2777, 0.0
        %2815 = vadd.xlane.f32.xlu0 %v2814
        %v2816 = vpop.xlane.xlu0 %2815
        %v2817 = vsel %vm2699, %v2779, 0.0
        %2818 = vadd.xlane.f32.xlu0 %v2817
        %v2819 = vpop.xlane.xlu0 %2818
        %v2820 = vsel %vm2699, %v2781, 0.0
        %2821 = vadd.xlane.f32.xlu0 %v2820
        %v2822 = vpop.xlane.xlu0 %2821
        %v2823 = vsel %vm2699, %v2783, 0.0
        %2824 = vadd.xlane.f32.xlu0 %v2823
        %v2825 = vpop.xlane.xlu0 %2824
        %v2826 = vsel %vm2699, %v2785, 0.0
        %2827 = vadd.xlane.f32.xlu0 %v2826
        %v2828 = vpop.xlane.xlu0 %2827
        %v2829 = vsel %vm2699, %v2787, 0.0
        %2830 = vadd.xlane.f32.xlu0 %v2829
        %v2831 = vpop.xlane.xlu0 %2830
        %v2832 = vsel %vm2699, %v2789, 0.0
        %2833 = vadd.xlane.f32.xlu0 %v2832
        %v2834 = vpop.xlane.xlu0 %2833
        %v2835 = vsel %vm2699, %v2791, 0.0
        %2836 = vadd.xlane.f32.xlu0 %v2835
        %v2837 = vpop.xlane.xlu0 %2836
        %v2838 = vsel %vm2699, %v2793, 0.0
        %2839 = vadd.xlane.f32.xlu0 %v2838
        %v2840 = vpop.xlane.xlu0 %2839
        %v2841 = vsel %vm2699, %v2795, 0.0
        %2842 = vadd.xlane.f32.xlu0 %v2841
        %v2843 = vpop.xlane.xlu0 %2842
        %v2844 = vrcp.pop %v2798
        %v2845 = vrcp.pop %v2801
        %v2846 = vrcp.pop %v2804
        %v2847 = vrcp.pop %v2807
        %v2848 = vrcp.pop %v2810
        %v2849 = vrcp.pop %v2813
        %v2850 = vrcp.pop %v2816
        %v2851 = vrcp.pop %v2819
        %v2852 = vrcp.pop %v2822
        %v2853 = vrcp.pop %v2825
        %v2854 = vrcp.pop %v2828
        %v2855 = vrcp.pop %v2831
        %v2856 = vrcp.pop %v2834
        %v2857 = vrcp.pop %v2837
        %v2858 = vrcp.pop %v2840
        %v2859 = vrcp.pop %v2843
        %v2860 = vmul.f32 %v2765, %v2844
        %v2861 = vmul.f32 %v2767, %v2845
        %v2862 = vmul.f32 %v2769, %v2846
        %v2863 = vmul.f32 %v2771, %v2847
        %v2864 = vmul.f32 %v2773, %v2848
        %v2865 = vmul.f32 %v2775, %v2849
        %v2866 = vmul.f32 %v2777, %v2850
        %v2867 = vmul.f32 %v2779, %v2851
        %v2868 = vmul.f32 %v2781, %v2852
        %v2869 = vmul.f32 %v2783, %v2853
        %v2870 = vmul.f32 %v2785, %v2854
        %v2871 = vmul.f32 %v2787, %v2855
        %v2872 = vmul.f32 %v2789, %v2856
        %v2873 = vmul.f32 %v2791, %v2857
        %v2874 = vmul.f32 %v2793, %v2858
        %v2875 = vmul.f32 %v2795, %v2859
        %v2876 = vpack.c.bf16 %v2861, %v2860
        %v2877 = vpack.c.bf16 %v2863, %v2862
        %v2878 = vpack.c.bf16 %v2865, %v2864
        %v2879 = vpack.c.bf16 %v2867, %v2866
        %v2880 = vpack.c.bf16 %v2869, %v2868
        %v2881 = vpack.c.bf16 %v2871, %v2870
        %v2882 = vpack.c.bf16 %v2873, %v2872
        %v2883 = vpack.c.bf16 %v2875, %v2874
        %v2886 = vunpack.c.l.b16 %v2226
        %v2887 = vunpack.c.l.b16 %v2227
        %v2888 = vpack.c.b16 %v2887, %v2886
        %v2891 = vsel %vm2699, %v2876, 0
        %2893 = vmatprep.subr.bf16.mxu0 0
        %2894 = vmatpush1.bf16.msra.mxu0 0
        %2895 = vmatprep.subr.bf16.mxu0 0
        %2896 = vmatpush1.bf16.msra.mxu0 0
        %2897 = vmatprep.subr.bf16.mxu0 0
        %2898 = vmatpush1.bf16.msra.mxu0 0
        %2899 = vmatprep.subr.bf16.mxu0 0
        %2900 = vmatpush1.bf16.msra.mxu0 0
        %2901 = vmatprep.subr.bf16.mxu0 0
        %2902 = vmatpush1.bf16.msra.mxu0 0
        %2903 = vmatprep.subr.bf16.mxu0 0
        %2904 = vmatpush1.bf16.msra.mxu0 0
        %2905 = vmatprep.subr.bf16.mxu0 0
        %2906 = vmatpush1.bf16.msra.mxu0 0
        %2907 = vmatprep.subr.bf16.mxu0 0
        %2908 = vmatpush1.bf16.msra.mxu0 %v2888
        %2909 = vmatprep.subr.bf16.mxu0 0
        %2910 = vmatpush2.bf16.msra.mxu0 0
        %2911 = vmatprep.subr.bf16.mxu0 0
        %2912 = vmatpush2.bf16.msra.mxu0 0
        %2913 = vmatprep.subr.bf16.mxu0 0
        %2914 = vmatpush2.bf16.msra.mxu0 0
        %2915 = vmatprep.subr.bf16.mxu0 0
        %2916 = vmatpush2.bf16.msra.mxu0 0
        %2917 = vmatprep.subr.bf16.mxu0 0
        %2918 = vmatpush2.bf16.msra.mxu0 0
        %2919 = vmatprep.subr.bf16.mxu0 0
        %2920 = vmatpush2.bf16.msra.mxu0 0
        %2921 = vmatprep.subr.bf16.mxu0 0
        %2922 = vmatpush2.bf16.msra.mxu0 0
        %2923 = vmatprep.subr.bf16.mxu0 0
        %2924 = vmatpush2.bf16.msra.mxu0 0
        %2925 = vmatprep.mubr.bf16.mxu0 0
        %2926 = vmatmul.mubr.bf16.gmra.mxu0 %v2891
        %v2927 = vpop.f32.mrf.mxu0
        %v2928 = vadd.f32 0.0, %v2927
        %v2929 = vpop.f32.mrf.mxu0
        %v2930 = vpop.f32.mrf.mxu0
        %v2931 = vadd.f32 0.0, %v2930
        %v2932 = vpop.f32.mrf.mxu0
        %2933 = vdwg.mxu0
        %v2936 = vunpack.c.l.b16 %v2228
        %v2937 = vunpack.c.l.b16 %v2229
        %v2938 = vpack.c.b16 %v2937, %v2936
        %v2941 = vsel %vm2699, %v2877, 0
        %2943 = vmatprep.subr.bf16.mxu0 0
        %2944 = vmatpush1.bf16.msra.mxu0 0
        %2945 = vmatprep.subr.bf16.mxu0 0
        %2946 = vmatpush1.bf16.msra.mxu0 0
        %2947 = vmatprep.subr.bf16.mxu0 0
        %2948 = vmatpush1.bf16.msra.mxu0 0
        %2949 = vmatprep.subr.bf16.mxu0 0
        %2950 = vmatpush1.bf16.msra.mxu0 0
        %2951 = vmatprep.subr.bf16.mxu0 0
        %2952 = vmatpush1.bf16.msra.mxu0 0
        %2953 = vmatprep.subr.bf16.mxu0 0
        %2954 = vmatpush1.bf16.msra.mxu0 0
        %2955 = vmatprep.subr.bf16.mxu0 0
        %2956 = vmatpush1.bf16.msra.mxu0 0
        %2957 = vmatprep.subr.bf16.mxu0 0
        %2958 = vmatpush1.bf16.msra.mxu0 %v2938
        %2959 = vmatprep.subr.bf16.mxu0 0
        %2960 = vmatpush2.bf16.msra.mxu0 0
        %2961 = vmatprep.subr.bf16.mxu0 0
        %2962 = vmatpush2.bf16.msra.mxu0 0
        %2963 = vmatprep.subr.bf16.mxu0 0
        %2964 = vmatpush2.bf16.msra.mxu0 0
        %2965 = vmatprep.subr.bf16.mxu0 0
        %2966 = vmatpush2.bf16.msra.mxu0 0
        %2967 = vmatprep.subr.bf16.mxu0 0
        %2968 = vmatpush2.bf16.msra.mxu0 0
        %2969 = vmatprep.subr.bf16.mxu0 0
        %2970 = vmatpush2.bf16.msra.mxu0 0
        %2971 = vmatprep.subr.bf16.mxu0 0
        %2972 = vmatpush2.bf16.msra.mxu0 0
        %2973 = vmatprep.subr.bf16.mxu0 0
        %2974 = vmatpush2.bf16.msra.mxu0 0
        %2975 = vmatprep.mubr.bf16.mxu0 0
        %2976 = vmatmul.mubr.bf16.gmra.mxu0 %v2941
        %v2977 = vpop.f32.mrf.mxu0
        %v2978 = vadd.f32 0.0, %v2977
        %v2979 = vpop.f32.mrf.mxu0
        %v2980 = vpop.f32.mrf.mxu0
        %v2981 = vadd.f32 0.0, %v2980
        %v2982 = vpop.f32.mrf.mxu0
        %2983 = vdwg.mxu0
        %v2986 = vunpack.c.l.b16 %v2230
        %v2987 = vunpack.c.l.b16 %v2231
        %v2988 = vpack.c.b16 %v2987, %v2986
        %v2991 = vsel %vm2699, %v2878, 0
        %2993 = vmatprep.subr.bf16.mxu0 0
        %2994 = vmatpush1.bf16.msra.mxu0 0
        %2995 = vmatprep.subr.bf16.mxu0 0
        %2996 = vmatpush1.bf16.msra.mxu0 0
        %2997 = vmatprep.subr.bf16.mxu0 0
        %2998 = vmatpush1.bf16.msra.mxu0 0
        %2999 = vmatprep.subr.bf16.mxu0 0
        %3000 = vmatpush1.bf16.msra.mxu0 0
        %3001 = vmatprep.subr.bf16.mxu0 0
        %3002 = vmatpush1.bf16.msra.mxu0 0
        %3003 = vmatprep.subr.bf16.mxu0 0
        %3004 = vmatpush1.bf16.msra.mxu0 0
        %3005 = vmatprep.subr.bf16.mxu0 0
        %3006 = vmatpush1.bf16.msra.mxu0 0
        %3007 = vmatprep.subr.bf16.mxu0 0
        %3008 = vmatpush1.bf16.msra.mxu0 %v2988
        %3009 = vmatprep.subr.bf16.mxu0 0
        %3010 = vmatpush2.bf16.msra.mxu0 0
        %3011 = vmatprep.subr.bf16.mxu0 0
        %3012 = vmatpush2.bf16.msra.mxu0 0
        %3013 = vmatprep.subr.bf16.mxu0 0
        %3014 = vmatpush2.bf16.msra.mxu0 0
        %3015 = vmatprep.subr.bf16.mxu0 0
        %3016 = vmatpush2.bf16.msra.mxu0 0
        %3017 = vmatprep.subr.bf16.mxu0 0
        %3018 = vmatpush2.bf16.msra.mxu0 0
        %3019 = vmatprep.subr.bf16.mxu0 0
        %3020 = vmatpush2.bf16.msra.mxu0 0
        %3021 = vmatprep.subr.bf16.mxu0 0
        %3022 = vmatpush2.bf16.msra.mxu0 0
        %3023 = vmatprep.subr.bf16.mxu0 0
        %3024 = vmatpush2.bf16.msra.mxu0 0
        %3025 = vmatprep.mubr.bf16.mxu0 0
        %3026 = vmatmul.mubr.bf16.gmra.mxu0 %v2991
        %v3027 = vpop.f32.mrf.mxu0
        %v3028 = vadd.f32 0.0, %v3027
        %v3029 = vpop.f32.mrf.mxu0
        %v3030 = vpop.f32.mrf.mxu0
        %v3031 = vadd.f32 0.0, %v3030
        %v3032 = vpop.f32.mrf.mxu0
        %3033 = vdwg.mxu0
        %v3036 = vunpack.c.l.b16 %v2232
        %v3037 = vunpack.c.l.b16 %v2233
        %v3038 = vpack.c.b16 %v3037, %v3036
        %v3041 = vsel %vm2699, %v2879, 0
        %3043 = vmatprep.subr.bf16.mxu0 0
        %3044 = vmatpush1.bf16.msra.mxu0 0
        %3045 = vmatprep.subr.bf16.mxu0 0
        %3046 = vmatpush1.bf16.msra.mxu0 0
        %3047 = vmatprep.subr.bf16.mxu0 0
        %3048 = vmatpush1.bf16.msra.mxu0 0
        %3049 = vmatprep.subr.bf16.mxu0 0
        %3050 = vmatpush1.bf16.msra.mxu0 0
        %3051 = vmatprep.subr.bf16.mxu0 0
        %3052 = vmatpush1.bf16.msra.mxu0 0
        %3053 = vmatprep.subr.bf16.mxu0 0
        %3054 = vmatpush1.bf16.msra.mxu0 0
        %3055 = vmatprep.subr.bf16.mxu0 0
        %3056 = vmatpush1.bf16.msra.mxu0 0
        %3057 = vmatprep.subr.bf16.mxu0 0
        %3058 = vmatpush1.bf16.msra.mxu0 %v3038
        %3059 = vmatprep.subr.bf16.mxu0 0
        %3060 = vmatpush2.bf16.msra.mxu0 0
        %3061 = vmatprep.subr.bf16.mxu0 0
        %3062 = vmatpush2.bf16.msra.mxu0 0
        %3063 = vmatprep.subr.bf16.mxu0 0
        %3064 = vmatpush2.bf16.msra.mxu0 0
        %3065 = vmatprep.subr.bf16.mxu0 0
        %3066 = vmatpush2.bf16.msra.mxu0 0
        %3067 = vmatprep.subr.bf16.mxu0 0
        %3068 = vmatpush2.bf16.msra.mxu0 0
        %3069 = vmatprep.subr.bf16.mxu0 0
        %3070 = vmatpush2.bf16.msra.mxu0 0
        %3071 = vmatprep.subr.bf16.mxu0 0
        %3072 = vmatpush2.bf16.msra.mxu0 0
        %3073 = vmatprep.subr.bf16.mxu0 0
        %3074 = vmatpush2.bf16.msra.mxu0 0
        %3075 = vmatprep.mubr.bf16.mxu0 0
        %3076 = vmatmul.mubr.bf16.gmra.mxu0 %v3041
        %v3077 = vpop.f32.mrf.mxu0
        %v3078 = vadd.f32 0.0, %v3077
        %v3079 = vpop.f32.mrf.mxu0
        %v3080 = vpop.f32.mrf.mxu0
        %v3081 = vadd.f32 0.0, %v3080
        %v3082 = vpop.f32.mrf.mxu0
        %3083 = vdwg.mxu0
        %v3086 = vunpack.c.l.b16 %v2234
        %v3087 = vunpack.c.l.b16 %v2235
        %v3088 = vpack.c.b16 %v3087, %v3086
        %v3091 = vsel %vm2699, %v2880, 0
        %3093 = vmatprep.subr.bf16.mxu0 0
        %3094 = vmatpush1.bf16.msra.mxu0 0
        %3095 = vmatprep.subr.bf16.mxu0 0
        %3096 = vmatpush1.bf16.msra.mxu0 0
        %3097 = vmatprep.subr.bf16.mxu0 0
        %3098 = vmatpush1.bf16.msra.mxu0 0
        %3099 = vmatprep.subr.bf16.mxu0 0
        %3100 = vmatpush1.bf16.msra.mxu0 0
        %3101 = vmatprep.subr.bf16.mxu0 0
        %3102 = vmatpush1.bf16.msra.mxu0 0
        %3103 = vmatprep.subr.bf16.mxu0 0
        %3104 = vmatpush1.bf16.msra.mxu0 0
        %3105 = vmatprep.subr.bf16.mxu0 0
        %3106 = vmatpush1.bf16.msra.mxu0 0
        %3107 = vmatprep.subr.bf16.mxu0 0
        %3108 = vmatpush1.bf16.msra.mxu0 %v3088
        %3109 = vmatprep.subr.bf16.mxu0 0
        %3110 = vmatpush2.bf16.msra.mxu0 0
        %3111 = vmatprep.subr.bf16.mxu0 0
        %3112 = vmatpush2.bf16.msra.mxu0 0
        %3113 = vmatprep.subr.bf16.mxu0 0
        %3114 = vmatpush2.bf16.msra.mxu0 0
        %3115 = vmatprep.subr.bf16.mxu0 0
        %3116 = vmatpush2.bf16.msra.mxu0 0
        %3117 = vmatprep.subr.bf16.mxu0 0
        %3118 = vmatpush2.bf16.msra.mxu0 0
        %3119 = vmatprep.subr.bf16.mxu0 0
        %3120 = vmatpush2.bf16.msra.mxu0 0
        %3121 = vmatprep.subr.bf16.mxu0 0
        %3122 = vmatpush2.bf16.msra.mxu0 0
        %3123 = vmatprep.subr.bf16.mxu0 0
        %3124 = vmatpush2.bf16.msra.mxu0 0
        %3125 = vmatprep.mubr.bf16.mxu0 0
        %3126 = vmatmul.mubr.bf16.gmra.mxu0 %v3091
        %v3127 = vpop.f32.mrf.mxu0
        %v3128 = vadd.f32 0.0, %v3127
        %v3129 = vpop.f32.mrf.mxu0
        %v3130 = vpop.f32.mrf.mxu0
        %v3131 = vadd.f32 0.0, %v3130
        %v3132 = vpop.f32.mrf.mxu0
        %3133 = vdwg.mxu0
        %v3136 = vunpack.c.l.b16 %v2236
        %v3137 = vunpack.c.l.b16 %v2237
        %v3138 = vpack.c.b16 %v3137, %v3136
        %v3141 = vsel %vm2699, %v2881, 0
        %3143 = vmatprep.subr.bf16.mxu0 0
        %3144 = vmatpush1.bf16.msra.mxu0 0
        %3145 = vmatprep.subr.bf16.mxu0 0
        %3146 = vmatpush1.bf16.msra.mxu0 0
        %3147 = vmatprep.subr.bf16.mxu0 0
        %3148 = vmatpush1.bf16.msra.mxu0 0
        %3149 = vmatprep.subr.bf16.mxu0 0
        %3150 = vmatpush1.bf16.msra.mxu0 0
        %3151 = vmatprep.subr.bf16.mxu0 0
        %3152 = vmatpush1.bf16.msra.mxu0 0
        %3153 = vmatprep.subr.bf16.mxu0 0
        %3154 = vmatpush1.bf16.msra.mxu0 0
        %3155 = vmatprep.subr.bf16.mxu0 0
        %3156 = vmatpush1.bf16.msra.mxu0 0
        %3157 = vmatprep.subr.bf16.mxu0 0
        %3158 = vmatpush1.bf16.msra.mxu0 %v3138
        %3159 = vmatprep.subr.bf16.mxu0 0
        %3160 = vmatpush2.bf16.msra.mxu0 0
        %3161 = vmatprep.subr.bf16.mxu0 0
        %3162 = vmatpush2.bf16.msra.mxu0 0
        %3163 = vmatprep.subr.bf16.mxu0 0
        %3164 = vmatpush2.bf16.msra.mxu0 0
        %3165 = vmatprep.subr.bf16.mxu0 0
        %3166 = vmatpush2.bf16.msra.mxu0 0
        %3167 = vmatprep.subr.bf16.mxu0 0
        %3168 = vmatpush2.bf16.msra.mxu0 0
        %3169 = vmatprep.subr.bf16.mxu0 0
        %3170 = vmatpush2.bf16.msra.mxu0 0
        %3171 = vmatprep.subr.bf16.mxu0 0
        %3172 = vmatpush2.bf16.msra.mxu0 0
        %3173 = vmatprep.subr.bf16.mxu0 0
        %3174 = vmatpush2.bf16.msra.mxu0 0
        %3175 = vmatprep.mubr.bf16.mxu0 0
        %3176 = vmatmul.mubr.bf16.gmra.mxu0 %v3141
        %v3177 = vpop.f32.mrf.mxu0
        %v3178 = vadd.f32 0.0, %v3177
        %v3179 = vpop.f32.mrf.mxu0
        %v3180 = vpop.f32.mrf.mxu0
        %v3181 = vadd.f32 0.0, %v3180
        %v3182 = vpop.f32.mrf.mxu0
        %3183 = vdwg.mxu0
        %v3186 = vunpack.c.l.b16 %v2238
        %v3187 = vunpack.c.l.b16 %v2239
        %v3188 = vpack.c.b16 %v3187, %v3186
        %v3191 = vsel %vm2699, %v2882, 0
        %3193 = vmatprep.subr.bf16.mxu0 0
        %3194 = vmatpush1.bf16.msra.mxu0 0
        %3195 = vmatprep.subr.bf16.mxu0 0
        %3196 = vmatpush1.bf16.msra.mxu0 0
        %3197 = vmatprep.subr.bf16.mxu0 0
        %3198 = vmatpush1.bf16.msra.mxu0 0
        %3199 = vmatprep.subr.bf16.mxu0 0
        %3200 = vmatpush1.bf16.msra.mxu0 0
        %3201 = vmatprep.subr.bf16.mxu0 0
        %3202 = vmatpush1.bf16.msra.mxu0 0
        %3203 = vmatprep.subr.bf16.mxu0 0
        %3204 = vmatpush1.bf16.msra.mxu0 0
        %3205 = vmatprep.subr.bf16.mxu0 0
        %3206 = vmatpush1.bf16.msra.mxu0 0
        %3207 = vmatprep.subr.bf16.mxu0 0
        %3208 = vmatpush1.bf16.msra.mxu0 %v3188
        %3209 = vmatprep.subr.bf16.mxu0 0
        %3210 = vmatpush2.bf16.msra.mxu0 0
        %3211 = vmatprep.subr.bf16.mxu0 0
        %3212 = vmatpush2.bf16.msra.mxu0 0
        %3213 = vmatprep.subr.bf16.mxu0 0
        %3214 = vmatpush2.bf16.msra.mxu0 0
        %3215 = vmatprep.subr.bf16.mxu0 0
        %3216 = vmatpush2.bf16.msra.mxu0 0
        %3217 = vmatprep.subr.bf16.mxu0 0
        %3218 = vmatpush2.bf16.msra.mxu0 0
        %3219 = vmatprep.subr.bf16.mxu0 0
        %3220 = vmatpush2.bf16.msra.mxu0 0
        %3221 = vmatprep.subr.bf16.mxu0 0
        %3222 = vmatpush2.bf16.msra.mxu0 0
        %3223 = vmatprep.subr.bf16.mxu0 0
        %3224 = vmatpush2.bf16.msra.mxu0 0
        %3225 = vmatprep.mubr.bf16.mxu0 0
        %3226 = vmatmul.mubr.bf16.gmra.mxu0 %v3191
        %v3227 = vpop.f32.mrf.mxu0
        %v3228 = vadd.f32 0.0, %v3227
        %v3229 = vpop.f32.mrf.mxu0
        %v3230 = vpop.f32.mrf.mxu0
        %v3231 = vadd.f32 0.0, %v3230
        %v3232 = vpop.f32.mrf.mxu0
        %3233 = vdwg.mxu0
        %v3236 = vunpack.c.l.b16 %v2240
        %v3237 = vunpack.c.l.b16 %v2241
        %v3238 = vpack.c.b16 %v3237, %v3236
        %v3241 = vsel %vm2699, %v2883, 0
        %3243 = vmatprep.subr.bf16.mxu0 0
        %3244 = vmatpush1.bf16.msra.mxu0 0
        %3245 = vmatprep.subr.bf16.mxu0 0
        %3246 = vmatpush1.bf16.msra.mxu0 0
        %3247 = vmatprep.subr.bf16.mxu0 0
        %3248 = vmatpush1.bf16.msra.mxu0 0
        %3249 = vmatprep.subr.bf16.mxu0 0
        %3250 = vmatpush1.bf16.msra.mxu0 0
        %3251 = vmatprep.subr.bf16.mxu0 0
        %3252 = vmatpush1.bf16.msra.mxu0 0
        %3253 = vmatprep.subr.bf16.mxu0 0
        %3254 = vmatpush1.bf16.msra.mxu0 0
        %3255 = vmatprep.subr.bf16.mxu0 0
        %3256 = vmatpush1.bf16.msra.mxu0 0
        %3257 = vmatprep.subr.bf16.mxu0 0
        %3258 = vmatpush1.bf16.msra.mxu0 %v3238
        %3259 = vmatprep.subr.bf16.mxu0 0
        %3260 = vmatpush2.bf16.msra.mxu0 0
        %3261 = vmatprep.subr.bf16.mxu0 0
        %3262 = vmatpush2.bf16.msra.mxu0 0
        %3263 = vmatprep.subr.bf16.mxu0 0
        %3264 = vmatpush2.bf16.msra.mxu0 0
        %3265 = vmatprep.subr.bf16.mxu0 0
        %3266 = vmatpush2.bf16.msra.mxu0 0
        %3267 = vmatprep.subr.bf16.mxu0 0
        %3268 = vmatpush2.bf16.msra.mxu0 0
        %3269 = vmatprep.subr.bf16.mxu0 0
        %3270 = vmatpush2.bf16.msra.mxu0 0
        %3271 = vmatprep.subr.bf16.mxu0 0
        %3272 = vmatpush2.bf16.msra.mxu0 0
        %3273 = vmatprep.subr.bf16.mxu0 0
        %3274 = vmatpush2.bf16.msra.mxu0 0
        %3275 = vmatprep.mubr.bf16.mxu0 0
        %3276 = vmatmul.mubr.bf16.gmra.mxu0 %v3241
        %v3277 = vpop.f32.mrf.mxu0
        %v3278 = vadd.f32 0.0, %v3277
        %v3279 = vpop.f32.mrf.mxu0
        %v3280 = vpop.f32.mrf.mxu0
        %v3281 = vadd.f32 0.0, %v3280
        %v3282 = vpop.f32.mrf.mxu0
        %3283 = vdwg.mxu0
        %v3284 = vpack.c.bf16 %v2931, %v2928
        %v3285 = vpack.c.bf16 %v2981, %v2978
        %v3286 = vpack.c.bf16 %v3031, %v3028
        %v3287 = vpack.c.bf16 %v3081, %v3078
        %v3288 = vpack.c.bf16 %v3131, %v3128
        %v3289 = vpack.c.bf16 %v3181, %v3178
        %v3290 = vpack.c.bf16 %v3231, %v3228
        %v3291 = vpack.c.bf16 %v3281, %v3278
        %3293 = vrot.lane.b32.xlu0 %v3285, 4
        %v3294 = vpop.permute.xlu0 %3293
        %3296 = vrot.lane.b32.xlu0 %v3286, 8
        %v3297 = vpop.permute.xlu0 %3296
        %3299 = vrot.lane.b32.xlu0 %v3287, 12
        %v3300 = vpop.permute.xlu0 %3299
        %3302 = vrot.lane.b32.xlu0 %v3288, 16
        %v3303 = vpop.permute.xlu0 %3302
        %3305 = vrot.lane.b32.xlu0 %v3289, 20
        %v3306 = vpop.permute.xlu0 %3305
        %3308 = vrot.lane.b32.xlu0 %v3290, 24
        %v3309 = vpop.permute.xlu0 %3308
        %3311 = vrot.lane.b32.xlu0 %v3291, 28
        %v3312 = vpop.permute.xlu0 %3311
        %v3315 = vsel %vm2252, %v3284, %v3294
        %vm3316 = vcmask 64512
        %v3318 = vsel %vm3316, %v3315, %v3297
        %vm3319 = vcmask 97280
        %v3321 = vsel %vm3319, %v3318, %v3300
        %v3323 = vsel %vm2699, %v3321, %v3303
        %vm3324 = vcmask 162816
        %v3326 = vsel %vm3324, %v3323, %v3306
        %vm3327 = vcmask 195584
        %v3329 = vsel %vm3327, %v3326, %v3309
        %vm3330 = vcmask 228352
        %v3332 = vsel %vm3330, %v3329, %v3312
        %v3333 = vld [vmem:[%s6] sm:$0xf]
        %v3334 = vld [vmem:[%s6 + $0x4] sm:$0xf]
        %v3335 = vld [vmem:[%s6 + $0x8] sm:$0xf]
        %v3336 = vld [vmem:[%s6 + $0xc] sm:$0xf]
        %v3337 = vld [vmem:[%s7] sm:$0x1]
        %v3339 = vlaneseq
        %v3340 = vshrl.u32 %v3339, 7
        %v3341 = vsub.s32 0, %v3340
        %v3342 = vrot.slane %v3337, %v3341
        %v3348 = vunpack.c.l.b16 %v3333
        %v3349 = vunpack.c.l.b16 %v3334
        %v3350 = vunpack.c.l.b16 %v3335
        %v3351 = vunpack.c.l.b16 %v3336
        %v3352 = vpack.c.b16 %v3349, %v3348
        %v3353 = vpack.c.b16 %v3351, %v3350
        %vm3356 = vcmask 261120
        %v3357 = vsel %vm3356, %v3332, 0
        %3359 = vmatprep.subr.bf16.mxu0 0
        %3360 = vmatpush1.bf16.msra.mxu0 0
        %3361 = vmatprep.subr.bf16.mxu0 0
        %3362 = vmatpush1.bf16.msra.mxu0 0
        %3363 = vmatprep.subr.bf16.mxu0 0
        %3364 = vmatpush1.bf16.msra.mxu0 0
        %3365 = vmatprep.subr.bf16.mxu0 0
        %3366 = vmatpush1.bf16.msra.mxu0 0
        %3367 = vmatprep.subr.bf16.mxu0 0
        %3368 = vmatpush1.bf16.msra.mxu0 0
        %3369 = vmatprep.subr.bf16.mxu0 0
        %3370 = vmatpush1.bf16.msra.mxu0 0
        %3371 = vmatprep.subr.bf16.mxu0 0
        %3372 = vmatpush1.bf16.msra.mxu0 %v3353
        %3373 = vmatprep.subr.bf16.mxu0 0
        %3374 = vmatpush1.bf16.msra.mxu0 %v3352
        %3375 = vmatprep.subr.bf16.mxu0 0
        %3376 = vmatpush2.bf16.msra.mxu0 0
        %3377 = vmatprep.subr.bf16.mxu0 0
        %3378 = vmatpush2.bf16.msra.mxu0 0
        %3379 = vmatprep.subr.bf16.mxu0 0
        %3380 = vmatpush2.bf16.msra.mxu0 0
        %3381 = vmatprep.subr.bf16.mxu0 0
        %3382 = vmatpush2.bf16.msra.mxu0 0
        %3383 = vmatprep.subr.bf16.mxu0 0
        %3384 = vmatpush2.bf16.msra.mxu0 0
        %3385 = vmatprep.subr.bf16.mxu0 0
        %3386 = vmatpush2.bf16.msra.mxu0 0
        %3387 = vmatprep.subr.bf16.mxu0 0
        %3388 = vmatpush2.bf16.msra.mxu0 0
        %3389 = vmatprep.subr.bf16.mxu0 0
        %3390 = vmatpush2.bf16.msra.mxu0 0
        %3391 = vmatprep.mubr.bf16.mxu0 0
        %3392 = vmatmul.mubr.bf16.gmra.mxu0 %v3357
        %v3393 = vpop.f32.mrf.mxu0
        %v3394 = vadd.f32 %v3342, %v3393
        %v3395 = vpop.f32.mrf.mxu0
        %v3396 = vpop.f32.mrf.mxu0
        %v3397 = vadd.f32 %v3342, %v3396
        %v3398 = vpop.f32.mrf.mxu0
        %3399 = vdwg.mxu0
        %s3400 = scalar_lea.vmem %s479, %s482
        %v3401 = vld [vmem:[%s3400] sm:$0xff]
        %v3402 = vld [vmem:[%s3400 + $0x8] sm:$0xff]
        %v3403 = vadd.f32 %v3401, %v3394
        %v3404 = vadd.f32 %v3402, %v3397
        %v3405 = vld [vmem:[%s8] sm:$0x1]
        %v3406 = vld [vmem:[%s9] sm:$0x1]
        %v3407 = vsel %vm3356, %v3403, 0.0
        %3408 = vadd.xlane.f32.xlu0 %v3407
        %v3409 = vpop.xlane.xlu0 %3408
        %v3410 = vsel %vm3356, %v3404, 0.0
        %3411 = vadd.xlane.f32.xlu0 %v3410
        %v3412 = vpop.xlane.xlu0 %3411
        %v3413 = vrcp.pop 32.0
        %v3414 = vmul.f32 %v3409, %v3413
        %v3415 = vmul.f32 %v3412, %v3413
        %v3416 = vsub.f32 %v3403, %v3414
        %v3417 = vsub.f32 %v3404, %v3415
        %v3418 = vmul.f32 %v3416, %v3416
        %v3419 = vmul.f32 %v3417, %v3417
        %v3420 = vsel %vm3356, %v3418, 0.0
        %3421 = vadd.xlane.f32.xlu0 %v3420
        %v3422 = vpop.xlane.xlu0 %3421
        %v3423 = vsel %vm3356, %v3419, 0.0
        %3424 = vadd.xlane.f32.xlu0 %v3423
        %v3425 = vpop.xlane.xlu0 %3424
        %v3426 = vmul.f32 %v3422, %v3413
        %v3427 = vmul.f32 %v3425, %v3413
        %v3428 = vadd.f32 %v3426, 1e-05
        %v3429 = vadd.f32 %v3427, 1e-05
        %v3430 = vrsqrt.pop %v3428
        %v3431 = vrsqrt.pop %v3429
        %v3432 = vmul.f32 %v3416, %v3430
        %v3433 = vmul.f32 %v3417, %v3431
        %v3435 = vlaneseq
        %v3436 = vshrl.u32 %v3435, 7
        %v3437 = vsub.s32 0, %v3436
        %v3438 = vrot.slane %v3405, %v3437
        %v3440 = vmul.f32 %v3432, %v3438
        %v3441 = vmul.f32 %v3433, %v3438
        %v3443 = vlaneseq
        %v3444 = vshrl.u32 %v3443, 7
        %v3445 = vsub.s32 0, %v3444
        %v3446 = vrot.slane %v3406, %v3445
        %v3448 = vadd.f32 %v3440, %v3446
        %v3449 = vadd.f32 %v3441, %v3446
        %v3450 = vpack.c.bf16 %v3449, %v3448
        %v3451 = vld [vmem:[%s10] sm:$0xf]
        %v3452 = vld [vmem:[%s10 + $0x4] sm:$0xf]
        %v3453 = vld [vmem:[%s10 + $0x8] sm:$0xf]
        %v3454 = vld [vmem:[%s10 + $0xc] sm:$0xf]
        %v3455 = vld [vmem:[%s11] sm:$0x1]
        %v3457 = vlaneseq
        %v3458 = vshrl.u32 %v3457, 7
        %v3459 = vsub.s32 0, %v3458
        %v3460 = vrot.slane %v3455, %v3459
        %v3466 = vunpack.c.l.b16 %v3451
        %v3467 = vunpack.c.l.b16 %v3452
        %v3468 = vunpack.c.l.b16 %v3453
        %v3469 = vunpack.c.l.b16 %v3454
        %v3470 = vpack.c.b16 %v3467, %v3466
        %v3471 = vpack.c.b16 %v3469, %v3468
        %v3475 = vsel %vm3356, %v3450, 0
        %3477 = vmatprep.subr.bf16.mxu0 0
        %3478 = vmatpush1.bf16.msra.mxu0 0
        %3479 = vmatprep.subr.bf16.mxu0 0
        %3480 = vmatpush1.bf16.msra.mxu0 0
        %3481 = vmatprep.subr.bf16.mxu0 0
        %3482 = vmatpush1.bf16.msra.mxu0 0
        %3483 = vmatprep.subr.bf16.mxu0 0
        %3484 = vmatpush1.bf16.msra.mxu0 0
        %3485 = vmatprep.subr.bf16.mxu0 0
        %3486 = vmatpush1.bf16.msra.mxu0 0
        %3487 = vmatprep.subr.bf16.mxu0 0
        %3488 = vmatpush1.bf16.msra.mxu0 0
        %3489 = vmatprep.subr.bf16.mxu0 0
        %3490 = vmatpush1.bf16.msra.mxu0 %v3471
        %3491 = vmatprep.subr.bf16.mxu0 0
        %3492 = vmatpush1.bf16.msra.mxu0 %v3470
        %3493 = vmatprep.subr.bf16.mxu0 0
        %3494 = vmatpush2.bf16.msra.mxu0 0
        %3495 = vmatprep.subr.bf16.mxu0 0
        %3496 = vmatpush2.bf16.msra.mxu0 0
        %3497 = vmatprep.subr.bf16.mxu0 0
        %3498 = vmatpush2.bf16.msra.mxu0 0
        %3499 = vmatprep.subr.bf16.mxu0 0
        %3500 = vmatpush2.bf16.msra.mxu0 0
        %3501 = vmatprep.subr.bf16.mxu0 0
        %3502 = vmatpush2.bf16.msra.mxu0 0
        %3503 = vmatprep.subr.bf16.mxu0 0
        %3504 = vmatpush2.bf16.msra.mxu0 0
        %3505 = vmatprep.subr.bf16.mxu0 0
        %3506 = vmatpush2.bf16.msra.mxu0 0
        %3507 = vmatprep.subr.bf16.mxu0 0
        %3508 = vmatpush2.bf16.msra.mxu0 0
        %3509 = vmatprep.mubr.bf16.mxu0 0
        %3510 = vmatmul.mubr.bf16.gmra.mxu0 %v3475
        %v3511 = vpop.f32.mrf.mxu0
        %v3512 = vadd.f32 %v3460, %v3511
        %v3513 = vpop.f32.mrf.mxu0
        %v3514 = vpop.f32.mrf.mxu0
        %v3515 = vadd.f32 %v3460, %v3514
        %v3516 = vpop.f32.mrf.mxu0
        %3517 = vdwg.mxu0
        %v3518 = vmul.f32 %v3512, %v3512
        %v3519 = vmul.f32 %v3515, %v3515
        %v3520 = vmul.f32 %v3512, %v3518
        %v3521 = vmul.f32 %v3515, %v3519
        %v3522 = vmul.f32 %v3520, 0.044715
        %v3523 = vmul.f32 %v3521, 0.044715
        %v3524 = vadd.f32 %v3512, %v3522
        %v3525 = vadd.f32 %v3515, %v3523
        %v3526 = vmul.f32 %v3524, 0.7978846
        %v3527 = vmul.f32 %v3525, 0.7978846
        %v3528 = vtanh.pop %v3526
        %v3529 = vtanh.pop %v3527
        %v3530 = vadd.f32 %v3528, 1.0
        %v3531 = vadd.f32 %v3529, 1.0
        %v3532 = vmul.f32 %v3530, 0.5
        %v3533 = vmul.f32 %v3531, 0.5
        %v3534 = vmul.f32 %v3512, %v3532
        %v3535 = vmul.f32 %v3515, %v3533
        %v3536 = vpack.c.bf16 %v3535, %v3534
        %v3537 = vld [vmem:[%s12] sm:$0xf]
        %v3538 = vld [vmem:[%s12 + $0x4] sm:$0xf]
        %v3539 = vld [vmem:[%s12 + $0x8] sm:$0xf]
        %v3540 = vld [vmem:[%s12 + $0xc] sm:$0xf]
        %v3541 = vld [vmem:[%s12 + $0x10] sm:$0xf]
        %v3542 = vld [vmem:[%s12 + $0x14] sm:$0xf]
        %v3543 = vld [vmem:[%s12 + $0x18] sm:$0xf]
        %v3544 = vld [vmem:[%s12 + $0x1c] sm:$0xf]
        %v3545 = vld [vmem:[%s12 + $0x20] sm:$0xf]
        %v3546 = vld [vmem:[%s12 + $0x24] sm:$0xf]
        %v3547 = vld [vmem:[%s12 + $0x28] sm:$0xf]
        %v3548 = vld [vmem:[%s12 + $0x2c] sm:$0xf]
        %v3549 = vld [vmem:[%s12 + $0x30] sm:$0xf]
        %v3550 = vld [vmem:[%s12 + $0x34] sm:$0xf]
        %v3551 = vld [vmem:[%s12 + $0x38] sm:$0xf]
        %v3552 = vld [vmem:[%s12 + $0x3c] sm:$0xf]
        %v3553 = vld [vmem:[%s13] sm:$0x1]
        %v3555 = vlaneseq
        %v3556 = vshrl.u32 %v3555, 7
        %v3557 = vsub.s32 0, %v3556
        %v3558 = vrot.slane %v3553, %v3557
        %v3576 = vunpack.c.l.b16 %v3537
        %v3577 = vunpack.c.l.b16 %v3538
        %v3578 = vunpack.c.l.b16 %v3539
        %v3579 = vunpack.c.l.b16 %v3540
        %v3580 = vunpack.c.l.b16 %v3541
        %v3581 = vunpack.c.l.b16 %v3542
        %v3582 = vunpack.c.l.b16 %v3543
        %v3583 = vunpack.c.l.b16 %v3544
        %v3584 = vunpack.c.l.b16 %v3545
        %v3585 = vunpack.c.l.b16 %v3546
        %v3586 = vunpack.c.l.b16 %v3547
        %v3587 = vunpack.c.l.b16 %v3548
        %v3588 = vunpack.c.l.b16 %v3549
        %v3589 = vunpack.c.l.b16 %v3550
        %v3590 = vunpack.c.l.b16 %v3551
        %v3591 = vunpack.c.l.b16 %v3552
        %v3592 = vpack.c.b16 %v3577, %v3576
        %v3593 = vpack.c.b16 %v3579, %v3578
        %v3594 = vpack.c.b16 %v3581, %v3580
        %v3595 = vpack.c.b16 %v3583, %v3582
        %v3596 = vpack.c.b16 %v3585, %v3584
        %v3597 = vpack.c.b16 %v3587, %v3586
        %v3598 = vpack.c.b16 %v3589, %v3588
        %v3599 = vpack.c.b16 %v3591, %v3590
        %3608 = vmatprep.subr.bf16.mxu0 0
        %3609 = vmatpush1.bf16.msra.mxu0 %v3599
        %3610 = vmatprep.subr.bf16.mxu0 0
        %3611 = vmatpush1.bf16.msra.mxu0 %v3598
        %3612 = vmatprep.subr.bf16.mxu0 0
        %3613 = vmatpush1.bf16.msra.mxu0 %v3597
        %3614 = vmatprep.subr.bf16.mxu0 0
        %3615 = vmatpush1.bf16.msra.mxu0 %v3596
        %3616 = vmatprep.subr.bf16.mxu0 0
        %3617 = vmatpush1.bf16.msra.mxu0 %v3595
        %3618 = vmatprep.subr.bf16.mxu0 0
        %3619 = vmatpush1.bf16.msra.mxu0 %v3594
        %3620 = vmatprep.subr.bf16.mxu0 0
        %3621 = vmatpush1.bf16.msra.mxu0 %v3593
        %3622 = vmatprep.subr.bf16.mxu0 0
        %3623 = vmatpush1.bf16.msra.mxu0 %v3592
        %3624 = vmatprep.subr.bf16.mxu0 0
        %3625 = vmatpush2.bf16.msra.mxu0 0
        %3626 = vmatprep.subr.bf16.mxu0 0
        %3627 = vmatpush2.bf16.msra.mxu0 0
        %3628 = vmatprep.subr.bf16.mxu0 0
        %3629 = vmatpush2.bf16.msra.mxu0 0
        %3630 = vmatprep.subr.bf16.mxu0 0
        %3631 = vmatpush2.bf16.msra.mxu0 0
        %3632 = vmatprep.subr.bf16.mxu0 0
        %3633 = vmatpush2.bf16.msra.mxu0 0
        %3634 = vmatprep.subr.bf16.mxu0 0
        %3635 = vmatpush2.bf16.msra.mxu0 0
        %3636 = vmatprep.subr.bf16.mxu0 0
        %3637 = vmatpush2.bf16.msra.mxu0 0
        %3638 = vmatprep.subr.bf16.mxu0 0
        %3639 = vmatpush2.bf16.msra.mxu0 0
        %3640 = vmatprep.mubr.bf16.mxu0 0
        %3641 = vmatmul.mubr.bf16.gmra.mxu0 %v3536
        %v3642 = vpop.f32.mrf.mxu0
        %v3643 = vadd.f32 %v3558, %v3642
        %v3644 = vpop.f32.mrf.mxu0
        %v3645 = vpop.f32.mrf.mxu0
        %v3646 = vadd.f32 %v3558, %v3645
        %v3647 = vpop.f32.mrf.mxu0
        %3648 = vdwg.mxu0
        %v3649 = vadd.f32 %v3403, %v3643
        %v3650 = vadd.f32 %v3404, %v3646
        %3651 = vst.msk [vmem:[%s474] sm:$0xff] %vm3356, %v3649
        %3652 = vst.msk [vmem:[%s474 + $0x8] sm:$0xff] %vm3356, %v3650
        %s3653 = sand.u32 %s349, 1
        %s3654 = scalar_lea.sflag [#allocation6], %s3653
        %s3655 = sand.u32 %s349, 1
        %s3656 = smul.addr %s3655, 16
        %s3657 = scalar_lea.vmem [#allocation5], %s3656
        // Predicated region
        $region81: #{tpu_custom_call.1} parent=75 // pred_check
          %p3658 = pneg %p359
        $region82: #{tpu_custom_call.1} parent=75 // pred_check_branch
          %3660 = sbr.rel (%p3658) target = $region84
        $region83: #{tpu_custom_call.1} parent=75 // pred_region
          %s3661 = smul.u32 2, %s33
          %s3663 = ssub.s32 256, 256
          %3664 = vsyncadd %s3654, %s3663
          %s3665 = smul.addr %s32, 2
          %s3666 = sadd.s32 %s3661, %s3665
          %s3667 = smul.addr %s3666, 128
          %s3668 = scalar_lea.hbm %s14, %s3667
          %s3669 = sshll.u32 %s3657, 4
          %s3670 = int_to_ptr.vmem [resolvable:$true] %s3669
          %3675 = dma.vmem_to_hbm [thread:$0]  %s3670, 256, %s3668, %s3654, 128, 128, 8
        $region84: #{tpu_custom_call.1} parent=75 // pred_fallthru
          _
      $region76: #{tpu_custom_call.1} parent=5 // pred_fallthru
        _
      %p3676 = scmp.le.s32.totalorder 2, %s23
      // Predicated region
      $region85: #{tpu_custom_call.1} parent=5 // pred_check
        %p3677 = pneg %p3676
      $region86: #{tpu_custom_call.1} parent=5 // pred_check_branch
        %3679 = sbr.rel (%p3677) target = $region88
      $region87: #{tpu_custom_call.1} parent=5 // pred_region
        %s3680 = ssub.s32 %s23, 2
        // Predicated region
        $region89: #{tpu_custom_call.1} parent=87 // pred_check
          %p3681 = pneg %p365
        $region90: #{tpu_custom_call.1} parent=87 // pred_check_branch
          %3683 = sbr.rel (%p3681) target = $region92
        $region91: #{tpu_custom_call.1} parent=87 // pred_region
          %s3684 = sand.u32 %s350, 1
          %s3685 = scalar_lea.sflag [#allocation6], %s3684
          %s3686 = sand.u32 %s350, 1
          %s3687 = smul.addr %s3686, 16
          %s3688 = scalar_lea.vmem [#allocation5], %s3687
          %3689 = dma.done %s3685, 256
        $region92: #{tpu_custom_call.1} parent=87 // pred_fallthru
          _
      $region88: #{tpu_custom_call.1} parent=5 // pred_fallthru
        _
    $region6: #{tpu_custom_call.1} parent=1 // loop_footer
      %s27 = sadd.s32 1, %s23
    $region7: #{tpu_custom_call.1} parent=1 // loop_footer_branch
      %22 = sbr.rel target = $region3
    $region8: #{tpu_custom_call.1} parent=1 // loop_exit
      _
    %3690 = vsyncpa [#allocation6], 1
    %s3691 = scalar_lea.sflag [#allocation6], 1
    %3692 = vsyncpa %s3691, 1

</llo_original>
